<compile_context>
chip_gen: v5e
topology: v5e:2x2
jax: 0.10.0
libtpu: 0.0.40
codegen_flags: <defaults>
</compile_context>

<pallas_src>
import functools
import math

import jax
import jax.numpy as jnp
from jax.experimental import pallas as pl
from jax.experimental.pallas import tpu as pltpu


# ------------------------------ tiling helpers ------------------------------

def _row_tile(M, cap=512):
    """Largest divisor of M that is a multiple of 16 (safe sublane tiling for
    f32 and packed bf16), <= cap, and < M when possible so the grid has >= 2
    'parallel' steps (keeps both TensorCores busy on v7x)."""
    if M % 16 != 0:
        return M
    upper = min(cap, M // 2 if M > 16 else M)
    upper -= upper % 16
    for t in range(upper, 15, -16):
        if M % t == 0:
            return t
    return M


def _q_tile(Nq, cap=256):
    """Query tile for attention: full extent when small, else a 16-multiple
    divisor <= cap so the [H, tq, Nk] f32 score block stays bounded in VMEM."""
    if Nq <= cap or Nq % 16 != 0:
        return Nq
    for t in range(cap, 15, -16):
        if Nq % t == 0:
            return t
    return Nq


def _cparams(*sems):
    return pltpu.CompilerParams(
        dimension_semantics=tuple(sems),
        vmem_limit_bytes=48 * 1024 * 1024)   # stays inside v7x's 64 MiB VMEM


# ------------------------------ Pallas kernels ------------------------------

def _multi_linear_kernel(n, *refs):
    # refs = [x, w0, b0, ..., w_{n-1}, b_{n-1}, o0, ..., o_{n-1}]
    # The x tile is loaded once (bf16) and reused for every matmul.
    x = refs[0][...].astype(jnp.bfloat16)
    for j in range(n):
        w_ref = refs[1 + 2 * j]
        b_ref = refs[2 + 2 * j]
        o_ref = refs[1 + 2 * n + j]
        acc = jnp.dot(x, w_ref[...], preferred_element_type=jnp.float32)
        o_ref[...] = (acc + b_ref[...]).astype(o_ref.dtype)


def multi_linear(x2d, weights, biases, out_dtype=jnp.bfloat16):
    """Row-tiled projection(s): one kernel, one x load per tile, one MXU matmul
    per (w, b) pair, separate lane-dense outputs (no concatenated tensors,
    no XLA slices afterwards).  Weights are expected in bf16."""
    n = len(weights)
    M, Din = x2d.shape
    tm = _row_tile(M)
    row = lambda i: (i, 0)
    rep = lambda i: (0, 0)
    in_specs = [pl.BlockSpec((tm, Din), row)]
    args = [x2d]
    out_shapes, out_specs = [], []
    flops = 0
    bytes_acc = M * Din * x2d.dtype.itemsize
    for w, b in zip(weights, biases):
        Dout = w.shape[1]
        in_specs += [pl.BlockSpec((Din, Dout), rep),
                     pl.BlockSpec((1, Dout), rep)]
        args += [w, b.reshape(1, Dout)]
        out_shapes.append(jax.ShapeDtypeStruct((M, Dout), out_dtype))
        out_specs.append(pl.BlockSpec((tm, Dout), row))
        flops += 2 * M * Din * Dout
        bytes_acc += (Din * Dout * w.dtype.itemsize
                      + M * Dout * jnp.dtype(out_dtype).itemsize)
    outs = pl.pallas_call(
        functools.partial(_multi_linear_kernel, n),
        out_shape=tuple(out_shapes),
        grid=(M // tm,),
        in_specs=in_specs,
        out_specs=tuple(out_specs),
        compiler_params=_cparams("parallel"),
        cost_estimate=pl.CostEstimate(flops=flops, transcendentals=0,
                                      bytes_accessed=bytes_acc),
    )(*args)
    return tuple(outs) if isinstance(outs, (list, tuple)) else (outs,)


def _proj_add_kernel(x_ref, w_ref, b_ref, r_ref, o_ref):
    # o = x @ w + b + residual
    acc = jnp.dot(x_ref[...].astype(jnp.bfloat16), w_ref[...],
                  preferred_element_type=jnp.float32)
    o_ref[...] = (acc + b_ref[...] + r_ref[...].astype(jnp.float32)
                  ).astype(o_ref.dtype)


def _proj_add_ln_kernel(x_ref, w_ref, b_ref, r_ref, g_ref, be_ref, o_ref):
    # o = LayerNorm(x @ w + b + residual) ; LN statistics in f32, eps = 1e-5.
    acc = jnp.dot(x_ref[...].astype(jnp.bfloat16), w_ref[...],
                  preferred_element_type=jnp.float32)
    y = acc + b_ref[...] + r_ref[...].astype(jnp.float32)
    mu = jnp.mean(y, axis=-1, keepdims=True)
    var = jnp.mean(jnp.square(y - mu), axis=-1, keepdims=True)
    y = (y - mu) * jax.lax.rsqrt(var + 1e-5)
    o_ref[...] = (y * g_ref[...] + be_ref[...]).astype(o_ref.dtype)


def proj_residual(x2d, w, b, res2d, ln=None):
    """Fused attention out-projection + residual add (+ optional LayerNorm)."""
    M, Din = x2d.shape
    Dout = w.shape[1]
    tm = _row_tile(M)
    row = lambda i: (i, 0)
    rep = lambda i: (0, 0)
    in_specs = [pl.BlockSpec((tm, Din), row),
                pl.BlockSpec((Din, Dout), rep),
                pl.BlockSpec((1, Dout), rep),
                pl.BlockSpec((tm, Dout), row)]
    args = [x2d, w, b.reshape(1, Dout), res2d]
    kern = _proj_add_kernel
    if ln is not None:
        in_specs += [pl.BlockSpec((1, Dout), rep), pl.BlockSpec((1, Dout), rep)]
        args += [ln["g"].reshape(1, Dout), ln["b"].reshape(1, Dout)]
        kern = _proj_add_ln_kernel
    cost = pl.CostEstimate(
        flops=2 * M * Din * Dout + 10 * M * Dout, transcendentals=0,
        bytes_accessed=M * Din * 2 + Din * Dout * 2 + 2 * M * Dout * 4)
    return pl.pallas_call(
        kern,
        out_shape=jax.ShapeDtypeStruct((M, Dout), jnp.float32),
        grid=(M // tm,),
        in_specs=in_specs,
        out_specs=pl.BlockSpec((tm, Dout), row),
        compiler_params=_cparams("parallel"),
        cost_estimate=cost,
    )(*args)


def _mlp_res_ln_kernel(x_ref, w1_ref, b1_ref, w2_ref, b2_ref,
                       r_ref, g_ref, be_ref, o_ref):
    # o = LayerNorm( fc2(GELU(fc1(x))) + residual )
    x = x_ref[...].astype(jnp.bfloat16)
    h = jnp.dot(x, w1_ref[...], preferred_element_type=jnp.float32) + b1_ref[...]
    # TODO(synk): torch F.gelu defaults to exact erf-GELU; tanh approximation
    # used here (EUP-friendly, ~1e-3 max abs difference).
    h = jax.nn.gelu(h, approximate=True)
    o = jnp.dot(h.astype(jnp.bfloat16), w2_ref[...],
                preferred_element_type=jnp.float32)
    y = o + b2_ref[...] + r_ref[...].astype(jnp.float32)
    mu = jnp.mean(y, axis=-1, keepdims=True)
    var = jnp.mean(jnp.square(y - mu), axis=-1, keepdims=True)
    y = (y - mu) * jax.lax.rsqrt(var + 1e-5)
    o_ref[...] = (y * g_ref[...] + be_ref[...]).astype(o_ref.dtype)


def mlp_residual_ln(x3d, p, res3d, ln):
    B, N, D = x3d.shape
    Dh = p["w1"].shape[1]
    M = B * N
    tm = _row_tile(M)
    row = lambda i: (i, 0)
    rep = lambda i: (0, 0)
    cost = pl.CostEstimate(
        flops=4 * M * D * Dh + 10 * M * D, transcendentals=M * Dh,
        bytes_accessed=2 * M * D * 4 + (D * Dh + Dh * D) * 2 + M * D * 4)
    y = pl.pallas_call(
        _mlp_res_ln_kernel,
        out_shape=jax.ShapeDtypeStruct((M, D), jnp.float32),
        grid=(M // tm,),
        in_specs=[pl.BlockSpec((tm, D), row),
                  pl.BlockSpec((D, Dh), rep),
                  pl.BlockSpec((1, Dh), rep),
                  pl.BlockSpec((Dh, D), rep),
                  pl.BlockSpec((1, D), rep),
                  pl.BlockSpec((tm, D), row),
                  pl.BlockSpec((1, D), rep),
                  pl.BlockSpec((1, D), rep)],
        out_specs=pl.BlockSpec((tm, D), row),
        compiler_params=_cparams("parallel"),
        cost_estimate=cost,
    )(x3d.reshape(M, D), p["w1"], p["b1"].reshape(1, Dh),
      p["w2"], p["b2"].reshape(1, D), res3d.reshape(M, D),
      ln["g"].reshape(1, D), ln["b"].reshape(1, D))
    return y.reshape(B, N, D)


def _mha_kernel(q_ref, k_ref, v_ref, o_ref, *, num_heads):
    # One (batch, query-tile) per grid point.  Lane dim stays D = H*hd; the
    # per-head contraction happens in-kernel with heads on a leading axis,
    # matching the torch reference's f32 score/softmax arithmetic.
    q = q_ref[0].astype(jnp.float32)       # [tq, D]
    k = k_ref[0].astype(jnp.float32)       # [Nk, D]
    v = v_ref[0].astype(jnp.float32)       # [Nk, D]
    tq, D = q.shape
    Nk = k.shape[0]
    hd = D // num_heads
    qh = q.reshape(tq, num_heads, hd).transpose(1, 0, 2)   # [H, tq, hd]
    kh = k.reshape(Nk, num_heads, hd).transpose(1, 0, 2)   # [H, Nk, hd]
    vh = v.reshape(Nk, num_heads, hd).transpose(1, 0, 2)   # [H, Nk, hd]
    scale = 1.0 / math.sqrt(hd)
    s = jnp.einsum('hqd,hkd->hqk', qh, kh,
                   preferred_element_type=jnp.float32) * scale      # [H, tq, Nk]
    s = s - jnp.max(s, axis=-1, keepdims=True)
    e = jnp.exp(s)
    inv = pl.reciprocal(jnp.sum(e, axis=-1, keepdims=True), approx=True)
    probs = e * inv
    oh = jnp.einsum('hqk,hkd->hqd', probs, vh,
                    preferred_element_type=jnp.float32)              # [H, tq, hd]
    o_ref[0] = oh.transpose(1, 0, 2).reshape(tq, D).astype(o_ref.dtype)


def mha(q, k, v, num_heads):
    # q,k,v: [B, Nq|Nk, D] (bf16), output [B, Nq, D] lane-dense (bf16).
    B, Nq, D = q.shape
    Nk = k.shape[1]
    tq = _q_tile(Nq)
    # TODO(synk): for very long KV (large N_img) add flash-style online-softmax
    # tiling over Nk; at these sizes full-K in VMEM is the right trade-off.
    cost = pl.CostEstimate(
        flops=4 * B * Nq * Nk * D, transcendentals=B * num_heads * Nq * Nk,
        bytes_accessed=2 * (2 * B * Nq * D + 2 * B * Nk * D))
    return pl.pallas_call(
        functools.partial(_mha_kernel, num_heads=num_heads),
        out_shape=jax.ShapeDtypeStruct((B, Nq, D), q.dtype),
        grid=(B, Nq // tq),
        in_specs=[pl.BlockSpec((1, tq, D), lambda b, i: (b, i, 0)),
                  pl.BlockSpec((1, Nk, D), lambda b, i: (b, 0, 0)),
                  pl.BlockSpec((1, Nk, D), lambda b, i: (b, 0, 0))],
        out_specs=pl.BlockSpec((1, tq, D), lambda b, i: (b, i, 0)),
        compiler_params=_cparams("parallel", "parallel"),
        cost_estimate=cost,
    )(q, k, v)


# --------------------------- attention block glue ---------------------------

def attention_block(q_in, kv_in, p, num_heads, residual, ln=None,
                    self_attn=False):
    """q/k/v projections + multi-head attention + fused
    out-projection/residual(/LayerNorm).  Serves the ViT self-attention and
    the SAM-style img_token_att blocks (dropout = identity, eval mode)."""
    B, Nq, D = q_in.shape
    Nk = kv_in.shape[1]
    if self_attn:                          # q, k, v from one kernel / one x load
        q, k, v = multi_linear(q_in.reshape(B * Nq, D),
                               (p["wq"], p["wk"], p["wv"]),
                               (p["bq"], p["bk"], p["bv"]))
    else:                                  # cross-attention: q kernel + fused kv kernel
        (q,) = multi_linear(q_in.reshape(B * Nq, D), (p["wq"],), (p["bq"],))
        k, v = multi_linear(kv_in.reshape(B * Nk, D),
                            (p["wk"], p["wv"]), (p["bk"], p["bv"]))
    q = q.reshape(B, Nq, D)
    k = k.reshape(B, Nk, D)
    v = v.reshape(B, Nk, D)
    o = mha(q, k, v, num_heads)            # [B, Nq, D] bf16, lane-dense
    y = proj_residual(o.reshape(B * Nq, D), p["wo"], p["bo"],
                      residual.reshape(B * Nq, D), ln)
    return y.reshape(B, Nq, D)


# ------------------------------- PromptDecoder ------------------------------

def prompt_decoder_forward(params, x, p_ids, num_heads):
    # t_f = embed(p)
    # TODO(synk): embedding row-gather is data-dependent and tiny; left to
    # XLA's gather rather than a per-row Pallas DMA loop.
    t_f = jnp.take(params["embed"], p_ids, axis=0)                    # [B, Np, D]
    # t_f = self_att(t_f)[0] + t_f ; norm          (fused residual + LN)
    t_f = attention_block(t_f, t_f, params["self_att"], num_heads,
                          residual=t_f, ln=params["norm"], self_attn=True)
    # t_f = i_t_att(t_f, x, x) + t_f ; norm1
    t_f = attention_block(t_f, x, params["i_t_att"], num_heads,
                          residual=t_f, ln=params["norm1"])
    # t_f = mlp(t_f) + t_f ; norm2                 (fused MLP + residual + LN)
    t_f = mlp_residual_ln(t_f, params["mlp"], t_f, params["norm2"])
    # out = t_i_att(x, t_f, t_f) + x               (no LayerNorm here)
    out = attention_block(x, t_f, params["t_i_att"], num_heads,
                          residual=x, ln=None)
    # t_f = fin_att(t_f, out, out) + t_f ; norm4
    t_f = attention_block(t_f, out, params["fin_att"], num_heads,
                          residual=t_f, ln=params["norm4"])
    return out, t_f


# ------------------------------ parameter setup ------------------------------

def _att_params(key, d):
    ks = jax.random.split(key, 8)
    w = lambda k, s: 0.02 * jax.random.normal(k, s, jnp.float32)
    return dict(wq=w(ks[0], (d, d)), bq=w(ks[1], (d,)),
                wk=w(ks[2], (d, d)), bk=w(ks[3], (d,)),
                wv=w(ks[4], (d, d)), bv=w(ks[5], (d,)),
                wo=w(ks[6], (d, d)), bo=w(ks[7], (d,)))


def _ln_params(d):
    return dict(g=jnp.ones((d,), jnp.float32), b=jnp.zeros((d,), jnp.float32))


def init_params(key, vocab, d, mlp_dim):
    ks = jax.random.split(key, 8)
    w = lambda k, s: 0.02 * jax.random.normal(k, s, jnp.float32)
    return dict(
        embed=w(ks[0], (vocab, d)),
        self_att=_att_params(ks[1], d),
        i_t_att=_att_params(ks[2], d),
        t_i_att=_att_params(ks[3], d),
        fin_att=_att_params(ks[4], d),
        mlp=dict(w1=w(ks[5], (d, mlp_dim)), b1=jnp.zeros((mlp_dim,), jnp.float32),
                 w2=w(ks[6], (mlp_dim, d)), b2=jnp.zeros((d,), jnp.float32)),
        norm=_ln_params(d), norm1=_ln_params(d), norm2=_ln_params(d),
        norm3=_ln_params(d),  # present in __init__, unused in forward
        norm4=_ln_params(d),
    )


def prepare_params(raw):
    """Pre-cast matmul weights to bf16 (biases / LN params / embedding stay f32)."""
    bf = lambda a: a.astype(jnp.bfloat16)

    def fa(p):
        return dict(wq=bf(p["wq"]), bq=p["bq"],
                    wk=bf(p["wk"]), bk=p["bk"],
                    wv=bf(p["wv"]), bv=p["bv"],
                    wo=bf(p["wo"]), bo=p["bo"])

    out = dict(raw)
    for name in ("self_att", "i_t_att", "t_i_att", "fin_att"):
        out[name] = fa(raw[name])
    out["mlp"] = dict(w1=bf(raw["mlp"]["w1"]), b1=raw["mlp"]["b1"],
                      w2=bf(raw["mlp"]["w2"]), b2=raw["mlp"]["b2"])
    return out


# ------------------------------------ main -----------------------------------

if __name__ == "__main__":
    B, N_img, Np = 2, 32, 16
    D, H, vocab, mlp_dim = 32, 4, 32, 64

    key = jax.random.PRNGKey(0)
    kx, kp, kw = jax.random.split(key, 3)
    x = jax.random.normal(kx, (B, N_img, D), jnp.float32)
    p_ids = jax.random.randint(kp, (B, Np), 0, vocab)
    params = prepare_params(init_params(kw, vocab, D, mlp_dim))

    fwd = jax.jit(functools.partial(prompt_decoder_forward, params, num_heads=H))
    out, t_f = fwd(x, p_ids)
    jax.block_until_ready((out, t_f))
    assert out.shape == (B, N_img, D) and t_f.shape == (B, Np, D)
    print("KERNEL_OK")
</pallas_src>

<mosaic_0001>
module attributes {stable_mosaic.version = 11 : i64} {
  func.func @_multi_linear_kernel(%arg0: i32, %arg1: memref<32x32xf32, #tpu.memory_space<vmem>>, %arg2: memref<32x32xbf16, #tpu.memory_space<vmem>>, %arg3: memref<1x32xf32, #tpu.memory_space<vmem>>, %arg4: memref<32x32xbf16, #tpu.memory_space<vmem>>) attributes {dimension_semantics = [#tpu.dimension_semantics<parallel>], iteration_bounds = array<i64: 2>, scalar_prefetch = 0 : i64, scratch_operands = 0 : i64, tpu.core_type = #tpu.core_type<tc>, window_params = [{transform_indices = @transform_0, window_bounds = array<i64: 32, 32>}, {pipeline_mode = #tpu.pipeline_mode<synchronous>, transform_indices = @transform_1, window_bounds = array<i64: 32, 32>}, {pipeline_mode = #tpu.pipeline_mode<synchronous>, transform_indices = @transform_2, window_bounds = array<i64: 1, 32>}, {transform_indices = @transform_3, window_bounds = array<i64: 32, 32>}]} {
    %c0 = arith.constant 0 : index
    %c0_0 = arith.constant 0 : index
    %0 = vector.load %arg1[%c0, %c0_0] : memref<32x32xf32, #tpu.memory_space<vmem>>, vector<32x32xf32>
    %1 = arith.truncf %0 : vector<32x32xf32> to vector<32x32xbf16>
    %c0_1 = arith.constant 0 : index
    %c0_2 = arith.constant 0 : index
    %2 = vector.load %arg2[%c0_1, %c0_2] : memref<32x32xbf16, #tpu.memory_space<vmem>>, vector<32x32xbf16>
    %cst = arith.constant dense<0.000000e+00> : vector<32x32xf32>
    %3 = tpu.matmul %1, %2, %cst {dimension_numbers = #tpu.dot_dimension_numbers<[1], [0], [0], [1], [0, 0, 1, 1], [], []>} : vector<32x32xbf16>, vector<32x32xbf16>, vector<32x32xf32> -> vector<32x32xf32>
    %c0_3 = arith.constant 0 : index
    %c0_4 = arith.constant 0 : index
    %4 = vector.load %arg3[%c0_3, %c0_4] : memref<1x32xf32, #tpu.memory_space<vmem>>, vector<1x32xf32>
    %5 = vector.broadcast %4 : vector<1x32xf32> to vector<32x32xf32>
    %6 = arith.addf %3, %5 : vector<32x32xf32>
    %7 = arith.truncf %6 : vector<32x32xf32> to vector<32x32xbf16>
    %c0_5 = arith.constant 0 : index
    %c0_6 = arith.constant 0 : index
    %8 = vector.load %arg4[%c0_5, %c0_6] : memref<32x32xbf16, #tpu.memory_space<vmem>>, vector<32x32xbf16>
    tpu.vector_store %arg4[%c0_5, %c0_6], %7 {strides = array<i32>} : memref<32x32xbf16, #tpu.memory_space<vmem>>, vector<32x32xbf16>,
    return
  }
  func.func @transform_0(%arg0: i32) -> (i32, i32) {
    %c0_i32 = arith.constant 0 : i32
    %c0_i32_0 = arith.constant 0 : i32
    return %arg0, %c0_i32 : i32, i32
  }
  func.func @transform_1(%arg0: i32) -> (i32, i32) {
    %c0_i32 = arith.constant 0 : i32
    %c0_i32_0 = arith.constant 0 : i32
    %c0_i32_1 = arith.constant 0 : i32
    return %c0_i32, %c0_i32_0 : i32, i32
  }
  func.func @transform_2(%arg0: i32) -> (i32, i32) {
    %c0_i32 = arith.constant 0 : i32
    %c0_i32_0 = arith.constant 0 : i32
    %c0_i32_1 = arith.constant 0 : i32
    return %c0_i32, %c0_i32_0 : i32, i32
  }
  func.func @transform_3(%arg0: i32) -> (i32, i32) {
    %c0_i32 = arith.constant 0 : i32
    %c0_i32_0 = arith.constant 0 : i32
    return %arg0, %c0_i32 : i32, i32
  }
}

module attributes {stable_mosaic.version = 11 : i64} {
  func.func @_multi_linear_kernel(%arg0: i32, %arg1: memref<16x32xf32, #tpu.memory_space<vmem>>, %arg2: memref<32x32xbf16, #tpu.memory_space<vmem>>, %arg3: memref<1x32xf32, #tpu.memory_space<vmem>>, %arg4: memref<32x32xbf16, #tpu.memory_space<vmem>>, %arg5: memref<1x32xf32, #tpu.memory_space<vmem>>, %arg6: memref<32x32xbf16, #tpu.memory_space<vmem>>, %arg7: memref<1x32xf32, #tpu.memory_space<vmem>>, %arg8: memref<16x32xbf16, #tpu.memory_space<vmem>>, %arg9: memref<16x32xbf16, #tpu.memory_space<vmem>>, %arg10: memref<16x32xbf16, #tpu.memory_space<vmem>>) attributes {dimension_semantics = [#tpu.dimension_semantics<parallel>], iteration_bounds = array<i64: 2>, scalar_prefetch = 0 : i64, scratch_operands = 0 : i64, tpu.core_type = #tpu.core_type<tc>, window_params = [{transform_indices = @transform_0, window_bounds = array<i64: 16, 32>}, {pipeline_mode = #tpu.pipeline_mode<synchronous>, transform_indices = @transform_1, window_bounds = array<i64: 32, 32>}, {pipeline_mode = #tpu.pipeline_mode<synchronous>, transform_indices = @transform_2, window_bounds = array<i64: 1, 32>}, {pipeline_mode = #tpu.pipeline_mode<synchronous>, transform_indices = @transform_3, window_bounds = array<i64: 32, 32>}, {pipeline_mode = #tpu.pipeline_mode<synchronous>, transform_indices = @transform_4, window_bounds = array<i64: 1, 32>}, {pipeline_mode = #tpu.pipeline_mode<synchronous>, transform_indices = @transform_5, window_bounds = array<i64: 32, 32>}, {pipeline_mode = #tpu.pipeline_mode<synchronous>, transform_indices = @transform_6, window_bounds = array<i64: 1, 32>}, {transform_indices = @transform_7, window_bounds = array<i64: 16, 32>}, {transform_indices = @transform_8, window_bounds = array<i64: 16, 32>}, {transform_indices = @transform_9, window_bounds = array<i64: 16, 32>}]} {
    %c0 = arith.constant 0 : index
    %c0_0 = arith.constant 0 : index
    %0 = vector.load %arg1[%c0, %c0_0] : memref<16x32xf32, #tpu.memory_space<vmem>>, vector<16x32xf32>
    %1 = arith.truncf %0 : vector<16x32xf32> to vector<16x32xbf16>
    %c0_1 = arith.constant 0 : index
    %c0_2 = arith.constant 0 : index
    %2 = vector.load %arg2[%c0_1, %c0_2] : memref<32x32xbf16, #tpu.memory_space<vmem>>, vector<32x32xbf16>
    %cst = arith.constant dense<0.000000e+00> : vector<16x32xf32>
    %3 = tpu.matmul %1, %2, %cst {dimension_numbers = #tpu.dot_dimension_numbers<[1], [0], [0], [1], [0, 0, 1, 1], [], []>} : vector<16x32xbf16>, vector<32x32xbf16>, vector<16x32xf32> -> vector<16x32xf32>
    %c0_3 = arith.constant 0 : index
    %c0_4 = arith.constant 0 : index
    %4 = vector.load %arg3[%c0_3, %c0_4] : memref<1x32xf32, #tpu.memory_space<vmem>>, vector<1x32xf32>
    %5 = vector.broadcast %4 : vector<1x32xf32> to vector<16x32xf32>
    %6 = arith.addf %3, %5 : vector<16x32xf32>
    %7 = arith.truncf %6 : vector<16x32xf32> to vector<16x32xbf16>
    %c0_5 = arith.constant 0 : index
    %c0_6 = arith.constant 0 : index
    %8 = vector.load %arg8[%c0_5, %c0_6] : memref<16x32xbf16, #tpu.memory_space<vmem>>, vector<16x32xbf16>
    tpu.vector_store %arg8[%c0_5, %c0_6], %7 {strides = array<i32>} : memref<16x32xbf16, #tpu.memory_space<vmem>>, vector<16x32xbf16>,
    %c0_7 = arith.constant 0 : index
    %c0_8 = arith.constant 0 : index
    %9 = vector.load %arg4[%c0_7, %c0_8] : memref<32x32xbf16, #tpu.memory_space<vmem>>, vector<32x32xbf16>
    %cst_9 = arith.constant dense<0.000000e+00> : vector<16x32xf32>
    %10 = tpu.matmul %1, %9, %cst_9 {dimension_numbers = #tpu.dot_dimension_numbers<[1], [0], [0], [1], [0, 0, 1, 1], [], []>} : vector<16x32xbf16>, vector<32x32xbf16>, vector<16x32xf32> -> vector<16x32xf32>
    %c0_10 = arith.constant 0 : index
    %c0_11 = arith.constant 0 : index
    %11 = vector.load %arg5[%c0_10, %c0_11] : memref<1x32xf32, #tpu.memory_space<vmem>>, vector<1x32xf32>
    %12 = vector.broadcast %11 : vector<1x32xf32> to vector<16x32xf32>
    %13 = arith.addf %10, %12 : vector<16x32xf32>
    %14 = arith.truncf %13 : vector<16x32xf32> to vector<16x32xbf16>
    %c0_12 = arith.constant 0 : index
    %c0_13 = arith.constant 0 : index
    %15 = vector.load %arg9[%c0_12, %c0_13] : memref<16x32xbf16, #tpu.memory_space<vmem>>, vector<16x32xbf16>
    tpu.vector_store %arg9[%c0_12, %c0_13], %14 {strides = array<i32>} : memref<16x32xbf16, #tpu.memory_space<vmem>>, vector<16x32xbf16>,
    %c0_14 = arith.constant 0 : index
    %c0_15 = arith.constant 0 : index
    %16 = vector.load %arg6[%c0_14, %c0_15] : memref<32x32xbf16, #tpu.memory_space<vmem>>, vector<32x32xbf16>
    %cst_16 = arith.constant dense<0.000000e+00> : vector<16x32xf32>
    %17 = tpu.matmul %1, %16, %cst_16 {dimension_numbers = #tpu.dot_dimension_numbers<[1], [0], [0], [1], [0, 0, 1, 1], [], []>} : vector<16x32xbf16>, vector<32x32xbf16>, vector<16x32xf32> -> vector<16x32xf32>
    %c0_17 = arith.constant 0 : index
    %c0_18 = arith.constant 0 : index
    %18 = vector.load %arg7[%c0_17, %c0_18] : memref<1x32xf32, #tpu.memory_space<vmem>>, vector<1x32xf32>
    %19 = vector.broadcast %18 : vector<1x32xf32> to vector<16x32xf32>
    %20 = arith.addf %17, %19 : vector<16x32xf32>
    %21 = arith.truncf %20 : vector<16x32xf32> to vector<16x32xbf16>
    %c0_19 = arith.constant 0 : index
    %c0_20 = arith.constant 0 : index
    %22 = vector.load %arg10[%c0_19, %c0_20] : memref<16x32xbf16, #tpu.memory_space<vmem>>, vector<16x32xbf16>
    tpu.vector_store %arg10[%c0_19, %c0_20], %21 {strides = array<i32>} : memref<16x32xbf16, #tpu.memory_space<vmem>>, vector<16x32xbf16>,
    return
  }
  func.func @transform_0(%arg0: i32) -> (i32, i32) {
    %c0_i32 = arith.constant 0 : i32
    %c0_i32_0 = arith.constant 0 : i32
    return %arg0, %c0_i32 : i32, i32
  }
  func.func @transform_1(%arg0: i32) -> (i32, i32) {
    %c0_i32 = arith.constant 0 : i32
    %c0_i32_0 = arith.constant 0 : i32
    %c0_i32_1 = arith.constant 0 : i32
    return %c0_i32, %c0_i32_0 : i32, i32
  }
  func.func @transform_2(%arg0: i32) -> (i32, i32) {
    %c0_i32 = arith.constant 0 : i32
    %c0_i32_0 = arith.constant 0 : i32
    %c0_i32_1 = arith.constant 0 : i32
    return %c0_i32, %c0_i32_0 : i32, i32
  }
  func.func @transform_3(%arg0: i32) -> (i32, i32) {
    %c0_i32 = arith.constant 0 : i32
    %c0_i32_0 = arith.constant 0 : i32
    %c0_i32_1 = arith.constant 0 : i32
    return %c0_i32, %c0_i32_0 : i32, i32
  }
  func.func @transform_4(%arg0: i32) -> (i32, i32) {
    %c0_i32 = arith.constant 0 : i32
    %c0_i32_0 = arith.constant 0 : i32
    %c0_i32_1 = arith.constant 0 : i32
    return %c0_i32, %c0_i32_0 : i32, i32
  }
  func.func @transform_5(%arg0: i32) -> (i32, i32) {
    %c0_i32 = arith.constant 0 : i32
    %c0_i32_0 = arith.constant 0 : i32
    %c0_i32_1 = arith.constant 0 : i32
    return %c0_i32, %c0_i32_0 : i32, i32
  }
  func.func @transform_6(%arg0: i32) -> (i32, i32) {
    %c0_i32 = arith.constant 0 : i32
    %c0_i32_0 = arith.constant 0 : i32
    %c0_i32_1 = arith.constant 0 : i32
    return %c0_i32, %c0_i32_0 : i32, i32
  }
  func.func @transform_7(%arg0: i32) -> (i32, i32) {
    %c0_i32 = arith.constant 0 : i32
    %c0_i32_0 = arith.constant 0 : i32
    return %arg0, %c0_i32 : i32, i32
  }
  func.func @transform_8(%arg0: i32) -> (i32, i32) {
    %c0_i32 = arith.constant 0 : i32
    %c0_i32_0 = arith.constant 0 : i32
    return %arg0, %c0_i32 : i32, i32
  }
  func.func @transform_9(%arg0: i32) -> (i32, i32) {
    %c0_i32 = arith.constant 0 : i32
    %c0_i32_0 = arith.constant 0 : i32
    return %arg0, %c0_i32 : i32, i32
  }
}

module attributes {stable_mosaic.version = 11 : i64} {
  func.func @_mha_kernel(%arg0: i32, %arg1: i32, %arg2: memref<1x16x32xbf16, #tpu.memory_space<vmem>>, %arg3: memref<1x16x32xbf16, #tpu.memory_space<vmem>>, %arg4: memref<1x16x32xbf16, #tpu.memory_space<vmem>>, %arg5: memref<1x16x32xbf16, #tpu.memory_space<vmem>>) attributes {dimension_semantics = [#tpu.dimension_semantics<parallel>, #tpu.dimension_semantics<parallel>], iteration_bounds = array<i64: 2, 1>, scalar_prefetch = 0 : i64, scratch_operands = 0 : i64, tpu.core_type = #tpu.core_type<tc>, window_params = [{transform_indices = @transform_0, window_bounds = array<i64: 1, 16, 32>}, {transform_indices = @transform_1, window_bounds = array<i64: 1, 16, 32>}, {transform_indices = @transform_2, window_bounds = array<i64: 1, 16, 32>}, {transform_indices = @transform_3, window_bounds = array<i64: 1, 16, 32>}]} {
    %c0 = arith.constant 0 : index
    %c0_0 = arith.constant 0 : index
    %c0_1 = arith.constant 0 : index
    %0 = vector.load %arg2[%c0, %c0_0, %c0_1] : memref<1x16x32xbf16, #tpu.memory_space<vmem>>, vector<1x16x32xbf16>
    %1 = vector.shape_cast %0 : vector<1x16x32xbf16> to vector<16x32xbf16>
    %2 = arith.extf %1 : vector<16x32xbf16> to vector<16x32xf32>
    %c0_2 = arith.constant 0 : index
    %c0_3 = arith.constant 0 : index
    %c0_4 = arith.constant 0 : index
    %3 = vector.load %arg3[%c0_2, %c0_3, %c0_4] : memref<1x16x32xbf16, #tpu.memory_space<vmem>>, vector<1x16x32xbf16>
    %4 = vector.shape_cast %3 : vector<1x16x32xbf16> to vector<16x32xbf16>
    %5 = arith.extf %4 : vector<16x32xbf16> to vector<16x32xf32>
    %c0_5 = arith.constant 0 : index
    %c0_6 = arith.constant 0 : index
    %c0_7 = arith.constant 0 : index
    %6 = vector.load %arg4[%c0_5, %c0_6, %c0_7] : memref<1x16x32xbf16, #tpu.memory_space<vmem>>, vector<1x16x32xbf16>
    %7 = vector.shape_cast %6 : vector<1x16x32xbf16> to vector<16x32xbf16>
    %8 = arith.extf %7 : vector<16x32xbf16> to vector<16x32xf32>
    %9 = vector.shape_cast %2 : vector<16x32xf32> to vector<16x4x8xf32>
    %10 = tpu.transpose %9, [1, 0, 2] : vector<16x4x8xf32> -> vector<4x16x8xf32>
    %11 = vector.shape_cast %5 : vector<16x32xf32> to vector<16x4x8xf32>
    %12 = tpu.transpose %11, [1, 0, 2] : vector<16x4x8xf32> -> vector<4x16x8xf32>
    %13 = vector.shape_cast %8 : vector<16x32xf32> to vector<16x4x8xf32>
    %14 = tpu.transpose %13, [1, 0, 2] : vector<16x4x8xf32> -> vector<4x16x8xf32>
    "tpu.trace_start"() <{level = 10 : i32, message = "hqd,hkd->hqk"}> : () -> ()
    %cst = arith.constant dense<0.000000e+00> : vector<4x16x16xf32>
    %15 = tpu.matmul %10, %12, %cst {dimension_numbers = #tpu.dot_dimension_numbers<[2], [2], [1], [1], [0, 0, 0, 1, 1, 1], [0], [0]>} : vector<4x16x8xf32>, vector<4x16x8xf32>, vector<4x16x16xf32> -> vector<4x16x16xf32>
    "tpu.trace_stop"() : () -> ()
    %cst_8 = arith.constant 0.353553385 : f32
    %16 = vector.broadcast %cst_8 : f32 to vector<4x16x16xf32>
    %17 = arith.mulf %15, %16 : vector<4x16x16xf32>
    %cst_9 = arith.constant dense<0xFF800000> : vector<4x16xf32>
    %18 = vector.multi_reduction <maximumf>, %17, %cst_9 [2] : vector<4x16x16xf32> to vector<4x16xf32>
    %19 = vector.shape_cast %18 : vector<4x16xf32> to vector<4x16x1xf32>
    %20 = vector.broadcast %19 : vector<4x16x1xf32> to vector<4x16x16xf32>
    %21 = arith.subf %17, %20 : vector<4x16x16xf32>
    %22 = math.exp %21 : vector<4x16x16xf32>
    %cst_10 = arith.constant dense<0.000000e+00> : vector<4x16xf32>
    %23 = vector.multi_reduction <add>, %22, %cst_10 [2] : vector<4x16x16xf32> to vector<4x16xf32>
    %24 = vector.shape_cast %23 : vector<4x16xf32> to vector<4x16x1xf32>
    %25 = tpu.reciprocal %24 {approx = true} : vector<4x16x1xf32> -> vector<4x16x1xf32>
    %26 = vector.broadcast %25 : vector<4x16x1xf32> to vector<4x16x16xf32>
    %27 = arith.mulf %22, %26 : vector<4x16x16xf32>
    "tpu.trace_start"() <{level = 10 : i32, message = "hqk,hkd->hqd"}> : () -> ()
    %cst_11 = arith.constant dense<0.000000e+00> : vector<4x16x8xf32>
    %28 = tpu.matmul %27, %14, %cst_11 {dimension_numbers = #tpu.dot_dimension_numbers<[2], [1], [1], [2], [0, 0, 0, 1, 1, 2], [0], [0]>} : vector<4x16x16xf32>, vector<4x16x8xf32>, vector<4x16x8xf32> -> vector<4x16x8xf32>
    "tpu.trace_stop"() : () -> ()
    %29 = tpu.transpose %28, [1, 0, 2] : vector<4x16x8xf32> -> vector<16x4x8xf32>
    %30 = vector.shape_cast %29 : vector<16x4x8xf32> to vector<16x32xf32>
    %31 = arith.truncf %30 : vector<16x32xf32> to vector<16x32xbf16>
    %c0_12 = arith.constant 0 : index
    %c0_13 = arith.constant 0 : index
    %c0_14 = arith.constant 0 : index
    %32 = vector.load %arg5[%c0_12, %c0_13, %c0_14] : memref<1x16x32xbf16, #tpu.memory_space<vmem>>, vector<1x16x32xbf16>
    %33 = vector.shape_cast %32 : vector<1x16x32xbf16> to vector<16x32xbf16>
    %34 = vector.shape_cast %31 : vector<16x32xbf16> to vector<1x16x32xbf16>
    tpu.vector_store %arg5[%c0_12, %c0_13, %c0_14], %34 {strides = array<i32>} : memref<1x16x32xbf16, #tpu.memory_space<vmem>>, vector<1x16x32xbf16>,
    return
  }
  func.func @transform_0(%arg0: i32, %arg1: i32) -> (i32, i32, i32) {
    %c0_i32 = arith.constant 0 : i32
    %c0_i32_0 = arith.constant 0 : i32
    return %arg0, %arg1, %c0_i32 : i32, i32, i32
  }
  func.func @transform_1(%arg0: i32, %arg1: i32) -> (i32, i32, i32) {
    %c0_i32 = arith.constant 0 : i32
    %c0_i32_0 = arith.constant 0 : i32
    %c0_i32_1 = arith.constant 0 : i32
    return %arg0, %c0_i32, %c0_i32_0 : i32, i32, i32
  }
  func.func @transform_2(%arg0: i32, %arg1: i32) -> (i32, i32, i32) {
    %c0_i32 = arith.constant 0 : i32
    %c0_i32_0 = arith.constant 0 : i32
    %c0_i32_1 = arith.constant 0 : i32
    return %arg0, %c0_i32, %c0_i32_0 : i32, i32, i32
  }
  func.func @transform_3(%arg0: i32, %arg1: i32) -> (i32, i32, i32) {
    %c0_i32 = arith.constant 0 : i32
    %c0_i32_0 = arith.constant 0 : i32
    return %arg0, %arg1, %c0_i32 : i32, i32, i32
  }
}

module attributes {stable_mosaic.version = 11 : i64} {
  func.func @_proj_add_ln_kernel(%arg0: i32, %arg1: memref<16x32xbf16, #tpu.memory_space<vmem>>, %arg2: memref<32x32xbf16, #tpu.memory_space<vmem>>, %arg3: memref<1x32xf32, #tpu.memory_space<vmem>>, %arg4: memref<16x32xf32, #tpu.memory_space<vmem>>, %arg5: memref<1x32xf32, #tpu.memory_space<vmem>>, %arg6: memref<1x32xf32, #tpu.memory_space<vmem>>, %arg7: memref<16x32xf32, #tpu.memory_space<vmem>>) attributes {dimension_semantics = [#tpu.dimension_semantics<parallel>], iteration_bounds = array<i64: 2>, scalar_prefetch = 0 : i64, scratch_operands = 0 : i64, tpu.core_type = #tpu.core_type<tc>, window_params = [{transform_indices = @transform_0, window_bounds = array<i64: 16, 32>}, {pipeline_mode = #tpu.pipeline_mode<synchronous>, transform_indices = @transform_1, window_bounds = array<i64: 32, 32>}, {pipeline_mode = #tpu.pipeline_mode<synchronous>, transform_indices = @transform_2, window_bounds = array<i64: 1, 32>}, {transform_indices = @transform_3, window_bounds = array<i64: 16, 32>}, {pipeline_mode = #tpu.pipeline_mode<synchronous>, transform_indices = @transform_4, window_bounds = array<i64: 1, 32>}, {pipeline_mode = #tpu.pipeline_mode<synchronous>, transform_indices = @transform_5, window_bounds = array<i64: 1, 32>}, {transform_indices = @transform_6, window_bounds = array<i64: 16, 32>}]} {
    %c0 = arith.constant 0 : index
    %c0_0 = arith.constant 0 : index
    %0 = vector.load %arg1[%c0, %c0_0] : memref<16x32xbf16, #tpu.memory_space<vmem>>, vector<16x32xbf16>
    %c0_1 = arith.constant 0 : index
    %c0_2 = arith.constant 0 : index
    %1 = vector.load %arg2[%c0_1, %c0_2] : memref<32x32xbf16, #tpu.memory_space<vmem>>, vector<32x32xbf16>
    %cst = arith.constant dense<0.000000e+00> : vector<16x32xf32>
    %2 = tpu.matmul %0, %1, %cst {dimension_numbers = #tpu.dot_dimension_numbers<[1], [0], [0], [1], [0, 0, 1, 1], [], []>} : vector<16x32xbf16>, vector<32x32xbf16>, vector<16x32xf32> -> vector<16x32xf32>
    %c0_3 = arith.constant 0 : index
    %c0_4 = arith.constant 0 : index
    %3 = vector.load %arg3[%c0_3, %c0_4] : memref<1x32xf32, #tpu.memory_space<vmem>>, vector<1x32xf32>
    %4 = vector.broadcast %3 : vector<1x32xf32> to vector<16x32xf32>
    %5 = arith.addf %2, %4 : vector<16x32xf32>
    %c0_5 = arith.constant 0 : index
    %c0_6 = arith.constant 0 : index
    %6 = vector.load %arg4[%c0_5, %c0_6] : memref<16x32xf32, #tpu.memory_space<vmem>>, vector<16x32xf32>
    %7 = arith.addf %5, %6 : vector<16x32xf32>
    %cst_7 = arith.constant dense<0.000000e+00> : vector<16xf32>
    %8 = vector.multi_reduction <add>, %7, %cst_7 [1] : vector<16x32xf32> to vector<16xf32>
    %9 = vector.shape_cast %8 : vector<16xf32> to vector<16x1xf32>
    %cst_8 = arith.constant 3.200000e+01 : f32
    %10 = vector.broadcast %cst_8 : f32 to vector<16x1xf32>
    %11 = arith.divf %9, %10 : vector<16x1xf32>
    %12 = vector.broadcast %11 : vector<16x1xf32> to vector<16x32xf32>
    %13 = arith.subf %7, %12 : vector<16x32xf32>
    %14 = arith.mulf %13, %13 : vector<16x32xf32>
    %cst_9 = arith.constant dense<0.000000e+00> : vector<16xf32>
    %15 = vector.multi_reduction <add>, %14, %cst_9 [1] : vector<16x32xf32> to vector<16xf32>
    %16 = vector.shape_cast %15 : vector<16xf32> to vector<16x1xf32>
    %cst_10 = arith.constant 3.200000e+01 : f32
    %17 = vector.broadcast %cst_10 : f32 to vector<16x1xf32>
    %18 = arith.divf %16, %17 : vector<16x1xf32>
    %19 = vector.broadcast %11 : vector<16x1xf32> to vector<16x32xf32>
    %20 = arith.subf %7, %19 : vector<16x32xf32>
    %cst_11 = arith.constant 9.99999974E-6 : f32
    %21 = vector.broadcast %cst_11 : f32 to vector<16x1xf32>
    %22 = arith.addf %18, %21 : vector<16x1xf32>
    %23 = math.rsqrt %22 : vector<16x1xf32>
    %24 = vector.broadcast %23 : vector<16x1xf32> to vector<16x32xf32>
    %25 = arith.mulf %20, %24 : vector<16x32xf32>
    %c0_12 = arith.constant 0 : index
    %c0_13 = arith.constant 0 : index
    %26 = vector.load %arg5[%c0_12, %c0_13] : memref<1x32xf32, #tpu.memory_space<vmem>>, vector<1x32xf32>
    %27 = vector.broadcast %26 : vector<1x32xf32> to vector<16x32xf32>
    %28 = arith.mulf %25, %27 : vector<16x32xf32>
    %c0_14 = arith.constant 0 : index
    %c0_15 = arith.constant 0 : index
    %29 = vector.load %arg6[%c0_14, %c0_15] : memref<1x32xf32, #tpu.memory_space<vmem>>, vector<1x32xf32>
    %30 = vector.broadcast %29 : vector<1x32xf32> to vector<16x32xf32>
    %31 = arith.addf %28, %30 : vector<16x32xf32>
    %c0_16 = arith.constant 0 : index
    %c0_17 = arith.constant 0 : index
    %32 = vector.load %arg7[%c0_16, %c0_17] : memref<16x32xf32, #tpu.memory_space<vmem>>, vector<16x32xf32>
    tpu.vector_store %arg7[%c0_16, %c0_17], %31 {strides = array<i32>} : memref<16x32xf32, #tpu.memory_space<vmem>>, vector<16x32xf32>,
    return
  }
  func.func @transform_0(%arg0: i32) -> (i32, i32) {
    %c0_i32 = arith.constant 0 : i32
    %c0_i32_0 = arith.constant 0 : i32
    return %arg0, %c0_i32 : i32, i32
  }
  func.func @transform_1(%arg0: i32) -> (i32, i32) {
    %c0_i32 = arith.constant 0 : i32
    %c0_i32_0 = arith.constant 0 : i32
    %c0_i32_1 = arith.constant 0 : i32
    return %c0_i32, %c0_i32_0 : i32, i32
  }
  func.func @transform_2(%arg0: i32) -> (i32, i32) {
    %c0_i32 = arith.constant 0 : i32
    %c0_i32_0 = arith.constant 0 : i32
    %c0_i32_1 = arith.constant 0 : i32
    return %c0_i32, %c0_i32_0 : i32, i32
  }
  func.func @transform_3(%arg0: i32) -> (i32, i32) {
    %c0_i32 = arith.constant 0 : i32
    %c0_i32_0 = arith.constant 0 : i32
    return %arg0, %c0_i32 : i32, i32
  }
  func.func @transform_4(%arg0: i32) -> (i32, i32) {
    %c0_i32 = arith.constant 0 : i32
    %c0_i32_0 = arith.constant 0 : i32
    %c0_i32_1 = arith.constant 0 : i32
    return %c0_i32, %c0_i32_0 : i32, i32
  }
  func.func @transform_5(%arg0: i32) -> (i32, i32) {
    %c0_i32 = arith.constant 0 : i32
    %c0_i32_0 = arith.constant 0 : i32
    %c0_i32_1 = arith.constant 0 : i32
    return %c0_i32, %c0_i32_0 : i32, i32
  }
  func.func @transform_6(%arg0: i32) -> (i32, i32) {
    %c0_i32 = arith.constant 0 : i32
    %c0_i32_0 = arith.constant 0 : i32
    return %arg0, %c0_i32 : i32, i32
  }
}

module attributes {stable_mosaic.version = 11 : i64} {
  func.func @_multi_linear_kernel(%arg0: i32, %arg1: memref<32x32xf32, #tpu.memory_space<vmem>>, %arg2: memref<32x32xbf16, #tpu.memory_space<vmem>>, %arg3: memref<1x32xf32, #tpu.memory_space<vmem>>, %arg4: memref<32x32xbf16, #tpu.memory_space<vmem>>, %arg5: memref<1x32xf32, #tpu.memory_space<vmem>>, %arg6: memref<32x32xbf16, #tpu.memory_space<vmem>>, %arg7: memref<32x32xbf16, #tpu.memory_space<vmem>>) attributes {dimension_semantics = [#tpu.dimension_semantics<parallel>], iteration_bounds = array<i64: 2>, scalar_prefetch = 0 : i64, scratch_operands = 0 : i64, tpu.core_type = #tpu.core_type<tc>, window_params = [{transform_indices = @transform_0, window_bounds = array<i64: 32, 32>}, {pipeline_mode = #tpu.pipeline_mode<synchronous>, transform_indices = @transform_1, window_bounds = array<i64: 32, 32>}, {pipeline_mode = #tpu.pipeline_mode<synchronous>, transform_indices = @transform_2, window_bounds = array<i64: 1, 32>}, {pipeline_mode = #tpu.pipeline_mode<synchronous>, transform_indices = @transform_3, window_bounds = array<i64: 32, 32>}, {pipeline_mode = #tpu.pipeline_mode<synchronous>, transform_indices = @transform_4, window_bounds = array<i64: 1, 32>}, {transform_indices = @transform_5, window_bounds = array<i64: 32, 32>}, {transform_indices = @transform_6, window_bounds = array<i64: 32, 32>}]} {
    %c0 = arith.constant 0 : index
    %c0_0 = arith.constant 0 : index
    %0 = vector.load %arg1[%c0, %c0_0] : memref<32x32xf32, #tpu.memory_space<vmem>>, vector<32x32xf32>
    %1 = arith.truncf %0 : vector<32x32xf32> to vector<32x32xbf16>
    %c0_1 = arith.constant 0 : index
    %c0_2 = arith.constant 0 : index
    %2 = vector.load %arg2[%c0_1, %c0_2] : memref<32x32xbf16, #tpu.memory_space<vmem>>, vector<32x32xbf16>
    %cst = arith.constant dense<0.000000e+00> : vector<32x32xf32>
    %3 = tpu.matmul %1, %2, %cst {dimension_numbers = #tpu.dot_dimension_numbers<[1], [0], [0], [1], [0, 0, 1, 1], [], []>} : vector<32x32xbf16>, vector<32x32xbf16>, vector<32x32xf32> -> vector<32x32xf32>
    %c0_3 = arith.constant 0 : index
    %c0_4 = arith.constant 0 : index
    %4 = vector.load %arg3[%c0_3, %c0_4] : memref<1x32xf32, #tpu.memory_space<vmem>>, vector<1x32xf32>
    %5 = vector.broadcast %4 : vector<1x32xf32> to vector<32x32xf32>
    %6 = arith.addf %3, %5 : vector<32x32xf32>
    %7 = arith.truncf %6 : vector<32x32xf32> to vector<32x32xbf16>
    %c0_5 = arith.constant 0 : index
    %c0_6 = arith.constant 0 : index
    %8 = vector.load %arg6[%c0_5, %c0_6] : memref<32x32xbf16, #tpu.memory_space<vmem>>, vector<32x32xbf16>
    tpu.vector_store %arg6[%c0_5, %c0_6], %7 {strides = array<i32>} : memref<32x32xbf16, #tpu.memory_space<vmem>>, vector<32x32xbf16>,
    %c0_7 = arith.constant 0 : index
    %c0_8 = arith.constant 0 : index
    %9 = vector.load %arg4[%c0_7, %c0_8] : memref<32x32xbf16, #tpu.memory_space<vmem>>, vector<32x32xbf16>
    %cst_9 = arith.constant dense<0.000000e+00> : vector<32x32xf32>
    %10 = tpu.matmul %1, %9, %cst_9 {dimension_numbers = #tpu.dot_dimension_numbers<[1], [0], [0], [1], [0, 0, 1, 1], [], []>} : vector<32x32xbf16>, vector<32x32xbf16>, vector<32x32xf32> -> vector<32x32xf32>
    %c0_10 = arith.constant 0 : index
    %c0_11 = arith.constant 0 : index
    %11 = vector.load %arg5[%c0_10, %c0_11] : memref<1x32xf32, #tpu.memory_space<vmem>>, vector<1x32xf32>
    %12 = vector.broadcast %11 : vector<1x32xf32> to vector<32x32xf32>
    %13 = arith.addf %10, %12 : vector<32x32xf32>
    %14 = arith.truncf %13 : vector<32x32xf32> to vector<32x32xbf16>
    %c0_12 = arith.constant 0 : index
    %c0_13 = arith.constant 0 : index
    %15 = vector.load %arg7[%c0_12, %c0_13] : memref<32x32xbf16, #tpu.memory_space<vmem>>, vector<32x32xbf16>
    tpu.vector_store %arg7[%c0_12, %c0_13], %14 {strides = array<i32>} : memref<32x32xbf16, #tpu.memory_space<vmem>>, vector<32x32xbf16>,
    return
  }
  func.func @transform_0(%arg0: i32) -> (i32, i32) {
    %c0_i32 = arith.constant 0 : i32
    %c0_i32_0 = arith.constant 0 : i32
    return %arg0, %c0_i32 : i32, i32
  }
  func.func @transform_1(%arg0: i32) -> (i32, i32) {
    %c0_i32 = arith.constant 0 : i32
    %c0_i32_0 = arith.constant 0 : i32
    %c0_i32_1 = arith.constant 0 : i32
    return %c0_i32, %c0_i32_0 : i32, i32
  }
  func.func @transform_2(%arg0: i32) -> (i32, i32) {
    %c0_i32 = arith.constant 0 : i32
    %c0_i32_0 = arith.constant 0 : i32
    %c0_i32_1 = arith.constant 0 : i32
    return %c0_i32, %c0_i32_0 : i32, i32
  }
  func.func @transform_3(%arg0: i32) -> (i32, i32) {
    %c0_i32 = arith.constant 0 : i32
    %c0_i32_0 = arith.constant 0 : i32
    %c0_i32_1 = arith.constant 0 : i32
    return %c0_i32, %c0_i32_0 : i32, i32
  }
  func.func @transform_4(%arg0: i32) -> (i32, i32) {
    %c0_i32 = arith.constant 0 : i32
    %c0_i32_0 = arith.constant 0 : i32
    %c0_i32_1 = arith.constant 0 : i32
    return %c0_i32, %c0_i32_0 : i32, i32
  }
  func.func @transform_5(%arg0: i32) -> (i32, i32) {
    %c0_i32 = arith.constant 0 : i32
    %c0_i32_0 = arith.constant 0 : i32
    return %arg0, %c0_i32 : i32, i32
  }
  func.func @transform_6(%arg0: i32) -> (i32, i32) {
    %c0_i32 = arith.constant 0 : i32
    %c0_i32_0 = arith.constant 0 : i32
    return %arg0, %c0_i32 : i32, i32
  }
}

module attributes {stable_mosaic.version = 11 : i64} {
  func.func @_multi_linear_kernel(%arg0: i32, %arg1: memref<16x32xf32, #tpu.memory_space<vmem>>, %arg2: memref<32x32xbf16, #tpu.memory_space<vmem>>, %arg3: memref<1x32xf32, #tpu.memory_space<vmem>>, %arg4: memref<16x32xbf16, #tpu.memory_space<vmem>>) attributes {dimension_semantics = [#tpu.dimension_semantics<parallel>], iteration_bounds = array<i64: 2>, scalar_prefetch = 0 : i64, scratch_operands = 0 : i64, tpu.core_type = #tpu.core_type<tc>, window_params = [{transform_indices = @transform_0, window_bounds = array<i64: 16, 32>}, {pipeline_mode = #tpu.pipeline_mode<synchronous>, transform_indices = @transform_1, window_bounds = array<i64: 32, 32>}, {pipeline_mode = #tpu.pipeline_mode<synchronous>, transform_indices = @transform_2, window_bounds = array<i64: 1, 32>}, {transform_indices = @transform_3, window_bounds = array<i64: 16, 32>}]} {
    %c0 = arith.constant 0 : index
    %c0_0 = arith.constant 0 : index
    %0 = vector.load %arg1[%c0, %c0_0] : memref<16x32xf32, #tpu.memory_space<vmem>>, vector<16x32xf32>
    %1 = arith.truncf %0 : vector<16x32xf32> to vector<16x32xbf16>
    %c0_1 = arith.constant 0 : index
    %c0_2 = arith.constant 0 : index
    %2 = vector.load %arg2[%c0_1, %c0_2] : memref<32x32xbf16, #tpu.memory_space<vmem>>, vector<32x32xbf16>
    %cst = arith.constant dense<0.000000e+00> : vector<16x32xf32>
    %3 = tpu.matmul %1, %2, %cst {dimension_numbers = #tpu.dot_dimension_numbers<[1], [0], [0], [1], [0, 0, 1, 1], [], []>} : vector<16x32xbf16>, vector<32x32xbf16>, vector<16x32xf32> -> vector<16x32xf32>
    %c0_3 = arith.constant 0 : index
    %c0_4 = arith.constant 0 : index
    %4 = vector.load %arg3[%c0_3, %c0_4] : memref<1x32xf32, #tpu.memory_space<vmem>>, vector<1x32xf32>
    %5 = vector.broadcast %4 : vector<1x32xf32> to vector<16x32xf32>
    %6 = arith.addf %3, %5 : vector<16x32xf32>
    %7 = arith.truncf %6 : vector<16x32xf32> to vector<16x32xbf16>
    %c0_5 = arith.constant 0 : index
    %c0_6 = arith.constant 0 : index
    %8 = vector.load %arg4[%c0_5, %c0_6] : memref<16x32xbf16, #tpu.memory_space<vmem>>, vector<16x32xbf16>
    tpu.vector_store %arg4[%c0_5, %c0_6], %7 {strides = array<i32>} : memref<16x32xbf16, #tpu.memory_space<vmem>>, vector<16x32xbf16>,
    return
  }
  func.func @transform_0(%arg0: i32) -> (i32, i32) {
    %c0_i32 = arith.constant 0 : i32
    %c0_i32_0 = arith.constant 0 : i32
    return %arg0, %c0_i32 : i32, i32
  }
  func.func @transform_1(%arg0: i32) -> (i32, i32) {
    %c0_i32 = arith.constant 0 : i32
    %c0_i32_0 = arith.constant 0 : i32
    %c0_i32_1 = arith.constant 0 : i32
    return %c0_i32, %c0_i32_0 : i32, i32
  }
  func.func @transform_2(%arg0: i32) -> (i32, i32) {
    %c0_i32 = arith.constant 0 : i32
    %c0_i32_0 = arith.constant 0 : i32
    %c0_i32_1 = arith.constant 0 : i32
    return %c0_i32, %c0_i32_0 : i32, i32
  }
  func.func @transform_3(%arg0: i32) -> (i32, i32) {
    %c0_i32 = arith.constant 0 : i32
    %c0_i32_0 = arith.constant 0 : i32
    return %arg0, %c0_i32 : i32, i32
  }
}

module attributes {stable_mosaic.version = 11 : i64} {
  func.func @_mha_kernel(%arg0: i32, %arg1: i32, %arg2: memref<1x16x32xbf16, #tpu.memory_space<vmem>>, %arg3: memref<1x32x32xbf16, #tpu.memory_space<vmem>>, %arg4: memref<1x32x32xbf16, #tpu.memory_space<vmem>>, %arg5: memref<1x16x32xbf16, #tpu.memory_space<vmem>>) attributes {dimension_semantics = [#tpu.dimension_semantics<parallel>, #tpu.dimension_semantics<parallel>], iteration_bounds = array<i64: 2, 1>, scalar_prefetch = 0 : i64, scratch_operands = 0 : i64, tpu.core_type = #tpu.core_type<tc>, window_params = [{transform_indices = @transform_0, window_bounds = array<i64: 1, 16, 32>}, {transform_indices = @transform_1, window_bounds = array<i64: 1, 32, 32>}, {transform_indices = @transform_2, window_bounds = array<i64: 1, 32, 32>}, {transform_indices = @transform_3, window_bounds = array<i64: 1, 16, 32>}]} {
    %c0 = arith.constant 0 : index
    %c0_0 = arith.constant 0 : index
    %c0_1 = arith.constant 0 : index
    %0 = vector.load %arg2[%c0, %c0_0, %c0_1] : memref<1x16x32xbf16, #tpu.memory_space<vmem>>, vector<1x16x32xbf16>
    %1 = vector.shape_cast %0 : vector<1x16x32xbf16> to vector<16x32xbf16>
    %2 = arith.extf %1 : vector<16x32xbf16> to vector<16x32xf32>
    %c0_2 = arith.constant 0 : index
    %c0_3 = arith.constant 0 : index
    %c0_4 = arith.constant 0 : index
    %3 = vector.load %arg3[%c0_2, %c0_3, %c0_4] : memref<1x32x32xbf16, #tpu.memory_space<vmem>>, vector<1x32x32xbf16>
    %4 = vector.shape_cast %3 : vector<1x32x32xbf16> to vector<32x32xbf16>
    %5 = arith.extf %4 : vector<32x32xbf16> to vector<32x32xf32>
    %c0_5 = arith.constant 0 : index
    %c0_6 = arith.constant 0 : index
    %c0_7 = arith.constant 0 : index
    %6 = vector.load %arg4[%c0_5, %c0_6, %c0_7] : memref<1x32x32xbf16, #tpu.memory_space<vmem>>, vector<1x32x32xbf16>
    %7 = vector.shape_cast %6 : vector<1x32x32xbf16> to vector<32x32xbf16>
    %8 = arith.extf %7 : vector<32x32xbf16> to vector<32x32xf32>
    %9 = vector.shape_cast %2 : vector<16x32xf32> to vector<16x4x8xf32>
    %10 = tpu.transpose %9, [1, 0, 2] : vector<16x4x8xf32> -> vector<4x16x8xf32>
    %11 = vector.shape_cast %5 : vector<32x32xf32> to vector<32x4x8xf32>
    %12 = tpu.transpose %11, [1, 0, 2] : vector<32x4x8xf32> -> vector<4x32x8xf32>
    %13 = vector.shape_cast %8 : vector<32x32xf32> to vector<32x4x8xf32>
    %14 = tpu.transpose %13, [1, 0, 2] : vector<32x4x8xf32> -> vector<4x32x8xf32>
    "tpu.trace_start"() <{level = 10 : i32, message = "hqd,hkd->hqk"}> : () -> ()
    %cst = arith.constant dense<0.000000e+00> : vector<4x16x32xf32>
    %15 = tpu.matmul %10, %12, %cst {dimension_numbers = #tpu.dot_dimension_numbers<[2], [2], [1], [1], [0, 0, 0, 1, 1, 1], [0], [0]>} : vector<4x16x8xf32>, vector<4x32x8xf32>, vector<4x16x32xf32> -> vector<4x16x32xf32>
    "tpu.trace_stop"() : () -> ()
    %cst_8 = arith.constant 0.353553385 : f32
    %16 = vector.broadcast %cst_8 : f32 to vector<4x16x32xf32>
    %17 = arith.mulf %15, %16 : vector<4x16x32xf32>
    %cst_9 = arith.constant dense<0xFF800000> : vector<4x16xf32>
    %18 = vector.multi_reduction <maximumf>, %17, %cst_9 [2] : vector<4x16x32xf32> to vector<4x16xf32>
    %19 = vector.shape_cast %18 : vector<4x16xf32> to vector<4x16x1xf32>
    %20 = vector.broadcast %19 : vector<4x16x1xf32> to vector<4x16x32xf32>
    %21 = arith.subf %17, %20 : vector<4x16x32xf32>
    %22 = math.exp %21 : vector<4x16x32xf32>
    %cst_10 = arith.constant dense<0.000000e+00> : vector<4x16xf32>
    %23 = vector.multi_reduction <add>, %22, %cst_10 [2] : vector<4x16x32xf32> to vector<4x16xf32>
    %24 = vector.shape_cast %23 : vector<4x16xf32> to vector<4x16x1xf32>
    %25 = tpu.reciprocal %24 {approx = true} : vector<4x16x1xf32> -> vector<4x16x1xf32>
    %26 = vector.broadcast %25 : vector<4x16x1xf32> to vector<4x16x32xf32>
    %27 = arith.mulf %22, %26 : vector<4x16x32xf32>
    "tpu.trace_start"() <{level = 10 : i32, message = "hqk,hkd->hqd"}> : () -> ()
    %cst_11 = arith.constant dense<0.000000e+00> : vector<4x16x8xf32>
    %28 = tpu.matmul %27, %14, %cst_11 {dimension_numbers = #tpu.dot_dimension_numbers<[2], [1], [1], [2], [0, 0, 0, 1, 1, 2], [0], [0]>} : vector<4x16x32xf32>, vector<4x32x8xf32>, vector<4x16x8xf32> -> vector<4x16x8xf32>
    "tpu.trace_stop"() : () -> ()
    %29 = tpu.transpose %28, [1, 0, 2] : vector<4x16x8xf32> -> vector<16x4x8xf32>
    %30 = vector.shape_cast %29 : vector<16x4x8xf32> to vector<16x32xf32>
    %31 = arith.truncf %30 : vector<16x32xf32> to vector<16x32xbf16>
    %c0_12 = arith.constant 0 : index
    %c0_13 = arith.constant 0 : index
    %c0_14 = arith.constant 0 : index
    %32 = vector.load %arg5[%c0_12, %c0_13, %c0_14] : memref<1x16x32xbf16, #tpu.memory_space<vmem>>, vector<1x16x32xbf16>
    %33 = vector.shape_cast %32 : vector<1x16x32xbf16> to vector<16x32xbf16>
    %34 = vector.shape_cast %31 : vector<16x32xbf16> to vector<1x16x32xbf16>
    tpu.vector_store %arg5[%c0_12, %c0_13, %c0_14], %34 {strides = array<i32>} : memref<1x16x32xbf16, #tpu.memory_space<vmem>>, vector<1x16x32xbf16>,
    return
  }
  func.func @transform_0(%arg0: i32, %arg1: i32) -> (i32, i32, i32) {
    %c0_i32 = arith.constant 0 : i32
    %c0_i32_0 = arith.constant 0 : i32
    return %arg0, %arg1, %c0_i32 : i32, i32, i32
  }
  func.func @transform_1(%arg0: i32, %arg1: i32) -> (i32, i32, i32) {
    %c0_i32 = arith.constant 0 : i32
    %c0_i32_0 = arith.constant 0 : i32
    %c0_i32_1 = arith.constant 0 : i32
    return %arg0, %c0_i32, %c0_i32_0 : i32, i32, i32
  }
  func.func @transform_2(%arg0: i32, %arg1: i32) -> (i32, i32, i32) {
    %c0_i32 = arith.constant 0 : i32
    %c0_i32_0 = arith.constant 0 : i32
    %c0_i32_1 = arith.constant 0 : i32
    return %arg0, %c0_i32, %c0_i32_0 : i32, i32, i32
  }
  func.func @transform_3(%arg0: i32, %arg1: i32) -> (i32, i32, i32) {
    %c0_i32 = arith.constant 0 : i32
    %c0_i32_0 = arith.constant 0 : i32
    return %arg0, %arg1, %c0_i32 : i32, i32, i32
  }
}

module attributes {stable_mosaic.version = 11 : i64} {
  func.func @_mlp_res_ln_kernel(%arg0: i32, %arg1: memref<16x32xf32, #tpu.memory_space<vmem>>, %arg2: memref<32x64xbf16, #tpu.memory_space<vmem>>, %arg3: memref<1x64xf32, #tpu.memory_space<vmem>>, %arg4: memref<64x32xbf16, #tpu.memory_space<vmem>>, %arg5: memref<1x32xf32, #tpu.memory_space<vmem>>, %arg6: memref<16x32xf32, #tpu.memory_space<vmem>>, %arg7: memref<1x32xf32, #tpu.memory_space<vmem>>, %arg8: memref<1x32xf32, #tpu.memory_space<vmem>>, %arg9: memref<16x32xf32, #tpu.memory_space<vmem>>) attributes {dimension_semantics = [#tpu.dimension_semantics<parallel>], iteration_bounds = array<i64: 2>, scalar_prefetch = 0 : i64, scratch_operands = 0 : i64, tpu.core_type = #tpu.core_type<tc>, window_params = [{transform_indices = @transform_0, window_bounds = array<i64: 16, 32>}, {pipeline_mode = #tpu.pipeline_mode<synchronous>, transform_indices = @transform_1, window_bounds = array<i64: 32, 64>}, {pipeline_mode = #tpu.pipeline_mode<synchronous>, transform_indices = @transform_2, window_bounds = array<i64: 1, 64>}, {pipeline_mode = #tpu.pipeline_mode<synchronous>, transform_indices = @transform_3, window_bounds = array<i64: 64, 32>}, {pipeline_mode = #tpu.pipeline_mode<synchronous>, transform_indices = @transform_4, window_bounds = array<i64: 1, 32>}, {transform_indices = @transform_5, window_bounds = array<i64: 16, 32>}, {pipeline_mode = #tpu.pipeline_mode<synchronous>, transform_indices = @transform_6, window_bounds = array<i64: 1, 32>}, {pipeline_mode = #tpu.pipeline_mode<synchronous>, transform_indices = @transform_7, window_bounds = array<i64: 1, 32>}, {transform_indices = @transform_8, window_bounds = array<i64: 16, 32>}]} {
    %c0 = arith.constant 0 : index
    %c0_0 = arith.constant 0 : index
    %0 = vector.load %arg1[%c0, %c0_0] : memref<16x32xf32, #tpu.memory_space<vmem>>, vector<16x32xf32>
    %1 = arith.truncf %0 : vector<16x32xf32> to vector<16x32xbf16>
    %c0_1 = arith.constant 0 : index
    %c0_2 = arith.constant 0 : index
    %2 = vector.load %arg2[%c0_1, %c0_2] : memref<32x64xbf16, #tpu.memory_space<vmem>>, vector<32x64xbf16>
    %cst = arith.constant dense<0.000000e+00> : vector<16x64xf32>
    %3 = tpu.matmul %1, %2, %cst {dimension_numbers = #tpu.dot_dimension_numbers<[1], [0], [0], [1], [0, 0, 1, 1], [], []>} : vector<16x32xbf16>, vector<32x64xbf16>, vector<16x64xf32> -> vector<16x64xf32>
    %c0_3 = arith.constant 0 : index
    %c0_4 = arith.constant 0 : index
    %4 = vector.load %arg3[%c0_3, %c0_4] : memref<1x64xf32, #tpu.memory_space<vmem>>, vector<1x64xf32>
    %5 = vector.broadcast %4 : vector<1x64xf32> to vector<16x64xf32>
    %6 = arith.addf %3, %5 : vector<16x64xf32>
    %7 = arith.mulf %6, %6 : vector<16x64xf32>
    %8 = arith.mulf %6, %7 : vector<16x64xf32>
    %cst_5 = arith.constant 4.471500e-02 : f32
    %9 = vector.broadcast %cst_5 : f32 to vector<16x64xf32>
    %10 = arith.mulf %9, %8 : vector<16x64xf32>
    %11 = arith.addf %6, %10 : vector<16x64xf32>
    %cst_6 = arith.constant 0.797884583 : f32
    %12 = vector.broadcast %cst_6 : f32 to vector<16x64xf32>
    %13 = arith.mulf %12, %11 : vector<16x64xf32>
    %14 = math.tanh %13 : vector<16x64xf32>
    %cst_7 = arith.constant 1.000000e+00 : f32
    %15 = vector.broadcast %cst_7 : f32 to vector<16x64xf32>
    %16 = arith.addf %15, %14 : vector<16x64xf32>
    %cst_8 = arith.constant 5.000000e-01 : f32
    %17 = vector.broadcast %cst_8 : f32 to vector<16x64xf32>
    %18 = arith.mulf %17, %16 : vector<16x64xf32>
    %19 = arith.mulf %6, %18 : vector<16x64xf32>
    %20 = arith.truncf %19 : vector<16x64xf32> to vector<16x64xbf16>
    %c0_9 = arith.constant 0 : index
    %c0_10 = arith.constant 0 : index
    %21 = vector.load %arg4[%c0_9, %c0_10] : memref<64x32xbf16, #tpu.memory_space<vmem>>, vector<64x32xbf16>
    %cst_11 = arith.constant dense<0.000000e+00> : vector<16x32xf32>
    %22 = tpu.matmul %20, %21, %cst_11 {dimension_numbers = #tpu.dot_dimension_numbers<[1], [0], [0], [1], [0, 0, 1, 1], [], []>} : vector<16x64xbf16>, vector<64x32xbf16>, vector<16x32xf32> -> vector<16x32xf32>
    %c0_12 = arith.constant 0 : index
    %c0_13 = arith.constant 0 : index
    %23 = vector.load %arg5[%c0_12, %c0_13] : memref<1x32xf32, #tpu.memory_space<vmem>>, vector<1x32xf32>
    %24 = vector.broadcast %23 : vector<1x32xf32> to vector<16x32xf32>
    %25 = arith.addf %22, %24 : vector<16x32xf32>
    %c0_14 = arith.constant 0 : index
    %c0_15 = arith.constant 0 : index
    %26 = vector.load %arg6[%c0_14, %c0_15] : memref<16x32xf32, #tpu.memory_space<vmem>>, vector<16x32xf32>
    %27 = arith.addf %25, %26 : vector<16x32xf32>
    %cst_16 = arith.constant dense<0.000000e+00> : vector<16xf32>
    %28 = vector.multi_reduction <add>, %27, %cst_16 [1] : vector<16x32xf32> to vector<16xf32>
    %29 = vector.shape_cast %28 : vector<16xf32> to vector<16x1xf32>
    %cst_17 = arith.constant 3.200000e+01 : f32
    %30 = vector.broadcast %cst_17 : f32 to vector<16x1xf32>
    %31 = arith.divf %29, %30 : vector<16x1xf32>
    %32 = vector.broadcast %31 : vector<16x1xf32> to vector<16x32xf32>
    %33 = arith.subf %27, %32 : vector<16x32xf32>
    %34 = arith.mulf %33, %33 : vector<16x32xf32>
    %cst_18 = arith.constant dense<0.000000e+00> : vector<16xf32>
    %35 = vector.multi_reduction <add>, %34, %cst_18 [1] : vector<16x32xf32> to vector<16xf32>
    %36 = vector.shape_cast %35 : vector<16xf32> to vector<16x1xf32>
    %cst_19 = arith.constant 3.200000e+01 : f32
    %37 = vector.broadcast %cst_19 : f32 to vector<16x1xf32>
    %38 = arith.divf %36, %37 : vector<16x1xf32>
    %39 = vector.broadcast %31 : vector<16x1xf32> to vector<16x32xf32>
    %40 = arith.subf %27, %39 : vector<16x32xf32>
    %cst_20 = arith.constant 9.99999974E-6 : f32
    %41 = vector.broadcast %cst_20 : f32 to vector<16x1xf32>
    %42 = arith.addf %38, %41 : vector<16x1xf32>
    %43 = math.rsqrt %42 : vector<16x1xf32>
    %44 = vector.broadcast %43 : vector<16x1xf32> to vector<16x32xf32>
    %45 = arith.mulf %40, %44 : vector<16x32xf32>
    %c0_21 = arith.constant 0 : index
    %c0_22 = arith.constant 0 : index
    %46 = vector.load %arg7[%c0_21, %c0_22] : memref<1x32xf32, #tpu.memory_space<vmem>>, vector<1x32xf32>
    %47 = vector.broadcast %46 : vector<1x32xf32> to vector<16x32xf32>
    %48 = arith.mulf %45, %47 : vector<16x32xf32>
    %c0_23 = arith.constant 0 : index
    %c0_24 = arith.constant 0 : index
    %49 = vector.load %arg8[%c0_23, %c0_24] : memref<1x32xf32, #tpu.memory_space<vmem>>, vector<1x32xf32>
    %50 = vector.broadcast %49 : vector<1x32xf32> to vector<16x32xf32>
    %51 = arith.addf %48, %50 : vector<16x32xf32>
    %c0_25 = arith.constant 0 : index
    %c0_26 = arith.constant 0 : index
    %52 = vector.load %arg9[%c0_25, %c0_26] : memref<16x32xf32, #tpu.memory_space<vmem>>, vector<16x32xf32>
    tpu.vector_store %arg9[%c0_25, %c0_26], %51 {strides = array<i32>} : memref<16x32xf32, #tpu.memory_space<vmem>>, vector<16x32xf32>,
    return
  }
  func.func @transform_0(%arg0: i32) -> (i32, i32) {
    %c0_i32 = arith.constant 0 : i32
    %c0_i32_0 = arith.constant 0 : i32
    return %arg0, %c0_i32 : i32, i32
  }
  func.func @transform_1(%arg0: i32) -> (i32, i32) {
    %c0_i32 = arith.constant 0 : i32
    %c0_i32_0 = arith.constant 0 : i32
    %c0_i32_1 = arith.constant 0 : i32
    return %c0_i32, %c0_i32_0 : i32, i32
  }
  func.func @transform_2(%arg0: i32) -> (i32, i32) {
    %c0_i32 = arith.constant 0 : i32
    %c0_i32_0 = arith.constant 0 : i32
    %c0_i32_1 = arith.constant 0 : i32
    return %c0_i32, %c0_i32_0 : i32, i32
  }
  func.func @transform_3(%arg0: i32) -> (i32, i32) {
    %c0_i32 = arith.constant 0 : i32
    %c0_i32_0 = arith.constant 0 : i32
    %c0_i32_1 = arith.constant 0 : i32
    return %c0_i32, %c0_i32_0 : i32, i32
  }
  func.func @transform_4(%arg0: i32) -> (i32, i32) {
    %c0_i32 = arith.constant 0 : i32
    %c0_i32_0 = arith.constant 0 : i32
    %c0_i32_1 = arith.constant 0 : i32
    return %c0_i32, %c0_i32_0 : i32, i32
  }
  func.func @transform_5(%arg0: i32) -> (i32, i32) {
    %c0_i32 = arith.constant 0 : i32
    %c0_i32_0 = arith.constant 0 : i32
    return %arg0, %c0_i32 : i32, i32
  }
  func.func @transform_6(%arg0: i32) -> (i32, i32) {
    %c0_i32 = arith.constant 0 : i32
    %c0_i32_0 = arith.constant 0 : i32
    %c0_i32_1 = arith.constant 0 : i32
    return %c0_i32, %c0_i32_0 : i32, i32
  }
  func.func @transform_7(%arg0: i32) -> (i32, i32) {
    %c0_i32 = arith.constant 0 : i32
    %c0_i32_0 = arith.constant 0 : i32
    %c0_i32_1 = arith.constant 0 : i32
    return %c0_i32, %c0_i32_0 : i32, i32
  }
  func.func @transform_8(%arg0: i32) -> (i32, i32) {
    %c0_i32 = arith.constant 0 : i32
    %c0_i32_0 = arith.constant 0 : i32
    return %arg0, %c0_i32 : i32, i32
  }
}

module attributes {stable_mosaic.version = 11 : i64} {
  func.func @_multi_linear_kernel(%arg0: i32, %arg1: memref<16x32xf32, #tpu.memory_space<vmem>>, %arg2: memref<32x32xbf16, #tpu.memory_space<vmem>>, %arg3: memref<1x32xf32, #tpu.memory_space<vmem>>, %arg4: memref<32x32xbf16, #tpu.memory_space<vmem>>, %arg5: memref<1x32xf32, #tpu.memory_space<vmem>>, %arg6: memref<16x32xbf16, #tpu.memory_space<vmem>>, %arg7: memref<16x32xbf16, #tpu.memory_space<vmem>>) attributes {dimension_semantics = [#tpu.dimension_semantics<parallel>], iteration_bounds = array<i64: 2>, scalar_prefetch = 0 : i64, scratch_operands = 0 : i64, tpu.core_type = #tpu.core_type<tc>, window_params = [{transform_indices = @transform_0, window_bounds = array<i64: 16, 32>}, {pipeline_mode = #tpu.pipeline_mode<synchronous>, transform_indices = @transform_1, window_bounds = array<i64: 32, 32>}, {pipeline_mode = #tpu.pipeline_mode<synchronous>, transform_indices = @transform_2, window_bounds = array<i64: 1, 32>}, {pipeline_mode = #tpu.pipeline_mode<synchronous>, transform_indices = @transform_3, window_bounds = array<i64: 32, 32>}, {pipeline_mode = #tpu.pipeline_mode<synchronous>, transform_indices = @transform_4, window_bounds = array<i64: 1, 32>}, {transform_indices = @transform_5, window_bounds = array<i64: 16, 32>}, {transform_indices = @transform_6, window_bounds = array<i64: 16, 32>}]} {
    %c0 = arith.constant 0 : index
    %c0_0 = arith.constant 0 : index
    %0 = vector.load %arg1[%c0, %c0_0] : memref<16x32xf32, #tpu.memory_space<vmem>>, vector<16x32xf32>
    %1 = arith.truncf %0 : vector<16x32xf32> to vector<16x32xbf16>
    %c0_1 = arith.constant 0 : index
    %c0_2 = arith.constant 0 : index
    %2 = vector.load %arg2[%c0_1, %c0_2] : memref<32x32xbf16, #tpu.memory_space<vmem>>, vector<32x32xbf16>
    %cst = arith.constant dense<0.000000e+00> : vector<16x32xf32>
    %3 = tpu.matmul %1, %2, %cst {dimension_numbers = #tpu.dot_dimension_numbers<[1], [0], [0], [1], [0, 0, 1, 1], [], []>} : vector<16x32xbf16>, vector<32x32xbf16>, vector<16x32xf32> -> vector<16x32xf32>
    %c0_3 = arith.constant 0 : index
    %c0_4 = arith.constant 0 : index
    %4 = vector.load %arg3[%c0_3, %c0_4] : memref<1x32xf32, #tpu.memory_space<vmem>>, vector<1x32xf32>
    %5 = vector.broadcast %4 : vector<1x32xf32> to vector<16x32xf32>
    %6 = arith.addf %3, %5 : vector<16x32xf32>
    %7 = arith.truncf %6 : vector<16x32xf32> to vector<16x32xbf16>
    %c0_5 = arith.constant 0 : index
    %c0_6 = arith.constant 0 : index
    %8 = vector.load %arg6[%c0_5, %c0_6] : memref<16x32xbf16, #tpu.memory_space<vmem>>, vector<16x32xbf16>
    tpu.vector_store %arg6[%c0_5, %c0_6], %7 {strides = array<i32>} : memref<16x32xbf16, #tpu.memory_space<vmem>>, vector<16x32xbf16>,
    %c0_7 = arith.constant 0 : index
    %c0_8 = arith.constant 0 : index
    %9 = vector.load %arg4[%c0_7, %c0_8] : memref<32x32xbf16, #tpu.memory_space<vmem>>, vector<32x32xbf16>
    %cst_9 = arith.constant dense<0.000000e+00> : vector<16x32xf32>
    %10 = tpu.matmul %1, %9, %cst_9 {dimension_numbers = #tpu.dot_dimension_numbers<[1], [0], [0], [1], [0, 0, 1, 1], [], []>} : vector<16x32xbf16>, vector<32x32xbf16>, vector<16x32xf32> -> vector<16x32xf32>
    %c0_10 = arith.constant 0 : index
    %c0_11 = arith.constant 0 : index
    %11 = vector.load %arg5[%c0_10, %c0_11] : memref<1x32xf32, #tpu.memory_space<vmem>>, vector<1x32xf32>
    %12 = vector.broadcast %11 : vector<1x32xf32> to vector<16x32xf32>
    %13 = arith.addf %10, %12 : vector<16x32xf32>
    %14 = arith.truncf %13 : vector<16x32xf32> to vector<16x32xbf16>
    %c0_12 = arith.constant 0 : index
    %c0_13 = arith.constant 0 : index
    %15 = vector.load %arg7[%c0_12, %c0_13] : memref<16x32xbf16, #tpu.memory_space<vmem>>, vector<16x32xbf16>
    tpu.vector_store %arg7[%c0_12, %c0_13], %14 {strides = array<i32>} : memref<16x32xbf16, #tpu.memory_space<vmem>>, vector<16x32xbf16>,
    return
  }
  func.func @transform_0(%arg0: i32) -> (i32, i32) {
    %c0_i32 = arith.constant 0 : i32
    %c0_i32_0 = arith.constant 0 : i32
    return %arg0, %c0_i32 : i32, i32
  }
  func.func @transform_1(%arg0: i32) -> (i32, i32) {
    %c0_i32 = arith.constant 0 : i32
    %c0_i32_0 = arith.constant 0 : i32
    %c0_i32_1 = arith.constant 0 : i32
    return %c0_i32, %c0_i32_0 : i32, i32
  }
  func.func @transform_2(%arg0: i32) -> (i32, i32) {
    %c0_i32 = arith.constant 0 : i32
    %c0_i32_0 = arith.constant 0 : i32
    %c0_i32_1 = arith.constant 0 : i32
    return %c0_i32, %c0_i32_0 : i32, i32
  }
  func.func @transform_3(%arg0: i32) -> (i32, i32) {
    %c0_i32 = arith.constant 0 : i32
    %c0_i32_0 = arith.constant 0 : i32
    %c0_i32_1 = arith.constant 0 : i32
    return %c0_i32, %c0_i32_0 : i32, i32
  }
  func.func @transform_4(%arg0: i32) -> (i32, i32) {
    %c0_i32 = arith.constant 0 : i32
    %c0_i32_0 = arith.constant 0 : i32
    %c0_i32_1 = arith.constant 0 : i32
    return %c0_i32, %c0_i32_0 : i32, i32
  }
  func.func @transform_5(%arg0: i32) -> (i32, i32) {
    %c0_i32 = arith.constant 0 : i32
    %c0_i32_0 = arith.constant 0 : i32
    return %arg0, %c0_i32 : i32, i32
  }
  func.func @transform_6(%arg0: i32) -> (i32, i32) {
    %c0_i32 = arith.constant 0 : i32
    %c0_i32_0 = arith.constant 0 : i32
    return %arg0, %c0_i32 : i32, i32
  }
}

module attributes {stable_mosaic.version = 11 : i64} {
  func.func @_mha_kernel(%arg0: i32, %arg1: i32, %arg2: memref<1x32x32xbf16, #tpu.memory_space<vmem>>, %arg3: memref<1x16x32xbf16, #tpu.memory_space<vmem>>, %arg4: memref<1x16x32xbf16, #tpu.memory_space<vmem>>, %arg5: memref<1x32x32xbf16, #tpu.memory_space<vmem>>) attributes {dimension_semantics = [#tpu.dimension_semantics<parallel>, #tpu.dimension_semantics<parallel>], iteration_bounds = array<i64: 2, 1>, scalar_prefetch = 0 : i64, scratch_operands = 0 : i64, tpu.core_type = #tpu.core_type<tc>, window_params = [{transform_indices = @transform_0, window_bounds = array<i64: 1, 32, 32>}, {transform_indices = @transform_1, window_bounds = array<i64: 1, 16, 32>}, {transform_indices = @transform_2, window_bounds = array<i64: 1, 16, 32>}, {transform_indices = @transform_3, window_bounds = array<i64: 1, 32, 32>}]} {
    %c0 = arith.constant 0 : index
    %c0_0 = arith.constant 0 : index
    %c0_1 = arith.constant 0 : index
    %0 = vector.load %arg2[%c0, %c0_0, %c0_1] : memref<1x32x32xbf16, #tpu.memory_space<vmem>>, vector<1x32x32xbf16>
    %1 = vector.shape_cast %0 : vector<1x32x32xbf16> to vector<32x32xbf16>
    %2 = arith.extf %1 : vector<32x32xbf16> to vector<32x32xf32>
    %c0_2 = arith.constant 0 : index
    %c0_3 = arith.constant 0 : index
    %c0_4 = arith.constant 0 : index
    %3 = vector.load %arg3[%c0_2, %c0_3, %c0_4] : memref<1x16x32xbf16, #tpu.memory_space<vmem>>, vector<1x16x32xbf16>
    %4 = vector.shape_cast %3 : vector<1x16x32xbf16> to vector<16x32xbf16>
    %5 = arith.extf %4 : vector<16x32xbf16> to vector<16x32xf32>
    %c0_5 = arith.constant 0 : index
    %c0_6 = arith.constant 0 : index
    %c0_7 = arith.constant 0 : index
    %6 = vector.load %arg4[%c0_5, %c0_6, %c0_7] : memref<1x16x32xbf16, #tpu.memory_space<vmem>>, vector<1x16x32xbf16>
    %7 = vector.shape_cast %6 : vector<1x16x32xbf16> to vector<16x32xbf16>
    %8 = arith.extf %7 : vector<16x32xbf16> to vector<16x32xf32>
    %9 = vector.shape_cast %2 : vector<32x32xf32> to vector<32x4x8xf32>
    %10 = tpu.transpose %9, [1, 0, 2] : vector<32x4x8xf32> -> vector<4x32x8xf32>
    %11 = vector.shape_cast %5 : vector<16x32xf32> to vector<16x4x8xf32>
    %12 = tpu.transpose %11, [1, 0, 2] : vector<16x4x8xf32> -> vector<4x16x8xf32>
    %13 = vector.shape_cast %8 : vector<16x32xf32> to vector<16x4x8xf32>
    %14 = tpu.transpose %13, [1, 0, 2] : vector<16x4x8xf32> -> vector<4x16x8xf32>
    "tpu.trace_start"() <{level = 10 : i32, message = "hqd,hkd->hqk"}> : () -> ()
    %cst = arith.constant dense<0.000000e+00> : vector<4x32x16xf32>
    %15 = tpu.matmul %10, %12, %cst {dimension_numbers = #tpu.dot_dimension_numbers<[2], [2], [1], [1], [0, 0, 0, 1, 1, 1], [0], [0]>} : vector<4x32x8xf32>, vector<4x16x8xf32>, vector<4x32x16xf32> -> vector<4x32x16xf32>
    "tpu.trace_stop"() : () -> ()
    %cst_8 = arith.constant 0.353553385 : f32
    %16 = vector.broadcast %cst_8 : f32 to vector<4x32x16xf32>
    %17 = arith.mulf %15, %16 : vector<4x32x16xf32>
    %cst_9 = arith.constant dense<0xFF800000> : vector<4x32xf32>
    %18 = vector.multi_reduction <maximumf>, %17, %cst_9 [2] : vector<4x32x16xf32> to vector<4x32xf32>
    %19 = vector.shape_cast %18 : vector<4x32xf32> to vector<4x32x1xf32>
    %20 = vector.broadcast %19 : vector<4x32x1xf32> to vector<4x32x16xf32>
    %21 = arith.subf %17, %20 : vector<4x32x16xf32>
    %22 = math.exp %21 : vector<4x32x16xf32>
    %cst_10 = arith.constant dense<0.000000e+00> : vector<4x32xf32>
    %23 = vector.multi_reduction <add>, %22, %cst_10 [2] : vector<4x32x16xf32> to vector<4x32xf32>
    %24 = vector.shape_cast %23 : vector<4x32xf32> to vector<4x32x1xf32>
    %25 = tpu.reciprocal %24 {approx = true} : vector<4x32x1xf32> -> vector<4x32x1xf32>
    %26 = vector.broadcast %25 : vector<4x32x1xf32> to vector<4x32x16xf32>
    %27 = arith.mulf %22, %26 : vector<4x32x16xf32>
    "tpu.trace_start"() <{level = 10 : i32, message = "hqk,hkd->hqd"}> : () -> ()
    %cst_11 = arith.constant dense<0.000000e+00> : vector<4x32x8xf32>
    %28 = tpu.matmul %27, %14, %cst_11 {dimension_numbers = #tpu.dot_dimension_numbers<[2], [1], [1], [2], [0, 0, 0, 1, 1, 2], [0], [0]>} : vector<4x32x16xf32>, vector<4x16x8xf32>, vector<4x32x8xf32> -> vector<4x32x8xf32>
    "tpu.trace_stop"() : () -> ()
    %29 = tpu.transpose %28, [1, 0, 2] : vector<4x32x8xf32> -> vector<32x4x8xf32>
    %30 = vector.shape_cast %29 : vector<32x4x8xf32> to vector<32x32xf32>
    %31 = arith.truncf %30 : vector<32x32xf32> to vector<32x32xbf16>
    %c0_12 = arith.constant 0 : index
    %c0_13 = arith.constant 0 : index
    %c0_14 = arith.constant 0 : index
    %32 = vector.load %arg5[%c0_12, %c0_13, %c0_14] : memref<1x32x32xbf16, #tpu.memory_space<vmem>>, vector<1x32x32xbf16>
    %33 = vector.shape_cast %32 : vector<1x32x32xbf16> to vector<32x32xbf16>
    %34 = vector.shape_cast %31 : vector<32x32xbf16> to vector<1x32x32xbf16>
    tpu.vector_store %arg5[%c0_12, %c0_13, %c0_14], %34 {strides = array<i32>} : memref<1x32x32xbf16, #tpu.memory_space<vmem>>, vector<1x32x32xbf16>,
    return
  }
  func.func @transform_0(%arg0: i32, %arg1: i32) -> (i32, i32, i32) {
    %c0_i32 = arith.constant 0 : i32
    %c0_i32_0 = arith.constant 0 : i32
    return %arg0, %arg1, %c0_i32 : i32, i32, i32
  }
  func.func @transform_1(%arg0: i32, %arg1: i32) -> (i32, i32, i32) {
    %c0_i32 = arith.constant 0 : i32
    %c0_i32_0 = arith.constant 0 : i32
    %c0_i32_1 = arith.constant 0 : i32
    return %arg0, %c0_i32, %c0_i32_0 : i32, i32, i32
  }
  func.func @transform_2(%arg0: i32, %arg1: i32) -> (i32, i32, i32) {
    %c0_i32 = arith.constant 0 : i32
    %c0_i32_0 = arith.constant 0 : i32
    %c0_i32_1 = arith.constant 0 : i32
    return %arg0, %c0_i32, %c0_i32_0 : i32, i32, i32
  }
  func.func @transform_3(%arg0: i32, %arg1: i32) -> (i32, i32, i32) {
    %c0_i32 = arith.constant 0 : i32
    %c0_i32_0 = arith.constant 0 : i32
    return %arg0, %arg1, %c0_i32 : i32, i32, i32
  }
}

module attributes {stable_mosaic.version = 11 : i64} {
  func.func @_proj_add_kernel(%arg0: i32, %arg1: memref<32x32xbf16, #tpu.memory_space<vmem>>, %arg2: memref<32x32xbf16, #tpu.memory_space<vmem>>, %arg3: memref<1x32xf32, #tpu.memory_space<vmem>>, %arg4: memref<32x32xf32, #tpu.memory_space<vmem>>, %arg5: memref<32x32xf32, #tpu.memory_space<vmem>>) attributes {dimension_semantics = [#tpu.dimension_semantics<parallel>], iteration_bounds = array<i64: 2>, scalar_prefetch = 0 : i64, scratch_operands = 0 : i64, tpu.core_type = #tpu.core_type<tc>, window_params = [{transform_indices = @transform_0, window_bounds = array<i64: 32, 32>}, {pipeline_mode = #tpu.pipeline_mode<synchronous>, transform_indices = @transform_1, window_bounds = array<i64: 32, 32>}, {pipeline_mode = #tpu.pipeline_mode<synchronous>, transform_indices = @transform_2, window_bounds = array<i64: 1, 32>}, {transform_indices = @transform_3, window_bounds = array<i64: 32, 32>}, {transform_indices = @transform_4, window_bounds = array<i64: 32, 32>}]} {
    %c0 = arith.constant 0 : index
    %c0_0 = arith.constant 0 : index
    %0 = vector.load %arg1[%c0, %c0_0] : memref<32x32xbf16, #tpu.memory_space<vmem>>, vector<32x32xbf16>
    %c0_1 = arith.constant 0 : index
    %c0_2 = arith.constant 0 : index
    %1 = vector.load %arg2[%c0_1, %c0_2] : memref<32x32xbf16, #tpu.memory_space<vmem>>, vector<32x32xbf16>
    %cst = arith.constant dense<0.000000e+00> : vector<32x32xf32>
    %2 = tpu.matmul %0, %1, %cst {dimension_numbers = #tpu.dot_dimension_numbers<[1], [0], [0], [1], [0, 0, 1, 1], [], []>} : vector<32x32xbf16>, vector<32x32xbf16>, vector<32x32xf32> -> vector<32x32xf32>
    %c0_3 = arith.constant 0 : index
    %c0_4 = arith.constant 0 : index
    %3 = vector.load %arg3[%c0_3, %c0_4] : memref<1x32xf32, #tpu.memory_space<vmem>>, vector<1x32xf32>
    %4 = vector.broadcast %3 : vector<1x32xf32> to vector<32x32xf32>
    %5 = arith.addf %2, %4 : vector<32x32xf32>
    %c0_5 = arith.constant 0 : index
    %c0_6 = arith.constant 0 : index
    %6 = vector.load %arg4[%c0_5, %c0_6] : memref<32x32xf32, #tpu.memory_space<vmem>>, vector<32x32xf32>
    %7 = arith.addf %5, %6 : vector<32x32xf32>
    %c0_7 = arith.constant 0 : index
    %c0_8 = arith.constant 0 : index
    %8 = vector.load %arg5[%c0_7, %c0_8] : memref<32x32xf32, #tpu.memory_space<vmem>>, vector<32x32xf32>
    tpu.vector_store %arg5[%c0_7, %c0_8], %7 {strides = array<i32>} : memref<32x32xf32, #tpu.memory_space<vmem>>, vector<32x32xf32>,
    return
  }
  func.func @transform_0(%arg0: i32) -> (i32, i32) {
    %c0_i32 = arith.constant 0 : i32
    %c0_i32_0 = arith.constant 0 : i32
    return %arg0, %c0_i32 : i32, i32
  }
  func.func @transform_1(%arg0: i32) -> (i32, i32) {
    %c0_i32 = arith.constant 0 : i32
    %c0_i32_0 = arith.constant 0 : i32
    %c0_i32_1 = arith.constant 0 : i32
    return %c0_i32, %c0_i32_0 : i32, i32
  }
  func.func @transform_2(%arg0: i32) -> (i32, i32) {
    %c0_i32 = arith.constant 0 : i32
    %c0_i32_0 = arith.constant 0 : i32
    %c0_i32_1 = arith.constant 0 : i32
    return %c0_i32, %c0_i32_0 : i32, i32
  }
  func.func @transform_3(%arg0: i32) -> (i32, i32) {
    %c0_i32 = arith.constant 0 : i32
    %c0_i32_0 = arith.constant 0 : i32
    return %arg0, %c0_i32 : i32, i32
  }
  func.func @transform_4(%arg0: i32) -> (i32, i32) {
    %c0_i32 = arith.constant 0 : i32
    %c0_i32_0 = arith.constant 0 : i32
    return %arg0, %c0_i32 : i32, i32
  }
}

module attributes {stable_mosaic.version = 11 : i64} {
  func.func @_proj_add_ln_kernel(%arg0: i32, %arg1: memref<16x32xbf16, #tpu.memory_space<vmem>>, %arg2: memref<32x32xbf16, #tpu.memory_space<vmem>>, %arg3: memref<1x32xf32, #tpu.memory_space<vmem>>, %arg4: memref<16x32xf32, #tpu.memory_space<vmem>>, %arg5: memref<1x32xf32, #tpu.memory_space<vmem>>, %arg6: memref<1x32xf32, #tpu.memory_space<vmem>>, %arg7: memref<16x32xf32, #tpu.memory_space<vmem>>) attributes {dimension_semantics = [#tpu.dimension_semantics<parallel>], iteration_bounds = array<i64: 2>, scalar_prefetch = 0 : i64, scratch_operands = 0 : i64, tpu.core_type = #tpu.core_type<tc>, window_params = [{transform_indices = @transform_0, window_bounds = array<i64: 16, 32>}, {pipeline_mode = #tpu.pipeline_mode<synchronous>, transform_indices = @transform_1, window_bounds = array<i64: 32, 32>}, {pipeline_mode = #tpu.pipeline_mode<synchronous>, transform_indices = @transform_2, window_bounds = array<i64: 1, 32>}, {transform_indices = @transform_3, window_bounds = array<i64: 16, 32>}, {pipeline_mode = #tpu.pipeline_mode<synchronous>, transform_indices = @transform_4, window_bounds = array<i64: 1, 32>}, {pipeline_mode = #tpu.pipeline_mode<synchronous>, transform_indices = @transform_5, window_bounds = array<i64: 1, 32>}, {transform_indices = @transform_6, window_bounds = array<i64: 16, 32>}]} {
    %c0 = arith.constant 0 : index
    %c0_0 = arith.constant 0 : index
    %0 = vector.load %arg1[%c0, %c0_0] : memref<16x32xbf16, #tpu.memory_space<vmem>>, vector<16x32xbf16>
    %c0_1 = arith.constant 0 : index
    %c0_2 = arith.constant 0 : index
    %1 = vector.load %arg2[%c0_1, %c0_2] : memref<32x32xbf16, #tpu.memory_space<vmem>>, vector<32x32xbf16>
    %cst = arith.constant dense<0.000000e+00> : vector<16x32xf32>
    %2 = tpu.matmul %0, %1, %cst {dimension_numbers = #tpu.dot_dimension_numbers<[1], [0], [0], [1], [0, 0, 1, 1], [], []>} : vector<16x32xbf16>, vector<32x32xbf16>, vector<16x32xf32> -> vector<16x32xf32>
    %c0_3 = arith.constant 0 : index
    %c0_4 = arith.constant 0 : index
    %3 = vector.load %arg3[%c0_3, %c0_4] : memref<1x32xf32, #tpu.memory_space<vmem>>, vector<1x32xf32>
    %4 = vector.broadcast %3 : vector<1x32xf32> to vector<16x32xf32>
    %5 = arith.addf %2, %4 : vector<16x32xf32>
    %c0_5 = arith.constant 0 : index
    %c0_6 = arith.constant 0 : index
    %6 = vector.load %arg4[%c0_5, %c0_6] : memref<16x32xf32, #tpu.memory_space<vmem>>, vector<16x32xf32>
    %7 = arith.addf %5, %6 : vector<16x32xf32>
    %cst_7 = arith.constant dense<0.000000e+00> : vector<16xf32>
    %8 = vector.multi_reduction <add>, %7, %cst_7 [1] : vector<16x32xf32> to vector<16xf32>
    %9 = vector.shape_cast %8 : vector<16xf32> to vector<16x1xf32>
    %cst_8 = arith.constant 3.200000e+01 : f32
    %10 = vector.broadcast %cst_8 : f32 to vector<16x1xf32>
    %11 = arith.divf %9, %10 : vector<16x1xf32>
    %12 = vector.broadcast %11 : vector<16x1xf32> to vector<16x32xf32>
    %13 = arith.subf %7, %12 : vector<16x32xf32>
    %14 = arith.mulf %13, %13 : vector<16x32xf32>
    %cst_9 = arith.constant dense<0.000000e+00> : vector<16xf32>
    %15 = vector.multi_reduction <add>, %14, %cst_9 [1] : vector<16x32xf32> to vector<16xf32>
    %16 = vector.shape_cast %15 : vector<16xf32> to vector<16x1xf32>
    %cst_10 = arith.constant 3.200000e+01 : f32
    %17 = vector.broadcast %cst_10 : f32 to vector<16x1xf32>
    %18 = arith.divf %16, %17 : vector<16x1xf32>
    %19 = vector.broadcast %11 : vector<16x1xf32> to vector<16x32xf32>
    %20 = arith.subf %7, %19 : vector<16x32xf32>
    %cst_11 = arith.constant 9.99999974E-6 : f32
    %21 = vector.broadcast %cst_11 : f32 to vector<16x1xf32>
    %22 = arith.addf %18, %21 : vector<16x1xf32>
    %23 = math.rsqrt %22 : vector<16x1xf32>
    %24 = vector.broadcast %23 : vector<16x1xf32> to vector<16x32xf32>
    %25 = arith.mulf %20, %24 : vector<16x32xf32>
    %c0_12 = arith.constant 0 : index
    %c0_13 = arith.constant 0 : index
    %26 = vector.load %arg5[%c0_12, %c0_13] : memref<1x32xf32, #tpu.memory_space<vmem>>, vector<1x32xf32>
    %27 = vector.broadcast %26 : vector<1x32xf32> to vector<16x32xf32>
    %28 = arith.mulf %25, %27 : vector<16x32xf32>
    %c0_14 = arith.constant 0 : index
    %c0_15 = arith.constant 0 : index
    %29 = vector.load %arg6[%c0_14, %c0_15] : memref<1x32xf32, #tpu.memory_space<vmem>>, vector<1x32xf32>
    %30 = vector.broadcast %29 : vector<1x32xf32> to vector<16x32xf32>
    %31 = arith.addf %28, %30 : vector<16x32xf32>
    %c0_16 = arith.constant 0 : index
    %c0_17 = arith.constant 0 : index
    %32 = vector.load %arg7[%c0_16, %c0_17] : memref<16x32xf32, #tpu.memory_space<vmem>>, vector<16x32xf32>
    tpu.vector_store %arg7[%c0_16, %c0_17], %31 {strides = array<i32>} : memref<16x32xf32, #tpu.memory_space<vmem>>, vector<16x32xf32>,
    return
  }
  func.func @transform_0(%arg0: i32) -> (i32, i32) {
    %c0_i32 = arith.constant 0 : i32
    %c0_i32_0 = arith.constant 0 : i32
    return %arg0, %c0_i32 : i32, i32
  }
  func.func @transform_1(%arg0: i32) -> (i32, i32) {
    %c0_i32 = arith.constant 0 : i32
    %c0_i32_0 = arith.constant 0 : i32
    %c0_i32_1 = arith.constant 0 : i32
    return %c0_i32, %c0_i32_0 : i32, i32
  }
  func.func @transform_2(%arg0: i32) -> (i32, i32) {
    %c0_i32 = arith.constant 0 : i32
    %c0_i32_0 = arith.constant 0 : i32
    %c0_i32_1 = arith.constant 0 : i32
    return %c0_i32, %c0_i32_0 : i32, i32
  }
  func.func @transform_3(%arg0: i32) -> (i32, i32) {
    %c0_i32 = arith.constant 0 : i32
    %c0_i32_0 = arith.constant 0 : i32
    return %arg0, %c0_i32 : i32, i32
  }
  func.func @transform_4(%arg0: i32) -> (i32, i32) {
    %c0_i32 = arith.constant 0 : i32
    %c0_i32_0 = arith.constant 0 : i32
    %c0_i32_1 = arith.constant 0 : i32
    return %c0_i32, %c0_i32_0 : i32, i32
  }
  func.func @transform_5(%arg0: i32) -> (i32, i32) {
    %c0_i32 = arith.constant 0 : i32
    %c0_i32_0 = arith.constant 0 : i32
    %c0_i32_1 = arith.constant 0 : i32
    return %c0_i32, %c0_i32_0 : i32, i32
  }
  func.func @transform_6(%arg0: i32) -> (i32, i32) {
    %c0_i32 = arith.constant 0 : i32
    %c0_i32_0 = arith.constant 0 : i32
    return %arg0, %c0_i32 : i32, i32
  }
}

</mosaic_0001>

<llo_original>
// kernel: prompt_decoder_forward.24
$region0: #{prompt_decoder_forward.24}
  #allocation0 [shape = 'u32[]', space=smem, size = 0x4, offset = 0x4, fixed_abs, tag = 'smem constant byte address 0x4 - core index']
  #allocation1 [shape = 'u32[72,128]{1,0:T(1,128)}', space=vmem, size = 0x9000, scoped, tag = 'internal scratch']
  %s0 = inlined_call_operand.vmem [shape: f32[64,32], index: 0, kind: input, shape index: {}]
  %s1 = inlined_call_operand.vmem [shape: bf16[32,32], index: 1, kind: input, shape index: {}]
  %s2 = inlined_call_operand.vmem [shape: f32[1,32], index: 2, kind: input, shape index: {}]
  %s3 = inlined_call_operand.vmem [shape: bf16[64,32], index: 3, kind: output, shape index: {}]
  %s4 = sld [smem:[#allocation0]]
  $region45: #{prompt_decoder_forward.24} parent=0
    _
  %s6 = ssub.s32 1, %s4
  %s7 = scalar_select 0, %s6, %s4
  loop: start=0, step=1, limit=4
  $region2: #{prompt_decoder_forward.24} parent=0 // loop_pre_header
    _
  $region3: #{prompt_decoder_forward.24} parent=0 // loop_header
    %s9 = sphi 0, %s13
    %p10 = scmp.ge.s32.totalorder %s9, 4
    %s19 = sphi 0, %s21
    %s22 = sphi 0, %s19
    %s23 = sphi 0, %s22
    %s39 = sphi 0, %s23
    %s43 = sphi 0, %s43
    %s45 = sphi 0, %s43
    %s46 = sphi 0, %s45
    %s60 = sphi 0, %s46
    %s64 = sphi 0, %s64
    %s66 = sphi 0, %s64
    %s67 = sphi 0, %s66
    %s81 = sphi 0, %s67
    %s87 = sphi 0, %s89
    %s90 = sphi 0, %s87
    %s91 = sphi 0, %s90
    %s107 = sphi 0, %s91
  $region4: #{prompt_decoder_forward.24} parent=0 // loop_header_branch
    %12 = sbr.rel (%p10) target = $region8
  $region5: #{prompt_decoder_forward.24} parent=0 // loop_body
    %s14 = ssub.s32 %s9, 1
    %s15 = ssub.s32 %s9, 2
    %s16 = sadd.s32 %s9, 1
    %s17 = ssub.s32 %s9, %s16
    %p18 = scmp.eq.s32.totalorder %s17, 0
    %s20 = sadd.s32 %s19, 1
    %s21 = scalar_select %p18, %s19, %s20
    %p24 = pneg %p18
    %p25 = scmp.eq.s32.totalorder %s9, 1
    %p26 = por %p24, %p25
    %p27 = scmp.ne.s32.totalorder %s19, %s22
    %p28 = scmp.eq.s32.totalorder %s9, 0
    %p29 = por %p27, %p28
    %p30 = scmp.ne.s32.totalorder %s19, %s22
    %p31 = scmp.eq.s32.totalorder %s14, 1
    %p32 = por %p30, %p31
    %p33 = scmp.ne.s32.totalorder %s22, %s23
    %p34 = scmp.eq.s32.totalorder %s14, 0
    %p35 = por %p33, %p34
    %p36 = scmp.ne.s32.totalorder %s22, %s23
    %p37 = scmp.eq.s32.totalorder %s15, 1
    %p38 = por %p36, %p37
    %p40 = scmp.ne.s32.totalorder %s23, %s39
    %p41 = scmp.eq.s32.totalorder %s15, 0
    %p42 = por %p40, %p41
    %s44 = sadd.s32 %s43, 1
    %p47 = scmp.eq.s32.totalorder %s9, 1
    %p48 = scmp.ne.s32.totalorder %s43, %s45
    %p49 = scmp.eq.s32.totalorder %s9, 0
    %p50 = por %p48, %p49
    %p51 = scmp.ne.s32.totalorder %s43, %s45
    %p52 = scmp.eq.s32.totalorder %s14, 1
    %p53 = por %p51, %p52
    %p54 = scmp.ne.s32.totalorder %s45, %s46
    %p55 = scmp.eq.s32.totalorder %s14, 0
    %p56 = por %p54, %p55
    %p57 = scmp.ne.s32.totalorder %s45, %s46
    %p58 = scmp.eq.s32.totalorder %s15, 1
    %p59 = por %p57, %p58
    %p61 = scmp.ne.s32.totalorder %s46, %s60
    %p62 = scmp.eq.s32.totalorder %s15, 0
    %p63 = por %p61, %p62
    %s65 = sadd.s32 %s64, 1
    %p68 = scmp.eq.s32.totalorder %s9, 1
    %p69 = scmp.ne.s32.totalorder %s64, %s66
    %p70 = scmp.eq.s32.totalorder %s9, 0
    %p71 = por %p69, %p70
    %p72 = scmp.ne.s32.totalorder %s64, %s66
    %p73 = scmp.eq.s32.totalorder %s14, 1
    %p74 = por %p72, %p73
    %p75 = scmp.ne.s32.totalorder %s66, %s67
    %p76 = scmp.eq.s32.totalorder %s14, 0
    %p77 = por %p75, %p76
    %p78 = scmp.ne.s32.totalorder %s66, %s67
    %p79 = scmp.eq.s32.totalorder %s15, 1
    %p80 = por %p78, %p79
    %p82 = scmp.ne.s32.totalorder %s67, %s81
    %p83 = scmp.eq.s32.totalorder %s15, 0
    %p84 = por %p82, %p83
    %s85 = ssub.s32 %s9, %s16
    %p86 = scmp.eq.s32.totalorder %s85, 0
    %s88 = sadd.s32 %s87, 1
    %s89 = scalar_select %p86, %s87, %s88
    %p92 = pneg %p86
    %p93 = scmp.eq.s32.totalorder %s9, 1
    %p94 = por %p92, %p93
    %p95 = scmp.ne.s32.totalorder %s87, %s90
    %p96 = scmp.eq.s32.totalorder %s9, 0
    %p97 = por %p95, %p96
    %p98 = scmp.ne.s32.totalorder %s87, %s90
    %p99 = scmp.eq.s32.totalorder %s14, 1
    %p100 = por %p98, %p99
    %p101 = scmp.ne.s32.totalorder %s90, %s91
    %p102 = scmp.eq.s32.totalorder %s14, 0
    %p103 = por %p101, %p102
    %p104 = scmp.ne.s32.totalorder %s90, %s91
    %p105 = scmp.eq.s32.totalorder %s15, 1
    %p106 = por %p104, %p105
    %p108 = scmp.ne.s32.totalorder %s91, %s107
    %p109 = scmp.eq.s32.totalorder %s15, 0
    %p110 = por %p108, %p109
    %p111 = scmp.le.s32.totalorder 1, %s9
    %p112 = scmp.lt.s32.totalorder %s9, 3
    %p113 = pnand %p111, %p112
    %p114 = pneg %p113
    // Predicated region
    $region9: #{prompt_decoder_forward.24} parent=5 // pred_check
      _
    $region10: #{prompt_decoder_forward.24} parent=5 // pred_check_branch
      %116 = sbr.rel (%p113) target = $region12
    $region11: #{prompt_decoder_forward.24} parent=5 // pred_region
      %s117 = ssub.s32 %s9, 1
      // Predicated region
      $region13: #{prompt_decoder_forward.24} parent=11 // pred_check
        %p118 = pneg %p56
      $region14: #{prompt_decoder_forward.24} parent=11 // pred_check_branch
        %120 = sbr.rel (%p118) target = $region16
      $region15: #{prompt_decoder_forward.24} parent=11 // pred_region
        _
      $region16: #{prompt_decoder_forward.24} parent=11 // pred_fallthru
        _
      // Predicated region
      $region17: #{prompt_decoder_forward.24} parent=11 // pred_check
        %p121 = pneg %p77
      $region18: #{prompt_decoder_forward.24} parent=11 // pred_check_branch
        %123 = sbr.rel (%p121) target = $region20
      $region19: #{prompt_decoder_forward.24} parent=11 // pred_region
        _
      $region20: #{prompt_decoder_forward.24} parent=11 // pred_fallthru
        _
    $region12: #{prompt_decoder_forward.24} parent=5 // pred_fallthru
      _
    %p124 = scmp.lt.s32.totalorder %s9, 2
    // Predicated region
    $region21: #{prompt_decoder_forward.24} parent=5 // pred_check
      %p125 = pneg %p124
    $region22: #{prompt_decoder_forward.24} parent=5 // pred_check_branch
      %127 = sbr.rel (%p125) target = $region24
    $region23: #{prompt_decoder_forward.24} parent=5 // pred_region
      // Predicated region
      $region25: #{prompt_decoder_forward.24} parent=23 // pred_check
        %p128 = pneg %p29
      $region26: #{prompt_decoder_forward.24} parent=23 // pred_check_branch
        %130 = sbr.rel (%p128) target = $region28
      $region27: #{prompt_decoder_forward.24} parent=23 // pred_region
        %s131 = smul.u32 4, %s9
        %p132 = scmp.lt.s32.totalorder %s131, 7
        %s133 = scalar_select %p132, %s131, 7
        %s134 = smul.addr %s133, 8
        %s135 = scalar_lea.vmem %s0, %s134
        %s136 = smul.u32 4, %s9
      $region28: #{prompt_decoder_forward.24} parent=23 // pred_fallthru
        _
    $region24: #{prompt_decoder_forward.24} parent=5 // pred_fallthru
      _
    %p137 = scmp.le.s32.totalorder 1, %s9
    %p138 = scmp.lt.s32.totalorder %s9, 3
    %p139 = pnand %p137, %p138
    %p140 = pneg %p139
    // Predicated region
    $region29: #{prompt_decoder_forward.24} parent=5 // pred_check
      _
    $region30: #{prompt_decoder_forward.24} parent=5 // pred_check_branch
      %142 = sbr.rel (%p139) target = $region32
    $region31: #{prompt_decoder_forward.24} parent=5 // pred_region
      %s143 = ssub.s32 %s9, 1
      %s144 = smul.u32 4, %s14
      %p145 = scmp.lt.s32.totalorder %s144, 7
      %s146 = scalar_select %p145, %s144, 7
      %s147 = smul.addr %s146, 8
      %s148 = scalar_lea.vmem %s0, %s147
      %p149 = pneg %p35
      %p150 = pneg %p32
      %p151 = pneg %p56
      %p152 = pneg %p53
      %p153 = pneg %p77
      %p154 = pneg %p74
      %p155 = pneg %p103
      %p156 = pneg %p100
      %s157 = smul.u32 4, %s14
      %p158 = scmp.lt.s32.totalorder %s157, 7
      %s159 = scalar_select %p158, %s157, 7
      %s160 = smul.addr %s159, 4
      %s161 = scalar_lea.vmem %s3, %s160
      %s162 = smul.u32 4, %s14
      %p163 = scmp.lt.s32.totalorder %s162, 7
      %s164 = scalar_select %p163, %s162, 7
      %s165 = smul.addr %s164, 8
      %s166 = scalar_lea.vmem %s0, %s165
      %s167 = smul.u32 4, %s14
      %s168 = smul.u32 4, %s14
      %p169 = scmp.lt.s32.totalorder %s168, 7
      %s170 = scalar_select %p169, %s168, 7
      %s171 = smul.addr %s170, 4
      %s172 = scalar_lea.vmem %s3, %s171
      %s173 = smul.u32 4, %s14
      %v175 = vld [vmem:[%s166] sm:$0xff]
      %v176 = vld [vmem:[%s166 + $0x8] sm:$0xff]
      %v177 = vld [vmem:[%s166 + $0x10] sm:$0xff]
      %v178 = vld [vmem:[%s166 + $0x18] sm:$0xff]
      %v179 = vpack.c.bf16 %v176, %v175
      %v180 = vpack.c.bf16 %v178, %v177
      %v181 = vld [vmem:[%s1] sm:$0xf]
      %v182 = vld [vmem:[%s1 + $0x4] sm:$0xf]
      %v183 = vld [vmem:[%s1 + $0x8] sm:$0xf]
      %v184 = vld [vmem:[%s1 + $0xc] sm:$0xf]
      %v185 = vld [vmem:[%s2] sm:$0x1]
      %v187 = vperm.slane %v185, 0
      %v193 = vunpack.c.l.b16 %v181
      %v194 = vunpack.c.l.b16 %v182
      %v195 = vunpack.c.l.b16 %v183
      %v196 = vunpack.c.l.b16 %v184
      %v197 = vpack.c.b16 %v194, %v193
      %v198 = vpack.c.b16 %v196, %v195
      %vm201 = vcmask 261120
      %v203 = vsel %vm201, %v179, 0
      %v206 = vsel %vm201, %v180, 0
      %208 = vmatpush.bf16.msra.mxu0 0
      %209 = vmatpush.bf16.msra.mxu0 0
      %210 = vmatpush.bf16.msra.mxu0 0
      %211 = vmatpush.bf16.msra.mxu0 0
      %212 = vmatpush.bf16.msra.mxu0 0
      %213 = vmatpush.bf16.msra.mxu0 0
      %214 = vmatpush.bf16.msra.mxu0 %v198
      %215 = vmatpush.bf16.msra.mxu0 %v197
      %216 = vmatmul.bf16.gmra.mxu0 %v203
      %v217 = vpop.f32.mrf.mxu0
      %v218 = vadd.f32 %v187, %v217
      %v219 = vpop.f32.mrf.mxu0
      %v220 = vadd.f32 %v187, %v219
      %221 = vmatmul.bf16.gmra.mxu0 %v206
      %v222 = vpop.f32.mrf.mxu0
      %v223 = vadd.f32 %v187, %v222
      %v224 = vpop.f32.mrf.mxu0
      %v225 = vadd.f32 %v187, %v224
      %226 = vdwg.mxu0
      %v227 = vpack.c.bf16 %v218, %v218
      %v228 = vpack.c.bf16 %v220, %v220
      %v229 = vpack.c.bf16 %v223, %v223
      %v230 = vpack.c.bf16 %v225, %v225
      %vm231 = vcmask 257024
      %232 = vst.msk [vmem:[%s172] sm:$0xf] %vm231, %v227
      %233 = vst.msk [vmem:[%s172 + $0x4] sm:$0xf] %vm231, %v228
      %234 = vst.msk [vmem:[%s172 + $0x8] sm:$0xf] %vm231, %v229
      %235 = vst.msk [vmem:[%s172 + $0xc] sm:$0xf] %vm231, %v230
      %s236 = smul.u32 4, %s14
      %p237 = scmp.lt.s32.totalorder %s236, 7
      %s238 = scalar_select %p237, %s236, 7
      %s239 = smul.addr %s238, 4
      %s240 = scalar_lea.vmem %s3, %s239
      // Predicated region
      $region33: #{prompt_decoder_forward.24} parent=31 // pred_check
        %p241 = pneg %p100
      $region34: #{prompt_decoder_forward.24} parent=31 // pred_check_branch
        %243 = sbr.rel (%p241) target = $region36
      $region35: #{prompt_decoder_forward.24} parent=31 // pred_region
        %s244 = smul.u32 4, %s14
      $region36: #{prompt_decoder_forward.24} parent=31 // pred_fallthru
        _
    $region32: #{prompt_decoder_forward.24} parent=5 // pred_fallthru
      _
    %p245 = scmp.le.s32.totalorder 2, %s9
    // Predicated region
    $region37: #{prompt_decoder_forward.24} parent=5 // pred_check
      %p246 = pneg %p245
    $region38: #{prompt_decoder_forward.24} parent=5 // pred_check_branch
      %248 = sbr.rel (%p246) target = $region40
    $region39: #{prompt_decoder_forward.24} parent=5 // pred_region
      %s249 = ssub.s32 %s9, 2
      // Predicated region
      $region41: #{prompt_decoder_forward.24} parent=39 // pred_check
        %p250 = pneg %p106
      $region42: #{prompt_decoder_forward.24} parent=39 // pred_check_branch
        %252 = sbr.rel (%p250) target = $region44
      $region43: #{prompt_decoder_forward.24} parent=39 // pred_region
        %s253 = smul.u32 4, %s15
        %p254 = scmp.lt.s32.totalorder %s253, 7
        %s255 = scalar_select %p254, %s253, 7
        %s256 = smul.addr %s255, 4
        %s257 = scalar_lea.vmem %s3, %s256
      $region44: #{prompt_decoder_forward.24} parent=39 // pred_fallthru
        _
    $region40: #{prompt_decoder_forward.24} parent=5 // pred_fallthru
      _
  $region6: #{prompt_decoder_forward.24} parent=0 // loop_footer
    %s13 = sadd.s32 1, %s9
  $region7: #{prompt_decoder_forward.24} parent=0 // loop_footer_branch
    %8 = sbr.rel target = $region3
  $region8: #{prompt_decoder_forward.24} parent=0 // loop_exit
    _

// kernel: prompt_decoder_forward.16
$region0: #{prompt_decoder_forward.16}
  #allocation0 [shape = 'u32[]', space=smem, size = 0x4, offset = 0x4, fixed_abs, tag = 'smem constant byte address 0x4 - core index']
  #allocation1 [shape = 'u32[72,128]{1,0:T(1,128)}', space=vmem, size = 0x9000, scoped, tag = 'internal scratch']
  %s0 = inlined_call_operand.vmem [shape: f32[32,32], index: 0, kind: input, shape index: {}]
  %s1 = inlined_call_operand.vmem [shape: bf16[32,32], index: 1, kind: input, shape index: {}]
  %s2 = inlined_call_operand.vmem [shape: f32[1,32], index: 2, kind: input, shape index: {}]
  %s3 = inlined_call_operand.vmem [shape: bf16[32,32], index: 3, kind: input, shape index: {}]
  %s4 = inlined_call_operand.vmem [shape: f32[1,32], index: 4, kind: input, shape index: {}]
  %s5 = inlined_call_operand.vmem [shape: bf16[32,32], index: 5, kind: input, shape index: {}]
  %s6 = inlined_call_operand.vmem [shape: f32[1,32], index: 6, kind: input, shape index: {}]
  %s7 = inlined_call_operand.vmem [shape: bf16[32,32], index: 7, kind: output, shape index: {0}]
  %s8 = inlined_call_operand.vmem [shape: bf16[32,32], index: 8, kind: output, shape index: {1}]
  %s9 = inlined_call_operand.vmem [shape: bf16[32,32], index: 9, kind: output, shape index: {2}]
  %10 = xla_tuple %s7, %s8, %s9
  %s11 = sld [smem:[#allocation0]]
  $region77: #{prompt_decoder_forward.16} parent=0
    _
  %s13 = ssub.s32 1, %s11
  %s14 = scalar_select 0, %s13, %s11
  loop: start=0, step=1, limit=4
  $region2: #{prompt_decoder_forward.16} parent=0 // loop_pre_header
    _
  $region3: #{prompt_decoder_forward.16} parent=0 // loop_header
    %s16 = sphi 0, %s20
    %p17 = scmp.ge.s32.totalorder %s16, 4
    %s26 = sphi 0, %s28
    %s29 = sphi 0, %s26
    %s30 = sphi 0, %s29
    %s46 = sphi 0, %s30
    %s50 = sphi 0, %s50
    %s52 = sphi 0, %s50
    %s53 = sphi 0, %s52
    %s67 = sphi 0, %s53
    %s71 = sphi 0, %s71
    %s73 = sphi 0, %s71
    %s74 = sphi 0, %s73
    %s88 = sphi 0, %s74
    %s92 = sphi 0, %s92
    %s94 = sphi 0, %s92
    %s95 = sphi 0, %s94
    %s109 = sphi 0, %s95
    %s113 = sphi 0, %s113
    %s115 = sphi 0, %s113
    %s116 = sphi 0, %s115
    %s130 = sphi 0, %s116
    %s134 = sphi 0, %s134
    %s136 = sphi 0, %s134
    %s137 = sphi 0, %s136
    %s151 = sphi 0, %s137
    %s155 = sphi 0, %s155
    %s157 = sphi 0, %s155
    %s158 = sphi 0, %s157
    %s172 = sphi 0, %s158
    %s178 = sphi 0, %s180
    %s181 = sphi 0, %s178
    %s182 = sphi 0, %s181
    %s198 = sphi 0, %s182
    %s204 = sphi 0, %s206
    %s207 = sphi 0, %s204
    %s208 = sphi 0, %s207
    %s224 = sphi 0, %s208
    %s230 = sphi 0, %s232
    %s233 = sphi 0, %s230
    %s234 = sphi 0, %s233
    %s250 = sphi 0, %s234
  $region4: #{prompt_decoder_forward.16} parent=0 // loop_header_branch
    %19 = sbr.rel (%p17) target = $region8
  $region5: #{prompt_decoder_forward.16} parent=0 // loop_body
    %s21 = ssub.s32 %s16, 1
    %s22 = ssub.s32 %s16, 2
    %s23 = sadd.s32 %s16, 1
    %s24 = ssub.s32 %s16, %s23
    %p25 = scmp.eq.s32.totalorder %s24, 0
    %s27 = sadd.s32 %s26, 1
    %s28 = scalar_select %p25, %s26, %s27
    %p31 = pneg %p25
    %p32 = scmp.eq.s32.totalorder %s16, 1
    %p33 = por %p31, %p32
    %p34 = scmp.ne.s32.totalorder %s26, %s29
    %p35 = scmp.eq.s32.totalorder %s16, 0
    %p36 = por %p34, %p35
    %p37 = scmp.ne.s32.totalorder %s26, %s29
    %p38 = scmp.eq.s32.totalorder %s21, 1
    %p39 = por %p37, %p38
    %p40 = scmp.ne.s32.totalorder %s29, %s30
    %p41 = scmp.eq.s32.totalorder %s21, 0
    %p42 = por %p40, %p41
    %p43 = scmp.ne.s32.totalorder %s29, %s30
    %p44 = scmp.eq.s32.totalorder %s22, 1
    %p45 = por %p43, %p44
    %p47 = scmp.ne.s32.totalorder %s30, %s46
    %p48 = scmp.eq.s32.totalorder %s22, 0
    %p49 = por %p47, %p48
    %s51 = sadd.s32 %s50, 1
    %p54 = scmp.eq.s32.totalorder %s16, 1
    %p55 = scmp.ne.s32.totalorder %s50, %s52
    %p56 = scmp.eq.s32.totalorder %s16, 0
    %p57 = por %p55, %p56
    %p58 = scmp.ne.s32.totalorder %s50, %s52
    %p59 = scmp.eq.s32.totalorder %s21, 1
    %p60 = por %p58, %p59
    %p61 = scmp.ne.s32.totalorder %s52, %s53
    %p62 = scmp.eq.s32.totalorder %s21, 0
    %p63 = por %p61, %p62
    %p64 = scmp.ne.s32.totalorder %s52, %s53
    %p65 = scmp.eq.s32.totalorder %s22, 1
    %p66 = por %p64, %p65
    %p68 = scmp.ne.s32.totalorder %s53, %s67
    %p69 = scmp.eq.s32.totalorder %s22, 0
    %p70 = por %p68, %p69
    %s72 = sadd.s32 %s71, 1
    %p75 = scmp.eq.s32.totalorder %s16, 1
    %p76 = scmp.ne.s32.totalorder %s71, %s73
    %p77 = scmp.eq.s32.totalorder %s16, 0
    %p78 = por %p76, %p77
    %p79 = scmp.ne.s32.totalorder %s71, %s73
    %p80 = scmp.eq.s32.totalorder %s21, 1
    %p81 = por %p79, %p80
    %p82 = scmp.ne.s32.totalorder %s73, %s74
    %p83 = scmp.eq.s32.totalorder %s21, 0
    %p84 = por %p82, %p83
    %p85 = scmp.ne.s32.totalorder %s73, %s74
    %p86 = scmp.eq.s32.totalorder %s22, 1
    %p87 = por %p85, %p86
    %p89 = scmp.ne.s32.totalorder %s74, %s88
    %p90 = scmp.eq.s32.totalorder %s22, 0
    %p91 = por %p89, %p90
    %s93 = sadd.s32 %s92, 1
    %p96 = scmp.eq.s32.totalorder %s16, 1
    %p97 = scmp.ne.s32.totalorder %s92, %s94
    %p98 = scmp.eq.s32.totalorder %s16, 0
    %p99 = por %p97, %p98
    %p100 = scmp.ne.s32.totalorder %s92, %s94
    %p101 = scmp.eq.s32.totalorder %s21, 1
    %p102 = por %p100, %p101
    %p103 = scmp.ne.s32.totalorder %s94, %s95
    %p104 = scmp.eq.s32.totalorder %s21, 0
    %p105 = por %p103, %p104
    %p106 = scmp.ne.s32.totalorder %s94, %s95
    %p107 = scmp.eq.s32.totalorder %s22, 1
    %p108 = por %p106, %p107
    %p110 = scmp.ne.s32.totalorder %s95, %s109
    %p111 = scmp.eq.s32.totalorder %s22, 0
    %p112 = por %p110, %p111
    %s114 = sadd.s32 %s113, 1
    %p117 = scmp.eq.s32.totalorder %s16, 1
    %p118 = scmp.ne.s32.totalorder %s113, %s115
    %p119 = scmp.eq.s32.totalorder %s16, 0
    %p120 = por %p118, %p119
    %p121 = scmp.ne.s32.totalorder %s113, %s115
    %p122 = scmp.eq.s32.totalorder %s21, 1
    %p123 = por %p121, %p122
    %p124 = scmp.ne.s32.totalorder %s115, %s116
    %p125 = scmp.eq.s32.totalorder %s21, 0
    %p126 = por %p124, %p125
    %p127 = scmp.ne.s32.totalorder %s115, %s116
    %p128 = scmp.eq.s32.totalorder %s22, 1
    %p129 = por %p127, %p128
    %p131 = scmp.ne.s32.totalorder %s116, %s130
    %p132 = scmp.eq.s32.totalorder %s22, 0
    %p133 = por %p131, %p132
    %s135 = sadd.s32 %s134, 1
    %p138 = scmp.eq.s32.totalorder %s16, 1
    %p139 = scmp.ne.s32.totalorder %s134, %s136
    %p140 = scmp.eq.s32.totalorder %s16, 0
    %p141 = por %p139, %p140
    %p142 = scmp.ne.s32.totalorder %s134, %s136
    %p143 = scmp.eq.s32.totalorder %s21, 1
    %p144 = por %p142, %p143
    %p145 = scmp.ne.s32.totalorder %s136, %s137
    %p146 = scmp.eq.s32.totalorder %s21, 0
    %p147 = por %p145, %p146
    %p148 = scmp.ne.s32.totalorder %s136, %s137
    %p149 = scmp.eq.s32.totalorder %s22, 1
    %p150 = por %p148, %p149
    %p152 = scmp.ne.s32.totalorder %s137, %s151
    %p153 = scmp.eq.s32.totalorder %s22, 0
    %p154 = por %p152, %p153
    %s156 = sadd.s32 %s155, 1
    %p159 = scmp.eq.s32.totalorder %s16, 1
    %p160 = scmp.ne.s32.totalorder %s155, %s157
    %p161 = scmp.eq.s32.totalorder %s16, 0
    %p162 = por %p160, %p161
    %p163 = scmp.ne.s32.totalorder %s155, %s157
    %p164 = scmp.eq.s32.totalorder %s21, 1
    %p165 = por %p163, %p164
    %p166 = scmp.ne.s32.totalorder %s157, %s158
    %p167 = scmp.eq.s32.totalorder %s21, 0
    %p168 = por %p166, %p167
    %p169 = scmp.ne.s32.totalorder %s157, %s158
    %p170 = scmp.eq.s32.totalorder %s22, 1
    %p171 = por %p169, %p170
    %p173 = scmp.ne.s32.totalorder %s158, %s172
    %p174 = scmp.eq.s32.totalorder %s22, 0
    %p175 = por %p173, %p174
    %s176 = ssub.s32 %s16, %s23
    %p177 = scmp.eq.s32.totalorder %s176, 0
    %s179 = sadd.s32 %s178, 1
    %s180 = scalar_select %p177, %s178, %s179
    %p183 = pneg %p177
    %p184 = scmp.eq.s32.totalorder %s16, 1
    %p185 = por %p183, %p184
    %p186 = scmp.ne.s32.totalorder %s178, %s181
    %p187 = scmp.eq.s32.totalorder %s16, 0
    %p188 = por %p186, %p187
    %p189 = scmp.ne.s32.totalorder %s178, %s181
    %p190 = scmp.eq.s32.totalorder %s21, 1
    %p191 = por %p189, %p190
    %p192 = scmp.ne.s32.totalorder %s181, %s182
    %p193 = scmp.eq.s32.totalorder %s21, 0
    %p194 = por %p192, %p193
    %p195 = scmp.ne.s32.totalorder %s181, %s182
    %p196 = scmp.eq.s32.totalorder %s22, 1
    %p197 = por %p195, %p196
    %p199 = scmp.ne.s32.totalorder %s182, %s198
    %p200 = scmp.eq.s32.totalorder %s22, 0
    %p201 = por %p199, %p200
    %s202 = ssub.s32 %s16, %s23
    %p203 = scmp.eq.s32.totalorder %s202, 0
    %s205 = sadd.s32 %s204, 1
    %s206 = scalar_select %p203, %s204, %s205
    %p209 = pneg %p203
    %p210 = scmp.eq.s32.totalorder %s16, 1
    %p211 = por %p209, %p210
    %p212 = scmp.ne.s32.totalorder %s204, %s207
    %p213 = scmp.eq.s32.totalorder %s16, 0
    %p214 = por %p212, %p213
    %p215 = scmp.ne.s32.totalorder %s204, %s207
    %p216 = scmp.eq.s32.totalorder %s21, 1
    %p217 = por %p215, %p216
    %p218 = scmp.ne.s32.totalorder %s207, %s208
    %p219 = scmp.eq.s32.totalorder %s21, 0
    %p220 = por %p218, %p219
    %p221 = scmp.ne.s32.totalorder %s207, %s208
    %p222 = scmp.eq.s32.totalorder %s22, 1
    %p223 = por %p221, %p222
    %p225 = scmp.ne.s32.totalorder %s208, %s224
    %p226 = scmp.eq.s32.totalorder %s22, 0
    %p227 = por %p225, %p226
    %s228 = ssub.s32 %s16, %s23
    %p229 = scmp.eq.s32.totalorder %s228, 0
    %s231 = sadd.s32 %s230, 1
    %s232 = scalar_select %p229, %s230, %s231
    %p235 = pneg %p229
    %p236 = scmp.eq.s32.totalorder %s16, 1
    %p237 = por %p235, %p236
    %p238 = scmp.ne.s32.totalorder %s230, %s233
    %p239 = scmp.eq.s32.totalorder %s16, 0
    %p240 = por %p238, %p239
    %p241 = scmp.ne.s32.totalorder %s230, %s233
    %p242 = scmp.eq.s32.totalorder %s21, 1
    %p243 = por %p241, %p242
    %p244 = scmp.ne.s32.totalorder %s233, %s234
    %p245 = scmp.eq.s32.totalorder %s21, 0
    %p246 = por %p244, %p245
    %p247 = scmp.ne.s32.totalorder %s233, %s234
    %p248 = scmp.eq.s32.totalorder %s22, 1
    %p249 = por %p247, %p248
    %p251 = scmp.ne.s32.totalorder %s234, %s250
    %p252 = scmp.eq.s32.totalorder %s22, 0
    %p253 = por %p251, %p252
    %p254 = scmp.le.s32.totalorder 1, %s16
    %p255 = scmp.lt.s32.totalorder %s16, 3
    %p256 = pnand %p254, %p255
    %p257 = pneg %p256
    // Predicated region
    $region9: #{prompt_decoder_forward.16} parent=5 // pred_check
      _
    $region10: #{prompt_decoder_forward.16} parent=5 // pred_check_branch
      %259 = sbr.rel (%p256) target = $region12
    $region11: #{prompt_decoder_forward.16} parent=5 // pred_region
      %s260 = ssub.s32 %s16, 1
      // Predicated region
      $region13: #{prompt_decoder_forward.16} parent=11 // pred_check
        %p261 = pneg %p63
      $region14: #{prompt_decoder_forward.16} parent=11 // pred_check_branch
        %263 = sbr.rel (%p261) target = $region16
      $region15: #{prompt_decoder_forward.16} parent=11 // pred_region
        _
      $region16: #{prompt_decoder_forward.16} parent=11 // pred_fallthru
        _
      // Predicated region
      $region17: #{prompt_decoder_forward.16} parent=11 // pred_check
        %p264 = pneg %p84
      $region18: #{prompt_decoder_forward.16} parent=11 // pred_check_branch
        %266 = sbr.rel (%p264) target = $region20
      $region19: #{prompt_decoder_forward.16} parent=11 // pred_region
        _
      $region20: #{prompt_decoder_forward.16} parent=11 // pred_fallthru
        _
      // Predicated region
      $region21: #{prompt_decoder_forward.16} parent=11 // pred_check
        %p267 = pneg %p105
      $region22: #{prompt_decoder_forward.16} parent=11 // pred_check_branch
        %269 = sbr.rel (%p267) target = $region24
      $region23: #{prompt_decoder_forward.16} parent=11 // pred_region
        _
      $region24: #{prompt_decoder_forward.16} parent=11 // pred_fallthru
        _
      // Predicated region
      $region25: #{prompt_decoder_forward.16} parent=11 // pred_check
        %p270 = pneg %p126
      $region26: #{prompt_decoder_forward.16} parent=11 // pred_check_branch
        %272 = sbr.rel (%p270) target = $region28
      $region27: #{prompt_decoder_forward.16} parent=11 // pred_region
        _
      $region28: #{prompt_decoder_forward.16} parent=11 // pred_fallthru
        _
      // Predicated region
      $region29: #{prompt_decoder_forward.16} parent=11 // pred_check
        %p273 = pneg %p147
      $region30: #{prompt_decoder_forward.16} parent=11 // pred_check_branch
        %275 = sbr.rel (%p273) target = $region32
      $region31: #{prompt_decoder_forward.16} parent=11 // pred_region
        _
      $region32: #{prompt_decoder_forward.16} parent=11 // pred_fallthru
        _
      // Predicated region
      $region33: #{prompt_decoder_forward.16} parent=11 // pred_check
        %p276 = pneg %p168
      $region34: #{prompt_decoder_forward.16} parent=11 // pred_check_branch
        %278 = sbr.rel (%p276) target = $region36
      $region35: #{prompt_decoder_forward.16} parent=11 // pred_region
        _
      $region36: #{prompt_decoder_forward.16} parent=11 // pred_fallthru
        _
    $region12: #{prompt_decoder_forward.16} parent=5 // pred_fallthru
      _
    %p279 = scmp.lt.s32.totalorder %s16, 2
    // Predicated region
    $region37: #{prompt_decoder_forward.16} parent=5 // pred_check
      %p280 = pneg %p279
    $region38: #{prompt_decoder_forward.16} parent=5 // pred_check_branch
      %282 = sbr.rel (%p280) target = $region40
    $region39: #{prompt_decoder_forward.16} parent=5 // pred_region
      // Predicated region
      $region41: #{prompt_decoder_forward.16} parent=39 // pred_check
        %p283 = pneg %p36
      $region42: #{prompt_decoder_forward.16} parent=39 // pred_check_branch
        %285 = sbr.rel (%p283) target = $region44
      $region43: #{prompt_decoder_forward.16} parent=39 // pred_region
        %s286 = smul.u32 2, %s16
        %p287 = scmp.lt.s32.totalorder %s286, 3
        %s288 = scalar_select %p287, %s286, 3
        %s289 = smul.addr %s288, 8
        %s290 = scalar_lea.vmem %s0, %s289
        %s291 = smul.u32 2, %s16
      $region44: #{prompt_decoder_forward.16} parent=39 // pred_fallthru
        _
    $region40: #{prompt_decoder_forward.16} parent=5 // pred_fallthru
      _
    %p292 = scmp.le.s32.totalorder 1, %s16
    %p293 = scmp.lt.s32.totalorder %s16, 3
    %p294 = pnand %p292, %p293
    %p295 = pneg %p294
    // Predicated region
    $region45: #{prompt_decoder_forward.16} parent=5 // pred_check
      _
    $region46: #{prompt_decoder_forward.16} parent=5 // pred_check_branch
      %297 = sbr.rel (%p294) target = $region48
    $region47: #{prompt_decoder_forward.16} parent=5 // pred_region
      %s298 = ssub.s32 %s16, 1
      %s299 = smul.u32 2, %s21
      %p300 = scmp.lt.s32.totalorder %s299, 3
      %s301 = scalar_select %p300, %s299, 3
      %s302 = smul.addr %s301, 8
      %s303 = scalar_lea.vmem %s0, %s302
      %p304 = pneg %p42
      %p305 = pneg %p39
      %p306 = pneg %p63
      %p307 = pneg %p60
      %p308 = pneg %p84
      %p309 = pneg %p81
      %p310 = pneg %p105
      %p311 = pneg %p102
      %p312 = pneg %p126
      %p313 = pneg %p123
      %p314 = pneg %p147
      %p315 = pneg %p144
      %p316 = pneg %p168
      %p317 = pneg %p165
      %p318 = pneg %p194
      %p319 = pneg %p191
      %s320 = smul.u32 2, %s21
      %p321 = scmp.lt.s32.totalorder %s320, 3
      %s322 = scalar_select %p321, %s320, 3
      %s323 = smul.addr %s322, 4
      %s324 = scalar_lea.vmem %s7, %s323
      %p325 = pneg %p220
      %p326 = pneg %p217
      %s327 = smul.u32 2, %s21
      %p328 = scmp.lt.s32.totalorder %s327, 3
      %s329 = scalar_select %p328, %s327, 3
      %s330 = smul.addr %s329, 4
      %s331 = scalar_lea.vmem %s8, %s330
      %p332 = pneg %p246
      %p333 = pneg %p243
      %s334 = smul.u32 2, %s21
      %p335 = scmp.lt.s32.totalorder %s334, 3
      %s336 = scalar_select %p335, %s334, 3
      %s337 = smul.addr %s336, 4
      %s338 = scalar_lea.vmem %s9, %s337
      %s339 = smul.u32 2, %s21
      %p340 = scmp.lt.s32.totalorder %s339, 3
      %s341 = scalar_select %p340, %s339, 3
      %s342 = smul.addr %s341, 8
      %s343 = scalar_lea.vmem %s0, %s342
      %s344 = smul.u32 2, %s21
      %s345 = smul.u32 2, %s21
      %p346 = scmp.lt.s32.totalorder %s345, 3
      %s347 = scalar_select %p346, %s345, 3
      %s348 = smul.addr %s347, 4
      %s349 = scalar_lea.vmem %s7, %s348
      %s350 = smul.u32 2, %s21
      %s351 = smul.u32 2, %s21
      %p352 = scmp.lt.s32.totalorder %s351, 3
      %s353 = scalar_select %p352, %s351, 3
      %s354 = smul.addr %s353, 4
      %s355 = scalar_lea.vmem %s8, %s354
      %s356 = smul.u32 2, %s21
      %s357 = smul.u32 2, %s21
      %p358 = scmp.lt.s32.totalorder %s357, 3
      %s359 = scalar_select %p358, %s357, 3
      %s360 = smul.addr %s359, 4
      %s361 = scalar_lea.vmem %s9, %s360
      %s362 = smul.u32 2, %s21
      %v364 = vld [vmem:[%s343] sm:$0xff]
      %v365 = vld [vmem:[%s343 + $0x8] sm:$0xff]
      %v366 = vpack.c.bf16 %v365, %v364
      %v367 = vld [vmem:[%s1] sm:$0xf]
      %v368 = vld [vmem:[%s1 + $0x4] sm:$0xf]
      %v369 = vld [vmem:[%s1 + $0x8] sm:$0xf]
      %v370 = vld [vmem:[%s1 + $0xc] sm:$0xf]
      %v371 = vld [vmem:[%s2] sm:$0x1]
      %v373 = vperm.slane %v371, 0
      %v379 = vunpack.c.l.b16 %v367
      %v380 = vunpack.c.l.b16 %v368
      %v381 = vunpack.c.l.b16 %v369
      %v382 = vunpack.c.l.b16 %v370
      %v383 = vpack.c.b16 %v380, %v379
      %v384 = vpack.c.b16 %v382, %v381
      %vm387 = vcmask 261120
      %v389 = vsel %vm387, %v366, 0
      %391 = vmatpush.bf16.msra.mxu0 0
      %392 = vmatpush.bf16.msra.mxu0 0
      %393 = vmatpush.bf16.msra.mxu0 0
      %394 = vmatpush.bf16.msra.mxu0 0
      %395 = vmatpush.bf16.msra.mxu0 0
      %396 = vmatpush.bf16.msra.mxu0 0
      %397 = vmatpush.bf16.msra.mxu0 %v384
      %398 = vmatpush.bf16.msra.mxu0 %v383
      %399 = vmatmul.bf16.gmra.mxu0 %v389
      %v400 = vpop.f32.mrf.mxu0
      %v401 = vadd.f32 %v373, %v400
      %v402 = vpop.f32.mrf.mxu0
      %v403 = vadd.f32 %v373, %v402
      %404 = vdwg.mxu0
      %v405 = vpack.c.bf16 %v401, %v401
      %v406 = vpack.c.bf16 %v403, %v403
      %vm407 = vcmask 257024
      %408 = vst.msk [vmem:[%s349] sm:$0xf] %vm407, %v405
      %409 = vst.msk [vmem:[%s349 + $0x4] sm:$0xf] %vm407, %v406
      %v410 = vld [vmem:[%s3] sm:$0xf]
      %v411 = vld [vmem:[%s3 + $0x4] sm:$0xf]
      %v412 = vld [vmem:[%s3 + $0x8] sm:$0xf]
      %v413 = vld [vmem:[%s3 + $0xc] sm:$0xf]
      %v414 = vld [vmem:[%s4] sm:$0x1]
      %v416 = vperm.slane %v414, 0
      %v422 = vunpack.c.l.b16 %v410
      %v423 = vunpack.c.l.b16 %v411
      %v424 = vunpack.c.l.b16 %v412
      %v425 = vunpack.c.l.b16 %v413
      %v426 = vpack.c.b16 %v423, %v422
      %v427 = vpack.c.b16 %v425, %v424
      %430 = vmatpush.bf16.msra.mxu0 0
      %431 = vmatpush.bf16.msra.mxu0 0
      %432 = vmatpush.bf16.msra.mxu0 0
      %433 = vmatpush.bf16.msra.mxu0 0
      %434 = vmatpush.bf16.msra.mxu0 0
      %435 = vmatpush.bf16.msra.mxu0 0
      %436 = vmatpush.bf16.msra.mxu0 %v427
      %437 = vmatpush.bf16.msra.mxu0 %v426
      %438 = vmatmul.bf16.gmra.mxu0 %v389
      %v439 = vpop.f32.mrf.mxu0
      %v440 = vadd.f32 %v416, %v439
      %v441 = vpop.f32.mrf.mxu0
      %v442 = vadd.f32 %v416, %v441
      %443 = vdwg.mxu0
      %v444 = vpack.c.bf16 %v440, %v440
      %v445 = vpack.c.bf16 %v442, %v442
      %446 = vst.msk [vmem:[%s355] sm:$0xf] %vm407, %v444
      %447 = vst.msk [vmem:[%s355 + $0x4] sm:$0xf] %vm407, %v445
      %v448 = vld [vmem:[%s5] sm:$0xf]
      %v449 = vld [vmem:[%s5 + $0x4] sm:$0xf]
      %v450 = vld [vmem:[%s5 + $0x8] sm:$0xf]
      %v451 = vld [vmem:[%s5 + $0xc] sm:$0xf]
      %v452 = vld [vmem:[%s6] sm:$0x1]
      %v454 = vperm.slane %v452, 0
      %v460 = vunpack.c.l.b16 %v448
      %v461 = vunpack.c.l.b16 %v449
      %v462 = vunpack.c.l.b16 %v450
      %v463 = vunpack.c.l.b16 %v451
      %v464 = vpack.c.b16 %v461, %v460
      %v465 = vpack.c.b16 %v463, %v462
      %468 = vmatpush.bf16.msra.mxu0 0
      %469 = vmatpush.bf16.msra.mxu0 0
      %470 = vmatpush.bf16.msra.mxu0 0
      %471 = vmatpush.bf16.msra.mxu0 0
      %472 = vmatpush.bf16.msra.mxu0 0
      %473 = vmatpush.bf16.msra.mxu0 0
      %474 = vmatpush.bf16.msra.mxu0 %v465
      %475 = vmatpush.bf16.msra.mxu0 %v464
      %476 = vmatmul.bf16.gmra.mxu0 %v389
      %v477 = vpop.f32.mrf.mxu0
      %v478 = vadd.f32 %v454, %v477
      %v479 = vpop.f32.mrf.mxu0
      %v480 = vadd.f32 %v454, %v479
      %481 = vdwg.mxu0
      %v482 = vpack.c.bf16 %v478, %v478
      %v483 = vpack.c.bf16 %v480, %v480
      %484 = vst.msk [vmem:[%s361] sm:$0xf] %vm407, %v482
      %485 = vst.msk [vmem:[%s361 + $0x4] sm:$0xf] %vm407, %v483
      %s486 = smul.u32 2, %s21
      %p487 = scmp.lt.s32.totalorder %s486, 3
      %s488 = scalar_select %p487, %s486, 3
      %s489 = smul.addr %s488, 4
      %s490 = scalar_lea.vmem %s7, %s489
      %s491 = smul.u32 2, %s21
      %p492 = scmp.lt.s32.totalorder %s491, 3
      %s493 = scalar_select %p492, %s491, 3
      %s494 = smul.addr %s493, 4
      %s495 = scalar_lea.vmem %s8, %s494
      %s496 = smul.u32 2, %s21
      %p497 = scmp.lt.s32.totalorder %s496, 3
      %s498 = scalar_select %p497, %s496, 3
      %s499 = smul.addr %s498, 4
      %s500 = scalar_lea.vmem %s9, %s499
      // Predicated region
      $region49: #{prompt_decoder_forward.16} parent=47 // pred_check
        %p501 = pneg %p191
      $region50: #{prompt_decoder_forward.16} parent=47 // pred_check_branch
        %503 = sbr.rel (%p501) target = $region52
      $region51: #{prompt_decoder_forward.16} parent=47 // pred_region
        %s504 = smul.u32 2, %s21
      $region52: #{prompt_decoder_forward.16} parent=47 // pred_fallthru
        _
      // Predicated region
      $region53: #{prompt_decoder_forward.16} parent=47 // pred_check
        %p505 = pneg %p217
      $region54: #{prompt_decoder_forward.16} parent=47 // pred_check_branch
        %507 = sbr.rel (%p505) target = $region56
      $region55: #{prompt_decoder_forward.16} parent=47 // pred_region
        %s508 = smul.u32 2, %s21
      $region56: #{prompt_decoder_forward.16} parent=47 // pred_fallthru
        _
      // Predicated region
      $region57: #{prompt_decoder_forward.16} parent=47 // pred_check
        %p509 = pneg %p243
      $region58: #{prompt_decoder_forward.16} parent=47 // pred_check_branch
        %511 = sbr.rel (%p509) target = $region60
      $region59: #{prompt_decoder_forward.16} parent=47 // pred_region
        %s512 = smul.u32 2, %s21
      $region60: #{prompt_decoder_forward.16} parent=47 // pred_fallthru
        _
    $region48: #{prompt_decoder_forward.16} parent=5 // pred_fallthru
      _
    %p513 = scmp.le.s32.totalorder 2, %s16
    // Predicated region
    $region61: #{prompt_decoder_forward.16} parent=5 // pred_check
      %p514 = pneg %p513
    $region62: #{prompt_decoder_forward.16} parent=5 // pred_check_branch
      %516 = sbr.rel (%p514) target = $region64
    $region63: #{prompt_decoder_forward.16} parent=5 // pred_region
      %s517 = ssub.s32 %s16, 2
      // Predicated region
      $region65: #{prompt_decoder_forward.16} parent=63 // pred_check
        %p518 = pneg %p197
      $region66: #{prompt_decoder_forward.16} parent=63 // pred_check_branch
        %520 = sbr.rel (%p518) target = $region68
      $region67: #{prompt_decoder_forward.16} parent=63 // pred_region
        %s521 = smul.u32 2, %s22
        %p522 = scmp.lt.s32.totalorder %s521, 3
        %s523 = scalar_select %p522, %s521, 3
        %s524 = smul.addr %s523, 4
        %s525 = scalar_lea.vmem %s7, %s524
      $region68: #{prompt_decoder_forward.16} parent=63 // pred_fallthru
        _
      // Predicated region
      $region69: #{prompt_decoder_forward.16} parent=63 // pred_check
        %p526 = pneg %p223
      $region70: #{prompt_decoder_forward.16} parent=63 // pred_check_branch
        %528 = sbr.rel (%p526) target = $region72
      $region71: #{prompt_decoder_forward.16} parent=63 // pred_region
        %s529 = smul.u32 2, %s22
        %p530 = scmp.lt.s32.totalorder %s529, 3
        %s531 = scalar_select %p530, %s529, 3
        %s532 = smul.addr %s531, 4
        %s533 = scalar_lea.vmem %s8, %s532
      $region72: #{prompt_decoder_forward.16} parent=63 // pred_fallthru
        _
      // Predicated region
      $region73: #{prompt_decoder_forward.16} parent=63 // pred_check
        %p534 = pneg %p249
      $region74: #{prompt_decoder_forward.16} parent=63 // pred_check_branch
        %536 = sbr.rel (%p534) target = $region76
      $region75: #{prompt_decoder_forward.16} parent=63 // pred_region
        %s537 = smul.u32 2, %s22
        %p538 = scmp.lt.s32.totalorder %s537, 3
        %s539 = scalar_select %p538, %s537, 3
        %s540 = smul.addr %s539, 4
        %s541 = scalar_lea.vmem %s9, %s540
      $region76: #{prompt_decoder_forward.16} parent=63 // pred_fallthru
        _
    $region64: #{prompt_decoder_forward.16} parent=5 // pred_fallthru
      _
  $region6: #{prompt_decoder_forward.16} parent=0 // loop_footer
    %s20 = sadd.s32 1, %s16
  $region7: #{prompt_decoder_forward.16} parent=0 // loop_footer_branch
    %15 = sbr.rel target = $region3
  $region8: #{prompt_decoder_forward.16} parent=0 // loop_exit
    _

// kernel: prompt_decoder_forward.18
$region0: #{prompt_decoder_forward.18}
  #allocation0 [shape = 'u32[]', space=smem, size = 0x4, offset = 0x4, fixed_abs, tag = 'smem constant byte address 0x4 - core index']
  #allocation1 [shape = 'u32[72,128]{1,0:T(1,128)}', space=vmem, size = 0x9000, scoped, tag = 'internal scratch']
  %s0 = inlined_call_operand.vmem [shape: bf16[32,32], index: 0, kind: input, shape index: {}]
  %s1 = inlined_call_operand.vmem [shape: bf16[32,32], index: 1, kind: input, shape index: {}]
  %s2 = inlined_call_operand.vmem [shape: f32[1,32], index: 2, kind: input, shape index: {}]
  %s3 = inlined_call_operand.vmem [shape: f32[32,32], index: 3, kind: input, shape index: {}]
  %s4 = inlined_call_operand.vmem [shape: f32[1,32], index: 4, kind: input, shape index: {}]
  %s5 = inlined_call_operand.vmem [shape: f32[1,32], index: 5, kind: input, shape index: {}]
  %s6 = inlined_call_operand.vmem [shape: f32[32,32], index: 6, kind: output, shape index: {}]
  %s7 = sld [smem:[#allocation0]]
  $region57: #{prompt_decoder_forward.18} parent=0
    _
  %s9 = ssub.s32 1, %s7
  %s10 = scalar_select 0, %s9, %s7
  loop: start=0, step=1, limit=4
  $region2: #{prompt_decoder_forward.18} parent=0 // loop_pre_header
    _
  $region3: #{prompt_decoder_forward.18} parent=0 // loop_header
    %s12 = sphi 0, %s16
    %p13 = scmp.ge.s32.totalorder %s12, 4
    %s22 = sphi 0, %s24
    %s25 = sphi 0, %s22
    %s26 = sphi 0, %s25
    %s42 = sphi 0, %s26
    %s46 = sphi 0, %s46
    %s48 = sphi 0, %s46
    %s49 = sphi 0, %s48
    %s63 = sphi 0, %s49
    %s67 = sphi 0, %s67
    %s69 = sphi 0, %s67
    %s70 = sphi 0, %s69
    %s84 = sphi 0, %s70
    %s90 = sphi 0, %s92
    %s93 = sphi 0, %s90
    %s94 = sphi 0, %s93
    %s110 = sphi 0, %s94
    %s114 = sphi 0, %s114
    %s116 = sphi 0, %s114
    %s117 = sphi 0, %s116
    %s131 = sphi 0, %s117
    %s135 = sphi 0, %s135
    %s137 = sphi 0, %s135
    %s138 = sphi 0, %s137
    %s152 = sphi 0, %s138
    %s158 = sphi 0, %s160
    %s161 = sphi 0, %s158
    %s162 = sphi 0, %s161
    %s178 = sphi 0, %s162
  $region4: #{prompt_decoder_forward.18} parent=0 // loop_header_branch
    %15 = sbr.rel (%p13) target = $region8
  $region5: #{prompt_decoder_forward.18} parent=0 // loop_body
    %s17 = ssub.s32 %s12, 1
    %s18 = ssub.s32 %s12, 2
    %s19 = sadd.s32 %s12, 1
    %s20 = ssub.s32 %s12, %s19
    %p21 = scmp.eq.s32.totalorder %s20, 0
    %s23 = sadd.s32 %s22, 1
    %s24 = scalar_select %p21, %s22, %s23
    %p27 = pneg %p21
    %p28 = scmp.eq.s32.totalorder %s12, 1
    %p29 = por %p27, %p28
    %p30 = scmp.ne.s32.totalorder %s22, %s25
    %p31 = scmp.eq.s32.totalorder %s12, 0
    %p32 = por %p30, %p31
    %p33 = scmp.ne.s32.totalorder %s22, %s25
    %p34 = scmp.eq.s32.totalorder %s17, 1
    %p35 = por %p33, %p34
    %p36 = scmp.ne.s32.totalorder %s25, %s26
    %p37 = scmp.eq.s32.totalorder %s17, 0
    %p38 = por %p36, %p37
    %p39 = scmp.ne.s32.totalorder %s25, %s26
    %p40 = scmp.eq.s32.totalorder %s18, 1
    %p41 = por %p39, %p40
    %p43 = scmp.ne.s32.totalorder %s26, %s42
    %p44 = scmp.eq.s32.totalorder %s18, 0
    %p45 = por %p43, %p44
    %s47 = sadd.s32 %s46, 1
    %p50 = scmp.eq.s32.totalorder %s12, 1
    %p51 = scmp.ne.s32.totalorder %s46, %s48
    %p52 = scmp.eq.s32.totalorder %s12, 0
    %p53 = por %p51, %p52
    %p54 = scmp.ne.s32.totalorder %s46, %s48
    %p55 = scmp.eq.s32.totalorder %s17, 1
    %p56 = por %p54, %p55
    %p57 = scmp.ne.s32.totalorder %s48, %s49
    %p58 = scmp.eq.s32.totalorder %s17, 0
    %p59 = por %p57, %p58
    %p60 = scmp.ne.s32.totalorder %s48, %s49
    %p61 = scmp.eq.s32.totalorder %s18, 1
    %p62 = por %p60, %p61
    %p64 = scmp.ne.s32.totalorder %s49, %s63
    %p65 = scmp.eq.s32.totalorder %s18, 0
    %p66 = por %p64, %p65
    %s68 = sadd.s32 %s67, 1
    %p71 = scmp.eq.s32.totalorder %s12, 1
    %p72 = scmp.ne.s32.totalorder %s67, %s69
    %p73 = scmp.eq.s32.totalorder %s12, 0
    %p74 = por %p72, %p73
    %p75 = scmp.ne.s32.totalorder %s67, %s69
    %p76 = scmp.eq.s32.totalorder %s17, 1
    %p77 = por %p75, %p76
    %p78 = scmp.ne.s32.totalorder %s69, %s70
    %p79 = scmp.eq.s32.totalorder %s17, 0
    %p80 = por %p78, %p79
    %p81 = scmp.ne.s32.totalorder %s69, %s70
    %p82 = scmp.eq.s32.totalorder %s18, 1
    %p83 = por %p81, %p82
    %p85 = scmp.ne.s32.totalorder %s70, %s84
    %p86 = scmp.eq.s32.totalorder %s18, 0
    %p87 = por %p85, %p86
    %s88 = ssub.s32 %s12, %s19
    %p89 = scmp.eq.s32.totalorder %s88, 0
    %s91 = sadd.s32 %s90, 1
    %s92 = scalar_select %p89, %s90, %s91
    %p95 = pneg %p89
    %p96 = scmp.eq.s32.totalorder %s12, 1
    %p97 = por %p95, %p96
    %p98 = scmp.ne.s32.totalorder %s90, %s93
    %p99 = scmp.eq.s32.totalorder %s12, 0
    %p100 = por %p98, %p99
    %p101 = scmp.ne.s32.totalorder %s90, %s93
    %p102 = scmp.eq.s32.totalorder %s17, 1
    %p103 = por %p101, %p102
    %p104 = scmp.ne.s32.totalorder %s93, %s94
    %p105 = scmp.eq.s32.totalorder %s17, 0
    %p106 = por %p104, %p105
    %p107 = scmp.ne.s32.totalorder %s93, %s94
    %p108 = scmp.eq.s32.totalorder %s18, 1
    %p109 = por %p107, %p108
    %p111 = scmp.ne.s32.totalorder %s94, %s110
    %p112 = scmp.eq.s32.totalorder %s18, 0
    %p113 = por %p111, %p112
    %s115 = sadd.s32 %s114, 1
    %p118 = scmp.eq.s32.totalorder %s12, 1
    %p119 = scmp.ne.s32.totalorder %s114, %s116
    %p120 = scmp.eq.s32.totalorder %s12, 0
    %p121 = por %p119, %p120
    %p122 = scmp.ne.s32.totalorder %s114, %s116
    %p123 = scmp.eq.s32.totalorder %s17, 1
    %p124 = por %p122, %p123
    %p125 = scmp.ne.s32.totalorder %s116, %s117
    %p126 = scmp.eq.s32.totalorder %s17, 0
    %p127 = por %p125, %p126
    %p128 = scmp.ne.s32.totalorder %s116, %s117
    %p129 = scmp.eq.s32.totalorder %s18, 1
    %p130 = por %p128, %p129
    %p132 = scmp.ne.s32.totalorder %s117, %s131
    %p133 = scmp.eq.s32.totalorder %s18, 0
    %p134 = por %p132, %p133
    %s136 = sadd.s32 %s135, 1
    %p139 = scmp.eq.s32.totalorder %s12, 1
    %p140 = scmp.ne.s32.totalorder %s135, %s137
    %p141 = scmp.eq.s32.totalorder %s12, 0
    %p142 = por %p140, %p141
    %p143 = scmp.ne.s32.totalorder %s135, %s137
    %p144 = scmp.eq.s32.totalorder %s17, 1
    %p145 = por %p143, %p144
    %p146 = scmp.ne.s32.totalorder %s137, %s138
    %p147 = scmp.eq.s32.totalorder %s17, 0
    %p148 = por %p146, %p147
    %p149 = scmp.ne.s32.totalorder %s137, %s138
    %p150 = scmp.eq.s32.totalorder %s18, 1
    %p151 = por %p149, %p150
    %p153 = scmp.ne.s32.totalorder %s138, %s152
    %p154 = scmp.eq.s32.totalorder %s18, 0
    %p155 = por %p153, %p154
    %s156 = ssub.s32 %s12, %s19
    %p157 = scmp.eq.s32.totalorder %s156, 0
    %s159 = sadd.s32 %s158, 1
    %s160 = scalar_select %p157, %s158, %s159
    %p163 = pneg %p157
    %p164 = scmp.eq.s32.totalorder %s12, 1
    %p165 = por %p163, %p164
    %p166 = scmp.ne.s32.totalorder %s158, %s161
    %p167 = scmp.eq.s32.totalorder %s12, 0
    %p168 = por %p166, %p167
    %p169 = scmp.ne.s32.totalorder %s158, %s161
    %p170 = scmp.eq.s32.totalorder %s17, 1
    %p171 = por %p169, %p170
    %p172 = scmp.ne.s32.totalorder %s161, %s162
    %p173 = scmp.eq.s32.totalorder %s17, 0
    %p174 = por %p172, %p173
    %p175 = scmp.ne.s32.totalorder %s161, %s162
    %p176 = scmp.eq.s32.totalorder %s18, 1
    %p177 = por %p175, %p176
    %p179 = scmp.ne.s32.totalorder %s162, %s178
    %p180 = scmp.eq.s32.totalorder %s18, 0
    %p181 = por %p179, %p180
    %p182 = scmp.le.s32.totalorder 1, %s12
    %p183 = scmp.lt.s32.totalorder %s12, 3
    %p184 = pnand %p182, %p183
    %p185 = pneg %p184
    // Predicated region
    $region9: #{prompt_decoder_forward.18} parent=5 // pred_check
      _
    $region10: #{prompt_decoder_forward.18} parent=5 // pred_check_branch
      %187 = sbr.rel (%p184) target = $region12
    $region11: #{prompt_decoder_forward.18} parent=5 // pred_region
      %s188 = ssub.s32 %s12, 1
      // Predicated region
      $region13: #{prompt_decoder_forward.18} parent=11 // pred_check
        %p189 = pneg %p59
      $region14: #{prompt_decoder_forward.18} parent=11 // pred_check_branch
        %191 = sbr.rel (%p189) target = $region16
      $region15: #{prompt_decoder_forward.18} parent=11 // pred_region
        _
      $region16: #{prompt_decoder_forward.18} parent=11 // pred_fallthru
        _
      // Predicated region
      $region17: #{prompt_decoder_forward.18} parent=11 // pred_check
        %p192 = pneg %p80
      $region18: #{prompt_decoder_forward.18} parent=11 // pred_check_branch
        %194 = sbr.rel (%p192) target = $region20
      $region19: #{prompt_decoder_forward.18} parent=11 // pred_region
        _
      $region20: #{prompt_decoder_forward.18} parent=11 // pred_fallthru
        _
      // Predicated region
      $region21: #{prompt_decoder_forward.18} parent=11 // pred_check
        %p195 = pneg %p127
      $region22: #{prompt_decoder_forward.18} parent=11 // pred_check_branch
        %197 = sbr.rel (%p195) target = $region24
      $region23: #{prompt_decoder_forward.18} parent=11 // pred_region
        _
      $region24: #{prompt_decoder_forward.18} parent=11 // pred_fallthru
        _
      // Predicated region
      $region25: #{prompt_decoder_forward.18} parent=11 // pred_check
        %p198 = pneg %p148
      $region26: #{prompt_decoder_forward.18} parent=11 // pred_check_branch
        %200 = sbr.rel (%p198) target = $region28
      $region27: #{prompt_decoder_forward.18} parent=11 // pred_region
        _
      $region28: #{prompt_decoder_forward.18} parent=11 // pred_fallthru
        _
    $region12: #{prompt_decoder_forward.18} parent=5 // pred_fallthru
      _
    %p201 = scmp.lt.s32.totalorder %s12, 2
    // Predicated region
    $region29: #{prompt_decoder_forward.18} parent=5 // pred_check
      %p202 = pneg %p201
    $region30: #{prompt_decoder_forward.18} parent=5 // pred_check_branch
      %204 = sbr.rel (%p202) target = $region32
    $region31: #{prompt_decoder_forward.18} parent=5 // pred_region
      // Predicated region
      $region33: #{prompt_decoder_forward.18} parent=31 // pred_check
        %p205 = pneg %p32
      $region34: #{prompt_decoder_forward.18} parent=31 // pred_check_branch
        %207 = sbr.rel (%p205) target = $region36
      $region35: #{prompt_decoder_forward.18} parent=31 // pred_region
        %s208 = smul.u32 2, %s12
        %p209 = scmp.lt.s32.totalorder %s208, 3
        %s210 = scalar_select %p209, %s208, 3
        %s211 = smul.addr %s210, 4
        %s212 = scalar_lea.vmem %s0, %s211
        %s213 = smul.u32 2, %s12
      $region36: #{prompt_decoder_forward.18} parent=31 // pred_fallthru
        _
      // Predicated region
      $region37: #{prompt_decoder_forward.18} parent=31 // pred_check
        %p214 = pneg %p100
      $region38: #{prompt_decoder_forward.18} parent=31 // pred_check_branch
        %216 = sbr.rel (%p214) target = $region40
      $region39: #{prompt_decoder_forward.18} parent=31 // pred_region
        %s217 = smul.u32 2, %s12
        %p218 = scmp.lt.s32.totalorder %s217, 3
        %s219 = scalar_select %p218, %s217, 3
        %s220 = smul.addr %s219, 8
        %s221 = scalar_lea.vmem %s3, %s220
        %s222 = smul.u32 2, %s12
      $region40: #{prompt_decoder_forward.18} parent=31 // pred_fallthru
        _
    $region32: #{prompt_decoder_forward.18} parent=5 // pred_fallthru
      _
    %p223 = scmp.le.s32.totalorder 1, %s12
    %p224 = scmp.lt.s32.totalorder %s12, 3
    %p225 = pnand %p223, %p224
    %p226 = pneg %p225
    // Predicated region
    $region41: #{prompt_decoder_forward.18} parent=5 // pred_check
      _
    $region42: #{prompt_decoder_forward.18} parent=5 // pred_check_branch
      %228 = sbr.rel (%p225) target = $region44
    $region43: #{prompt_decoder_forward.18} parent=5 // pred_region
      %s229 = ssub.s32 %s12, 1
      %s230 = smul.u32 2, %s17
      %p231 = scmp.lt.s32.totalorder %s230, 3
      %s232 = scalar_select %p231, %s230, 3
      %s233 = smul.addr %s232, 4
      %s234 = scalar_lea.vmem %s0, %s233
      %p235 = pneg %p38
      %p236 = pneg %p35
      %p237 = pneg %p59
      %p238 = pneg %p56
      %p239 = pneg %p80
      %p240 = pneg %p77
      %s241 = smul.u32 2, %s17
      %p242 = scmp.lt.s32.totalorder %s241, 3
      %s243 = scalar_select %p242, %s241, 3
      %s244 = smul.addr %s243, 8
      %s245 = scalar_lea.vmem %s3, %s244
      %p246 = pneg %p106
      %p247 = pneg %p103
      %p248 = pneg %p127
      %p249 = pneg %p124
      %p250 = pneg %p148
      %p251 = pneg %p145
      %p252 = pneg %p174
      %p253 = pneg %p171
      %s254 = smul.u32 2, %s17
      %p255 = scmp.lt.s32.totalorder %s254, 3
      %s256 = scalar_select %p255, %s254, 3
      %s257 = smul.addr %s256, 8
      %s258 = scalar_lea.vmem %s6, %s257
      %s259 = smul.u32 2, %s17
      %p260 = scmp.lt.s32.totalorder %s259, 3
      %s261 = scalar_select %p260, %s259, 3
      %s262 = smul.addr %s261, 4
      %s263 = scalar_lea.vmem %s0, %s262
      %s264 = smul.u32 2, %s17
      %s265 = smul.u32 2, %s17
      %p266 = scmp.lt.s32.totalorder %s265, 3
      %s267 = scalar_select %p266, %s265, 3
      %s268 = smul.addr %s267, 8
      %s269 = scalar_lea.vmem %s3, %s268
      %s270 = smul.u32 2, %s17
      %s271 = smul.u32 2, %s17
      %p272 = scmp.lt.s32.totalorder %s271, 3
      %s273 = scalar_select %p272, %s271, 3
      %s274 = smul.addr %s273, 8
      %s275 = scalar_lea.vmem %s6, %s274
      %s276 = smul.u32 2, %s17
      %v278 = vld [vmem:[%s263] sm:$0xf]
      %v279 = vld [vmem:[%s263 + $0x4] sm:$0xf]
      %v280 = vld [vmem:[%s1] sm:$0xf]
      %v281 = vld [vmem:[%s1 + $0x4] sm:$0xf]
      %v282 = vld [vmem:[%s1 + $0x8] sm:$0xf]
      %v283 = vld [vmem:[%s1 + $0xc] sm:$0xf]
      %v284 = vld [vmem:[%s2] sm:$0x1]
      %v286 = vperm.slane %v284, 0
      %v290 = vunpack.c.l.b16 %v278
      %v291 = vunpack.c.l.b16 %v279
      %v292 = vpack.c.b16 %v291, %v290
      %v297 = vunpack.c.l.b16 %v280
      %v298 = vunpack.c.l.b16 %v281
      %v299 = vunpack.c.l.b16 %v282
      %v300 = vunpack.c.l.b16 %v283
      %v301 = vpack.c.b16 %v298, %v297
      %v302 = vpack.c.b16 %v300, %v299
      %vm305 = vcmask 261120
      %v307 = vsel %vm305, %v292, 0
      %309 = vmatpush.bf16.msra.mxu0 0
      %310 = vmatpush.bf16.msra.mxu0 0
      %311 = vmatpush.bf16.msra.mxu0 0
      %312 = vmatpush.bf16.msra.mxu0 0
      %313 = vmatpush.bf16.msra.mxu0 0
      %314 = vmatpush.bf16.msra.mxu0 0
      %315 = vmatpush.bf16.msra.mxu0 %v302
      %316 = vmatpush.bf16.msra.mxu0 %v301
      %317 = vmatmul.bf16.gmra.mxu0 %v307
      %v318 = vpop.f32.mrf.mxu0
      %v319 = vadd.f32 %v286, %v318
      %v320 = vpop.f32.mrf.mxu0
      %v321 = vadd.f32 %v286, %v320
      %322 = vdwg.mxu0
      %v323 = vld [vmem:[%s269] sm:$0xff]
      %v324 = vld [vmem:[%s269 + $0x8] sm:$0xff]
      %v325 = vadd.f32 %v319, %v323
      %v326 = vadd.f32 %v321, %v324
      %v327 = vsel %vm305, %v325, 0.0
      %328 = vadd.xlane.f32.xlu0 %v327
      %v329 = vpop.xlane.xlu0 %328
      %v330 = vsel %vm305, %v326, 0.0
      %331 = vadd.xlane.f32.xlu0 %v330
      %v332 = vpop.xlane.xlu0 %331
      %v333 = vrcp.pop 32.0
      %v334 = vmul.f32 32.0, %v333
      %v335 = vsub.f32 1.0, %v334
      %v336 = vmul.f32 %v333, %v335
      %v337 = vadd.f32 %v333, %v336
      %vm338 = vweird.f32 %v333
      %v339 = vsel %vm338, %v333, %v337
      %v340 = vmul.f32 %v329, %v339
      %v341 = vmul.f32 %v332, %v339
      %v342 = vsub.f32 %v325, %v340
      %v343 = vsub.f32 %v326, %v341
      %v344 = vmul.f32 %v342, %v342
      %v345 = vmul.f32 %v343, %v343
      %v346 = vsel %vm305, %v344, 0.0
      %347 = vadd.xlane.f32.xlu0 %v346
      %v348 = vpop.xlane.xlu0 %347
      %v349 = vsel %vm305, %v345, 0.0
      %350 = vadd.xlane.f32.xlu0 %v349
      %v351 = vpop.xlane.xlu0 %350
      %v352 = vmul.f32 %v348, %v339
      %v353 = vmul.f32 %v351, %v339
      %v354 = vadd.f32 %v352, 1e-05
      %v355 = vadd.f32 %v353, 1e-05
      %v356 = vrsqrt.pop %v354
      %v357 = vmul.f32 %v356, %v354
      %v358 = vmul.f32 %v357, %v356
      %v359 = vmul.f32 0.5, %v358
      %v360 = vsub.f32 1.5, %v359
      %v361 = vmul.f32 %v356, %v360
      %vm362 = vweird.f32 %v354
      %vm363 = vweird.f32 %v356
      %vm364 = vmor %vm362, %vm363
      %v365 = vsel %vm364, %v356, %v361
      %v366 = vrsqrt.pop %v355
      %v367 = vmul.f32 %v366, %v355
      %v368 = vmul.f32 %v367, %v366
      %v369 = vmul.f32 0.5, %v368
      %v370 = vsub.f32 1.5, %v369
      %v371 = vmul.f32 %v366, %v370
      %vm372 = vweird.f32 %v355
      %vm373 = vweird.f32 %v366
      %vm374 = vmor %vm372, %vm373
      %v375 = vsel %vm374, %v366, %v371
      %v376 = vmul.f32 %v342, %v365
      %v377 = vmul.f32 %v343, %v375
      %v378 = vld [vmem:[%s4] sm:$0x1]
      %v380 = vperm.slane %v378, 0
      %v382 = vmul.f32 %v376, %v380
      %v383 = vmul.f32 %v377, %v380
      %v384 = vld [vmem:[%s5] sm:$0x1]
      %v386 = vperm.slane %v384, 0
      %v388 = vadd.f32 %v382, %v386
      %v389 = vadd.f32 %v383, %v386
      %390 = vst.msk [vmem:[%s275] sm:$0xff] %vm305, %v388
      %391 = vst.msk [vmem:[%s275 + $0x8] sm:$0xff] %vm305, %v389
      %s392 = smul.u32 2, %s17
      %p393 = scmp.lt.s32.totalorder %s392, 3
      %s394 = scalar_select %p393, %s392, 3
      %s395 = smul.addr %s394, 8
      %s396 = scalar_lea.vmem %s6, %s395
      // Predicated region
      $region45: #{prompt_decoder_forward.18} parent=43 // pred_check
        %p397 = pneg %p171
      $region46: #{prompt_decoder_forward.18} parent=43 // pred_check_branch
        %399 = sbr.rel (%p397) target = $region48
      $region47: #{prompt_decoder_forward.18} parent=43 // pred_region
        %s400 = smul.u32 2, %s17
      $region48: #{prompt_decoder_forward.18} parent=43 // pred_fallthru
        _
    $region44: #{prompt_decoder_forward.18} parent=5 // pred_fallthru
      _
    %p401 = scmp.le.s32.totalorder 2, %s12
    // Predicated region
    $region49: #{prompt_decoder_forward.18} parent=5 // pred_check
      %p402 = pneg %p401
    $region50: #{prompt_decoder_forward.18} parent=5 // pred_check_branch
      %404 = sbr.rel (%p402) target = $region52
    $region51: #{prompt_decoder_forward.18} parent=5 // pred_region
      %s405 = ssub.s32 %s12, 2
      // Predicated region
      $region53: #{prompt_decoder_forward.18} parent=51 // pred_check
        %p406 = pneg %p177
      $region54: #{prompt_decoder_forward.18} parent=51 // pred_check_branch
        %408 = sbr.rel (%p406) target = $region56
      $region55: #{prompt_decoder_forward.18} parent=51 // pred_region
        %s409 = smul.u32 2, %s18
        %p410 = scmp.lt.s32.totalorder %s409, 3
        %s411 = scalar_select %p410, %s409, 3
        %s412 = smul.addr %s411, 8
        %s413 = scalar_lea.vmem %s6, %s412
      $region56: #{prompt_decoder_forward.18} parent=51 // pred_fallthru
        _
    $region52: #{prompt_decoder_forward.18} parent=5 // pred_fallthru
      _
  $region6: #{prompt_decoder_forward.18} parent=0 // loop_footer
    %s16 = sadd.s32 1, %s12
  $region7: #{prompt_decoder_forward.18} parent=0 // loop_footer_branch
    %11 = sbr.rel target = $region3
  $region8: #{prompt_decoder_forward.18} parent=0 // loop_exit
    _

// kernel: prompt_decoder_forward.17
$region0: #{prompt_decoder_forward.17}
  #allocation0 [shape = 'u32[]', space=smem, size = 0x4, offset = 0x4, fixed_abs, tag = 'smem constant byte address 0x4 - core index']
  #allocation1 [shape = 'u32[72,128]{1,0:T(1,128)}', space=vmem, size = 0x9000, scoped, tag = 'internal scratch']
  %s0 = inlined_call_operand.vmem [shape: bf16[2,16,32], index: 0, kind: input, shape index: {}]
  %s1 = inlined_call_operand.vmem [shape: bf16[2,16,32], index: 1, kind: input, shape index: {}]
  %s2 = inlined_call_operand.vmem [shape: bf16[2,16,32], index: 2, kind: input, shape index: {}]
  %s3 = inlined_call_operand.vmem [shape: bf16[2,16,32], index: 3, kind: output, shape index: {}]
  %s4 = sld [smem:[#allocation0]]
  $region45: #{prompt_decoder_forward.17} parent=0
    _
  %s6 = ssub.s32 1, %s4
  %s7 = scalar_select 0, %s6, %s4
  loop: start=0, step=1, limit=4
  $region2: #{prompt_decoder_forward.17} parent=0 // loop_pre_header
    _
  $region3: #{prompt_decoder_forward.17} parent=0 // loop_header
    %s9 = sphi 0, %s13
    %p10 = scmp.ge.s32.totalorder %s9, 4
    %s16 = sphi 0, %s28
    %s17 = sphi 0, %s24
    %s18 = sphi 0, %s16
    %s19 = sphi 0, %s17
    %s20 = sphi 0, %s18
    %s21 = sphi 0, %s19
    %s33 = sphi 0, %s35
    %s36 = sphi 0, %s33
    %s37 = sphi 0, %s36
    %s53 = sphi 0, %s37
    %s59 = sphi 0, %s61
    %s62 = sphi 0, %s59
    %s63 = sphi 0, %s62
    %s79 = sphi 0, %s63
    %s85 = sphi 0, %s87
    %s88 = sphi 0, %s85
    %s89 = sphi 0, %s88
    %s105 = sphi 0, %s89
    %s113 = sphi 0, %s115
    %s116 = sphi 0, %s113
    %s117 = sphi 0, %s116
    %s133 = sphi 0, %s117
  $region4: #{prompt_decoder_forward.17} parent=0 // loop_header_branch
    %12 = sbr.rel (%p10) target = $region8
  $region5: #{prompt_decoder_forward.17} parent=0 // loop_body
    %s14 = ssub.s32 %s9, 1
    %s15 = ssub.s32 %s9, 2
    %s22 = sadd.s32 1, %s17
    %p23 = scmp.ge.s32.totalorder %s22, 1
    %s24 = scalar_select %p23, 0, %s22
    %s25 = sadd.s32 1, %s16
    %s26 = scalar_select %p23, %s25, %s16
    %p27 = scmp.ge.s32.totalorder %s26, 2
    %s28 = scalar_select %p27, 0, %s26
    %s29 = ssub.s32 %s16, %s28
    %s30 = ssub.s32 %s17, %s24
    %s31 = sor.u32 %s29, %s30
    %p32 = scmp.eq.s32.totalorder %s31, 0
    %s34 = sadd.s32 %s33, 1
    %s35 = scalar_select %p32, %s33, %s34
    %p38 = pneg %p32
    %p39 = scmp.eq.s32.totalorder %s9, 1
    %p40 = por %p38, %p39
    %p41 = scmp.ne.s32.totalorder %s33, %s36
    %p42 = scmp.eq.s32.totalorder %s9, 0
    %p43 = por %p41, %p42
    %p44 = scmp.ne.s32.totalorder %s33, %s36
    %p45 = scmp.eq.s32.totalorder %s14, 1
    %p46 = por %p44, %p45
    %p47 = scmp.ne.s32.totalorder %s36, %s37
    %p48 = scmp.eq.s32.totalorder %s14, 0
    %p49 = por %p47, %p48
    %p50 = scmp.ne.s32.totalorder %s36, %s37
    %p51 = scmp.eq.s32.totalorder %s15, 1
    %p52 = por %p50, %p51
    %p54 = scmp.ne.s32.totalorder %s37, %s53
    %p55 = scmp.eq.s32.totalorder %s15, 0
    %p56 = por %p54, %p55
    %s57 = ssub.s32 %s16, %s28
    %p58 = scmp.eq.s32.totalorder %s57, 0
    %s60 = sadd.s32 %s59, 1
    %s61 = scalar_select %p58, %s59, %s60
    %p64 = pneg %p58
    %p65 = scmp.eq.s32.totalorder %s9, 1
    %p66 = por %p64, %p65
    %p67 = scmp.ne.s32.totalorder %s59, %s62
    %p68 = scmp.eq.s32.totalorder %s9, 0
    %p69 = por %p67, %p68
    %p70 = scmp.ne.s32.totalorder %s59, %s62
    %p71 = scmp.eq.s32.totalorder %s14, 1
    %p72 = por %p70, %p71
    %p73 = scmp.ne.s32.totalorder %s62, %s63
    %p74 = scmp.eq.s32.totalorder %s14, 0
    %p75 = por %p73, %p74
    %p76 = scmp.ne.s32.totalorder %s62, %s63
    %p77 = scmp.eq.s32.totalorder %s15, 1
    %p78 = por %p76, %p77
    %p80 = scmp.ne.s32.totalorder %s63, %s79
    %p81 = scmp.eq.s32.totalorder %s15, 0
    %p82 = por %p80, %p81
    %s83 = ssub.s32 %s16, %s28
    %p84 = scmp.eq.s32.totalorder %s83, 0
    %s86 = sadd.s32 %s85, 1
    %s87 = scalar_select %p84, %s85, %s86
    %p90 = pneg %p84
    %p91 = scmp.eq.s32.totalorder %s9, 1
    %p92 = por %p90, %p91
    %p93 = scmp.ne.s32.totalorder %s85, %s88
    %p94 = scmp.eq.s32.totalorder %s9, 0
    %p95 = por %p93, %p94
    %p96 = scmp.ne.s32.totalorder %s85, %s88
    %p97 = scmp.eq.s32.totalorder %s14, 1
    %p98 = por %p96, %p97
    %p99 = scmp.ne.s32.totalorder %s88, %s89
    %p100 = scmp.eq.s32.totalorder %s14, 0
    %p101 = por %p99, %p100
    %p102 = scmp.ne.s32.totalorder %s88, %s89
    %p103 = scmp.eq.s32.totalorder %s15, 1
    %p104 = por %p102, %p103
    %p106 = scmp.ne.s32.totalorder %s89, %s105
    %p107 = scmp.eq.s32.totalorder %s15, 0
    %p108 = por %p106, %p107
    %s109 = ssub.s32 %s16, %s28
    %s110 = ssub.s32 %s17, %s24
    %s111 = sor.u32 %s109, %s110
    %p112 = scmp.eq.s32.totalorder %s111, 0
    %s114 = sadd.s32 %s113, 1
    %s115 = scalar_select %p112, %s113, %s114
    %p118 = pneg %p112
    %p119 = scmp.eq.s32.totalorder %s9, 1
    %p120 = por %p118, %p119
    %p121 = scmp.ne.s32.totalorder %s113, %s116
    %p122 = scmp.eq.s32.totalorder %s9, 0
    %p123 = por %p121, %p122
    %p124 = scmp.ne.s32.totalorder %s113, %s116
    %p125 = scmp.eq.s32.totalorder %s14, 1
    %p126 = por %p124, %p125
    %p127 = scmp.ne.s32.totalorder %s116, %s117
    %p128 = scmp.eq.s32.totalorder %s14, 0
    %p129 = por %p127, %p128
    %p130 = scmp.ne.s32.totalorder %s116, %s117
    %p131 = scmp.eq.s32.totalorder %s15, 1
    %p132 = por %p130, %p131
    %p134 = scmp.ne.s32.totalorder %s117, %s133
    %p135 = scmp.eq.s32.totalorder %s15, 0
    %p136 = por %p134, %p135
    %p137 = scmp.le.s32.totalorder 1, %s9
    %p138 = scmp.lt.s32.totalorder %s9, 3
    %p139 = pnand %p137, %p138
    %p140 = pneg %p139
    // Predicated region
    $region9: #{prompt_decoder_forward.17} parent=5 // pred_check
      _
    $region10: #{prompt_decoder_forward.17} parent=5 // pred_check_branch
      %142 = sbr.rel (%p139) target = $region12
    $region11: #{prompt_decoder_forward.17} parent=5 // pred_region
      %s143 = ssub.s32 %s9, 1
    $region12: #{prompt_decoder_forward.17} parent=5 // pred_fallthru
      _
    %p144 = scmp.lt.s32.totalorder %s9, 2
    // Predicated region
    $region13: #{prompt_decoder_forward.17} parent=5 // pred_check
      %p145 = pneg %p144
    $region14: #{prompt_decoder_forward.17} parent=5 // pred_check_branch
      %147 = sbr.rel (%p145) target = $region16
    $region15: #{prompt_decoder_forward.17} parent=5 // pred_region
      // Predicated region
      $region17: #{prompt_decoder_forward.17} parent=15 // pred_check
        %p148 = pneg %p43
      $region18: #{prompt_decoder_forward.17} parent=15 // pred_check_branch
        %150 = sbr.rel (%p148) target = $region20
      $region19: #{prompt_decoder_forward.17} parent=15 // pred_region
        %s151 = smul.u32 2, %s17
        %p152 = scmp.lt.s32.totalorder %s16, 1
        %s153 = scalar_select %p152, %s16, 1
        %p154 = scmp.lt.s32.totalorder %s151, 1
        %s155 = scalar_select %p154, %s151, 1
        %s156 = smul.addr %s153, 2
        %s157 = sadd.s32 %s155, %s156
        %s158 = smul.addr %s157, 4
        %s159 = scalar_lea.vmem %s0, %s158
        %s160 = smul.u32 2, %s17
      $region20: #{prompt_decoder_forward.17} parent=15 // pred_fallthru
        _
      // Predicated region
      $region21: #{prompt_decoder_forward.17} parent=15 // pred_check
        %p161 = pneg %p69
      $region22: #{prompt_decoder_forward.17} parent=15 // pred_check_branch
        %163 = sbr.rel (%p161) target = $region24
      $region23: #{prompt_decoder_forward.17} parent=15 // pred_region
        %p164 = scmp.lt.s32.totalorder %s16, 1
        %s165 = scalar_select %p164, %s16, 1
        %s166 = smul.addr %s165, 2
        %s167 = smul.addr %s166, 4
        %s168 = scalar_lea.vmem %s1, %s167
      $region24: #{prompt_decoder_forward.17} parent=15 // pred_fallthru
        _
      // Predicated region
      $region25: #{prompt_decoder_forward.17} parent=15 // pred_check
        %p169 = pneg %p95
      $region26: #{prompt_decoder_forward.17} parent=15 // pred_check_branch
        %171 = sbr.rel (%p169) target = $region28
      $region27: #{prompt_decoder_forward.17} parent=15 // pred_region
        %p172 = scmp.lt.s32.totalorder %s16, 1
        %s173 = scalar_select %p172, %s16, 1
        %s174 = smul.addr %s173, 2
        %s175 = smul.addr %s174, 4
        %s176 = scalar_lea.vmem %s2, %s175
      $region28: #{prompt_decoder_forward.17} parent=15 // pred_fallthru
        _
    $region16: #{prompt_decoder_forward.17} parent=5 // pred_fallthru
      _
    %p177 = scmp.le.s32.totalorder 1, %s9
    %p178 = scmp.lt.s32.totalorder %s9, 3
    %p179 = pnand %p177, %p178
    %p180 = pneg %p179
    // Predicated region
    $region29: #{prompt_decoder_forward.17} parent=5 // pred_check
      _
    $region30: #{prompt_decoder_forward.17} parent=5 // pred_check_branch
      %182 = sbr.rel (%p179) target = $region32
    $region31: #{prompt_decoder_forward.17} parent=5 // pred_region
      %s183 = ssub.s32 %s9, 1
      %s184 = smul.u32 2, %s19
      %p185 = scmp.lt.s32.totalorder %s18, 1
      %s186 = scalar_select %p185, %s18, 1
      %p187 = scmp.lt.s32.totalorder %s184, 1
      %s188 = scalar_select %p187, %s184, 1
      %s189 = smul.addr %s186, 2
      %s190 = sadd.s32 %s188, %s189
      %s191 = smul.addr %s190, 4
      %s192 = scalar_lea.vmem %s0, %s191
      %p193 = pneg %p49
      %p194 = pneg %p46
      %p195 = scmp.lt.s32.totalorder %s18, 1
      %s196 = scalar_select %p195, %s18, 1
      %s197 = smul.addr %s196, 2
      %s198 = smul.addr %s197, 4
      %s199 = scalar_lea.vmem %s1, %s198
      %p200 = pneg %p75
      %p201 = pneg %p72
      %p202 = scmp.lt.s32.totalorder %s18, 1
      %s203 = scalar_select %p202, %s18, 1
      %s204 = smul.addr %s203, 2
      %s205 = smul.addr %s204, 4
      %s206 = scalar_lea.vmem %s2, %s205
      %p207 = pneg %p101
      %p208 = pneg %p98
      %p209 = pneg %p129
      %p210 = pneg %p126
      %s211 = smul.u32 2, %s19
      %p212 = scmp.lt.s32.totalorder %s18, 1
      %s213 = scalar_select %p212, %s18, 1
      %p214 = scmp.lt.s32.totalorder %s211, 1
      %s215 = scalar_select %p214, %s211, 1
      %s216 = smul.addr %s213, 2
      %s217 = sadd.s32 %s215, %s216
      %s218 = smul.addr %s217, 4
      %s219 = scalar_lea.vmem %s3, %s218
      %s220 = smul.u32 2, %s19
      %p221 = scmp.lt.s32.totalorder %s18, 1
      %s222 = scalar_select %p221, %s18, 1
      %p223 = scmp.lt.s32.totalorder %s220, 1
      %s224 = scalar_select %p223, %s220, 1
      %s225 = smul.addr %s222, 2
      %s226 = sadd.s32 %s224, %s225
      %s227 = smul.addr %s226, 4
      %s228 = scalar_lea.vmem %s0, %s227
      %s229 = smul.u32 2, %s19
      %p230 = scmp.lt.s32.totalorder %s18, 1
      %s231 = scalar_select %p230, %s18, 1
      %s232 = smul.addr %s231, 2
      %s233 = smul.addr %s232, 4
      %s234 = scalar_lea.vmem %s1, %s233
      %p235 = scmp.lt.s32.totalorder %s18, 1
      %s236 = scalar_select %p235, %s18, 1
      %s237 = smul.addr %s236, 2
      %s238 = smul.addr %s237, 4
      %s239 = scalar_lea.vmem %s2, %s238
      %s240 = smul.u32 2, %s19
      %p241 = scmp.lt.s32.totalorder %s18, 1
      %s242 = scalar_select %p241, %s18, 1
      %p243 = scmp.lt.s32.totalorder %s240, 1
      %s244 = scalar_select %p243, %s240, 1
      %s245 = smul.addr %s242, 2
      %s246 = sadd.s32 %s244, %s245
      %s247 = smul.addr %s246, 4
      %s248 = scalar_lea.vmem %s3, %s247
      %s249 = smul.u32 2, %s19
      %v250 = vld [vmem:[%s228] sm:$0xf]
      %v251 = vld [vmem:[%s228 + $0x4] sm:$0xf]
      %v252 = vunpack.c.l.bf16 %v250
      %v253 = vunpack.c.l.bf16 %v251
      %v254 = vld [vmem:[%s234] sm:$0xf]
      %v255 = vld [vmem:[%s234 + $0x4] sm:$0xf]
      %v256 = vunpack.c.l.bf16 %v254
      %v257 = vunpack.c.l.bf16 %v255
      %v258 = vld [vmem:[%s239] sm:$0xf]
      %v259 = vld [vmem:[%s239 + $0x4] sm:$0xf]
      %v260 = vunpack.c.l.bf16 %v258
      %v261 = vunpack.c.l.bf16 %v259
      %264 = vrot.lane.b32.xlu0 %v252, 120
      %v265 = vpop.permute.xlu0 %264
      %266 = vrot.lane.b32.xlu0 %v253, 120
      %v267 = vpop.permute.xlu0 %266
      %270 = vrot.lane.b32.xlu0 %v252, 112
      %v271 = vpop.permute.xlu0 %270
      %272 = vrot.lane.b32.xlu0 %v253, 112
      %v273 = vpop.permute.xlu0 %272
      %276 = vrot.lane.b32.xlu0 %v252, 104
      %v277 = vpop.permute.xlu0 %276
      %278 = vrot.lane.b32.xlu0 %v253, 104
      %v279 = vpop.permute.xlu0 %278
      %v282 = vrot.slane %v271, 4
      %vm283 = vcmask 1047556
      %v284 = vsel %vm283, %v282, %v252
      %v285 = vrot.slane %v252, 4
      %v286 = vsel %vm283, %v271, %v285
      %v288 = vunpack.c.l.s4 1983009808
      %v289 = vunpack.c.0.s8 %v288
      %v290 = vperm.slane %v284, %v289
      %v292 = vunpack.c.l.s4 1983009808
      %v293 = vunpack.c.0.s8 %v292
      %v294 = vperm.slane %v286, %v293
      %v295 = vrot.slane %v277, 4
      %v296 = vsel %vm283, %v295, %v265
      %v297 = vrot.slane %v265, 4
      %v298 = vsel %vm283, %v277, %v297
      %v300 = vunpack.c.l.s4 1983009808
      %v301 = vunpack.c.0.s8 %v300
      %v302 = vperm.slane %v296, %v301
      %v304 = vunpack.c.l.s4 1983009808
      %v305 = vunpack.c.0.s8 %v304
      %v306 = vperm.slane %v298, %v305
      %v307 = vrot.slane %v302, 4
      %v308 = vsel %vm283, %v307, %v290
      %v309 = vrot.slane %v290, 4
      %v310 = vsel %vm283, %v302, %v309
      %v312 = vunpack.c.l.s4 1934713408
      %v313 = vunpack.c.0.s8 %v312
      %v314 = vperm.slane %v308, %v313
      %v316 = vunpack.c.l.s4 1934713408
      %v317 = vunpack.c.0.s8 %v316
      %v318 = vperm.slane %v310, %v317
      %v319 = vrot.slane %v306, 4
      %v320 = vsel %vm283, %v319, %v294
      %v321 = vrot.slane %v294, 4
      %v322 = vsel %vm283, %v306, %v321
      %v324 = vunpack.c.l.s4 1934713408
      %v325 = vunpack.c.0.s8 %v324
      %v326 = vperm.slane %v320, %v325
      %v328 = vunpack.c.l.s4 1934713408
      %v329 = vunpack.c.0.s8 %v328
      %v330 = vperm.slane %v322, %v329
      %v331 = vrot.slane %v314, 4
      %v332 = vsel %vm283, 0.0, %v331
      %v333 = vrot.slane %v318, 4
      %v334 = vsel %vm283, 0.0, %v333
      %v335 = vrot.slane %v326, 4
      %v336 = vsel %vm283, 0.0, %v335
      %v337 = vrot.slane %v330, 4
      %v338 = vsel %vm283, 0.0, %v337
      %v339 = vrot.slane %v273, 4
      %v340 = vsel %vm283, %v339, %v253
      %v341 = vrot.slane %v253, 4
      %v342 = vsel %vm283, %v273, %v341
      %v344 = vunpack.c.l.s4 1983009808
      %v345 = vunpack.c.0.s8 %v344
      %v346 = vperm.slane %v340, %v345
      %v348 = vunpack.c.l.s4 1983009808
      %v349 = vunpack.c.0.s8 %v348
      %v350 = vperm.slane %v342, %v349
      %v351 = vrot.slane %v279, 4
      %v352 = vsel %vm283, %v351, %v267
      %v353 = vrot.slane %v267, 4
      %v354 = vsel %vm283, %v279, %v353
      %v356 = vunpack.c.l.s4 1983009808
      %v357 = vunpack.c.0.s8 %v356
      %v358 = vperm.slane %v352, %v357
      %v360 = vunpack.c.l.s4 1983009808
      %v361 = vunpack.c.0.s8 %v360
      %v362 = vperm.slane %v354, %v361
      %v363 = vrot.slane %v358, 4
      %v364 = vsel %vm283, %v363, %v346
      %v365 = vrot.slane %v346, 4
      %v366 = vsel %vm283, %v358, %v365
      %v368 = vunpack.c.l.s4 1934713408
      %v369 = vunpack.c.0.s8 %v368
      %v370 = vperm.slane %v364, %v369
      %v372 = vunpack.c.l.s4 1934713408
      %v373 = vunpack.c.0.s8 %v372
      %v374 = vperm.slane %v366, %v373
      %v375 = vrot.slane %v362, 4
      %v376 = vsel %vm283, %v375, %v350
      %v377 = vrot.slane %v350, 4
      %v378 = vsel %vm283, %v362, %v377
      %v380 = vunpack.c.l.s4 1934713408
      %v381 = vunpack.c.0.s8 %v380
      %v382 = vperm.slane %v376, %v381
      %v384 = vunpack.c.l.s4 1934713408
      %v385 = vunpack.c.0.s8 %v384
      %v386 = vperm.slane %v378, %v385
      %v387 = vrot.slane %v370, 4
      %v388 = vsel %vm283, 0.0, %v387
      %v389 = vrot.slane %v374, 4
      %v390 = vsel %vm283, 0.0, %v389
      %v391 = vrot.slane %v382, 4
      %v392 = vsel %vm283, 0.0, %v391
      %v393 = vrot.slane %v386, 4
      %v394 = vsel %vm283, 0.0, %v393
      %v395 = vsel %vm283, %v333, %v314
      %v397 = vunpack.c.l.s4 1983009808
      %v398 = vunpack.c.0.s8 %v397
      %v399 = vperm.slane %v395, %v398
      %v400 = vrot.slane %v334, 4
      %v401 = vsel %vm283, %v400, %v332
      %v403 = vunpack.c.l.s4 1983009808
      %v404 = vunpack.c.0.s8 %v403
      %v405 = vperm.slane %v401, %v404
      %v406 = vsel %vm283, %v337, %v326
      %v408 = vunpack.c.l.s4 1983009808
      %v409 = vunpack.c.0.s8 %v408
      %v410 = vperm.slane %v406, %v409
      %v411 = vrot.slane %v338, 4
      %v412 = vsel %vm283, %v411, %v336
      %v414 = vunpack.c.l.s4 1983009808
      %v415 = vunpack.c.0.s8 %v414
      %v416 = vperm.slane %v412, %v415
      %v417 = vrot.slane %v405, 4
      %v418 = vsel %vm283, %v417, %v399
      %v419 = vrot.slane %v399, 4
      %v420 = vsel %vm283, %v405, %v419
      %v422 = vunpack.c.l.s4 1934713408
      %v423 = vunpack.c.0.s8 %v422
      %v424 = vperm.slane %v418, %v423
      %v426 = vunpack.c.l.s4 1934713408
      %v427 = vunpack.c.0.s8 %v426
      %v428 = vperm.slane %v420, %v427
      %v429 = vrot.slane %v416, 4
      %v430 = vsel %vm283, %v429, %v410
      %v431 = vrot.slane %v410, 4
      %v432 = vsel %vm283, %v416, %v431
      %v434 = vunpack.c.l.s4 1934713408
      %v435 = vunpack.c.0.s8 %v434
      %v436 = vperm.slane %v430, %v435
      %v438 = vunpack.c.l.s4 1934713408
      %v439 = vunpack.c.0.s8 %v438
      %v440 = vperm.slane %v432, %v439
      %v441 = vrot.slane %v436, 4
      %v442 = vsel %vm283, %v441, %v424
      %v443 = vrot.slane %v424, 4
      %v444 = vsel %vm283, %v436, %v443
      %v445 = vrot.slane %v440, 4
      %v446 = vsel %vm283, %v445, %v428
      %v447 = vrot.slane %v428, 4
      %v448 = vsel %vm283, %v440, %v447
      %v449 = vsel %vm283, %v389, %v370
      %v451 = vunpack.c.l.s4 1983009808
      %v452 = vunpack.c.0.s8 %v451
      %v453 = vperm.slane %v449, %v452
      %v454 = vrot.slane %v390, 4
      %v455 = vsel %vm283, %v454, %v388
      %v457 = vunpack.c.l.s4 1983009808
      %v458 = vunpack.c.0.s8 %v457
      %v459 = vperm.slane %v455, %v458
      %v460 = vsel %vm283, %v393, %v382
      %v462 = vunpack.c.l.s4 1983009808
      %v463 = vunpack.c.0.s8 %v462
      %v464 = vperm.slane %v460, %v463
      %v465 = vrot.slane %v394, 4
      %v466 = vsel %vm283, %v465, %v392
      %v468 = vunpack.c.l.s4 1983009808
      %v469 = vunpack.c.0.s8 %v468
      %v470 = vperm.slane %v466, %v469
      %v471 = vrot.slane %v459, 4
      %v472 = vsel %vm283, %v471, %v453
      %v473 = vrot.slane %v453, 4
      %v474 = vsel %vm283, %v459, %v473
      %v476 = vunpack.c.l.s4 1934713408
      %v477 = vunpack.c.0.s8 %v476
      %v478 = vperm.slane %v472, %v477
      %v480 = vunpack.c.l.s4 1934713408
      %v481 = vunpack.c.0.s8 %v480
      %v482 = vperm.slane %v474, %v481
      %v483 = vrot.slane %v470, 4
      %v484 = vsel %vm283, %v483, %v464
      %v485 = vrot.slane %v464, 4
      %v486 = vsel %vm283, %v470, %v485
      %v488 = vunpack.c.l.s4 1934713408
      %v489 = vunpack.c.0.s8 %v488
      %v490 = vperm.slane %v484, %v489
      %v492 = vunpack.c.l.s4 1934713408
      %v493 = vunpack.c.0.s8 %v492
      %v494 = vperm.slane %v486, %v493
      %v495 = vrot.slane %v490, 4
      %v496 = vsel %vm283, %v495, %v478
      %v497 = vrot.slane %v478, 4
      %v498 = vsel %vm283, %v490, %v497
      %v499 = vrot.slane %v494, 4
      %v500 = vsel %vm283, %v499, %v482
      %v501 = vrot.slane %v482, 4
      %v502 = vsel %vm283, %v494, %v501
      %505 = vrot.lane.b32.xlu0 %v256, 120
      %v506 = vpop.permute.xlu0 %505
      %507 = vrot.lane.b32.xlu0 %v257, 120
      %v508 = vpop.permute.xlu0 %507
      %511 = vrot.lane.b32.xlu0 %v256, 112
      %v512 = vpop.permute.xlu0 %511
      %513 = vrot.lane.b32.xlu0 %v257, 112
      %v514 = vpop.permute.xlu0 %513
      %517 = vrot.lane.b32.xlu0 %v256, 104
      %v518 = vpop.permute.xlu0 %517
      %519 = vrot.lane.b32.xlu0 %v257, 104
      %v520 = vpop.permute.xlu0 %519
      %v523 = vrot.slane %v512, 4
      %v524 = vsel %vm283, %v523, %v256
      %v525 = vrot.slane %v256, 4
      %v526 = vsel %vm283, %v512, %v525
      %v528 = vunpack.c.l.s4 1983009808
      %v529 = vunpack.c.0.s8 %v528
      %v530 = vperm.slane %v524, %v529
      %v532 = vunpack.c.l.s4 1983009808
      %v533 = vunpack.c.0.s8 %v532
      %v534 = vperm.slane %v526, %v533
      %v535 = vrot.slane %v518, 4
      %v536 = vsel %vm283, %v535, %v506
      %v537 = vrot.slane %v506, 4
      %v538 = vsel %vm283, %v518, %v537
      %v540 = vunpack.c.l.s4 1983009808
      %v541 = vunpack.c.0.s8 %v540
      %v542 = vperm.slane %v536, %v541
      %v544 = vunpack.c.l.s4 1983009808
      %v545 = vunpack.c.0.s8 %v544
      %v546 = vperm.slane %v538, %v545
      %v547 = vrot.slane %v542, 4
      %v548 = vsel %vm283, %v547, %v530
      %v549 = vrot.slane %v530, 4
      %v550 = vsel %vm283, %v542, %v549
      %v552 = vunpack.c.l.s4 1934713408
      %v553 = vunpack.c.0.s8 %v552
      %v554 = vperm.slane %v548, %v553
      %v556 = vunpack.c.l.s4 1934713408
      %v557 = vunpack.c.0.s8 %v556
      %v558 = vperm.slane %v550, %v557
      %v559 = vrot.slane %v546, 4
      %v560 = vsel %vm283, %v559, %v534
      %v561 = vrot.slane %v534, 4
      %v562 = vsel %vm283, %v546, %v561
      %v564 = vunpack.c.l.s4 1934713408
      %v565 = vunpack.c.0.s8 %v564
      %v566 = vperm.slane %v560, %v565
      %v568 = vunpack.c.l.s4 1934713408
      %v569 = vunpack.c.0.s8 %v568
      %v570 = vperm.slane %v562, %v569
      %v571 = vrot.slane %v554, 4
      %v572 = vsel %vm283, 0.0, %v571
      %v573 = vrot.slane %v558, 4
      %v574 = vsel %vm283, 0.0, %v573
      %v575 = vrot.slane %v566, 4
      %v576 = vsel %vm283, 0.0, %v575
      %v577 = vrot.slane %v570, 4
      %v578 = vsel %vm283, 0.0, %v577
      %v579 = vrot.slane %v514, 4
      %v580 = vsel %vm283, %v579, %v257
      %v581 = vrot.slane %v257, 4
      %v582 = vsel %vm283, %v514, %v581
      %v584 = vunpack.c.l.s4 1983009808
      %v585 = vunpack.c.0.s8 %v584
      %v586 = vperm.slane %v580, %v585
      %v588 = vunpack.c.l.s4 1983009808
      %v589 = vunpack.c.0.s8 %v588
      %v590 = vperm.slane %v582, %v589
      %v591 = vrot.slane %v520, 4
      %v592 = vsel %vm283, %v591, %v508
      %v593 = vrot.slane %v508, 4
      %v594 = vsel %vm283, %v520, %v593
      %v596 = vunpack.c.l.s4 1983009808
      %v597 = vunpack.c.0.s8 %v596
      %v598 = vperm.slane %v592, %v597
      %v600 = vunpack.c.l.s4 1983009808
      %v601 = vunpack.c.0.s8 %v600
      %v602 = vperm.slane %v594, %v601
      %v603 = vrot.slane %v598, 4
      %v604 = vsel %vm283, %v603, %v586
      %v605 = vrot.slane %v586, 4
      %v606 = vsel %vm283, %v598, %v605
      %v608 = vunpack.c.l.s4 1934713408
      %v609 = vunpack.c.0.s8 %v608
      %v610 = vperm.slane %v604, %v609
      %v612 = vunpack.c.l.s4 1934713408
      %v613 = vunpack.c.0.s8 %v612
      %v614 = vperm.slane %v606, %v613
      %v615 = vrot.slane %v602, 4
      %v616 = vsel %vm283, %v615, %v590
      %v617 = vrot.slane %v590, 4
      %v618 = vsel %vm283, %v602, %v617
      %v620 = vunpack.c.l.s4 1934713408
      %v621 = vunpack.c.0.s8 %v620
      %v622 = vperm.slane %v616, %v621
      %v624 = vunpack.c.l.s4 1934713408
      %v625 = vunpack.c.0.s8 %v624
      %v626 = vperm.slane %v618, %v625
      %v627 = vrot.slane %v610, 4
      %v628 = vsel %vm283, 0.0, %v627
      %v629 = vrot.slane %v614, 4
      %v630 = vsel %vm283, 0.0, %v629
      %v631 = vrot.slane %v622, 4
      %v632 = vsel %vm283, 0.0, %v631
      %v633 = vrot.slane %v626, 4
      %v634 = vsel %vm283, 0.0, %v633
      %v635 = vsel %vm283, %v573, %v554
      %v637 = vunpack.c.l.s4 1983009808
      %v638 = vunpack.c.0.s8 %v637
      %v639 = vperm.slane %v635, %v638
      %v640 = vrot.slane %v574, 4
      %v641 = vsel %vm283, %v640, %v572
      %v643 = vunpack.c.l.s4 1983009808
      %v644 = vunpack.c.0.s8 %v643
      %v645 = vperm.slane %v641, %v644
      %v646 = vsel %vm283, %v577, %v566
      %v648 = vunpack.c.l.s4 1983009808
      %v649 = vunpack.c.0.s8 %v648
      %v650 = vperm.slane %v646, %v649
      %v651 = vrot.slane %v578, 4
      %v652 = vsel %vm283, %v651, %v576
      %v654 = vunpack.c.l.s4 1983009808
      %v655 = vunpack.c.0.s8 %v654
      %v656 = vperm.slane %v652, %v655
      %v657 = vrot.slane %v645, 4
      %v658 = vsel %vm283, %v657, %v639
      %v659 = vrot.slane %v639, 4
      %v660 = vsel %vm283, %v645, %v659
      %v662 = vunpack.c.l.s4 1934713408
      %v663 = vunpack.c.0.s8 %v662
      %v664 = vperm.slane %v658, %v663
      %v666 = vunpack.c.l.s4 1934713408
      %v667 = vunpack.c.0.s8 %v666
      %v668 = vperm.slane %v660, %v667
      %v669 = vrot.slane %v656, 4
      %v670 = vsel %vm283, %v669, %v650
      %v671 = vrot.slane %v650, 4
      %v672 = vsel %vm283, %v656, %v671
      %v674 = vunpack.c.l.s4 1934713408
      %v675 = vunpack.c.0.s8 %v674
      %v676 = vperm.slane %v670, %v675
      %v678 = vunpack.c.l.s4 1934713408
      %v679 = vunpack.c.0.s8 %v678
      %v680 = vperm.slane %v672, %v679
      %v681 = vrot.slane %v676, 4
      %v682 = vsel %vm283, %v681, %v664
      %v683 = vrot.slane %v664, 4
      %v684 = vsel %vm283, %v676, %v683
      %v685 = vrot.slane %v680, 4
      %v686 = vsel %vm283, %v685, %v668
      %v687 = vrot.slane %v668, 4
      %v688 = vsel %vm283, %v680, %v687
      %v689 = vsel %vm283, %v629, %v610
      %v691 = vunpack.c.l.s4 1983009808
      %v692 = vunpack.c.0.s8 %v691
      %v693 = vperm.slane %v689, %v692
      %v694 = vrot.slane %v630, 4
      %v695 = vsel %vm283, %v694, %v628
      %v697 = vunpack.c.l.s4 1983009808
      %v698 = vunpack.c.0.s8 %v697
      %v699 = vperm.slane %v695, %v698
      %v700 = vsel %vm283, %v633, %v622
      %v702 = vunpack.c.l.s4 1983009808
      %v703 = vunpack.c.0.s8 %v702
      %v704 = vperm.slane %v700, %v703
      %v705 = vrot.slane %v634, 4
      %v706 = vsel %vm283, %v705, %v632
      %v708 = vunpack.c.l.s4 1983009808
      %v709 = vunpack.c.0.s8 %v708
      %v710 = vperm.slane %v706, %v709
      %v711 = vrot.slane %v699, 4
      %v712 = vsel %vm283, %v711, %v693
      %v713 = vrot.slane %v693, 4
      %v714 = vsel %vm283, %v699, %v713
      %v716 = vunpack.c.l.s4 1934713408
      %v717 = vunpack.c.0.s8 %v716
      %v718 = vperm.slane %v712, %v717
      %v720 = vunpack.c.l.s4 1934713408
      %v721 = vunpack.c.0.s8 %v720
      %v722 = vperm.slane %v714, %v721
      %v723 = vrot.slane %v710, 4
      %v724 = vsel %vm283, %v723, %v704
      %v725 = vrot.slane %v704, 4
      %v726 = vsel %vm283, %v710, %v725
      %v728 = vunpack.c.l.s4 1934713408
      %v729 = vunpack.c.0.s8 %v728
      %v730 = vperm.slane %v724, %v729
      %v732 = vunpack.c.l.s4 1934713408
      %v733 = vunpack.c.0.s8 %v732
      %v734 = vperm.slane %v726, %v733
      %v735 = vrot.slane %v730, 4
      %v736 = vsel %vm283, %v735, %v718
      %v737 = vrot.slane %v718, 4
      %v738 = vsel %vm283, %v730, %v737
      %v739 = vrot.slane %v734, 4
      %v740 = vsel %vm283, %v739, %v722
      %v741 = vrot.slane %v722, 4
      %v742 = vsel %vm283, %v734, %v741
      %745 = vrot.lane.b32.xlu0 %v260, 120
      %v746 = vpop.permute.xlu0 %745
      %747 = vrot.lane.b32.xlu0 %v261, 120
      %v748 = vpop.permute.xlu0 %747
      %751 = vrot.lane.b32.xlu0 %v260, 112
      %v752 = vpop.permute.xlu0 %751
      %753 = vrot.lane.b32.xlu0 %v261, 112
      %v754 = vpop.permute.xlu0 %753
      %757 = vrot.lane.b32.xlu0 %v260, 104
      %v758 = vpop.permute.xlu0 %757
      %759 = vrot.lane.b32.xlu0 %v261, 104
      %v760 = vpop.permute.xlu0 %759
      %v763 = vrot.slane %v752, 4
      %v764 = vsel %vm283, %v763, %v260
      %v765 = vrot.slane %v260, 4
      %v766 = vsel %vm283, %v752, %v765
      %v768 = vunpack.c.l.s4 1983009808
      %v769 = vunpack.c.0.s8 %v768
      %v770 = vperm.slane %v764, %v769
      %v772 = vunpack.c.l.s4 1983009808
      %v773 = vunpack.c.0.s8 %v772
      %v774 = vperm.slane %v766, %v773
      %v775 = vrot.slane %v758, 4
      %v776 = vsel %vm283, %v775, %v746
      %v777 = vrot.slane %v746, 4
      %v778 = vsel %vm283, %v758, %v777
      %v780 = vunpack.c.l.s4 1983009808
      %v781 = vunpack.c.0.s8 %v780
      %v782 = vperm.slane %v776, %v781
      %v784 = vunpack.c.l.s4 1983009808
      %v785 = vunpack.c.0.s8 %v784
      %v786 = vperm.slane %v778, %v785
      %v787 = vrot.slane %v782, 4
      %v788 = vsel %vm283, %v787, %v770
      %v789 = vrot.slane %v770, 4
      %v790 = vsel %vm283, %v782, %v789
      %v792 = vunpack.c.l.s4 1934713408
      %v793 = vunpack.c.0.s8 %v792
      %v794 = vperm.slane %v788, %v793
      %v796 = vunpack.c.l.s4 1934713408
      %v797 = vunpack.c.0.s8 %v796
      %v798 = vperm.slane %v790, %v797
      %v799 = vrot.slane %v786, 4
      %v800 = vsel %vm283, %v799, %v774
      %v801 = vrot.slane %v774, 4
      %v802 = vsel %vm283, %v786, %v801
      %v804 = vunpack.c.l.s4 1934713408
      %v805 = vunpack.c.0.s8 %v804
      %v806 = vperm.slane %v800, %v805
      %v808 = vunpack.c.l.s4 1934713408
      %v809 = vunpack.c.0.s8 %v808
      %v810 = vperm.slane %v802, %v809
      %v811 = vrot.slane %v794, 4
      %v812 = vsel %vm283, 0.0, %v811
      %v813 = vrot.slane %v798, 4
      %v814 = vsel %vm283, 0.0, %v813
      %v815 = vrot.slane %v806, 4
      %v816 = vsel %vm283, 0.0, %v815
      %v817 = vrot.slane %v810, 4
      %v818 = vsel %vm283, 0.0, %v817
      %v819 = vrot.slane %v754, 4
      %v820 = vsel %vm283, %v819, %v261
      %v821 = vrot.slane %v261, 4
      %v822 = vsel %vm283, %v754, %v821
      %v824 = vunpack.c.l.s4 1983009808
      %v825 = vunpack.c.0.s8 %v824
      %v826 = vperm.slane %v820, %v825
      %v828 = vunpack.c.l.s4 1983009808
      %v829 = vunpack.c.0.s8 %v828
      %v830 = vperm.slane %v822, %v829
      %v831 = vrot.slane %v760, 4
      %v832 = vsel %vm283, %v831, %v748
      %v833 = vrot.slane %v748, 4
      %v834 = vsel %vm283, %v760, %v833
      %v836 = vunpack.c.l.s4 1983009808
      %v837 = vunpack.c.0.s8 %v836
      %v838 = vperm.slane %v832, %v837
      %v840 = vunpack.c.l.s4 1983009808
      %v841 = vunpack.c.0.s8 %v840
      %v842 = vperm.slane %v834, %v841
      %v843 = vrot.slane %v838, 4
      %v844 = vsel %vm283, %v843, %v826
      %v845 = vrot.slane %v826, 4
      %v846 = vsel %vm283, %v838, %v845
      %v848 = vunpack.c.l.s4 1934713408
      %v849 = vunpack.c.0.s8 %v848
      %v850 = vperm.slane %v844, %v849
      %v852 = vunpack.c.l.s4 1934713408
      %v853 = vunpack.c.0.s8 %v852
      %v854 = vperm.slane %v846, %v853
      %v855 = vrot.slane %v842, 4
      %v856 = vsel %vm283, %v855, %v830
      %v857 = vrot.slane %v830, 4
      %v858 = vsel %vm283, %v842, %v857
      %v860 = vunpack.c.l.s4 1934713408
      %v861 = vunpack.c.0.s8 %v860
      %v862 = vperm.slane %v856, %v861
      %v864 = vunpack.c.l.s4 1934713408
      %v865 = vunpack.c.0.s8 %v864
      %v866 = vperm.slane %v858, %v865
      %v867 = vrot.slane %v850, 4
      %v868 = vsel %vm283, 0.0, %v867
      %v869 = vrot.slane %v854, 4
      %v870 = vsel %vm283, 0.0, %v869
      %v871 = vrot.slane %v862, 4
      %v872 = vsel %vm283, 0.0, %v871
      %v873 = vrot.slane %v866, 4
      %v874 = vsel %vm283, 0.0, %v873
      %v875 = vsel %vm283, %v813, %v794
      %v877 = vunpack.c.l.s4 1983009808
      %v878 = vunpack.c.0.s8 %v877
      %v879 = vperm.slane %v875, %v878
      %v880 = vrot.slane %v814, 4
      %v881 = vsel %vm283, %v880, %v812
      %v883 = vunpack.c.l.s4 1983009808
      %v884 = vunpack.c.0.s8 %v883
      %v885 = vperm.slane %v881, %v884
      %v886 = vsel %vm283, %v817, %v806
      %v888 = vunpack.c.l.s4 1983009808
      %v889 = vunpack.c.0.s8 %v888
      %v890 = vperm.slane %v886, %v889
      %v891 = vrot.slane %v818, 4
      %v892 = vsel %vm283, %v891, %v816
      %v894 = vunpack.c.l.s4 1983009808
      %v895 = vunpack.c.0.s8 %v894
      %v896 = vperm.slane %v892, %v895
      %v897 = vrot.slane %v885, 4
      %v898 = vsel %vm283, %v897, %v879
      %v899 = vrot.slane %v879, 4
      %v900 = vsel %vm283, %v885, %v899
      %v902 = vunpack.c.l.s4 1934713408
      %v903 = vunpack.c.0.s8 %v902
      %v904 = vperm.slane %v898, %v903
      %v906 = vunpack.c.l.s4 1934713408
      %v907 = vunpack.c.0.s8 %v906
      %v908 = vperm.slane %v900, %v907
      %v909 = vrot.slane %v896, 4
      %v910 = vsel %vm283, %v909, %v890
      %v911 = vrot.slane %v890, 4
      %v912 = vsel %vm283, %v896, %v911
      %v914 = vunpack.c.l.s4 1934713408
      %v915 = vunpack.c.0.s8 %v914
      %v916 = vperm.slane %v910, %v915
      %v918 = vunpack.c.l.s4 1934713408
      %v919 = vunpack.c.0.s8 %v918
      %v920 = vperm.slane %v912, %v919
      %v921 = vrot.slane %v916, 4
      %v922 = vsel %vm283, %v921, %v904
      %v923 = vrot.slane %v904, 4
      %v924 = vsel %vm283, %v916, %v923
      %v925 = vrot.slane %v920, 4
      %v926 = vsel %vm283, %v925, %v908
      %v927 = vrot.slane %v908, 4
      %v928 = vsel %vm283, %v920, %v927
      %v929 = vsel %vm283, %v869, %v850
      %v931 = vunpack.c.l.s4 1983009808
      %v932 = vunpack.c.0.s8 %v931
      %v933 = vperm.slane %v929, %v932
      %v934 = vrot.slane %v870, 4
      %v935 = vsel %vm283, %v934, %v868
      %v937 = vunpack.c.l.s4 1983009808
      %v938 = vunpack.c.0.s8 %v937
      %v939 = vperm.slane %v935, %v938
      %v940 = vsel %vm283, %v873, %v862
      %v942 = vunpack.c.l.s4 1983009808
      %v943 = vunpack.c.0.s8 %v942
      %v944 = vperm.slane %v940, %v943
      %v945 = vrot.slane %v874, 4
      %v946 = vsel %vm283, %v945, %v872
      %v948 = vunpack.c.l.s4 1983009808
      %v949 = vunpack.c.0.s8 %v948
      %v950 = vperm.slane %v946, %v949
      %v951 = vrot.slane %v939, 4
      %v952 = vsel %vm283, %v951, %v933
      %v953 = vrot.slane %v933, 4
      %v954 = vsel %vm283, %v939, %v953
      %v956 = vunpack.c.l.s4 1934713408
      %v957 = vunpack.c.0.s8 %v956
      %v958 = vperm.slane %v952, %v957
      %v960 = vunpack.c.l.s4 1934713408
      %v961 = vunpack.c.0.s8 %v960
      %v962 = vperm.slane %v954, %v961
      %v963 = vrot.slane %v950, 4
      %v964 = vsel %vm283, %v963, %v944
      %v965 = vrot.slane %v944, 4
      %v966 = vsel %vm283, %v950, %v965
      %v968 = vunpack.c.l.s4 1934713408
      %v969 = vunpack.c.0.s8 %v968
      %v970 = vperm.slane %v964, %v969
      %v972 = vunpack.c.l.s4 1934713408
      %v973 = vunpack.c.0.s8 %v972
      %v974 = vperm.slane %v966, %v973
      %v975 = vrot.slane %v970, 4
      %v976 = vsel %vm283, %v975, %v958
      %v977 = vrot.slane %v958, 4
      %v978 = vsel %vm283, %v970, %v977
      %v979 = vrot.slane %v974, 4
      %v980 = vsel %vm283, %v979, %v962
      %v981 = vrot.slane %v962, 4
      %v982 = vsel %vm283, %v974, %v981
      %vm983 = vcmask 64512
      %v985 = vsel %vm983, %v442, 0
      %v988 = vsel %vm983, %v496, 0
      %v991 = vsel %vm983, %v682, 0
      %v994 = vsel %vm983, %v736, 0
      %996 = vmatpush.xpose.msra.mxu0 0.0
      %997 = vmatpush.xpose.msra.mxu0 0.0
      %998 = vmatpush.xpose.msra.mxu0 0.0
      %999 = vmatpush.xpose.msra.mxu0 0.0
      %1000 = vmatpush.xpose.msra.mxu0 0.0
      %1001 = vmatpush.xpose.msra.mxu0 0.0
      %1002 = vmatpush.xpose.msra.mxu0 0.0
      %1003 = vmatpush.xpose.msra.mxu0 0.0
      %1004 = vmatpush.xpose.msra.mxu0 0.0
      %1005 = vmatpush.xpose.msra.mxu0 0.0
      %1006 = vmatpush.xpose.msra.mxu0 0.0
      %1007 = vmatpush.xpose.msra.mxu0 0.0
      %1008 = vmatpush.xpose.msra.mxu0 0.0
      %1009 = vmatpush.xpose.msra.mxu0 0.0
      %1010 = vmatpush.xpose.msra.mxu0 %v994
      %1011 = vmatpush.xpose.msra.mxu0 %v991
      %1012 = vmatmul.f32.gmra.mxu0 %v985
      %v1013 = vpop.f32.mrf.mxu0
      %v1014 = vadd.f32 0.0, %v1013
      %1015 = vmatmul.f32.gmra.mxu0 %v988
      %v1016 = vpop.f32.mrf.mxu0
      %v1017 = vadd.f32 0.0, %v1016
      %1018 = vdwg.mxu0
      %v1020 = vsel %vm983, %v444, 0
      %v1023 = vsel %vm983, %v498, 0
      %v1026 = vsel %vm983, %v684, 0
      %v1029 = vsel %vm983, %v738, 0
      %1031 = vmatpush.xpose.msra.mxu0 0.0
      %1032 = vmatpush.xpose.msra.mxu0 0.0
      %1033 = vmatpush.xpose.msra.mxu0 0.0
      %1034 = vmatpush.xpose.msra.mxu0 0.0
      %1035 = vmatpush.xpose.msra.mxu0 0.0
      %1036 = vmatpush.xpose.msra.mxu0 0.0
      %1037 = vmatpush.xpose.msra.mxu0 0.0
      %1038 = vmatpush.xpose.msra.mxu0 0.0
      %1039 = vmatpush.xpose.msra.mxu0 0.0
      %1040 = vmatpush.xpose.msra.mxu0 0.0
      %1041 = vmatpush.xpose.msra.mxu0 0.0
      %1042 = vmatpush.xpose.msra.mxu0 0.0
      %1043 = vmatpush.xpose.msra.mxu0 0.0
      %1044 = vmatpush.xpose.msra.mxu0 0.0
      %1045 = vmatpush.xpose.msra.mxu0 %v1029
      %1046 = vmatpush.xpose.msra.mxu0 %v1026
      %1047 = vmatmul.f32.gmra.mxu0 %v1020
      %v1048 = vpop.f32.mrf.mxu0
      %v1049 = vadd.f32 0.0, %v1048
      %1050 = vmatmul.f32.gmra.mxu0 %v1023
      %v1051 = vpop.f32.mrf.mxu0
      %v1052 = vadd.f32 0.0, %v1051
      %1053 = vdwg.mxu0
      %v1055 = vsel %vm983, %v446, 0
      %v1058 = vsel %vm983, %v500, 0
      %v1061 = vsel %vm983, %v686, 0
      %v1064 = vsel %vm983, %v740, 0
      %1066 = vmatpush.xpose.msra.mxu0 0.0
      %1067 = vmatpush.xpose.msra.mxu0 0.0
      %1068 = vmatpush.xpose.msra.mxu0 0.0
      %1069 = vmatpush.xpose.msra.mxu0 0.0
      %1070 = vmatpush.xpose.msra.mxu0 0.0
      %1071 = vmatpush.xpose.msra.mxu0 0.0
      %1072 = vmatpush.xpose.msra.mxu0 0.0
      %1073 = vmatpush.xpose.msra.mxu0 0.0
      %1074 = vmatpush.xpose.msra.mxu0 0.0
      %1075 = vmatpush.xpose.msra.mxu0 0.0
      %1076 = vmatpush.xpose.msra.mxu0 0.0
      %1077 = vmatpush.xpose.msra.mxu0 0.0
      %1078 = vmatpush.xpose.msra.mxu0 0.0
      %1079 = vmatpush.xpose.msra.mxu0 0.0
      %1080 = vmatpush.xpose.msra.mxu0 %v1064
      %1081 = vmatpush.xpose.msra.mxu0 %v1061
      %1082 = vmatmul.f32.gmra.mxu0 %v1055
      %v1083 = vpop.f32.mrf.mxu0
      %v1084 = vadd.f32 0.0, %v1083
      %1085 = vmatmul.f32.gmra.mxu0 %v1058
      %v1086 = vpop.f32.mrf.mxu0
      %v1087 = vadd.f32 0.0, %v1086
      %1088 = vdwg.mxu0
      %v1090 = vsel %vm983, %v448, 0
      %v1093 = vsel %vm983, %v502, 0
      %v1096 = vsel %vm983, %v688, 0
      %v1099 = vsel %vm983, %v742, 0
      %1101 = vmatpush.xpose.msra.mxu0 0.0
      %1102 = vmatpush.xpose.msra.mxu0 0.0
      %1103 = vmatpush.xpose.msra.mxu0 0.0
      %1104 = vmatpush.xpose.msra.mxu0 0.0
      %1105 = vmatpush.xpose.msra.mxu0 0.0
      %1106 = vmatpush.xpose.msra.mxu0 0.0
      %1107 = vmatpush.xpose.msra.mxu0 0.0
      %1108 = vmatpush.xpose.msra.mxu0 0.0
      %1109 = vmatpush.xpose.msra.mxu0 0.0
      %1110 = vmatpush.xpose.msra.mxu0 0.0
      %1111 = vmatpush.xpose.msra.mxu0 0.0
      %1112 = vmatpush.xpose.msra.mxu0 0.0
      %1113 = vmatpush.xpose.msra.mxu0 0.0
      %1114 = vmatpush.xpose.msra.mxu0 0.0
      %1115 = vmatpush.xpose.msra.mxu0 %v1099
      %1116 = vmatpush.xpose.msra.mxu0 %v1096
      %1117 = vmatmul.f32.gmra.mxu0 %v1090
      %v1118 = vpop.f32.mrf.mxu0
      %v1119 = vadd.f32 0.0, %v1118
      %1120 = vmatmul.f32.gmra.mxu0 %v1093
      %v1121 = vpop.f32.mrf.mxu0
      %v1122 = vadd.f32 0.0, %v1121
      %1123 = vdwg.mxu0
      %v1124 = vmul.f32 %v1014, 0.35355338
      %v1125 = vmul.f32 %v1017, 0.35355338
      %v1126 = vmul.f32 %v1049, 0.35355338
      %v1127 = vmul.f32 %v1052, 0.35355338
      %v1128 = vmul.f32 %v1084, 0.35355338
      %v1129 = vmul.f32 %v1087, 0.35355338
      %v1130 = vmul.f32 %v1119, 0.35355338
      %v1131 = vmul.f32 %v1122, 0.35355338
      %vm1132 = vcmask 130048
      %v1133 = vsel %vm1132, %v1124, -inf
      %1134 = vmax.xlane.f32.xlu0 %v1133
      %v1135 = vpop.xlane.xlu0 %1134
      %v1136 = vsel %vm1132, %v1125, -inf
      %1137 = vmax.xlane.f32.xlu0 %v1136
      %v1138 = vpop.xlane.xlu0 %1137
      %v1139 = vsel %vm1132, %v1126, -inf
      %1140 = vmax.xlane.f32.xlu0 %v1139
      %v1141 = vpop.xlane.xlu0 %1140
      %v1142 = vsel %vm1132, %v1127, -inf
      %1143 = vmax.xlane.f32.xlu0 %v1142
      %v1144 = vpop.xlane.xlu0 %1143
      %v1145 = vsel %vm1132, %v1128, -inf
      %1146 = vmax.xlane.f32.xlu0 %v1145
      %v1147 = vpop.xlane.xlu0 %1146
      %v1148 = vsel %vm1132, %v1129, -inf
      %1149 = vmax.xlane.f32.xlu0 %v1148
      %v1150 = vpop.xlane.xlu0 %1149
      %v1151 = vsel %vm1132, %v1130, -inf
      %1152 = vmax.xlane.f32.xlu0 %v1151
      %v1153 = vpop.xlane.xlu0 %1152
      %v1154 = vsel %vm1132, %v1131, -inf
      %1155 = vmax.xlane.f32.xlu0 %v1154
      %v1156 = vpop.xlane.xlu0 %1155
      %v1157 = vsub.f32 %v1124, %v1135
      %v1158 = vsub.f32 %v1125, %v1138
      %v1159 = vsub.f32 %v1126, %v1141
      %v1160 = vsub.f32 %v1127, %v1144
      %v1161 = vsub.f32 %v1128, %v1147
      %v1162 = vsub.f32 %v1129, %v1150
      %v1163 = vsub.f32 %v1130, %v1153
      %v1164 = vsub.f32 %v1131, %v1156
      %v1165 = vmul.f32 %v1157, 1.442695
      %v1166 = vpow.pop %v1165
      %v1167 = vmul.f32 %v1158, 1.442695
      %v1168 = vpow.pop %v1167
      %v1169 = vmul.f32 %v1159, 1.442695
      %v1170 = vpow.pop %v1169
      %v1171 = vmul.f32 %v1160, 1.442695
      %v1172 = vpow.pop %v1171
      %v1173 = vmul.f32 %v1161, 1.442695
      %v1174 = vpow.pop %v1173
      %v1175 = vmul.f32 %v1162, 1.442695
      %v1176 = vpow.pop %v1175
      %v1177 = vmul.f32 %v1163, 1.442695
      %v1178 = vpow.pop %v1177
      %v1179 = vmul.f32 %v1164, 1.442695
      %v1180 = vpow.pop %v1179
      %v1181 = vsel %vm1132, %v1166, 0.0
      %1182 = vadd.xlane.f32.xlu0 %v1181
      %v1183 = vpop.xlane.xlu0 %1182
      %v1184 = vsel %vm1132, %v1168, 0.0
      %1185 = vadd.xlane.f32.xlu0 %v1184
      %v1186 = vpop.xlane.xlu0 %1185
      %v1187 = vsel %vm1132, %v1170, 0.0
      %1188 = vadd.xlane.f32.xlu0 %v1187
      %v1189 = vpop.xlane.xlu0 %1188
      %v1190 = vsel %vm1132, %v1172, 0.0
      %1191 = vadd.xlane.f32.xlu0 %v1190
      %v1192 = vpop.xlane.xlu0 %1191
      %v1193 = vsel %vm1132, %v1174, 0.0
      %1194 = vadd.xlane.f32.xlu0 %v1193
      %v1195 = vpop.xlane.xlu0 %1194
      %v1196 = vsel %vm1132, %v1176, 0.0
      %1197 = vadd.xlane.f32.xlu0 %v1196
      %v1198 = vpop.xlane.xlu0 %1197
      %v1199 = vsel %vm1132, %v1178, 0.0
      %1200 = vadd.xlane.f32.xlu0 %v1199
      %v1201 = vpop.xlane.xlu0 %1200
      %v1202 = vsel %vm1132, %v1180, 0.0
      %1203 = vadd.xlane.f32.xlu0 %v1202
      %v1204 = vpop.xlane.xlu0 %1203
      %v1205 = vrcp.pop %v1183
      %v1206 = vrcp.pop %v1186
      %v1207 = vrcp.pop %v1189
      %v1208 = vrcp.pop %v1192
      %v1209 = vrcp.pop %v1195
      %v1210 = vrcp.pop %v1198
      %v1211 = vrcp.pop %v1201
      %v1212 = vrcp.pop %v1204
      %v1213 = vmul.f32 %v1166, %v1205
      %v1214 = vmul.f32 %v1168, %v1206
      %v1215 = vmul.f32 %v1170, %v1207
      %v1216 = vmul.f32 %v1172, %v1208
      %v1217 = vmul.f32 %v1174, %v1209
      %v1218 = vmul.f32 %v1176, %v1210
      %v1219 = vmul.f32 %v1178, %v1211
      %v1220 = vmul.f32 %v1180, %v1212
      %v1222 = vsel %vm1132, %v1213, 0
      %v1225 = vsel %vm1132, %v1214, 0
      %1227 = vmatpush.msra.mxu0 0.0
      %1228 = vmatpush.msra.mxu0 0.0
      %1229 = vmatpush.msra.mxu0 0.0
      %1230 = vmatpush.msra.mxu0 0.0
      %1231 = vmatpush.msra.mxu0 0.0
      %1232 = vmatpush.msra.mxu0 0.0
      %1233 = vmatpush.msra.mxu0 0.0
      %1234 = vmatpush.msra.mxu0 0.0
      %1235 = vmatpush.msra.mxu0 0.0
      %1236 = vmatpush.msra.mxu0 0.0
      %1237 = vmatpush.msra.mxu0 0.0
      %1238 = vmatpush.msra.mxu0 0.0
      %1239 = vmatpush.msra.mxu0 0.0
      %1240 = vmatpush.msra.mxu0 0.0
      %1241 = vmatpush.msra.mxu0 %v976
      %1242 = vmatpush.msra.mxu0 %v922
      %1243 = vmatmul.f32.gmra.mxu0 %v1222
      %v1244 = vpop.f32.mrf.mxu0
      %v1245 = vadd.f32 0.0, %v1244
      %1246 = vmatmul.f32.gmra.mxu0 %v1225
      %v1247 = vpop.f32.mrf.mxu0
      %v1248 = vadd.f32 0.0, %v1247
      %1249 = vdwg.mxu0
      %v1251 = vsel %vm1132, %v1215, 0
      %v1254 = vsel %vm1132, %v1216, 0
      %1256 = vmatpush.msra.mxu0 0.0
      %1257 = vmatpush.msra.mxu0 0.0
      %1258 = vmatpush.msra.mxu0 0.0
      %1259 = vmatpush.msra.mxu0 0.0
      %1260 = vmatpush.msra.mxu0 0.0
      %1261 = vmatpush.msra.mxu0 0.0
      %1262 = vmatpush.msra.mxu0 0.0
      %1263 = vmatpush.msra.mxu0 0.0
      %1264 = vmatpush.msra.mxu0 0.0
      %1265 = vmatpush.msra.mxu0 0.0
      %1266 = vmatpush.msra.mxu0 0.0
      %1267 = vmatpush.msra.mxu0 0.0
      %1268 = vmatpush.msra.mxu0 0.0
      %1269 = vmatpush.msra.mxu0 0.0
      %1270 = vmatpush.msra.mxu0 %v978
      %1271 = vmatpush.msra.mxu0 %v924
      %1272 = vmatmul.f32.gmra.mxu0 %v1251
      %v1273 = vpop.f32.mrf.mxu0
      %v1274 = vadd.f32 0.0, %v1273
      %1275 = vmatmul.f32.gmra.mxu0 %v1254
      %v1276 = vpop.f32.mrf.mxu0
      %v1277 = vadd.f32 0.0, %v1276
      %1278 = vdwg.mxu0
      %v1280 = vsel %vm1132, %v1217, 0
      %v1283 = vsel %vm1132, %v1218, 0
      %1285 = vmatpush.msra.mxu0 0.0
      %1286 = vmatpush.msra.mxu0 0.0
      %1287 = vmatpush.msra.mxu0 0.0
      %1288 = vmatpush.msra.mxu0 0.0
      %1289 = vmatpush.msra.mxu0 0.0
      %1290 = vmatpush.msra.mxu0 0.0
      %1291 = vmatpush.msra.mxu0 0.0
      %1292 = vmatpush.msra.mxu0 0.0
      %1293 = vmatpush.msra.mxu0 0.0
      %1294 = vmatpush.msra.mxu0 0.0
      %1295 = vmatpush.msra.mxu0 0.0
      %1296 = vmatpush.msra.mxu0 0.0
      %1297 = vmatpush.msra.mxu0 0.0
      %1298 = vmatpush.msra.mxu0 0.0
      %1299 = vmatpush.msra.mxu0 %v980
      %1300 = vmatpush.msra.mxu0 %v926
      %1301 = vmatmul.f32.gmra.mxu0 %v1280
      %v1302 = vpop.f32.mrf.mxu0
      %v1303 = vadd.f32 0.0, %v1302
      %1304 = vmatmul.f32.gmra.mxu0 %v1283
      %v1305 = vpop.f32.mrf.mxu0
      %v1306 = vadd.f32 0.0, %v1305
      %1307 = vdwg.mxu0
      %v1309 = vsel %vm1132, %v1219, 0
      %v1312 = vsel %vm1132, %v1220, 0
      %1314 = vmatpush.msra.mxu0 0.0
      %1315 = vmatpush.msra.mxu0 0.0
      %1316 = vmatpush.msra.mxu0 0.0
      %1317 = vmatpush.msra.mxu0 0.0
      %1318 = vmatpush.msra.mxu0 0.0
      %1319 = vmatpush.msra.mxu0 0.0
      %1320 = vmatpush.msra.mxu0 0.0
      %1321 = vmatpush.msra.mxu0 0.0
      %1322 = vmatpush.msra.mxu0 0.0
      %1323 = vmatpush.msra.mxu0 0.0
      %1324 = vmatpush.msra.mxu0 0.0
      %1325 = vmatpush.msra.mxu0 0.0
      %1326 = vmatpush.msra.mxu0 0.0
      %1327 = vmatpush.msra.mxu0 0.0
      %1328 = vmatpush.msra.mxu0 %v982
      %1329 = vmatpush.msra.mxu0 %v928
      %1330 = vmatmul.f32.gmra.mxu0 %v1309
      %v1331 = vpop.f32.mrf.mxu0
      %v1332 = vadd.f32 0.0, %v1331
      %1333 = vmatmul.f32.gmra.mxu0 %v1312
      %v1334 = vpop.f32.mrf.mxu0
      %v1335 = vadd.f32 0.0, %v1334
      %1336 = vdwg.mxu0
      %v1337 = vrot.slane %v1303, 4
      %v1338 = vsel %vm283, %v1337, %v1245
      %v1339 = vrot.slane %v1245, 4
      %v1340 = vsel %vm283, %v1303, %v1339
      %v1342 = vunpack.c.l.s4 1983009808
      %v1343 = vunpack.c.0.s8 %v1342
      %v1344 = vperm.slane %v1338, %v1343
      %v1346 = vunpack.c.l.s4 1983009808
      %v1347 = vunpack.c.0.s8 %v1346
      %v1348 = vperm.slane %v1340, %v1347
      %v1349 = vrot.slane %v1332, 4
      %v1350 = vsel %vm283, %v1349, %v1274
      %v1351 = vrot.slane %v1274, 4
      %v1352 = vsel %vm283, %v1332, %v1351
      %v1354 = vunpack.c.l.s4 1983009808
      %v1355 = vunpack.c.0.s8 %v1354
      %v1356 = vperm.slane %v1350, %v1355
      %v1358 = vunpack.c.l.s4 1983009808
      %v1359 = vunpack.c.0.s8 %v1358
      %v1360 = vperm.slane %v1352, %v1359
      %v1361 = vrot.slane %v1356, 4
      %v1362 = vsel %vm283, %v1361, %v1344
      %v1363 = vrot.slane %v1344, 4
      %v1364 = vsel %vm283, %v1356, %v1363
      %v1366 = vunpack.c.l.s4 1934713408
      %v1367 = vunpack.c.0.s8 %v1366
      %v1368 = vperm.slane %v1362, %v1367
      %v1370 = vunpack.c.l.s4 1934713408
      %v1371 = vunpack.c.0.s8 %v1370
      %v1372 = vperm.slane %v1364, %v1371
      %v1373 = vrot.slane %v1360, 4
      %v1374 = vsel %vm283, %v1373, %v1348
      %v1375 = vrot.slane %v1348, 4
      %v1376 = vsel %vm283, %v1360, %v1375
      %v1378 = vunpack.c.l.s4 1934713408
      %v1379 = vunpack.c.0.s8 %v1378
      %v1380 = vperm.slane %v1374, %v1379
      %v1382 = vunpack.c.l.s4 1934713408
      %v1383 = vunpack.c.0.s8 %v1382
      %v1384 = vperm.slane %v1376, %v1383
      %v1385 = vrot.slane %v1368, 4
      %v1386 = vsel %vm283, 0.0, %v1385
      %v1387 = vrot.slane %v1372, 4
      %v1388 = vsel %vm283, 0.0, %v1387
      %v1389 = vrot.slane %v1380, 4
      %v1390 = vsel %vm283, 0.0, %v1389
      %v1391 = vrot.slane %v1384, 4
      %v1392 = vsel %vm283, 0.0, %v1391
      %v1393 = vrot.slane %v1306, 4
      %v1394 = vsel %vm283, %v1393, %v1248
      %v1395 = vrot.slane %v1248, 4
      %v1396 = vsel %vm283, %v1306, %v1395
      %v1398 = vunpack.c.l.s4 1983009808
      %v1399 = vunpack.c.0.s8 %v1398
      %v1400 = vperm.slane %v1394, %v1399
      %v1402 = vunpack.c.l.s4 1983009808
      %v1403 = vunpack.c.0.s8 %v1402
      %v1404 = vperm.slane %v1396, %v1403
      %v1405 = vrot.slane %v1335, 4
      %v1406 = vsel %vm283, %v1405, %v1277
      %v1407 = vrot.slane %v1277, 4
      %v1408 = vsel %vm283, %v1335, %v1407
      %v1410 = vunpack.c.l.s4 1983009808
      %v1411 = vunpack.c.0.s8 %v1410
      %v1412 = vperm.slane %v1406, %v1411
      %v1414 = vunpack.c.l.s4 1983009808
      %v1415 = vunpack.c.0.s8 %v1414
      %v1416 = vperm.slane %v1408, %v1415
      %v1417 = vrot.slane %v1412, 4
      %v1418 = vsel %vm283, %v1417, %v1400
      %v1419 = vrot.slane %v1400, 4
      %v1420 = vsel %vm283, %v1412, %v1419
      %v1422 = vunpack.c.l.s4 1934713408
      %v1423 = vunpack.c.0.s8 %v1422
      %v1424 = vperm.slane %v1418, %v1423
      %v1426 = vunpack.c.l.s4 1934713408
      %v1427 = vunpack.c.0.s8 %v1426
      %v1428 = vperm.slane %v1420, %v1427
      %v1429 = vrot.slane %v1416, 4
      %v1430 = vsel %vm283, %v1429, %v1404
      %v1431 = vrot.slane %v1404, 4
      %v1432 = vsel %vm283, %v1416, %v1431
      %v1434 = vunpack.c.l.s4 1934713408
      %v1435 = vunpack.c.0.s8 %v1434
      %v1436 = vperm.slane %v1430, %v1435
      %v1438 = vunpack.c.l.s4 1934713408
      %v1439 = vunpack.c.0.s8 %v1438
      %v1440 = vperm.slane %v1432, %v1439
      %v1441 = vrot.slane %v1424, 4
      %v1442 = vsel %vm283, 0.0, %v1441
      %v1443 = vrot.slane %v1428, 4
      %v1444 = vsel %vm283, 0.0, %v1443
      %v1445 = vrot.slane %v1436, 4
      %v1446 = vsel %vm283, 0.0, %v1445
      %v1447 = vrot.slane %v1440, 4
      %v1448 = vsel %vm283, 0.0, %v1447
      %v1449 = vsel %vm283, %v1387, %v1368
      %v1451 = vunpack.c.l.s4 1983009808
      %v1452 = vunpack.c.0.s8 %v1451
      %v1453 = vperm.slane %v1449, %v1452
      %v1454 = vrot.slane %v1388, 4
      %v1455 = vsel %vm283, %v1454, %v1386
      %v1457 = vunpack.c.l.s4 1983009808
      %v1458 = vunpack.c.0.s8 %v1457
      %v1459 = vperm.slane %v1455, %v1458
      %v1460 = vsel %vm283, %v1391, %v1380
      %v1462 = vunpack.c.l.s4 1983009808
      %v1463 = vunpack.c.0.s8 %v1462
      %v1464 = vperm.slane %v1460, %v1463
      %v1465 = vrot.slane %v1392, 4
      %v1466 = vsel %vm283, %v1465, %v1390
      %v1468 = vunpack.c.l.s4 1983009808
      %v1469 = vunpack.c.0.s8 %v1468
      %v1470 = vperm.slane %v1466, %v1469
      %v1471 = vrot.slane %v1459, 4
      %v1472 = vsel %vm283, %v1471, %v1453
      %v1473 = vrot.slane %v1453, 4
      %v1474 = vsel %vm283, %v1459, %v1473
      %v1476 = vunpack.c.l.s4 1934713408
      %v1477 = vunpack.c.0.s8 %v1476
      %v1478 = vperm.slane %v1472, %v1477
      %v1480 = vunpack.c.l.s4 1934713408
      %v1481 = vunpack.c.0.s8 %v1480
      %v1482 = vperm.slane %v1474, %v1481
      %v1483 = vrot.slane %v1470, 4
      %v1484 = vsel %vm283, %v1483, %v1464
      %v1485 = vrot.slane %v1464, 4
      %v1486 = vsel %vm283, %v1470, %v1485
      %v1488 = vunpack.c.l.s4 1934713408
      %v1489 = vunpack.c.0.s8 %v1488
      %v1490 = vperm.slane %v1484, %v1489
      %v1492 = vunpack.c.l.s4 1934713408
      %v1493 = vunpack.c.0.s8 %v1492
      %v1494 = vperm.slane %v1486, %v1493
      %v1495 = vrot.slane %v1490, 4
      %v1496 = vsel %vm283, %v1495, %v1478
      %v1497 = vrot.slane %v1478, 4
      %v1498 = vsel %vm283, %v1490, %v1497
      %v1499 = vrot.slane %v1494, 4
      %v1500 = vsel %vm283, %v1499, %v1482
      %v1501 = vrot.slane %v1482, 4
      %v1502 = vsel %vm283, %v1494, %v1501
      %v1503 = vsel %vm283, %v1443, %v1424
      %v1505 = vunpack.c.l.s4 1983009808
      %v1506 = vunpack.c.0.s8 %v1505
      %v1507 = vperm.slane %v1503, %v1506
      %v1508 = vrot.slane %v1444, 4
      %v1509 = vsel %vm283, %v1508, %v1442
      %v1511 = vunpack.c.l.s4 1983009808
      %v1512 = vunpack.c.0.s8 %v1511
      %v1513 = vperm.slane %v1509, %v1512
      %v1514 = vsel %vm283, %v1447, %v1436
      %v1516 = vunpack.c.l.s4 1983009808
      %v1517 = vunpack.c.0.s8 %v1516
      %v1518 = vperm.slane %v1514, %v1517
      %v1519 = vrot.slane %v1448, 4
      %v1520 = vsel %vm283, %v1519, %v1446
      %v1522 = vunpack.c.l.s4 1983009808
      %v1523 = vunpack.c.0.s8 %v1522
      %v1524 = vperm.slane %v1520, %v1523
      %v1525 = vrot.slane %v1513, 4
      %v1526 = vsel %vm283, %v1525, %v1507
      %v1527 = vrot.slane %v1507, 4
      %v1528 = vsel %vm283, %v1513, %v1527
      %v1530 = vunpack.c.l.s4 1934713408
      %v1531 = vunpack.c.0.s8 %v1530
      %v1532 = vperm.slane %v1526, %v1531
      %v1534 = vunpack.c.l.s4 1934713408
      %v1535 = vunpack.c.0.s8 %v1534
      %v1536 = vperm.slane %v1528, %v1535
      %v1537 = vrot.slane %v1524, 4
      %v1538 = vsel %vm283, %v1537, %v1518
      %v1539 = vrot.slane %v1518, 4
      %v1540 = vsel %vm283, %v1524, %v1539
      %v1542 = vunpack.c.l.s4 1934713408
      %v1543 = vunpack.c.0.s8 %v1542
      %v1544 = vperm.slane %v1538, %v1543
      %v1546 = vunpack.c.l.s4 1934713408
      %v1547 = vunpack.c.0.s8 %v1546
      %v1548 = vperm.slane %v1540, %v1547
      %v1549 = vrot.slane %v1544, 4
      %v1550 = vsel %vm283, %v1549, %v1532
      %v1551 = vrot.slane %v1532, 4
      %v1552 = vsel %vm283, %v1544, %v1551
      %v1553 = vrot.slane %v1548, 4
      %v1554 = vsel %vm283, %v1553, %v1536
      %v1555 = vrot.slane %v1536, 4
      %v1556 = vsel %vm283, %v1548, %v1555
      %1559 = vrot.lane.b32.xlu0 %v1498, 8
      %v1560 = vpop.permute.xlu0 %1559
      %1561 = vrot.lane.b32.xlu0 %v1552, 8
      %v1562 = vpop.permute.xlu0 %1561
      %1567 = vrot.lane.b32.xlu0 %v1500, 16
      %v1568 = vpop.permute.xlu0 %1567
      %1569 = vrot.lane.b32.xlu0 %v1554, 16
      %v1570 = vpop.permute.xlu0 %1569
      %1575 = vrot.lane.b32.xlu0 %v1502, 24
      %v1576 = vpop.permute.xlu0 %1575
      %1577 = vrot.lane.b32.xlu0 %v1556, 24
      %v1578 = vpop.permute.xlu0 %1577
      %v1581 = vsel %vm983, %v1496, %v1560
      %v1582 = vsel %vm983, %v1550, %v1562
      %v1583 = vsel %vm1132, %v1581, %v1568
      %v1584 = vsel %vm1132, %v1582, %v1570
      %vm1585 = vcmask 195584
      %v1586 = vsel %vm1585, %v1583, %v1576
      %v1587 = vsel %vm1585, %v1584, %v1578
      %v1588 = vpack.c.bf16 %v1586, %v1586
      %v1589 = vpack.c.bf16 %v1587, %v1587
      %vm1590 = vcmask 257024
      %1591 = vst.msk [vmem:[%s248] sm:$0xf] %vm1590, %v1588
      %1592 = vst.msk [vmem:[%s248 + $0x4] sm:$0xf] %vm1590, %v1589
      %s1593 = smul.u32 2, %s19
      %p1594 = scmp.lt.s32.totalorder %s18, 1
      %s1595 = scalar_select %p1594, %s18, 1
      %p1596 = scmp.lt.s32.totalorder %s1593, 1
      %s1597 = scalar_select %p1596, %s1593, 1
      %s1598 = smul.addr %s1595, 2
      %s1599 = sadd.s32 %s1597, %s1598
      %s1600 = smul.addr %s1599, 4
      %s1601 = scalar_lea.vmem %s3, %s1600
      // Predicated region
      $region33: #{prompt_decoder_forward.17} parent=31 // pred_check
        %p1602 = pneg %p126
      $region34: #{prompt_decoder_forward.17} parent=31 // pred_check_branch
        %1604 = sbr.rel (%p1602) target = $region36
      $region35: #{prompt_decoder_forward.17} parent=31 // pred_region
        %s1605 = smul.u32 2, %s19
      $region36: #{prompt_decoder_forward.17} parent=31 // pred_fallthru
        _
    $region32: #{prompt_decoder_forward.17} parent=5 // pred_fallthru
      _
    %p1606 = scmp.le.s32.totalorder 2, %s9
    // Predicated region
    $region37: #{prompt_decoder_forward.17} parent=5 // pred_check
      %p1607 = pneg %p1606
    $region38: #{prompt_decoder_forward.17} parent=5 // pred_check_branch
      %1609 = sbr.rel (%p1607) target = $region40
    $region39: #{prompt_decoder_forward.17} parent=5 // pred_region
      %s1610 = ssub.s32 %s9, 2
      // Predicated region
      $region41: #{prompt_decoder_forward.17} parent=39 // pred_check
        %p1611 = pneg %p132
      $region42: #{prompt_decoder_forward.17} parent=39 // pred_check_branch
        %1613 = sbr.rel (%p1611) target = $region44
      $region43: #{prompt_decoder_forward.17} parent=39 // pred_region
        %s1614 = smul.u32 2, %s21
        %p1615 = scmp.lt.s32.totalorder %s20, 1
        %s1616 = scalar_select %p1615, %s20, 1
        %p1617 = scmp.lt.s32.totalorder %s1614, 1
        %s1618 = scalar_select %p1617, %s1614, 1
        %s1619 = smul.addr %s1616, 2
        %s1620 = sadd.s32 %s1618, %s1619
        %s1621 = smul.addr %s1620, 4
        %s1622 = scalar_lea.vmem %s3, %s1621
      $region44: #{prompt_decoder_forward.17} parent=39 // pred_fallthru
        _
    $region40: #{prompt_decoder_forward.17} parent=5 // pred_fallthru
      _
  $region6: #{prompt_decoder_forward.17} parent=0 // loop_footer
    %s13 = sadd.s32 1, %s9
  $region7: #{prompt_decoder_forward.17} parent=0 // loop_footer_branch
    %8 = sbr.rel target = $region3
  $region8: #{prompt_decoder_forward.17} parent=0 // loop_exit
    _

// kernel: prompt_decoder_forward.19
$region0: #{prompt_decoder_forward.19}
  #allocation0 [shape = 'u32[]', space=smem, size = 0x4, offset = 0x4, fixed_abs, tag = 'smem constant byte address 0x4 - core index']
  #allocation1 [shape = 'u32[72,128]{1,0:T(1,128)}', space=vmem, size = 0x9000, scoped, tag = 'internal scratch']
  %s0 = inlined_call_operand.vmem [shape: f32[32,32], index: 0, kind: input, shape index: {}]
  %s1 = inlined_call_operand.vmem [shape: bf16[32,32], index: 1, kind: input, shape index: {}]
  %s2 = inlined_call_operand.vmem [shape: f32[1,32], index: 2, kind: input, shape index: {}]
  %s3 = inlined_call_operand.vmem [shape: bf16[32,32], index: 3, kind: output, shape index: {}]
  %s4 = sld [smem:[#allocation0]]
  $region45: #{prompt_decoder_forward.19} parent=0
    _
  %s6 = ssub.s32 1, %s4
  %s7 = scalar_select 0, %s6, %s4
  loop: start=0, step=1, limit=4
  $region2: #{prompt_decoder_forward.19} parent=0 // loop_pre_header
    _
  $region3: #{prompt_decoder_forward.19} parent=0 // loop_header
    %s9 = sphi 0, %s13
    %p10 = scmp.ge.s32.totalorder %s9, 4
    %s19 = sphi 0, %s21
    %s22 = sphi 0, %s19
    %s23 = sphi 0, %s22
    %s39 = sphi 0, %s23
    %s43 = sphi 0, %s43
    %s45 = sphi 0, %s43
    %s46 = sphi 0, %s45
    %s60 = sphi 0, %s46
    %s64 = sphi 0, %s64
    %s66 = sphi 0, %s64
    %s67 = sphi 0, %s66
    %s81 = sphi 0, %s67
    %s87 = sphi 0, %s89
    %s90 = sphi 0, %s87
    %s91 = sphi 0, %s90
    %s107 = sphi 0, %s91
  $region4: #{prompt_decoder_forward.19} parent=0 // loop_header_branch
    %12 = sbr.rel (%p10) target = $region8
  $region5: #{prompt_decoder_forward.19} parent=0 // loop_body
    %s14 = ssub.s32 %s9, 1
    %s15 = ssub.s32 %s9, 2
    %s16 = sadd.s32 %s9, 1
    %s17 = ssub.s32 %s9, %s16
    %p18 = scmp.eq.s32.totalorder %s17, 0
    %s20 = sadd.s32 %s19, 1
    %s21 = scalar_select %p18, %s19, %s20
    %p24 = pneg %p18
    %p25 = scmp.eq.s32.totalorder %s9, 1
    %p26 = por %p24, %p25
    %p27 = scmp.ne.s32.totalorder %s19, %s22
    %p28 = scmp.eq.s32.totalorder %s9, 0
    %p29 = por %p27, %p28
    %p30 = scmp.ne.s32.totalorder %s19, %s22
    %p31 = scmp.eq.s32.totalorder %s14, 1
    %p32 = por %p30, %p31
    %p33 = scmp.ne.s32.totalorder %s22, %s23
    %p34 = scmp.eq.s32.totalorder %s14, 0
    %p35 = por %p33, %p34
    %p36 = scmp.ne.s32.totalorder %s22, %s23
    %p37 = scmp.eq.s32.totalorder %s15, 1
    %p38 = por %p36, %p37
    %p40 = scmp.ne.s32.totalorder %s23, %s39
    %p41 = scmp.eq.s32.totalorder %s15, 0
    %p42 = por %p40, %p41
    %s44 = sadd.s32 %s43, 1
    %p47 = scmp.eq.s32.totalorder %s9, 1
    %p48 = scmp.ne.s32.totalorder %s43, %s45
    %p49 = scmp.eq.s32.totalorder %s9, 0
    %p50 = por %p48, %p49
    %p51 = scmp.ne.s32.totalorder %s43, %s45
    %p52 = scmp.eq.s32.totalorder %s14, 1
    %p53 = por %p51, %p52
    %p54 = scmp.ne.s32.totalorder %s45, %s46
    %p55 = scmp.eq.s32.totalorder %s14, 0
    %p56 = por %p54, %p55
    %p57 = scmp.ne.s32.totalorder %s45, %s46
    %p58 = scmp.eq.s32.totalorder %s15, 1
    %p59 = por %p57, %p58
    %p61 = scmp.ne.s32.totalorder %s46, %s60
    %p62 = scmp.eq.s32.totalorder %s15, 0
    %p63 = por %p61, %p62
    %s65 = sadd.s32 %s64, 1
    %p68 = scmp.eq.s32.totalorder %s9, 1
    %p69 = scmp.ne.s32.totalorder %s64, %s66
    %p70 = scmp.eq.s32.totalorder %s9, 0
    %p71 = por %p69, %p70
    %p72 = scmp.ne.s32.totalorder %s64, %s66
    %p73 = scmp.eq.s32.totalorder %s14, 1
    %p74 = por %p72, %p73
    %p75 = scmp.ne.s32.totalorder %s66, %s67
    %p76 = scmp.eq.s32.totalorder %s14, 0
    %p77 = por %p75, %p76
    %p78 = scmp.ne.s32.totalorder %s66, %s67
    %p79 = scmp.eq.s32.totalorder %s15, 1
    %p80 = por %p78, %p79
    %p82 = scmp.ne.s32.totalorder %s67, %s81
    %p83 = scmp.eq.s32.totalorder %s15, 0
    %p84 = por %p82, %p83
    %s85 = ssub.s32 %s9, %s16
    %p86 = scmp.eq.s32.totalorder %s85, 0
    %s88 = sadd.s32 %s87, 1
    %s89 = scalar_select %p86, %s87, %s88
    %p92 = pneg %p86
    %p93 = scmp.eq.s32.totalorder %s9, 1
    %p94 = por %p92, %p93
    %p95 = scmp.ne.s32.totalorder %s87, %s90
    %p96 = scmp.eq.s32.totalorder %s9, 0
    %p97 = por %p95, %p96
    %p98 = scmp.ne.s32.totalorder %s87, %s90
    %p99 = scmp.eq.s32.totalorder %s14, 1
    %p100 = por %p98, %p99
    %p101 = scmp.ne.s32.totalorder %s90, %s91
    %p102 = scmp.eq.s32.totalorder %s14, 0
    %p103 = por %p101, %p102
    %p104 = scmp.ne.s32.totalorder %s90, %s91
    %p105 = scmp.eq.s32.totalorder %s15, 1
    %p106 = por %p104, %p105
    %p108 = scmp.ne.s32.totalorder %s91, %s107
    %p109 = scmp.eq.s32.totalorder %s15, 0
    %p110 = por %p108, %p109
    %p111 = scmp.le.s32.totalorder 1, %s9
    %p112 = scmp.lt.s32.totalorder %s9, 3
    %p113 = pnand %p111, %p112
    %p114 = pneg %p113
    // Predicated region
    $region9: #{prompt_decoder_forward.19} parent=5 // pred_check
      _
    $region10: #{prompt_decoder_forward.19} parent=5 // pred_check_branch
      %116 = sbr.rel (%p113) target = $region12
    $region11: #{prompt_decoder_forward.19} parent=5 // pred_region
      %s117 = ssub.s32 %s9, 1
      // Predicated region
      $region13: #{prompt_decoder_forward.19} parent=11 // pred_check
        %p118 = pneg %p56
      $region14: #{prompt_decoder_forward.19} parent=11 // pred_check_branch
        %120 = sbr.rel (%p118) target = $region16
      $region15: #{prompt_decoder_forward.19} parent=11 // pred_region
        _
      $region16: #{prompt_decoder_forward.19} parent=11 // pred_fallthru
        _
      // Predicated region
      $region17: #{prompt_decoder_forward.19} parent=11 // pred_check
        %p121 = pneg %p77
      $region18: #{prompt_decoder_forward.19} parent=11 // pred_check_branch
        %123 = sbr.rel (%p121) target = $region20
      $region19: #{prompt_decoder_forward.19} parent=11 // pred_region
        _
      $region20: #{prompt_decoder_forward.19} parent=11 // pred_fallthru
        _
    $region12: #{prompt_decoder_forward.19} parent=5 // pred_fallthru
      _
    %p124 = scmp.lt.s32.totalorder %s9, 2
    // Predicated region
    $region21: #{prompt_decoder_forward.19} parent=5 // pred_check
      %p125 = pneg %p124
    $region22: #{prompt_decoder_forward.19} parent=5 // pred_check_branch
      %127 = sbr.rel (%p125) target = $region24
    $region23: #{prompt_decoder_forward.19} parent=5 // pred_region
      // Predicated region
      $region25: #{prompt_decoder_forward.19} parent=23 // pred_check
        %p128 = pneg %p29
      $region26: #{prompt_decoder_forward.19} parent=23 // pred_check_branch
        %130 = sbr.rel (%p128) target = $region28
      $region27: #{prompt_decoder_forward.19} parent=23 // pred_region
        %s131 = smul.u32 2, %s9
        %p132 = scmp.lt.s32.totalorder %s131, 3
        %s133 = scalar_select %p132, %s131, 3
        %s134 = smul.addr %s133, 8
        %s135 = scalar_lea.vmem %s0, %s134
        %s136 = smul.u32 2, %s9
      $region28: #{prompt_decoder_forward.19} parent=23 // pred_fallthru
        _
    $region24: #{prompt_decoder_forward.19} parent=5 // pred_fallthru
      _
    %p137 = scmp.le.s32.totalorder 1, %s9
    %p138 = scmp.lt.s32.totalorder %s9, 3
    %p139 = pnand %p137, %p138
    %p140 = pneg %p139
    // Predicated region
    $region29: #{prompt_decoder_forward.19} parent=5 // pred_check
      _
    $region30: #{prompt_decoder_forward.19} parent=5 // pred_check_branch
      %142 = sbr.rel (%p139) target = $region32
    $region31: #{prompt_decoder_forward.19} parent=5 // pred_region
      %s143 = ssub.s32 %s9, 1
      %s144 = smul.u32 2, %s14
      %p145 = scmp.lt.s32.totalorder %s144, 3
      %s146 = scalar_select %p145, %s144, 3
      %s147 = smul.addr %s146, 8
      %s148 = scalar_lea.vmem %s0, %s147
      %p149 = pneg %p35
      %p150 = pneg %p32
      %p151 = pneg %p56
      %p152 = pneg %p53
      %p153 = pneg %p77
      %p154 = pneg %p74
      %p155 = pneg %p103
      %p156 = pneg %p100
      %s157 = smul.u32 2, %s14
      %p158 = scmp.lt.s32.totalorder %s157, 3
      %s159 = scalar_select %p158, %s157, 3
      %s160 = smul.addr %s159, 4
      %s161 = scalar_lea.vmem %s3, %s160
      %s162 = smul.u32 2, %s14
      %p163 = scmp.lt.s32.totalorder %s162, 3
      %s164 = scalar_select %p163, %s162, 3
      %s165 = smul.addr %s164, 8
      %s166 = scalar_lea.vmem %s0, %s165
      %s167 = smul.u32 2, %s14
      %s168 = smul.u32 2, %s14
      %p169 = scmp.lt.s32.totalorder %s168, 3
      %s170 = scalar_select %p169, %s168, 3
      %s171 = smul.addr %s170, 4
      %s172 = scalar_lea.vmem %s3, %s171
      %s173 = smul.u32 2, %s14
      %v175 = vld [vmem:[%s166] sm:$0xff]
      %v176 = vld [vmem:[%s166 + $0x8] sm:$0xff]
      %v177 = vpack.c.bf16 %v176, %v175
      %v178 = vld [vmem:[%s1] sm:$0xf]
      %v179 = vld [vmem:[%s1 + $0x4] sm:$0xf]
      %v180 = vld [vmem:[%s1 + $0x8] sm:$0xf]
      %v181 = vld [vmem:[%s1 + $0xc] sm:$0xf]
      %v182 = vld [vmem:[%s2] sm:$0x1]
      %v184 = vperm.slane %v182, 0
      %v190 = vunpack.c.l.b16 %v178
      %v191 = vunpack.c.l.b16 %v179
      %v192 = vunpack.c.l.b16 %v180
      %v193 = vunpack.c.l.b16 %v181
      %v194 = vpack.c.b16 %v191, %v190
      %v195 = vpack.c.b16 %v193, %v192
      %vm198 = vcmask 261120
      %v200 = vsel %vm198, %v177, 0
      %202 = vmatpush.bf16.msra.mxu0 0
      %203 = vmatpush.bf16.msra.mxu0 0
      %204 = vmatpush.bf16.msra.mxu0 0
      %205 = vmatpush.bf16.msra.mxu0 0
      %206 = vmatpush.bf16.msra.mxu0 0
      %207 = vmatpush.bf16.msra.mxu0 0
      %208 = vmatpush.bf16.msra.mxu0 %v195
      %209 = vmatpush.bf16.msra.mxu0 %v194
      %210 = vmatmul.bf16.gmra.mxu0 %v200
      %v211 = vpop.f32.mrf.mxu0
      %v212 = vadd.f32 %v184, %v211
      %v213 = vpop.f32.mrf.mxu0
      %v214 = vadd.f32 %v184, %v213
      %215 = vdwg.mxu0
      %v216 = vpack.c.bf16 %v212, %v212
      %v217 = vpack.c.bf16 %v214, %v214
      %vm218 = vcmask 257024
      %219 = vst.msk [vmem:[%s172] sm:$0xf] %vm218, %v216
      %220 = vst.msk [vmem:[%s172 + $0x4] sm:$0xf] %vm218, %v217
      %s221 = smul.u32 2, %s14
      %p222 = scmp.lt.s32.totalorder %s221, 3
      %s223 = scalar_select %p222, %s221, 3
      %s224 = smul.addr %s223, 4
      %s225 = scalar_lea.vmem %s3, %s224
      // Predicated region
      $region33: #{prompt_decoder_forward.19} parent=31 // pred_check
        %p226 = pneg %p100
      $region34: #{prompt_decoder_forward.19} parent=31 // pred_check_branch
        %228 = sbr.rel (%p226) target = $region36
      $region35: #{prompt_decoder_forward.19} parent=31 // pred_region
        %s229 = smul.u32 2, %s14
      $region36: #{prompt_decoder_forward.19} parent=31 // pred_fallthru
        _
    $region32: #{prompt_decoder_forward.19} parent=5 // pred_fallthru
      _
    %p230 = scmp.le.s32.totalorder 2, %s9
    // Predicated region
    $region37: #{prompt_decoder_forward.19} parent=5 // pred_check
      %p231 = pneg %p230
    $region38: #{prompt_decoder_forward.19} parent=5 // pred_check_branch
      %233 = sbr.rel (%p231) target = $region40
    $region39: #{prompt_decoder_forward.19} parent=5 // pred_region
      %s234 = ssub.s32 %s9, 2
      // Predicated region
      $region41: #{prompt_decoder_forward.19} parent=39 // pred_check
        %p235 = pneg %p106
      $region42: #{prompt_decoder_forward.19} parent=39 // pred_check_branch
        %237 = sbr.rel (%p235) target = $region44
      $region43: #{prompt_decoder_forward.19} parent=39 // pred_region
        %s238 = smul.u32 2, %s15
        %p239 = scmp.lt.s32.totalorder %s238, 3
        %s240 = scalar_select %p239, %s238, 3
        %s241 = smul.addr %s240, 4
        %s242 = scalar_lea.vmem %s3, %s241
      $region44: #{prompt_decoder_forward.19} parent=39 // pred_fallthru
        _
    $region40: #{prompt_decoder_forward.19} parent=5 // pred_fallthru
      _
  $region6: #{prompt_decoder_forward.19} parent=0 // loop_footer
    %s13 = sadd.s32 1, %s9
  $region7: #{prompt_decoder_forward.19} parent=0 // loop_footer_branch
    %8 = sbr.rel target = $region3
  $region8: #{prompt_decoder_forward.19} parent=0 // loop_exit
    _

// kernel: prompt_decoder_forward.20
$region0: #{prompt_decoder_forward.20}
  #allocation0 [shape = 'u32[]', space=smem, size = 0x4, offset = 0x4, fixed_abs, tag = 'smem constant byte address 0x4 - core index']
  #allocation1 [shape = 'u32[72,128]{1,0:T(1,128)}', space=vmem, size = 0x9000, scoped, tag = 'internal scratch']
  %s0 = inlined_call_operand.vmem [shape: f32[64,32], index: 0, kind: input, shape index: {}]
  %s1 = inlined_call_operand.vmem [shape: bf16[32,32], index: 1, kind: input, shape index: {}]
  %s2 = inlined_call_operand.vmem [shape: f32[1,32], index: 2, kind: input, shape index: {}]
  %s3 = inlined_call_operand.vmem [shape: bf16[32,32], index: 3, kind: input, shape index: {}]
  %s4 = inlined_call_operand.vmem [shape: f32[1,32], index: 4, kind: input, shape index: {}]
  %s5 = inlined_call_operand.vmem [shape: bf16[64,32], index: 5, kind: output, shape index: {0}]
  %s6 = inlined_call_operand.vmem [shape: bf16[64,32], index: 6, kind: output, shape index: {1}]
  %7 = xla_tuple %s5, %s6
  %s8 = sld [smem:[#allocation0]]
  $region61: #{prompt_decoder_forward.20} parent=0
    _
  %s10 = ssub.s32 1, %s8
  %s11 = scalar_select 0, %s10, %s8
  loop: start=0, step=1, limit=4
  $region2: #{prompt_decoder_forward.20} parent=0 // loop_pre_header
    _
  $region3: #{prompt_decoder_forward.20} parent=0 // loop_header
    %s13 = sphi 0, %s17
    %p14 = scmp.ge.s32.totalorder %s13, 4
    %s23 = sphi 0, %s25
    %s26 = sphi 0, %s23
    %s27 = sphi 0, %s26
    %s43 = sphi 0, %s27
    %s47 = sphi 0, %s47
    %s49 = sphi 0, %s47
    %s50 = sphi 0, %s49
    %s64 = sphi 0, %s50
    %s68 = sphi 0, %s68
    %s70 = sphi 0, %s68
    %s71 = sphi 0, %s70
    %s85 = sphi 0, %s71
    %s89 = sphi 0, %s89
    %s91 = sphi 0, %s89
    %s92 = sphi 0, %s91
    %s106 = sphi 0, %s92
    %s110 = sphi 0, %s110
    %s112 = sphi 0, %s110
    %s113 = sphi 0, %s112
    %s127 = sphi 0, %s113
    %s133 = sphi 0, %s135
    %s136 = sphi 0, %s133
    %s137 = sphi 0, %s136
    %s153 = sphi 0, %s137
    %s159 = sphi 0, %s161
    %s162 = sphi 0, %s159
    %s163 = sphi 0, %s162
    %s179 = sphi 0, %s163
  $region4: #{prompt_decoder_forward.20} parent=0 // loop_header_branch
    %16 = sbr.rel (%p14) target = $region8
  $region5: #{prompt_decoder_forward.20} parent=0 // loop_body
    %s18 = ssub.s32 %s13, 1
    %s19 = ssub.s32 %s13, 2
    %s20 = sadd.s32 %s13, 1
    %s21 = ssub.s32 %s13, %s20
    %p22 = scmp.eq.s32.totalorder %s21, 0
    %s24 = sadd.s32 %s23, 1
    %s25 = scalar_select %p22, %s23, %s24
    %p28 = pneg %p22
    %p29 = scmp.eq.s32.totalorder %s13, 1
    %p30 = por %p28, %p29
    %p31 = scmp.ne.s32.totalorder %s23, %s26
    %p32 = scmp.eq.s32.totalorder %s13, 0
    %p33 = por %p31, %p32
    %p34 = scmp.ne.s32.totalorder %s23, %s26
    %p35 = scmp.eq.s32.totalorder %s18, 1
    %p36 = por %p34, %p35
    %p37 = scmp.ne.s32.totalorder %s26, %s27
    %p38 = scmp.eq.s32.totalorder %s18, 0
    %p39 = por %p37, %p38
    %p40 = scmp.ne.s32.totalorder %s26, %s27
    %p41 = scmp.eq.s32.totalorder %s19, 1
    %p42 = por %p40, %p41
    %p44 = scmp.ne.s32.totalorder %s27, %s43
    %p45 = scmp.eq.s32.totalorder %s19, 0
    %p46 = por %p44, %p45
    %s48 = sadd.s32 %s47, 1
    %p51 = scmp.eq.s32.totalorder %s13, 1
    %p52 = scmp.ne.s32.totalorder %s47, %s49
    %p53 = scmp.eq.s32.totalorder %s13, 0
    %p54 = por %p52, %p53
    %p55 = scmp.ne.s32.totalorder %s47, %s49
    %p56 = scmp.eq.s32.totalorder %s18, 1
    %p57 = por %p55, %p56
    %p58 = scmp.ne.s32.totalorder %s49, %s50
    %p59 = scmp.eq.s32.totalorder %s18, 0
    %p60 = por %p58, %p59
    %p61 = scmp.ne.s32.totalorder %s49, %s50
    %p62 = scmp.eq.s32.totalorder %s19, 1
    %p63 = por %p61, %p62
    %p65 = scmp.ne.s32.totalorder %s50, %s64
    %p66 = scmp.eq.s32.totalorder %s19, 0
    %p67 = por %p65, %p66
    %s69 = sadd.s32 %s68, 1
    %p72 = scmp.eq.s32.totalorder %s13, 1
    %p73 = scmp.ne.s32.totalorder %s68, %s70
    %p74 = scmp.eq.s32.totalorder %s13, 0
    %p75 = por %p73, %p74
    %p76 = scmp.ne.s32.totalorder %s68, %s70
    %p77 = scmp.eq.s32.totalorder %s18, 1
    %p78 = por %p76, %p77
    %p79 = scmp.ne.s32.totalorder %s70, %s71
    %p80 = scmp.eq.s32.totalorder %s18, 0
    %p81 = por %p79, %p80
    %p82 = scmp.ne.s32.totalorder %s70, %s71
    %p83 = scmp.eq.s32.totalorder %s19, 1
    %p84 = por %p82, %p83
    %p86 = scmp.ne.s32.totalorder %s71, %s85
    %p87 = scmp.eq.s32.totalorder %s19, 0
    %p88 = por %p86, %p87
    %s90 = sadd.s32 %s89, 1
    %p93 = scmp.eq.s32.totalorder %s13, 1
    %p94 = scmp.ne.s32.totalorder %s89, %s91
    %p95 = scmp.eq.s32.totalorder %s13, 0
    %p96 = por %p94, %p95
    %p97 = scmp.ne.s32.totalorder %s89, %s91
    %p98 = scmp.eq.s32.totalorder %s18, 1
    %p99 = por %p97, %p98
    %p100 = scmp.ne.s32.totalorder %s91, %s92
    %p101 = scmp.eq.s32.totalorder %s18, 0
    %p102 = por %p100, %p101
    %p103 = scmp.ne.s32.totalorder %s91, %s92
    %p104 = scmp.eq.s32.totalorder %s19, 1
    %p105 = por %p103, %p104
    %p107 = scmp.ne.s32.totalorder %s92, %s106
    %p108 = scmp.eq.s32.totalorder %s19, 0
    %p109 = por %p107, %p108
    %s111 = sadd.s32 %s110, 1
    %p114 = scmp.eq.s32.totalorder %s13, 1
    %p115 = scmp.ne.s32.totalorder %s110, %s112
    %p116 = scmp.eq.s32.totalorder %s13, 0
    %p117 = por %p115, %p116
    %p118 = scmp.ne.s32.totalorder %s110, %s112
    %p119 = scmp.eq.s32.totalorder %s18, 1
    %p120 = por %p118, %p119
    %p121 = scmp.ne.s32.totalorder %s112, %s113
    %p122 = scmp.eq.s32.totalorder %s18, 0
    %p123 = por %p121, %p122
    %p124 = scmp.ne.s32.totalorder %s112, %s113
    %p125 = scmp.eq.s32.totalorder %s19, 1
    %p126 = por %p124, %p125
    %p128 = scmp.ne.s32.totalorder %s113, %s127
    %p129 = scmp.eq.s32.totalorder %s19, 0
    %p130 = por %p128, %p129
    %s131 = ssub.s32 %s13, %s20
    %p132 = scmp.eq.s32.totalorder %s131, 0
    %s134 = sadd.s32 %s133, 1
    %s135 = scalar_select %p132, %s133, %s134
    %p138 = pneg %p132
    %p139 = scmp.eq.s32.totalorder %s13, 1
    %p140 = por %p138, %p139
    %p141 = scmp.ne.s32.totalorder %s133, %s136
    %p142 = scmp.eq.s32.totalorder %s13, 0
    %p143 = por %p141, %p142
    %p144 = scmp.ne.s32.totalorder %s133, %s136
    %p145 = scmp.eq.s32.totalorder %s18, 1
    %p146 = por %p144, %p145
    %p147 = scmp.ne.s32.totalorder %s136, %s137
    %p148 = scmp.eq.s32.totalorder %s18, 0
    %p149 = por %p147, %p148
    %p150 = scmp.ne.s32.totalorder %s136, %s137
    %p151 = scmp.eq.s32.totalorder %s19, 1
    %p152 = por %p150, %p151
    %p154 = scmp.ne.s32.totalorder %s137, %s153
    %p155 = scmp.eq.s32.totalorder %s19, 0
    %p156 = por %p154, %p155
    %s157 = ssub.s32 %s13, %s20
    %p158 = scmp.eq.s32.totalorder %s157, 0
    %s160 = sadd.s32 %s159, 1
    %s161 = scalar_select %p158, %s159, %s160
    %p164 = pneg %p158
    %p165 = scmp.eq.s32.totalorder %s13, 1
    %p166 = por %p164, %p165
    %p167 = scmp.ne.s32.totalorder %s159, %s162
    %p168 = scmp.eq.s32.totalorder %s13, 0
    %p169 = por %p167, %p168
    %p170 = scmp.ne.s32.totalorder %s159, %s162
    %p171 = scmp.eq.s32.totalorder %s18, 1
    %p172 = por %p170, %p171
    %p173 = scmp.ne.s32.totalorder %s162, %s163
    %p174 = scmp.eq.s32.totalorder %s18, 0
    %p175 = por %p173, %p174
    %p176 = scmp.ne.s32.totalorder %s162, %s163
    %p177 = scmp.eq.s32.totalorder %s19, 1
    %p178 = por %p176, %p177
    %p180 = scmp.ne.s32.totalorder %s163, %s179
    %p181 = scmp.eq.s32.totalorder %s19, 0
    %p182 = por %p180, %p181
    %p183 = scmp.le.s32.totalorder 1, %s13
    %p184 = scmp.lt.s32.totalorder %s13, 3
    %p185 = pnand %p183, %p184
    %p186 = pneg %p185
    // Predicated region
    $region9: #{prompt_decoder_forward.20} parent=5 // pred_check
      _
    $region10: #{prompt_decoder_forward.20} parent=5 // pred_check_branch
      %188 = sbr.rel (%p185) target = $region12
    $region11: #{prompt_decoder_forward.20} parent=5 // pred_region
      %s189 = ssub.s32 %s13, 1
      // Predicated region
      $region13: #{prompt_decoder_forward.20} parent=11 // pred_check
        %p190 = pneg %p60
      $region14: #{prompt_decoder_forward.20} parent=11 // pred_check_branch
        %192 = sbr.rel (%p190) target = $region16
      $region15: #{prompt_decoder_forward.20} parent=11 // pred_region
        _
      $region16: #{prompt_decoder_forward.20} parent=11 // pred_fallthru
        _
      // Predicated region
      $region17: #{prompt_decoder_forward.20} parent=11 // pred_check
        %p193 = pneg %p81
      $region18: #{prompt_decoder_forward.20} parent=11 // pred_check_branch
        %195 = sbr.rel (%p193) target = $region20
      $region19: #{prompt_decoder_forward.20} parent=11 // pred_region
        _
      $region20: #{prompt_decoder_forward.20} parent=11 // pred_fallthru
        _
      // Predicated region
      $region21: #{prompt_decoder_forward.20} parent=11 // pred_check
        %p196 = pneg %p102
      $region22: #{prompt_decoder_forward.20} parent=11 // pred_check_branch
        %198 = sbr.rel (%p196) target = $region24
      $region23: #{prompt_decoder_forward.20} parent=11 // pred_region
        _
      $region24: #{prompt_decoder_forward.20} parent=11 // pred_fallthru
        _
      // Predicated region
      $region25: #{prompt_decoder_forward.20} parent=11 // pred_check
        %p199 = pneg %p123
      $region26: #{prompt_decoder_forward.20} parent=11 // pred_check_branch
        %201 = sbr.rel (%p199) target = $region28
      $region27: #{prompt_decoder_forward.20} parent=11 // pred_region
        _
      $region28: #{prompt_decoder_forward.20} parent=11 // pred_fallthru
        _
    $region12: #{prompt_decoder_forward.20} parent=5 // pred_fallthru
      _
    %p202 = scmp.lt.s32.totalorder %s13, 2
    // Predicated region
    $region29: #{prompt_decoder_forward.20} parent=5 // pred_check
      %p203 = pneg %p202
    $region30: #{prompt_decoder_forward.20} parent=5 // pred_check_branch
      %205 = sbr.rel (%p203) target = $region32
    $region31: #{prompt_decoder_forward.20} parent=5 // pred_region
      // Predicated region
      $region33: #{prompt_decoder_forward.20} parent=31 // pred_check
        %p206 = pneg %p33
      $region34: #{prompt_decoder_forward.20} parent=31 // pred_check_branch
        %208 = sbr.rel (%p206) target = $region36
      $region35: #{prompt_decoder_forward.20} parent=31 // pred_region
        %s209 = smul.u32 4, %s13
        %p210 = scmp.lt.s32.totalorder %s209, 7
        %s211 = scalar_select %p210, %s209, 7
        %s212 = smul.addr %s211, 8
        %s213 = scalar_lea.vmem %s0, %s212
        %s214 = smul.u32 4, %s13
      $region36: #{prompt_decoder_forward.20} parent=31 // pred_fallthru
        _
    $region32: #{prompt_decoder_forward.20} parent=5 // pred_fallthru
      _
    %p215 = scmp.le.s32.totalorder 1, %s13
    %p216 = scmp.lt.s32.totalorder %s13, 3
    %p217 = pnand %p215, %p216
    %p218 = pneg %p217
    // Predicated region
    $region37: #{prompt_decoder_forward.20} parent=5 // pred_check
      _
    $region38: #{prompt_decoder_forward.20} parent=5 // pred_check_branch
      %220 = sbr.rel (%p217) target = $region40
    $region39: #{prompt_decoder_forward.20} parent=5 // pred_region
      %s221 = ssub.s32 %s13, 1
      %s222 = smul.u32 4, %s18
      %p223 = scmp.lt.s32.totalorder %s222, 7
      %s224 = scalar_select %p223, %s222, 7
      %s225 = smul.addr %s224, 8
      %s226 = scalar_lea.vmem %s0, %s225
      %p227 = pneg %p39
      %p228 = pneg %p36
      %p229 = pneg %p60
      %p230 = pneg %p57
      %p231 = pneg %p81
      %p232 = pneg %p78
      %p233 = pneg %p102
      %p234 = pneg %p99
      %p235 = pneg %p123
      %p236 = pneg %p120
      %p237 = pneg %p149
      %p238 = pneg %p146
      %s239 = smul.u32 4, %s18
      %p240 = scmp.lt.s32.totalorder %s239, 7
      %s241 = scalar_select %p240, %s239, 7
      %s242 = smul.addr %s241, 4
      %s243 = scalar_lea.vmem %s5, %s242
      %p244 = pneg %p175
      %p245 = pneg %p172
      %s246 = smul.u32 4, %s18
      %p247 = scmp.lt.s32.totalorder %s246, 7
      %s248 = scalar_select %p247, %s246, 7
      %s249 = smul.addr %s248, 4
      %s250 = scalar_lea.vmem %s6, %s249
      %s251 = smul.u32 4, %s18
      %p252 = scmp.lt.s32.totalorder %s251, 7
      %s253 = scalar_select %p252, %s251, 7
      %s254 = smul.addr %s253, 8
      %s255 = scalar_lea.vmem %s0, %s254
      %s256 = smul.u32 4, %s18
      %s257 = smul.u32 4, %s18
      %p258 = scmp.lt.s32.totalorder %s257, 7
      %s259 = scalar_select %p258, %s257, 7
      %s260 = smul.addr %s259, 4
      %s261 = scalar_lea.vmem %s5, %s260
      %s262 = smul.u32 4, %s18
      %s263 = smul.u32 4, %s18
      %p264 = scmp.lt.s32.totalorder %s263, 7
      %s265 = scalar_select %p264, %s263, 7
      %s266 = smul.addr %s265, 4
      %s267 = scalar_lea.vmem %s6, %s266
      %s268 = smul.u32 4, %s18
      %v270 = vld [vmem:[%s255] sm:$0xff]
      %v271 = vld [vmem:[%s255 + $0x8] sm:$0xff]
      %v272 = vld [vmem:[%s255 + $0x10] sm:$0xff]
      %v273 = vld [vmem:[%s255 + $0x18] sm:$0xff]
      %v274 = vpack.c.bf16 %v271, %v270
      %v275 = vpack.c.bf16 %v273, %v272
      %v276 = vld [vmem:[%s1] sm:$0xf]
      %v277 = vld [vmem:[%s1 + $0x4] sm:$0xf]
      %v278 = vld [vmem:[%s1 + $0x8] sm:$0xf]
      %v279 = vld [vmem:[%s1 + $0xc] sm:$0xf]
      %v280 = vld [vmem:[%s2] sm:$0x1]
      %v282 = vperm.slane %v280, 0
      %v288 = vunpack.c.l.b16 %v276
      %v289 = vunpack.c.l.b16 %v277
      %v290 = vunpack.c.l.b16 %v278
      %v291 = vunpack.c.l.b16 %v279
      %v292 = vpack.c.b16 %v289, %v288
      %v293 = vpack.c.b16 %v291, %v290
      %vm296 = vcmask 261120
      %v298 = vsel %vm296, %v274, 0
      %v301 = vsel %vm296, %v275, 0
      %303 = vmatpush.bf16.msra.mxu0 0
      %304 = vmatpush.bf16.msra.mxu0 0
      %305 = vmatpush.bf16.msra.mxu0 0
      %306 = vmatpush.bf16.msra.mxu0 0
      %307 = vmatpush.bf16.msra.mxu0 0
      %308 = vmatpush.bf16.msra.mxu0 0
      %309 = vmatpush.bf16.msra.mxu0 %v293
      %310 = vmatpush.bf16.msra.mxu0 %v292
      %311 = vmatmul.bf16.gmra.mxu0 %v298
      %v312 = vpop.f32.mrf.mxu0
      %v313 = vadd.f32 %v282, %v312
      %v314 = vpop.f32.mrf.mxu0
      %v315 = vadd.f32 %v282, %v314
      %316 = vmatmul.bf16.gmra.mxu0 %v301
      %v317 = vpop.f32.mrf.mxu0
      %v318 = vadd.f32 %v282, %v317
      %v319 = vpop.f32.mrf.mxu0
      %v320 = vadd.f32 %v282, %v319
      %321 = vdwg.mxu0
      %v322 = vpack.c.bf16 %v313, %v313
      %v323 = vpack.c.bf16 %v315, %v315
      %v324 = vpack.c.bf16 %v318, %v318
      %v325 = vpack.c.bf16 %v320, %v320
      %vm326 = vcmask 257024
      %327 = vst.msk [vmem:[%s261] sm:$0xf] %vm326, %v322
      %328 = vst.msk [vmem:[%s261 + $0x4] sm:$0xf] %vm326, %v323
      %329 = vst.msk [vmem:[%s261 + $0x8] sm:$0xf] %vm326, %v324
      %330 = vst.msk [vmem:[%s261 + $0xc] sm:$0xf] %vm326, %v325
      %v331 = vld [vmem:[%s3] sm:$0xf]
      %v332 = vld [vmem:[%s3 + $0x4] sm:$0xf]
      %v333 = vld [vmem:[%s3 + $0x8] sm:$0xf]
      %v334 = vld [vmem:[%s3 + $0xc] sm:$0xf]
      %v335 = vld [vmem:[%s4] sm:$0x1]
      %v337 = vperm.slane %v335, 0
      %v343 = vunpack.c.l.b16 %v331
      %v344 = vunpack.c.l.b16 %v332
      %v345 = vunpack.c.l.b16 %v333
      %v346 = vunpack.c.l.b16 %v334
      %v347 = vpack.c.b16 %v344, %v343
      %v348 = vpack.c.b16 %v346, %v345
      %351 = vmatpush.bf16.msra.mxu0 0
      %352 = vmatpush.bf16.msra.mxu0 0
      %353 = vmatpush.bf16.msra.mxu0 0
      %354 = vmatpush.bf16.msra.mxu0 0
      %355 = vmatpush.bf16.msra.mxu0 0
      %356 = vmatpush.bf16.msra.mxu0 0
      %357 = vmatpush.bf16.msra.mxu0 %v348
      %358 = vmatpush.bf16.msra.mxu0 %v347
      %359 = vmatmul.bf16.gmra.mxu0 %v298
      %v360 = vpop.f32.mrf.mxu0
      %v361 = vadd.f32 %v337, %v360
      %v362 = vpop.f32.mrf.mxu0
      %v363 = vadd.f32 %v337, %v362
      %364 = vmatmul.bf16.gmra.mxu0 %v301
      %v365 = vpop.f32.mrf.mxu0
      %v366 = vadd.f32 %v337, %v365
      %v367 = vpop.f32.mrf.mxu0
      %v368 = vadd.f32 %v337, %v367
      %369 = vdwg.mxu0
      %v370 = vpack.c.bf16 %v361, %v361
      %v371 = vpack.c.bf16 %v363, %v363
      %v372 = vpack.c.bf16 %v366, %v366
      %v373 = vpack.c.bf16 %v368, %v368
      %374 = vst.msk [vmem:[%s267] sm:$0xf] %vm326, %v370
      %375 = vst.msk [vmem:[%s267 + $0x4] sm:$0xf] %vm326, %v371
      %376 = vst.msk [vmem:[%s267 + $0x8] sm:$0xf] %vm326, %v372
      %377 = vst.msk [vmem:[%s267 + $0xc] sm:$0xf] %vm326, %v373
      %s378 = smul.u32 4, %s18
      %p379 = scmp.lt.s32.totalorder %s378, 7
      %s380 = scalar_select %p379, %s378, 7
      %s381 = smul.addr %s380, 4
      %s382 = scalar_lea.vmem %s5, %s381
      %s383 = smul.u32 4, %s18
      %p384 = scmp.lt.s32.totalorder %s383, 7
      %s385 = scalar_select %p384, %s383, 7
      %s386 = smul.addr %s385, 4
      %s387 = scalar_lea.vmem %s6, %s386
      // Predicated region
      $region41: #{prompt_decoder_forward.20} parent=39 // pred_check
        %p388 = pneg %p146
      $region42: #{prompt_decoder_forward.20} parent=39 // pred_check_branch
        %390 = sbr.rel (%p388) target = $region44
      $region43: #{prompt_decoder_forward.20} parent=39 // pred_region
        %s391 = smul.u32 4, %s18
      $region44: #{prompt_decoder_forward.20} parent=39 // pred_fallthru
        _
      // Predicated region
      $region45: #{prompt_decoder_forward.20} parent=39 // pred_check
        %p392 = pneg %p172
      $region46: #{prompt_decoder_forward.20} parent=39 // pred_check_branch
        %394 = sbr.rel (%p392) target = $region48
      $region47: #{prompt_decoder_forward.20} parent=39 // pred_region
        %s395 = smul.u32 4, %s18
      $region48: #{prompt_decoder_forward.20} parent=39 // pred_fallthru
        _
    $region40: #{prompt_decoder_forward.20} parent=5 // pred_fallthru
      _
    %p396 = scmp.le.s32.totalorder 2, %s13
    // Predicated region
    $region49: #{prompt_decoder_forward.20} parent=5 // pred_check
      %p397 = pneg %p396
    $region50: #{prompt_decoder_forward.20} parent=5 // pred_check_branch
      %399 = sbr.rel (%p397) target = $region52
    $region51: #{prompt_decoder_forward.20} parent=5 // pred_region
      %s400 = ssub.s32 %s13, 2
      // Predicated region
      $region53: #{prompt_decoder_forward.20} parent=51 // pred_check
        %p401 = pneg %p152
      $region54: #{prompt_decoder_forward.20} parent=51 // pred_check_branch
        %403 = sbr.rel (%p401) target = $region56
      $region55: #{prompt_decoder_forward.20} parent=51 // pred_region
        %s404 = smul.u32 4, %s19
        %p405 = scmp.lt.s32.totalorder %s404, 7
        %s406 = scalar_select %p405, %s404, 7
        %s407 = smul.addr %s406, 4
        %s408 = scalar_lea.vmem %s5, %s407
      $region56: #{prompt_decoder_forward.20} parent=51 // pred_fallthru
        _
      // Predicated region
      $region57: #{prompt_decoder_forward.20} parent=51 // pred_check
        %p409 = pneg %p178
      $region58: #{prompt_decoder_forward.20} parent=51 // pred_check_branch
        %411 = sbr.rel (%p409) target = $region60
      $region59: #{prompt_decoder_forward.20} parent=51 // pred_region
        %s412 = smul.u32 4, %s19
        %p413 = scmp.lt.s32.totalorder %s412, 7
        %s414 = scalar_select %p413, %s412, 7
        %s415 = smul.addr %s414, 4
        %s416 = scalar_lea.vmem %s6, %s415
      $region60: #{prompt_decoder_forward.20} parent=51 // pred_fallthru
        _
    $region52: #{prompt_decoder_forward.20} parent=5 // pred_fallthru
      _
  $region6: #{prompt_decoder_forward.20} parent=0 // loop_footer
    %s17 = sadd.s32 1, %s13
  $region7: #{prompt_decoder_forward.20} parent=0 // loop_footer_branch
    %12 = sbr.rel target = $region3
  $region8: #{prompt_decoder_forward.20} parent=0 // loop_exit
    _

// kernel: prompt_decoder_forward.21
$region0: #{prompt_decoder_forward.21}
  #allocation0 [shape = 'u32[]', space=smem, size = 0x4, offset = 0x4, fixed_abs, tag = 'smem constant byte address 0x4 - core index']
  #allocation1 [shape = 'u32[72,128]{1,0:T(1,128)}', space=vmem, size = 0x9000, scoped, tag = 'internal scratch']
  %s0 = inlined_call_operand.vmem [shape: bf16[2,16,32], index: 0, kind: input, shape index: {}]
  %s1 = inlined_call_operand.vmem [shape: bf16[2,32,32], index: 1, kind: input, shape index: {}]
  %s2 = inlined_call_operand.vmem [shape: bf16[2,32,32], index: 2, kind: input, shape index: {}]
  %s3 = inlined_call_operand.vmem [shape: bf16[2,16,32], index: 3, kind: output, shape index: {}]
  %s4 = sld [smem:[#allocation0]]
  $region45: #{prompt_decoder_forward.21} parent=0
    _
  %s6 = ssub.s32 1, %s4
  %s7 = scalar_select 0, %s6, %s4
  loop: start=0, step=1, limit=4
  $region2: #{prompt_decoder_forward.21} parent=0 // loop_pre_header
    _
  $region3: #{prompt_decoder_forward.21} parent=0 // loop_header
    %s9 = sphi 0, %s13
    %p10 = scmp.ge.s32.totalorder %s9, 4
    %s16 = sphi 0, %s28
    %s17 = sphi 0, %s24
    %s18 = sphi 0, %s16
    %s19 = sphi 0, %s17
    %s20 = sphi 0, %s18
    %s21 = sphi 0, %s19
    %s33 = sphi 0, %s35
    %s36 = sphi 0, %s33
    %s37 = sphi 0, %s36
    %s53 = sphi 0, %s37
    %s59 = sphi 0, %s61
    %s62 = sphi 0, %s59
    %s63 = sphi 0, %s62
    %s79 = sphi 0, %s63
    %s85 = sphi 0, %s87
    %s88 = sphi 0, %s85
    %s89 = sphi 0, %s88
    %s105 = sphi 0, %s89
    %s113 = sphi 0, %s115
    %s116 = sphi 0, %s113
    %s117 = sphi 0, %s116
    %s133 = sphi 0, %s117
  $region4: #{prompt_decoder_forward.21} parent=0 // loop_header_branch
    %12 = sbr.rel (%p10) target = $region8
  $region5: #{prompt_decoder_forward.21} parent=0 // loop_body
    %s14 = ssub.s32 %s9, 1
    %s15 = ssub.s32 %s9, 2
    %s22 = sadd.s32 1, %s17
    %p23 = scmp.ge.s32.totalorder %s22, 1
    %s24 = scalar_select %p23, 0, %s22
    %s25 = sadd.s32 1, %s16
    %s26 = scalar_select %p23, %s25, %s16
    %p27 = scmp.ge.s32.totalorder %s26, 2
    %s28 = scalar_select %p27, 0, %s26
    %s29 = ssub.s32 %s16, %s28
    %s30 = ssub.s32 %s17, %s24
    %s31 = sor.u32 %s29, %s30
    %p32 = scmp.eq.s32.totalorder %s31, 0
    %s34 = sadd.s32 %s33, 1
    %s35 = scalar_select %p32, %s33, %s34
    %p38 = pneg %p32
    %p39 = scmp.eq.s32.totalorder %s9, 1
    %p40 = por %p38, %p39
    %p41 = scmp.ne.s32.totalorder %s33, %s36
    %p42 = scmp.eq.s32.totalorder %s9, 0
    %p43 = por %p41, %p42
    %p44 = scmp.ne.s32.totalorder %s33, %s36
    %p45 = scmp.eq.s32.totalorder %s14, 1
    %p46 = por %p44, %p45
    %p47 = scmp.ne.s32.totalorder %s36, %s37
    %p48 = scmp.eq.s32.totalorder %s14, 0
    %p49 = por %p47, %p48
    %p50 = scmp.ne.s32.totalorder %s36, %s37
    %p51 = scmp.eq.s32.totalorder %s15, 1
    %p52 = por %p50, %p51
    %p54 = scmp.ne.s32.totalorder %s37, %s53
    %p55 = scmp.eq.s32.totalorder %s15, 0
    %p56 = por %p54, %p55
    %s57 = ssub.s32 %s16, %s28
    %p58 = scmp.eq.s32.totalorder %s57, 0
    %s60 = sadd.s32 %s59, 1
    %s61 = scalar_select %p58, %s59, %s60
    %p64 = pneg %p58
    %p65 = scmp.eq.s32.totalorder %s9, 1
    %p66 = por %p64, %p65
    %p67 = scmp.ne.s32.totalorder %s59, %s62
    %p68 = scmp.eq.s32.totalorder %s9, 0
    %p69 = por %p67, %p68
    %p70 = scmp.ne.s32.totalorder %s59, %s62
    %p71 = scmp.eq.s32.totalorder %s14, 1
    %p72 = por %p70, %p71
    %p73 = scmp.ne.s32.totalorder %s62, %s63
    %p74 = scmp.eq.s32.totalorder %s14, 0
    %p75 = por %p73, %p74
    %p76 = scmp.ne.s32.totalorder %s62, %s63
    %p77 = scmp.eq.s32.totalorder %s15, 1
    %p78 = por %p76, %p77
    %p80 = scmp.ne.s32.totalorder %s63, %s79
    %p81 = scmp.eq.s32.totalorder %s15, 0
    %p82 = por %p80, %p81
    %s83 = ssub.s32 %s16, %s28
    %p84 = scmp.eq.s32.totalorder %s83, 0
    %s86 = sadd.s32 %s85, 1
    %s87 = scalar_select %p84, %s85, %s86
    %p90 = pneg %p84
    %p91 = scmp.eq.s32.totalorder %s9, 1
    %p92 = por %p90, %p91
    %p93 = scmp.ne.s32.totalorder %s85, %s88
    %p94 = scmp.eq.s32.totalorder %s9, 0
    %p95 = por %p93, %p94
    %p96 = scmp.ne.s32.totalorder %s85, %s88
    %p97 = scmp.eq.s32.totalorder %s14, 1
    %p98 = por %p96, %p97
    %p99 = scmp.ne.s32.totalorder %s88, %s89
    %p100 = scmp.eq.s32.totalorder %s14, 0
    %p101 = por %p99, %p100
    %p102 = scmp.ne.s32.totalorder %s88, %s89
    %p103 = scmp.eq.s32.totalorder %s15, 1
    %p104 = por %p102, %p103
    %p106 = scmp.ne.s32.totalorder %s89, %s105
    %p107 = scmp.eq.s32.totalorder %s15, 0
    %p108 = por %p106, %p107
    %s109 = ssub.s32 %s16, %s28
    %s110 = ssub.s32 %s17, %s24
    %s111 = sor.u32 %s109, %s110
    %p112 = scmp.eq.s32.totalorder %s111, 0
    %s114 = sadd.s32 %s113, 1
    %s115 = scalar_select %p112, %s113, %s114
    %p118 = pneg %p112
    %p119 = scmp.eq.s32.totalorder %s9, 1
    %p120 = por %p118, %p119
    %p121 = scmp.ne.s32.totalorder %s113, %s116
    %p122 = scmp.eq.s32.totalorder %s9, 0
    %p123 = por %p121, %p122
    %p124 = scmp.ne.s32.totalorder %s113, %s116
    %p125 = scmp.eq.s32.totalorder %s14, 1
    %p126 = por %p124, %p125
    %p127 = scmp.ne.s32.totalorder %s116, %s117
    %p128 = scmp.eq.s32.totalorder %s14, 0
    %p129 = por %p127, %p128
    %p130 = scmp.ne.s32.totalorder %s116, %s117
    %p131 = scmp.eq.s32.totalorder %s15, 1
    %p132 = por %p130, %p131
    %p134 = scmp.ne.s32.totalorder %s117, %s133
    %p135 = scmp.eq.s32.totalorder %s15, 0
    %p136 = por %p134, %p135
    %p137 = scmp.le.s32.totalorder 1, %s9
    %p138 = scmp.lt.s32.totalorder %s9, 3
    %p139 = pnand %p137, %p138
    %p140 = pneg %p139
    // Predicated region
    $region9: #{prompt_decoder_forward.21} parent=5 // pred_check
      _
    $region10: #{prompt_decoder_forward.21} parent=5 // pred_check_branch
      %142 = sbr.rel (%p139) target = $region12
    $region11: #{prompt_decoder_forward.21} parent=5 // pred_region
      %s143 = ssub.s32 %s9, 1
    $region12: #{prompt_decoder_forward.21} parent=5 // pred_fallthru
      _
    %p144 = scmp.lt.s32.totalorder %s9, 2
    // Predicated region
    $region13: #{prompt_decoder_forward.21} parent=5 // pred_check
      %p145 = pneg %p144
    $region14: #{prompt_decoder_forward.21} parent=5 // pred_check_branch
      %147 = sbr.rel (%p145) target = $region16
    $region15: #{prompt_decoder_forward.21} parent=5 // pred_region
      // Predicated region
      $region17: #{prompt_decoder_forward.21} parent=15 // pred_check
        %p148 = pneg %p43
      $region18: #{prompt_decoder_forward.21} parent=15 // pred_check_branch
        %150 = sbr.rel (%p148) target = $region20
      $region19: #{prompt_decoder_forward.21} parent=15 // pred_region
        %s151 = smul.u32 2, %s17
        %p152 = scmp.lt.s32.totalorder %s16, 1
        %s153 = scalar_select %p152, %s16, 1
        %p154 = scmp.lt.s32.totalorder %s151, 1
        %s155 = scalar_select %p154, %s151, 1
        %s156 = smul.addr %s153, 2
        %s157 = sadd.s32 %s155, %s156
        %s158 = smul.addr %s157, 4
        %s159 = scalar_lea.vmem %s0, %s158
        %s160 = smul.u32 2, %s17
      $region20: #{prompt_decoder_forward.21} parent=15 // pred_fallthru
        _
      // Predicated region
      $region21: #{prompt_decoder_forward.21} parent=15 // pred_check
        %p161 = pneg %p69
      $region22: #{prompt_decoder_forward.21} parent=15 // pred_check_branch
        %163 = sbr.rel (%p161) target = $region24
      $region23: #{prompt_decoder_forward.21} parent=15 // pred_region
        %p164 = scmp.lt.s32.totalorder %s16, 1
        %s165 = scalar_select %p164, %s16, 1
        %s166 = smul.addr %s165, 4
        %s167 = smul.addr %s166, 4
        %s168 = scalar_lea.vmem %s1, %s167
      $region24: #{prompt_decoder_forward.21} parent=15 // pred_fallthru
        _
      // Predicated region
      $region25: #{prompt_decoder_forward.21} parent=15 // pred_check
        %p169 = pneg %p95
      $region26: #{prompt_decoder_forward.21} parent=15 // pred_check_branch
        %171 = sbr.rel (%p169) target = $region28
      $region27: #{prompt_decoder_forward.21} parent=15 // pred_region
        %p172 = scmp.lt.s32.totalorder %s16, 1
        %s173 = scalar_select %p172, %s16, 1
        %s174 = smul.addr %s173, 4
        %s175 = smul.addr %s174, 4
        %s176 = scalar_lea.vmem %s2, %s175
      $region28: #{prompt_decoder_forward.21} parent=15 // pred_fallthru
        _
    $region16: #{prompt_decoder_forward.21} parent=5 // pred_fallthru
      _
    %p177 = scmp.le.s32.totalorder 1, %s9
    %p178 = scmp.lt.s32.totalorder %s9, 3
    %p179 = pnand %p177, %p178
    %p180 = pneg %p179
    // Predicated region
    $region29: #{prompt_decoder_forward.21} parent=5 // pred_check
      _
    $region30: #{prompt_decoder_forward.21} parent=5 // pred_check_branch
      %182 = sbr.rel (%p179) target = $region32
    $region31: #{prompt_decoder_forward.21} parent=5 // pred_region
      %s183 = ssub.s32 %s9, 1
      %s184 = smul.u32 2, %s19
      %p185 = scmp.lt.s32.totalorder %s18, 1
      %s186 = scalar_select %p185, %s18, 1
      %p187 = scmp.lt.s32.totalorder %s184, 1
      %s188 = scalar_select %p187, %s184, 1
      %s189 = smul.addr %s186, 2
      %s190 = sadd.s32 %s188, %s189
      %s191 = smul.addr %s190, 4
      %s192 = scalar_lea.vmem %s0, %s191
      %p193 = pneg %p49
      %p194 = pneg %p46
      %p195 = scmp.lt.s32.totalorder %s18, 1
      %s196 = scalar_select %p195, %s18, 1
      %s197 = smul.addr %s196, 4
      %s198 = smul.addr %s197, 4
      %s199 = scalar_lea.vmem %s1, %s198
      %p200 = pneg %p75
      %p201 = pneg %p72
      %p202 = scmp.lt.s32.totalorder %s18, 1
      %s203 = scalar_select %p202, %s18, 1
      %s204 = smul.addr %s203, 4
      %s205 = smul.addr %s204, 4
      %s206 = scalar_lea.vmem %s2, %s205
      %p207 = pneg %p101
      %p208 = pneg %p98
      %p209 = pneg %p129
      %p210 = pneg %p126
      %s211 = smul.u32 2, %s19
      %p212 = scmp.lt.s32.totalorder %s18, 1
      %s213 = scalar_select %p212, %s18, 1
      %p214 = scmp.lt.s32.totalorder %s211, 1
      %s215 = scalar_select %p214, %s211, 1
      %s216 = smul.addr %s213, 2
      %s217 = sadd.s32 %s215, %s216
      %s218 = smul.addr %s217, 4
      %s219 = scalar_lea.vmem %s3, %s218
      %s220 = smul.u32 2, %s19
      %p221 = scmp.lt.s32.totalorder %s18, 1
      %s222 = scalar_select %p221, %s18, 1
      %p223 = scmp.lt.s32.totalorder %s220, 1
      %s224 = scalar_select %p223, %s220, 1
      %s225 = smul.addr %s222, 2
      %s226 = sadd.s32 %s224, %s225
      %s227 = smul.addr %s226, 4
      %s228 = scalar_lea.vmem %s0, %s227
      %s229 = smul.u32 2, %s19
      %p230 = scmp.lt.s32.totalorder %s18, 1
      %s231 = scalar_select %p230, %s18, 1
      %s232 = smul.addr %s231, 4
      %s233 = smul.addr %s232, 4
      %s234 = scalar_lea.vmem %s1, %s233
      %p235 = scmp.lt.s32.totalorder %s18, 1
      %s236 = scalar_select %p235, %s18, 1
      %s237 = smul.addr %s236, 4
      %s238 = smul.addr %s237, 4
      %s239 = scalar_lea.vmem %s2, %s238
      %s240 = smul.u32 2, %s19
      %p241 = scmp.lt.s32.totalorder %s18, 1
      %s242 = scalar_select %p241, %s18, 1
      %p243 = scmp.lt.s32.totalorder %s240, 1
      %s244 = scalar_select %p243, %s240, 1
      %s245 = smul.addr %s242, 2
      %s246 = sadd.s32 %s244, %s245
      %s247 = smul.addr %s246, 4
      %s248 = scalar_lea.vmem %s3, %s247
      %s249 = smul.u32 2, %s19
      %v250 = vld [vmem:[%s228] sm:$0xf]
      %v251 = vld [vmem:[%s228 + $0x4] sm:$0xf]
      %v252 = vunpack.c.l.bf16 %v250
      %v253 = vunpack.c.l.bf16 %v251
      %v254 = vld [vmem:[%s234] sm:$0xf]
      %v255 = vld [vmem:[%s234 + $0x4] sm:$0xf]
      %v256 = vld [vmem:[%s234 + $0x8] sm:$0xf]
      %v257 = vld [vmem:[%s234 + $0xc] sm:$0xf]
      %v258 = vunpack.c.l.bf16 %v254
      %v259 = vunpack.c.l.bf16 %v255
      %v260 = vunpack.c.l.bf16 %v256
      %v261 = vunpack.c.l.bf16 %v257
      %v262 = vld [vmem:[%s239] sm:$0xf]
      %v263 = vld [vmem:[%s239 + $0x4] sm:$0xf]
      %v264 = vld [vmem:[%s239 + $0x8] sm:$0xf]
      %v265 = vld [vmem:[%s239 + $0xc] sm:$0xf]
      %v266 = vunpack.c.l.bf16 %v262
      %v267 = vunpack.c.l.bf16 %v263
      %v268 = vunpack.c.l.bf16 %v264
      %v269 = vunpack.c.l.bf16 %v265
      %272 = vrot.lane.b32.xlu0 %v252, 120
      %v273 = vpop.permute.xlu0 %272
      %274 = vrot.lane.b32.xlu0 %v253, 120
      %v275 = vpop.permute.xlu0 %274
      %278 = vrot.lane.b32.xlu0 %v252, 112
      %v279 = vpop.permute.xlu0 %278
      %280 = vrot.lane.b32.xlu0 %v253, 112
      %v281 = vpop.permute.xlu0 %280
      %284 = vrot.lane.b32.xlu0 %v252, 104
      %v285 = vpop.permute.xlu0 %284
      %286 = vrot.lane.b32.xlu0 %v253, 104
      %v287 = vpop.permute.xlu0 %286
      %v290 = vrot.slane %v279, 4
      %vm291 = vcmask 1047556
      %v292 = vsel %vm291, %v290, %v252
      %v293 = vrot.slane %v252, 4
      %v294 = vsel %vm291, %v279, %v293
      %v296 = vunpack.c.l.s4 1983009808
      %v297 = vunpack.c.0.s8 %v296
      %v298 = vperm.slane %v292, %v297
      %v300 = vunpack.c.l.s4 1983009808
      %v301 = vunpack.c.0.s8 %v300
      %v302 = vperm.slane %v294, %v301
      %v303 = vrot.slane %v285, 4
      %v304 = vsel %vm291, %v303, %v273
      %v305 = vrot.slane %v273, 4
      %v306 = vsel %vm291, %v285, %v305
      %v308 = vunpack.c.l.s4 1983009808
      %v309 = vunpack.c.0.s8 %v308
      %v310 = vperm.slane %v304, %v309
      %v312 = vunpack.c.l.s4 1983009808
      %v313 = vunpack.c.0.s8 %v312
      %v314 = vperm.slane %v306, %v313
      %v315 = vrot.slane %v310, 4
      %v316 = vsel %vm291, %v315, %v298
      %v317 = vrot.slane %v298, 4
      %v318 = vsel %vm291, %v310, %v317
      %v320 = vunpack.c.l.s4 1934713408
      %v321 = vunpack.c.0.s8 %v320
      %v322 = vperm.slane %v316, %v321
      %v324 = vunpack.c.l.s4 1934713408
      %v325 = vunpack.c.0.s8 %v324
      %v326 = vperm.slane %v318, %v325
      %v327 = vrot.slane %v314, 4
      %v328 = vsel %vm291, %v327, %v302
      %v329 = vrot.slane %v302, 4
      %v330 = vsel %vm291, %v314, %v329
      %v332 = vunpack.c.l.s4 1934713408
      %v333 = vunpack.c.0.s8 %v332
      %v334 = vperm.slane %v328, %v333
      %v336 = vunpack.c.l.s4 1934713408
      %v337 = vunpack.c.0.s8 %v336
      %v338 = vperm.slane %v330, %v337
      %v339 = vrot.slane %v322, 4
      %v340 = vsel %vm291, 0.0, %v339
      %v341 = vrot.slane %v326, 4
      %v342 = vsel %vm291, 0.0, %v341
      %v343 = vrot.slane %v334, 4
      %v344 = vsel %vm291, 0.0, %v343
      %v345 = vrot.slane %v338, 4
      %v346 = vsel %vm291, 0.0, %v345
      %v347 = vrot.slane %v281, 4
      %v348 = vsel %vm291, %v347, %v253
      %v349 = vrot.slane %v253, 4
      %v350 = vsel %vm291, %v281, %v349
      %v352 = vunpack.c.l.s4 1983009808
      %v353 = vunpack.c.0.s8 %v352
      %v354 = vperm.slane %v348, %v353
      %v356 = vunpack.c.l.s4 1983009808
      %v357 = vunpack.c.0.s8 %v356
      %v358 = vperm.slane %v350, %v357
      %v359 = vrot.slane %v287, 4
      %v360 = vsel %vm291, %v359, %v275
      %v361 = vrot.slane %v275, 4
      %v362 = vsel %vm291, %v287, %v361
      %v364 = vunpack.c.l.s4 1983009808
      %v365 = vunpack.c.0.s8 %v364
      %v366 = vperm.slane %v360, %v365
      %v368 = vunpack.c.l.s4 1983009808
      %v369 = vunpack.c.0.s8 %v368
      %v370 = vperm.slane %v362, %v369
      %v371 = vrot.slane %v366, 4
      %v372 = vsel %vm291, %v371, %v354
      %v373 = vrot.slane %v354, 4
      %v374 = vsel %vm291, %v366, %v373
      %v376 = vunpack.c.l.s4 1934713408
      %v377 = vunpack.c.0.s8 %v376
      %v378 = vperm.slane %v372, %v377
      %v380 = vunpack.c.l.s4 1934713408
      %v381 = vunpack.c.0.s8 %v380
      %v382 = vperm.slane %v374, %v381
      %v383 = vrot.slane %v370, 4
      %v384 = vsel %vm291, %v383, %v358
      %v385 = vrot.slane %v358, 4
      %v386 = vsel %vm291, %v370, %v385
      %v388 = vunpack.c.l.s4 1934713408
      %v389 = vunpack.c.0.s8 %v388
      %v390 = vperm.slane %v384, %v389
      %v392 = vunpack.c.l.s4 1934713408
      %v393 = vunpack.c.0.s8 %v392
      %v394 = vperm.slane %v386, %v393
      %v395 = vrot.slane %v378, 4
      %v396 = vsel %vm291, 0.0, %v395
      %v397 = vrot.slane %v382, 4
      %v398 = vsel %vm291, 0.0, %v397
      %v399 = vrot.slane %v390, 4
      %v400 = vsel %vm291, 0.0, %v399
      %v401 = vrot.slane %v394, 4
      %v402 = vsel %vm291, 0.0, %v401
      %v403 = vsel %vm291, %v341, %v322
      %v405 = vunpack.c.l.s4 1983009808
      %v406 = vunpack.c.0.s8 %v405
      %v407 = vperm.slane %v403, %v406
      %v408 = vrot.slane %v342, 4
      %v409 = vsel %vm291, %v408, %v340
      %v411 = vunpack.c.l.s4 1983009808
      %v412 = vunpack.c.0.s8 %v411
      %v413 = vperm.slane %v409, %v412
      %v414 = vsel %vm291, %v345, %v334
      %v416 = vunpack.c.l.s4 1983009808
      %v417 = vunpack.c.0.s8 %v416
      %v418 = vperm.slane %v414, %v417
      %v419 = vrot.slane %v346, 4
      %v420 = vsel %vm291, %v419, %v344
      %v422 = vunpack.c.l.s4 1983009808
      %v423 = vunpack.c.0.s8 %v422
      %v424 = vperm.slane %v420, %v423
      %v425 = vrot.slane %v413, 4
      %v426 = vsel %vm291, %v425, %v407
      %v427 = vrot.slane %v407, 4
      %v428 = vsel %vm291, %v413, %v427
      %v430 = vunpack.c.l.s4 1934713408
      %v431 = vunpack.c.0.s8 %v430
      %v432 = vperm.slane %v426, %v431
      %v434 = vunpack.c.l.s4 1934713408
      %v435 = vunpack.c.0.s8 %v434
      %v436 = vperm.slane %v428, %v435
      %v437 = vrot.slane %v424, 4
      %v438 = vsel %vm291, %v437, %v418
      %v439 = vrot.slane %v418, 4
      %v440 = vsel %vm291, %v424, %v439
      %v442 = vunpack.c.l.s4 1934713408
      %v443 = vunpack.c.0.s8 %v442
      %v444 = vperm.slane %v438, %v443
      %v446 = vunpack.c.l.s4 1934713408
      %v447 = vunpack.c.0.s8 %v446
      %v448 = vperm.slane %v440, %v447
      %v449 = vrot.slane %v444, 4
      %v450 = vsel %vm291, %v449, %v432
      %v451 = vrot.slane %v432, 4
      %v452 = vsel %vm291, %v444, %v451
      %v453 = vrot.slane %v448, 4
      %v454 = vsel %vm291, %v453, %v436
      %v455 = vrot.slane %v436, 4
      %v456 = vsel %vm291, %v448, %v455
      %v457 = vsel %vm291, %v397, %v378
      %v459 = vunpack.c.l.s4 1983009808
      %v460 = vunpack.c.0.s8 %v459
      %v461 = vperm.slane %v457, %v460
      %v462 = vrot.slane %v398, 4
      %v463 = vsel %vm291, %v462, %v396
      %v465 = vunpack.c.l.s4 1983009808
      %v466 = vunpack.c.0.s8 %v465
      %v467 = vperm.slane %v463, %v466
      %v468 = vsel %vm291, %v401, %v390
      %v470 = vunpack.c.l.s4 1983009808
      %v471 = vunpack.c.0.s8 %v470
      %v472 = vperm.slane %v468, %v471
      %v473 = vrot.slane %v402, 4
      %v474 = vsel %vm291, %v473, %v400
      %v476 = vunpack.c.l.s4 1983009808
      %v477 = vunpack.c.0.s8 %v476
      %v478 = vperm.slane %v474, %v477
      %v479 = vrot.slane %v467, 4
      %v480 = vsel %vm291, %v479, %v461
      %v481 = vrot.slane %v461, 4
      %v482 = vsel %vm291, %v467, %v481
      %v484 = vunpack.c.l.s4 1934713408
      %v485 = vunpack.c.0.s8 %v484
      %v486 = vperm.slane %v480, %v485
      %v488 = vunpack.c.l.s4 1934713408
      %v489 = vunpack.c.0.s8 %v488
      %v490 = vperm.slane %v482, %v489
      %v491 = vrot.slane %v478, 4
      %v492 = vsel %vm291, %v491, %v472
      %v493 = vrot.slane %v472, 4
      %v494 = vsel %vm291, %v478, %v493
      %v496 = vunpack.c.l.s4 1934713408
      %v497 = vunpack.c.0.s8 %v496
      %v498 = vperm.slane %v492, %v497
      %v500 = vunpack.c.l.s4 1934713408
      %v501 = vunpack.c.0.s8 %v500
      %v502 = vperm.slane %v494, %v501
      %v503 = vrot.slane %v498, 4
      %v504 = vsel %vm291, %v503, %v486
      %v505 = vrot.slane %v486, 4
      %v506 = vsel %vm291, %v498, %v505
      %v507 = vrot.slane %v502, 4
      %v508 = vsel %vm291, %v507, %v490
      %v509 = vrot.slane %v490, 4
      %v510 = vsel %vm291, %v502, %v509
      %515 = vrot.lane.b32.xlu0 %v258, 120
      %v516 = vpop.permute.xlu0 %515
      %517 = vrot.lane.b32.xlu0 %v259, 120
      %v518 = vpop.permute.xlu0 %517
      %519 = vrot.lane.b32.xlu0 %v260, 120
      %v520 = vpop.permute.xlu0 %519
      %521 = vrot.lane.b32.xlu0 %v261, 120
      %v522 = vpop.permute.xlu0 %521
      %527 = vrot.lane.b32.xlu0 %v258, 112
      %v528 = vpop.permute.xlu0 %527
      %529 = vrot.lane.b32.xlu0 %v259, 112
      %v530 = vpop.permute.xlu0 %529
      %531 = vrot.lane.b32.xlu0 %v260, 112
      %v532 = vpop.permute.xlu0 %531
      %533 = vrot.lane.b32.xlu0 %v261, 112
      %v534 = vpop.permute.xlu0 %533
      %539 = vrot.lane.b32.xlu0 %v258, 104
      %v540 = vpop.permute.xlu0 %539
      %541 = vrot.lane.b32.xlu0 %v259, 104
      %v542 = vpop.permute.xlu0 %541
      %543 = vrot.lane.b32.xlu0 %v260, 104
      %v544 = vpop.permute.xlu0 %543
      %545 = vrot.lane.b32.xlu0 %v261, 104
      %v546 = vpop.permute.xlu0 %545
      %v551 = vrot.slane %v528, 4
      %v552 = vsel %vm291, %v551, %v258
      %v553 = vrot.slane %v258, 4
      %v554 = vsel %vm291, %v528, %v553
      %v556 = vunpack.c.l.s4 1983009808
      %v557 = vunpack.c.0.s8 %v556
      %v558 = vperm.slane %v552, %v557
      %v560 = vunpack.c.l.s4 1983009808
      %v561 = vunpack.c.0.s8 %v560
      %v562 = vperm.slane %v554, %v561
      %v563 = vrot.slane %v540, 4
      %v564 = vsel %vm291, %v563, %v516
      %v565 = vrot.slane %v516, 4
      %v566 = vsel %vm291, %v540, %v565
      %v568 = vunpack.c.l.s4 1983009808
      %v569 = vunpack.c.0.s8 %v568
      %v570 = vperm.slane %v564, %v569
      %v572 = vunpack.c.l.s4 1983009808
      %v573 = vunpack.c.0.s8 %v572
      %v574 = vperm.slane %v566, %v573
      %v575 = vrot.slane %v570, 4
      %v576 = vsel %vm291, %v575, %v558
      %v577 = vrot.slane %v558, 4
      %v578 = vsel %vm291, %v570, %v577
      %v580 = vunpack.c.l.s4 1934713408
      %v581 = vunpack.c.0.s8 %v580
      %v582 = vperm.slane %v576, %v581
      %v584 = vunpack.c.l.s4 1934713408
      %v585 = vunpack.c.0.s8 %v584
      %v586 = vperm.slane %v578, %v585
      %v587 = vrot.slane %v574, 4
      %v588 = vsel %vm291, %v587, %v562
      %v589 = vrot.slane %v562, 4
      %v590 = vsel %vm291, %v574, %v589
      %v592 = vunpack.c.l.s4 1934713408
      %v593 = vunpack.c.0.s8 %v592
      %v594 = vperm.slane %v588, %v593
      %v596 = vunpack.c.l.s4 1934713408
      %v597 = vunpack.c.0.s8 %v596
      %v598 = vperm.slane %v590, %v597
      %v599 = vrot.slane %v582, 4
      %v600 = vsel %vm291, 0.0, %v599
      %v601 = vrot.slane %v586, 4
      %v602 = vsel %vm291, 0.0, %v601
      %v603 = vrot.slane %v594, 4
      %v604 = vsel %vm291, 0.0, %v603
      %v605 = vrot.slane %v598, 4
      %v606 = vsel %vm291, 0.0, %v605
      %v607 = vrot.slane %v530, 4
      %v608 = vsel %vm291, %v607, %v259
      %v609 = vrot.slane %v259, 4
      %v610 = vsel %vm291, %v530, %v609
      %v612 = vunpack.c.l.s4 1983009808
      %v613 = vunpack.c.0.s8 %v612
      %v614 = vperm.slane %v608, %v613
      %v616 = vunpack.c.l.s4 1983009808
      %v617 = vunpack.c.0.s8 %v616
      %v618 = vperm.slane %v610, %v617
      %v619 = vrot.slane %v542, 4
      %v620 = vsel %vm291, %v619, %v518
      %v621 = vrot.slane %v518, 4
      %v622 = vsel %vm291, %v542, %v621
      %v624 = vunpack.c.l.s4 1983009808
      %v625 = vunpack.c.0.s8 %v624
      %v626 = vperm.slane %v620, %v625
      %v628 = vunpack.c.l.s4 1983009808
      %v629 = vunpack.c.0.s8 %v628
      %v630 = vperm.slane %v622, %v629
      %v631 = vrot.slane %v626, 4
      %v632 = vsel %vm291, %v631, %v614
      %v633 = vrot.slane %v614, 4
      %v634 = vsel %vm291, %v626, %v633
      %v636 = vunpack.c.l.s4 1934713408
      %v637 = vunpack.c.0.s8 %v636
      %v638 = vperm.slane %v632, %v637
      %v640 = vunpack.c.l.s4 1934713408
      %v641 = vunpack.c.0.s8 %v640
      %v642 = vperm.slane %v634, %v641
      %v643 = vrot.slane %v630, 4
      %v644 = vsel %vm291, %v643, %v618
      %v645 = vrot.slane %v618, 4
      %v646 = vsel %vm291, %v630, %v645
      %v648 = vunpack.c.l.s4 1934713408
      %v649 = vunpack.c.0.s8 %v648
      %v650 = vperm.slane %v644, %v649
      %v652 = vunpack.c.l.s4 1934713408
      %v653 = vunpack.c.0.s8 %v652
      %v654 = vperm.slane %v646, %v653
      %v655 = vrot.slane %v638, 4
      %v656 = vsel %vm291, 0.0, %v655
      %v657 = vrot.slane %v642, 4
      %v658 = vsel %vm291, 0.0, %v657
      %v659 = vrot.slane %v650, 4
      %v660 = vsel %vm291, 0.0, %v659
      %v661 = vrot.slane %v654, 4
      %v662 = vsel %vm291, 0.0, %v661
      %v663 = vrot.slane %v532, 4
      %v664 = vsel %vm291, %v663, %v260
      %v665 = vrot.slane %v260, 4
      %v666 = vsel %vm291, %v532, %v665
      %v668 = vunpack.c.l.s4 1983009808
      %v669 = vunpack.c.0.s8 %v668
      %v670 = vperm.slane %v664, %v669
      %v672 = vunpack.c.l.s4 1983009808
      %v673 = vunpack.c.0.s8 %v672
      %v674 = vperm.slane %v666, %v673
      %v675 = vrot.slane %v544, 4
      %v676 = vsel %vm291, %v675, %v520
      %v677 = vrot.slane %v520, 4
      %v678 = vsel %vm291, %v544, %v677
      %v680 = vunpack.c.l.s4 1983009808
      %v681 = vunpack.c.0.s8 %v680
      %v682 = vperm.slane %v676, %v681
      %v684 = vunpack.c.l.s4 1983009808
      %v685 = vunpack.c.0.s8 %v684
      %v686 = vperm.slane %v678, %v685
      %v687 = vrot.slane %v682, 4
      %v688 = vsel %vm291, %v687, %v670
      %v689 = vrot.slane %v670, 4
      %v690 = vsel %vm291, %v682, %v689
      %v692 = vunpack.c.l.s4 1934713408
      %v693 = vunpack.c.0.s8 %v692
      %v694 = vperm.slane %v688, %v693
      %v696 = vunpack.c.l.s4 1934713408
      %v697 = vunpack.c.0.s8 %v696
      %v698 = vperm.slane %v690, %v697
      %v699 = vrot.slane %v686, 4
      %v700 = vsel %vm291, %v699, %v674
      %v701 = vrot.slane %v674, 4
      %v702 = vsel %vm291, %v686, %v701
      %v704 = vunpack.c.l.s4 1934713408
      %v705 = vunpack.c.0.s8 %v704
      %v706 = vperm.slane %v700, %v705
      %v708 = vunpack.c.l.s4 1934713408
      %v709 = vunpack.c.0.s8 %v708
      %v710 = vperm.slane %v702, %v709
      %v711 = vrot.slane %v694, 4
      %v712 = vsel %vm291, 0.0, %v711
      %v713 = vrot.slane %v698, 4
      %v714 = vsel %vm291, 0.0, %v713
      %v715 = vrot.slane %v706, 4
      %v716 = vsel %vm291, 0.0, %v715
      %v717 = vrot.slane %v710, 4
      %v718 = vsel %vm291, 0.0, %v717
      %v719 = vrot.slane %v534, 4
      %v720 = vsel %vm291, %v719, %v261
      %v721 = vrot.slane %v261, 4
      %v722 = vsel %vm291, %v534, %v721
      %v724 = vunpack.c.l.s4 1983009808
      %v725 = vunpack.c.0.s8 %v724
      %v726 = vperm.slane %v720, %v725
      %v728 = vunpack.c.l.s4 1983009808
      %v729 = vunpack.c.0.s8 %v728
      %v730 = vperm.slane %v722, %v729
      %v731 = vrot.slane %v546, 4
      %v732 = vsel %vm291, %v731, %v522
      %v733 = vrot.slane %v522, 4
      %v734 = vsel %vm291, %v546, %v733
      %v736 = vunpack.c.l.s4 1983009808
      %v737 = vunpack.c.0.s8 %v736
      %v738 = vperm.slane %v732, %v737
      %v740 = vunpack.c.l.s4 1983009808
      %v741 = vunpack.c.0.s8 %v740
      %v742 = vperm.slane %v734, %v741
      %v743 = vrot.slane %v738, 4
      %v744 = vsel %vm291, %v743, %v726
      %v745 = vrot.slane %v726, 4
      %v746 = vsel %vm291, %v738, %v745
      %v748 = vunpack.c.l.s4 1934713408
      %v749 = vunpack.c.0.s8 %v748
      %v750 = vperm.slane %v744, %v749
      %v752 = vunpack.c.l.s4 1934713408
      %v753 = vunpack.c.0.s8 %v752
      %v754 = vperm.slane %v746, %v753
      %v755 = vrot.slane %v742, 4
      %v756 = vsel %vm291, %v755, %v730
      %v757 = vrot.slane %v730, 4
      %v758 = vsel %vm291, %v742, %v757
      %v760 = vunpack.c.l.s4 1934713408
      %v761 = vunpack.c.0.s8 %v760
      %v762 = vperm.slane %v756, %v761
      %v764 = vunpack.c.l.s4 1934713408
      %v765 = vunpack.c.0.s8 %v764
      %v766 = vperm.slane %v758, %v765
      %v767 = vrot.slane %v750, 4
      %v768 = vsel %vm291, 0.0, %v767
      %v769 = vrot.slane %v754, 4
      %v770 = vsel %vm291, 0.0, %v769
      %v771 = vrot.slane %v762, 4
      %v772 = vsel %vm291, 0.0, %v771
      %v773 = vrot.slane %v766, 4
      %v774 = vsel %vm291, 0.0, %v773
      %v775 = vsel %vm291, %v601, %v582
      %v777 = vunpack.c.l.s4 1983009808
      %v778 = vunpack.c.0.s8 %v777
      %v779 = vperm.slane %v775, %v778
      %v780 = vrot.slane %v602, 4
      %v781 = vsel %vm291, %v780, %v600
      %v783 = vunpack.c.l.s4 1983009808
      %v784 = vunpack.c.0.s8 %v783
      %v785 = vperm.slane %v781, %v784
      %v786 = vsel %vm291, %v605, %v594
      %v788 = vunpack.c.l.s4 1983009808
      %v789 = vunpack.c.0.s8 %v788
      %v790 = vperm.slane %v786, %v789
      %v791 = vrot.slane %v606, 4
      %v792 = vsel %vm291, %v791, %v604
      %v794 = vunpack.c.l.s4 1983009808
      %v795 = vunpack.c.0.s8 %v794
      %v796 = vperm.slane %v792, %v795
      %v797 = vrot.slane %v785, 4
      %v798 = vsel %vm291, %v797, %v779
      %v799 = vrot.slane %v779, 4
      %v800 = vsel %vm291, %v785, %v799
      %v802 = vunpack.c.l.s4 1934713408
      %v803 = vunpack.c.0.s8 %v802
      %v804 = vperm.slane %v798, %v803
      %v806 = vunpack.c.l.s4 1934713408
      %v807 = vunpack.c.0.s8 %v806
      %v808 = vperm.slane %v800, %v807
      %v809 = vrot.slane %v796, 4
      %v810 = vsel %vm291, %v809, %v790
      %v811 = vrot.slane %v790, 4
      %v812 = vsel %vm291, %v796, %v811
      %v814 = vunpack.c.l.s4 1934713408
      %v815 = vunpack.c.0.s8 %v814
      %v816 = vperm.slane %v810, %v815
      %v818 = vunpack.c.l.s4 1934713408
      %v819 = vunpack.c.0.s8 %v818
      %v820 = vperm.slane %v812, %v819
      %v821 = vrot.slane %v816, 4
      %v822 = vsel %vm291, %v821, %v804
      %v823 = vrot.slane %v804, 4
      %v824 = vsel %vm291, %v816, %v823
      %v825 = vrot.slane %v820, 4
      %v826 = vsel %vm291, %v825, %v808
      %v827 = vrot.slane %v808, 4
      %v828 = vsel %vm291, %v820, %v827
      %v829 = vsel %vm291, %v657, %v638
      %v831 = vunpack.c.l.s4 1983009808
      %v832 = vunpack.c.0.s8 %v831
      %v833 = vperm.slane %v829, %v832
      %v834 = vrot.slane %v658, 4
      %v835 = vsel %vm291, %v834, %v656
      %v837 = vunpack.c.l.s4 1983009808
      %v838 = vunpack.c.0.s8 %v837
      %v839 = vperm.slane %v835, %v838
      %v840 = vsel %vm291, %v661, %v650
      %v842 = vunpack.c.l.s4 1983009808
      %v843 = vunpack.c.0.s8 %v842
      %v844 = vperm.slane %v840, %v843
      %v845 = vrot.slane %v662, 4
      %v846 = vsel %vm291, %v845, %v660
      %v848 = vunpack.c.l.s4 1983009808
      %v849 = vunpack.c.0.s8 %v848
      %v850 = vperm.slane %v846, %v849
      %v851 = vrot.slane %v839, 4
      %v852 = vsel %vm291, %v851, %v833
      %v853 = vrot.slane %v833, 4
      %v854 = vsel %vm291, %v839, %v853
      %v856 = vunpack.c.l.s4 1934713408
      %v857 = vunpack.c.0.s8 %v856
      %v858 = vperm.slane %v852, %v857
      %v860 = vunpack.c.l.s4 1934713408
      %v861 = vunpack.c.0.s8 %v860
      %v862 = vperm.slane %v854, %v861
      %v863 = vrot.slane %v850, 4
      %v864 = vsel %vm291, %v863, %v844
      %v865 = vrot.slane %v844, 4
      %v866 = vsel %vm291, %v850, %v865
      %v868 = vunpack.c.l.s4 1934713408
      %v869 = vunpack.c.0.s8 %v868
      %v870 = vperm.slane %v864, %v869
      %v872 = vunpack.c.l.s4 1934713408
      %v873 = vunpack.c.0.s8 %v872
      %v874 = vperm.slane %v866, %v873
      %v875 = vrot.slane %v870, 4
      %v876 = vsel %vm291, %v875, %v858
      %v877 = vrot.slane %v858, 4
      %v878 = vsel %vm291, %v870, %v877
      %v879 = vrot.slane %v874, 4
      %v880 = vsel %vm291, %v879, %v862
      %v881 = vrot.slane %v862, 4
      %v882 = vsel %vm291, %v874, %v881
      %v883 = vsel %vm291, %v713, %v694
      %v885 = vunpack.c.l.s4 1983009808
      %v886 = vunpack.c.0.s8 %v885
      %v887 = vperm.slane %v883, %v886
      %v888 = vrot.slane %v714, 4
      %v889 = vsel %vm291, %v888, %v712
      %v891 = vunpack.c.l.s4 1983009808
      %v892 = vunpack.c.0.s8 %v891
      %v893 = vperm.slane %v889, %v892
      %v894 = vsel %vm291, %v717, %v706
      %v896 = vunpack.c.l.s4 1983009808
      %v897 = vunpack.c.0.s8 %v896
      %v898 = vperm.slane %v894, %v897
      %v899 = vrot.slane %v718, 4
      %v900 = vsel %vm291, %v899, %v716
      %v902 = vunpack.c.l.s4 1983009808
      %v903 = vunpack.c.0.s8 %v902
      %v904 = vperm.slane %v900, %v903
      %v905 = vrot.slane %v893, 4
      %v906 = vsel %vm291, %v905, %v887
      %v907 = vrot.slane %v887, 4
      %v908 = vsel %vm291, %v893, %v907
      %v910 = vunpack.c.l.s4 1934713408
      %v911 = vunpack.c.0.s8 %v910
      %v912 = vperm.slane %v906, %v911
      %v914 = vunpack.c.l.s4 1934713408
      %v915 = vunpack.c.0.s8 %v914
      %v916 = vperm.slane %v908, %v915
      %v917 = vrot.slane %v904, 4
      %v918 = vsel %vm291, %v917, %v898
      %v919 = vrot.slane %v898, 4
      %v920 = vsel %vm291, %v904, %v919
      %v922 = vunpack.c.l.s4 1934713408
      %v923 = vunpack.c.0.s8 %v922
      %v924 = vperm.slane %v918, %v923
      %v926 = vunpack.c.l.s4 1934713408
      %v927 = vunpack.c.0.s8 %v926
      %v928 = vperm.slane %v920, %v927
      %v929 = vrot.slane %v924, 4
      %v930 = vsel %vm291, %v929, %v912
      %v931 = vrot.slane %v912, 4
      %v932 = vsel %vm291, %v924, %v931
      %v933 = vrot.slane %v928, 4
      %v934 = vsel %vm291, %v933, %v916
      %v935 = vrot.slane %v916, 4
      %v936 = vsel %vm291, %v928, %v935
      %v937 = vsel %vm291, %v769, %v750
      %v939 = vunpack.c.l.s4 1983009808
      %v940 = vunpack.c.0.s8 %v939
      %v941 = vperm.slane %v937, %v940
      %v942 = vrot.slane %v770, 4
      %v943 = vsel %vm291, %v942, %v768
      %v945 = vunpack.c.l.s4 1983009808
      %v946 = vunpack.c.0.s8 %v945
      %v947 = vperm.slane %v943, %v946
      %v948 = vsel %vm291, %v773, %v762
      %v950 = vunpack.c.l.s4 1983009808
      %v951 = vunpack.c.0.s8 %v950
      %v952 = vperm.slane %v948, %v951
      %v953 = vrot.slane %v774, 4
      %v954 = vsel %vm291, %v953, %v772
      %v956 = vunpack.c.l.s4 1983009808
      %v957 = vunpack.c.0.s8 %v956
      %v958 = vperm.slane %v954, %v957
      %v959 = vrot.slane %v947, 4
      %v960 = vsel %vm291, %v959, %v941
      %v961 = vrot.slane %v941, 4
      %v962 = vsel %vm291, %v947, %v961
      %v964 = vunpack.c.l.s4 1934713408
      %v965 = vunpack.c.0.s8 %v964
      %v966 = vperm.slane %v960, %v965
      %v968 = vunpack.c.l.s4 1934713408
      %v969 = vunpack.c.0.s8 %v968
      %v970 = vperm.slane %v962, %v969
      %v971 = vrot.slane %v958, 4
      %v972 = vsel %vm291, %v971, %v952
      %v973 = vrot.slane %v952, 4
      %v974 = vsel %vm291, %v958, %v973
      %v976 = vunpack.c.l.s4 1934713408
      %v977 = vunpack.c.0.s8 %v976
      %v978 = vperm.slane %v972, %v977
      %v980 = vunpack.c.l.s4 1934713408
      %v981 = vunpack.c.0.s8 %v980
      %v982 = vperm.slane %v974, %v981
      %v983 = vrot.slane %v978, 4
      %v984 = vsel %vm291, %v983, %v966
      %v985 = vrot.slane %v966, 4
      %v986 = vsel %vm291, %v978, %v985
      %v987 = vrot.slane %v982, 4
      %v988 = vsel %vm291, %v987, %v970
      %v989 = vrot.slane %v970, 4
      %v990 = vsel %vm291, %v982, %v989
      %995 = vrot.lane.b32.xlu0 %v266, 120
      %v996 = vpop.permute.xlu0 %995
      %997 = vrot.lane.b32.xlu0 %v267, 120
      %v998 = vpop.permute.xlu0 %997
      %999 = vrot.lane.b32.xlu0 %v268, 120
      %v1000 = vpop.permute.xlu0 %999
      %1001 = vrot.lane.b32.xlu0 %v269, 120
      %v1002 = vpop.permute.xlu0 %1001
      %1007 = vrot.lane.b32.xlu0 %v266, 112
      %v1008 = vpop.permute.xlu0 %1007
      %1009 = vrot.lane.b32.xlu0 %v267, 112
      %v1010 = vpop.permute.xlu0 %1009
      %1011 = vrot.lane.b32.xlu0 %v268, 112
      %v1012 = vpop.permute.xlu0 %1011
      %1013 = vrot.lane.b32.xlu0 %v269, 112
      %v1014 = vpop.permute.xlu0 %1013
      %1019 = vrot.lane.b32.xlu0 %v266, 104
      %v1020 = vpop.permute.xlu0 %1019
      %1021 = vrot.lane.b32.xlu0 %v267, 104
      %v1022 = vpop.permute.xlu0 %1021
      %1023 = vrot.lane.b32.xlu0 %v268, 104
      %v1024 = vpop.permute.xlu0 %1023
      %1025 = vrot.lane.b32.xlu0 %v269, 104
      %v1026 = vpop.permute.xlu0 %1025
      %v1031 = vrot.slane %v1008, 4
      %v1032 = vsel %vm291, %v1031, %v266
      %v1033 = vrot.slane %v266, 4
      %v1034 = vsel %vm291, %v1008, %v1033
      %v1036 = vunpack.c.l.s4 1983009808
      %v1037 = vunpack.c.0.s8 %v1036
      %v1038 = vperm.slane %v1032, %v1037
      %v1040 = vunpack.c.l.s4 1983009808
      %v1041 = vunpack.c.0.s8 %v1040
      %v1042 = vperm.slane %v1034, %v1041
      %v1043 = vrot.slane %v1020, 4
      %v1044 = vsel %vm291, %v1043, %v996
      %v1045 = vrot.slane %v996, 4
      %v1046 = vsel %vm291, %v1020, %v1045
      %v1048 = vunpack.c.l.s4 1983009808
      %v1049 = vunpack.c.0.s8 %v1048
      %v1050 = vperm.slane %v1044, %v1049
      %v1052 = vunpack.c.l.s4 1983009808
      %v1053 = vunpack.c.0.s8 %v1052
      %v1054 = vperm.slane %v1046, %v1053
      %v1055 = vrot.slane %v1050, 4
      %v1056 = vsel %vm291, %v1055, %v1038
      %v1057 = vrot.slane %v1038, 4
      %v1058 = vsel %vm291, %v1050, %v1057
      %v1060 = vunpack.c.l.s4 1934713408
      %v1061 = vunpack.c.0.s8 %v1060
      %v1062 = vperm.slane %v1056, %v1061
      %v1064 = vunpack.c.l.s4 1934713408
      %v1065 = vunpack.c.0.s8 %v1064
      %v1066 = vperm.slane %v1058, %v1065
      %v1067 = vrot.slane %v1054, 4
      %v1068 = vsel %vm291, %v1067, %v1042
      %v1069 = vrot.slane %v1042, 4
      %v1070 = vsel %vm291, %v1054, %v1069
      %v1072 = vunpack.c.l.s4 1934713408
      %v1073 = vunpack.c.0.s8 %v1072
      %v1074 = vperm.slane %v1068, %v1073
      %v1076 = vunpack.c.l.s4 1934713408
      %v1077 = vunpack.c.0.s8 %v1076
      %v1078 = vperm.slane %v1070, %v1077
      %v1079 = vrot.slane %v1062, 4
      %v1080 = vsel %vm291, 0.0, %v1079
      %v1081 = vrot.slane %v1066, 4
      %v1082 = vsel %vm291, 0.0, %v1081
      %v1083 = vrot.slane %v1074, 4
      %v1084 = vsel %vm291, 0.0, %v1083
      %v1085 = vrot.slane %v1078, 4
      %v1086 = vsel %vm291, 0.0, %v1085
      %v1087 = vrot.slane %v1010, 4
      %v1088 = vsel %vm291, %v1087, %v267
      %v1089 = vrot.slane %v267, 4
      %v1090 = vsel %vm291, %v1010, %v1089
      %v1092 = vunpack.c.l.s4 1983009808
      %v1093 = vunpack.c.0.s8 %v1092
      %v1094 = vperm.slane %v1088, %v1093
      %v1096 = vunpack.c.l.s4 1983009808
      %v1097 = vunpack.c.0.s8 %v1096
      %v1098 = vperm.slane %v1090, %v1097
      %v1099 = vrot.slane %v1022, 4
      %v1100 = vsel %vm291, %v1099, %v998
      %v1101 = vrot.slane %v998, 4
      %v1102 = vsel %vm291, %v1022, %v1101
      %v1104 = vunpack.c.l.s4 1983009808
      %v1105 = vunpack.c.0.s8 %v1104
      %v1106 = vperm.slane %v1100, %v1105
      %v1108 = vunpack.c.l.s4 1983009808
      %v1109 = vunpack.c.0.s8 %v1108
      %v1110 = vperm.slane %v1102, %v1109
      %v1111 = vrot.slane %v1106, 4
      %v1112 = vsel %vm291, %v1111, %v1094
      %v1113 = vrot.slane %v1094, 4
      %v1114 = vsel %vm291, %v1106, %v1113
      %v1116 = vunpack.c.l.s4 1934713408
      %v1117 = vunpack.c.0.s8 %v1116
      %v1118 = vperm.slane %v1112, %v1117
      %v1120 = vunpack.c.l.s4 1934713408
      %v1121 = vunpack.c.0.s8 %v1120
      %v1122 = vperm.slane %v1114, %v1121
      %v1123 = vrot.slane %v1110, 4
      %v1124 = vsel %vm291, %v1123, %v1098
      %v1125 = vrot.slane %v1098, 4
      %v1126 = vsel %vm291, %v1110, %v1125
      %v1128 = vunpack.c.l.s4 1934713408
      %v1129 = vunpack.c.0.s8 %v1128
      %v1130 = vperm.slane %v1124, %v1129
      %v1132 = vunpack.c.l.s4 1934713408
      %v1133 = vunpack.c.0.s8 %v1132
      %v1134 = vperm.slane %v1126, %v1133
      %v1135 = vrot.slane %v1118, 4
      %v1136 = vsel %vm291, 0.0, %v1135
      %v1137 = vrot.slane %v1122, 4
      %v1138 = vsel %vm291, 0.0, %v1137
      %v1139 = vrot.slane %v1130, 4
      %v1140 = vsel %vm291, 0.0, %v1139
      %v1141 = vrot.slane %v1134, 4
      %v1142 = vsel %vm291, 0.0, %v1141
      %v1143 = vrot.slane %v1012, 4
      %v1144 = vsel %vm291, %v1143, %v268
      %v1145 = vrot.slane %v268, 4
      %v1146 = vsel %vm291, %v1012, %v1145
      %v1148 = vunpack.c.l.s4 1983009808
      %v1149 = vunpack.c.0.s8 %v1148
      %v1150 = vperm.slane %v1144, %v1149
      %v1152 = vunpack.c.l.s4 1983009808
      %v1153 = vunpack.c.0.s8 %v1152
      %v1154 = vperm.slane %v1146, %v1153
      %v1155 = vrot.slane %v1024, 4
      %v1156 = vsel %vm291, %v1155, %v1000
      %v1157 = vrot.slane %v1000, 4
      %v1158 = vsel %vm291, %v1024, %v1157
      %v1160 = vunpack.c.l.s4 1983009808
      %v1161 = vunpack.c.0.s8 %v1160
      %v1162 = vperm.slane %v1156, %v1161
      %v1164 = vunpack.c.l.s4 1983009808
      %v1165 = vunpack.c.0.s8 %v1164
      %v1166 = vperm.slane %v1158, %v1165
      %v1167 = vrot.slane %v1162, 4
      %v1168 = vsel %vm291, %v1167, %v1150
      %v1169 = vrot.slane %v1150, 4
      %v1170 = vsel %vm291, %v1162, %v1169
      %v1172 = vunpack.c.l.s4 1934713408
      %v1173 = vunpack.c.0.s8 %v1172
      %v1174 = vperm.slane %v1168, %v1173
      %v1176 = vunpack.c.l.s4 1934713408
      %v1177 = vunpack.c.0.s8 %v1176
      %v1178 = vperm.slane %v1170, %v1177
      %v1179 = vrot.slane %v1166, 4
      %v1180 = vsel %vm291, %v1179, %v1154
      %v1181 = vrot.slane %v1154, 4
      %v1182 = vsel %vm291, %v1166, %v1181
      %v1184 = vunpack.c.l.s4 1934713408
      %v1185 = vunpack.c.0.s8 %v1184
      %v1186 = vperm.slane %v1180, %v1185
      %v1188 = vunpack.c.l.s4 1934713408
      %v1189 = vunpack.c.0.s8 %v1188
      %v1190 = vperm.slane %v1182, %v1189
      %v1191 = vrot.slane %v1174, 4
      %v1192 = vsel %vm291, 0.0, %v1191
      %v1193 = vrot.slane %v1178, 4
      %v1194 = vsel %vm291, 0.0, %v1193
      %v1195 = vrot.slane %v1186, 4
      %v1196 = vsel %vm291, 0.0, %v1195
      %v1197 = vrot.slane %v1190, 4
      %v1198 = vsel %vm291, 0.0, %v1197
      %v1199 = vrot.slane %v1014, 4
      %v1200 = vsel %vm291, %v1199, %v269
      %v1201 = vrot.slane %v269, 4
      %v1202 = vsel %vm291, %v1014, %v1201
      %v1204 = vunpack.c.l.s4 1983009808
      %v1205 = vunpack.c.0.s8 %v1204
      %v1206 = vperm.slane %v1200, %v1205
      %v1208 = vunpack.c.l.s4 1983009808
      %v1209 = vunpack.c.0.s8 %v1208
      %v1210 = vperm.slane %v1202, %v1209
      %v1211 = vrot.slane %v1026, 4
      %v1212 = vsel %vm291, %v1211, %v1002
      %v1213 = vrot.slane %v1002, 4
      %v1214 = vsel %vm291, %v1026, %v1213
      %v1216 = vunpack.c.l.s4 1983009808
      %v1217 = vunpack.c.0.s8 %v1216
      %v1218 = vperm.slane %v1212, %v1217
      %v1220 = vunpack.c.l.s4 1983009808
      %v1221 = vunpack.c.0.s8 %v1220
      %v1222 = vperm.slane %v1214, %v1221
      %v1223 = vrot.slane %v1218, 4
      %v1224 = vsel %vm291, %v1223, %v1206
      %v1225 = vrot.slane %v1206, 4
      %v1226 = vsel %vm291, %v1218, %v1225
      %v1228 = vunpack.c.l.s4 1934713408
      %v1229 = vunpack.c.0.s8 %v1228
      %v1230 = vperm.slane %v1224, %v1229
      %v1232 = vunpack.c.l.s4 1934713408
      %v1233 = vunpack.c.0.s8 %v1232
      %v1234 = vperm.slane %v1226, %v1233
      %v1235 = vrot.slane %v1222, 4
      %v1236 = vsel %vm291, %v1235, %v1210
      %v1237 = vrot.slane %v1210, 4
      %v1238 = vsel %vm291, %v1222, %v1237
      %v1240 = vunpack.c.l.s4 1934713408
      %v1241 = vunpack.c.0.s8 %v1240
      %v1242 = vperm.slane %v1236, %v1241
      %v1244 = vunpack.c.l.s4 1934713408
      %v1245 = vunpack.c.0.s8 %v1244
      %v1246 = vperm.slane %v1238, %v1245
      %v1247 = vrot.slane %v1230, 4
      %v1248 = vsel %vm291, 0.0, %v1247
      %v1249 = vrot.slane %v1234, 4
      %v1250 = vsel %vm291, 0.0, %v1249
      %v1251 = vrot.slane %v1242, 4
      %v1252 = vsel %vm291, 0.0, %v1251
      %v1253 = vrot.slane %v1246, 4
      %v1254 = vsel %vm291, 0.0, %v1253
      %v1255 = vsel %vm291, %v1081, %v1062
      %v1257 = vunpack.c.l.s4 1983009808
      %v1258 = vunpack.c.0.s8 %v1257
      %v1259 = vperm.slane %v1255, %v1258
      %v1260 = vrot.slane %v1082, 4
      %v1261 = vsel %vm291, %v1260, %v1080
      %v1263 = vunpack.c.l.s4 1983009808
      %v1264 = vunpack.c.0.s8 %v1263
      %v1265 = vperm.slane %v1261, %v1264
      %v1266 = vsel %vm291, %v1085, %v1074
      %v1268 = vunpack.c.l.s4 1983009808
      %v1269 = vunpack.c.0.s8 %v1268
      %v1270 = vperm.slane %v1266, %v1269
      %v1271 = vrot.slane %v1086, 4
      %v1272 = vsel %vm291, %v1271, %v1084
      %v1274 = vunpack.c.l.s4 1983009808
      %v1275 = vunpack.c.0.s8 %v1274
      %v1276 = vperm.slane %v1272, %v1275
      %v1277 = vrot.slane %v1265, 4
      %v1278 = vsel %vm291, %v1277, %v1259
      %v1279 = vrot.slane %v1259, 4
      %v1280 = vsel %vm291, %v1265, %v1279
      %v1282 = vunpack.c.l.s4 1934713408
      %v1283 = vunpack.c.0.s8 %v1282
      %v1284 = vperm.slane %v1278, %v1283
      %v1286 = vunpack.c.l.s4 1934713408
      %v1287 = vunpack.c.0.s8 %v1286
      %v1288 = vperm.slane %v1280, %v1287
      %v1289 = vrot.slane %v1276, 4
      %v1290 = vsel %vm291, %v1289, %v1270
      %v1291 = vrot.slane %v1270, 4
      %v1292 = vsel %vm291, %v1276, %v1291
      %v1294 = vunpack.c.l.s4 1934713408
      %v1295 = vunpack.c.0.s8 %v1294
      %v1296 = vperm.slane %v1290, %v1295
      %v1298 = vunpack.c.l.s4 1934713408
      %v1299 = vunpack.c.0.s8 %v1298
      %v1300 = vperm.slane %v1292, %v1299
      %v1301 = vrot.slane %v1296, 4
      %v1302 = vsel %vm291, %v1301, %v1284
      %v1303 = vrot.slane %v1284, 4
      %v1304 = vsel %vm291, %v1296, %v1303
      %v1305 = vrot.slane %v1300, 4
      %v1306 = vsel %vm291, %v1305, %v1288
      %v1307 = vrot.slane %v1288, 4
      %v1308 = vsel %vm291, %v1300, %v1307
      %v1309 = vsel %vm291, %v1137, %v1118
      %v1311 = vunpack.c.l.s4 1983009808
      %v1312 = vunpack.c.0.s8 %v1311
      %v1313 = vperm.slane %v1309, %v1312
      %v1314 = vrot.slane %v1138, 4
      %v1315 = vsel %vm291, %v1314, %v1136
      %v1317 = vunpack.c.l.s4 1983009808
      %v1318 = vunpack.c.0.s8 %v1317
      %v1319 = vperm.slane %v1315, %v1318
      %v1320 = vsel %vm291, %v1141, %v1130
      %v1322 = vunpack.c.l.s4 1983009808
      %v1323 = vunpack.c.0.s8 %v1322
      %v1324 = vperm.slane %v1320, %v1323
      %v1325 = vrot.slane %v1142, 4
      %v1326 = vsel %vm291, %v1325, %v1140
      %v1328 = vunpack.c.l.s4 1983009808
      %v1329 = vunpack.c.0.s8 %v1328
      %v1330 = vperm.slane %v1326, %v1329
      %v1331 = vrot.slane %v1319, 4
      %v1332 = vsel %vm291, %v1331, %v1313
      %v1333 = vrot.slane %v1313, 4
      %v1334 = vsel %vm291, %v1319, %v1333
      %v1336 = vunpack.c.l.s4 1934713408
      %v1337 = vunpack.c.0.s8 %v1336
      %v1338 = vperm.slane %v1332, %v1337
      %v1340 = vunpack.c.l.s4 1934713408
      %v1341 = vunpack.c.0.s8 %v1340
      %v1342 = vperm.slane %v1334, %v1341
      %v1343 = vrot.slane %v1330, 4
      %v1344 = vsel %vm291, %v1343, %v1324
      %v1345 = vrot.slane %v1324, 4
      %v1346 = vsel %vm291, %v1330, %v1345
      %v1348 = vunpack.c.l.s4 1934713408
      %v1349 = vunpack.c.0.s8 %v1348
      %v1350 = vperm.slane %v1344, %v1349
      %v1352 = vunpack.c.l.s4 1934713408
      %v1353 = vunpack.c.0.s8 %v1352
      %v1354 = vperm.slane %v1346, %v1353
      %v1355 = vrot.slane %v1350, 4
      %v1356 = vsel %vm291, %v1355, %v1338
      %v1357 = vrot.slane %v1338, 4
      %v1358 = vsel %vm291, %v1350, %v1357
      %v1359 = vrot.slane %v1354, 4
      %v1360 = vsel %vm291, %v1359, %v1342
      %v1361 = vrot.slane %v1342, 4
      %v1362 = vsel %vm291, %v1354, %v1361
      %v1363 = vsel %vm291, %v1193, %v1174
      %v1365 = vunpack.c.l.s4 1983009808
      %v1366 = vunpack.c.0.s8 %v1365
      %v1367 = vperm.slane %v1363, %v1366
      %v1368 = vrot.slane %v1194, 4
      %v1369 = vsel %vm291, %v1368, %v1192
      %v1371 = vunpack.c.l.s4 1983009808
      %v1372 = vunpack.c.0.s8 %v1371
      %v1373 = vperm.slane %v1369, %v1372
      %v1374 = vsel %vm291, %v1197, %v1186
      %v1376 = vunpack.c.l.s4 1983009808
      %v1377 = vunpack.c.0.s8 %v1376
      %v1378 = vperm.slane %v1374, %v1377
      %v1379 = vrot.slane %v1198, 4
      %v1380 = vsel %vm291, %v1379, %v1196
      %v1382 = vunpack.c.l.s4 1983009808
      %v1383 = vunpack.c.0.s8 %v1382
      %v1384 = vperm.slane %v1380, %v1383
      %v1385 = vrot.slane %v1373, 4
      %v1386 = vsel %vm291, %v1385, %v1367
      %v1387 = vrot.slane %v1367, 4
      %v1388 = vsel %vm291, %v1373, %v1387
      %v1390 = vunpack.c.l.s4 1934713408
      %v1391 = vunpack.c.0.s8 %v1390
      %v1392 = vperm.slane %v1386, %v1391
      %v1394 = vunpack.c.l.s4 1934713408
      %v1395 = vunpack.c.0.s8 %v1394
      %v1396 = vperm.slane %v1388, %v1395
      %v1397 = vrot.slane %v1384, 4
      %v1398 = vsel %vm291, %v1397, %v1378
      %v1399 = vrot.slane %v1378, 4
      %v1400 = vsel %vm291, %v1384, %v1399
      %v1402 = vunpack.c.l.s4 1934713408
      %v1403 = vunpack.c.0.s8 %v1402
      %v1404 = vperm.slane %v1398, %v1403
      %v1406 = vunpack.c.l.s4 1934713408
      %v1407 = vunpack.c.0.s8 %v1406
      %v1408 = vperm.slane %v1400, %v1407
      %v1409 = vrot.slane %v1404, 4
      %v1410 = vsel %vm291, %v1409, %v1392
      %v1411 = vrot.slane %v1392, 4
      %v1412 = vsel %vm291, %v1404, %v1411
      %v1413 = vrot.slane %v1408, 4
      %v1414 = vsel %vm291, %v1413, %v1396
      %v1415 = vrot.slane %v1396, 4
      %v1416 = vsel %vm291, %v1408, %v1415
      %v1417 = vsel %vm291, %v1249, %v1230
      %v1419 = vunpack.c.l.s4 1983009808
      %v1420 = vunpack.c.0.s8 %v1419
      %v1421 = vperm.slane %v1417, %v1420
      %v1422 = vrot.slane %v1250, 4
      %v1423 = vsel %vm291, %v1422, %v1248
      %v1425 = vunpack.c.l.s4 1983009808
      %v1426 = vunpack.c.0.s8 %v1425
      %v1427 = vperm.slane %v1423, %v1426
      %v1428 = vsel %vm291, %v1253, %v1242
      %v1430 = vunpack.c.l.s4 1983009808
      %v1431 = vunpack.c.0.s8 %v1430
      %v1432 = vperm.slane %v1428, %v1431
      %v1433 = vrot.slane %v1254, 4
      %v1434 = vsel %vm291, %v1433, %v1252
      %v1436 = vunpack.c.l.s4 1983009808
      %v1437 = vunpack.c.0.s8 %v1436
      %v1438 = vperm.slane %v1434, %v1437
      %v1439 = vrot.slane %v1427, 4
      %v1440 = vsel %vm291, %v1439, %v1421
      %v1441 = vrot.slane %v1421, 4
      %v1442 = vsel %vm291, %v1427, %v1441
      %v1444 = vunpack.c.l.s4 1934713408
      %v1445 = vunpack.c.0.s8 %v1444
      %v1446 = vperm.slane %v1440, %v1445
      %v1448 = vunpack.c.l.s4 1934713408
      %v1449 = vunpack.c.0.s8 %v1448
      %v1450 = vperm.slane %v1442, %v1449
      %v1451 = vrot.slane %v1438, 4
      %v1452 = vsel %vm291, %v1451, %v1432
      %v1453 = vrot.slane %v1432, 4
      %v1454 = vsel %vm291, %v1438, %v1453
      %v1456 = vunpack.c.l.s4 1934713408
      %v1457 = vunpack.c.0.s8 %v1456
      %v1458 = vperm.slane %v1452, %v1457
      %v1460 = vunpack.c.l.s4 1934713408
      %v1461 = vunpack.c.0.s8 %v1460
      %v1462 = vperm.slane %v1454, %v1461
      %v1463 = vrot.slane %v1458, 4
      %v1464 = vsel %vm291, %v1463, %v1446
      %v1465 = vrot.slane %v1446, 4
      %v1466 = vsel %vm291, %v1458, %v1465
      %v1467 = vrot.slane %v1462, 4
      %v1468 = vsel %vm291, %v1467, %v1450
      %v1469 = vrot.slane %v1450, 4
      %v1470 = vsel %vm291, %v1462, %v1469
      %vm1471 = vcmask 64512
      %v1473 = vsel %vm1471, %v450, 0
      %v1476 = vsel %vm1471, %v504, 0
      %v1479 = vsel %vm1471, %v822, 0
      %v1482 = vsel %vm1471, %v876, 0
      %v1485 = vsel %vm1471, %v930, 0
      %v1488 = vsel %vm1471, %v984, 0
      %1490 = vmatpush.xpose.msra.mxu0 0.0
      %1491 = vmatpush.xpose.msra.mxu0 0.0
      %1492 = vmatpush.xpose.msra.mxu0 0.0
      %1493 = vmatpush.xpose.msra.mxu0 0.0
      %1494 = vmatpush.xpose.msra.mxu0 0.0
      %1495 = vmatpush.xpose.msra.mxu0 0.0
      %1496 = vmatpush.xpose.msra.mxu0 0.0
      %1497 = vmatpush.xpose.msra.mxu0 0.0
      %1498 = vmatpush.xpose.msra.mxu0 0.0
      %1499 = vmatpush.xpose.msra.mxu0 0.0
      %1500 = vmatpush.xpose.msra.mxu0 0.0
      %1501 = vmatpush.xpose.msra.mxu0 0.0
      %1502 = vmatpush.xpose.msra.mxu0 %v1488
      %1503 = vmatpush.xpose.msra.mxu0 %v1485
      %1504 = vmatpush.xpose.msra.mxu0 %v1482
      %1505 = vmatpush.xpose.msra.mxu0 %v1479
      %1506 = vmatmul.f32.gmra.mxu0 %v1473
      %v1507 = vpop.f32.mrf.mxu0
      %v1508 = vadd.f32 0.0, %v1507
      %1509 = vmatmul.f32.gmra.mxu0 %v1476
      %v1510 = vpop.f32.mrf.mxu0
      %v1511 = vadd.f32 0.0, %v1510
      %1512 = vdwg.mxu0
      %v1514 = vsel %vm1471, %v452, 0
      %v1517 = vsel %vm1471, %v506, 0
      %v1520 = vsel %vm1471, %v824, 0
      %v1523 = vsel %vm1471, %v878, 0
      %v1526 = vsel %vm1471, %v932, 0
      %v1529 = vsel %vm1471, %v986, 0
      %1531 = vmatpush.xpose.msra.mxu0 0.0
      %1532 = vmatpush.xpose.msra.mxu0 0.0
      %1533 = vmatpush.xpose.msra.mxu0 0.0
      %1534 = vmatpush.xpose.msra.mxu0 0.0
      %1535 = vmatpush.xpose.msra.mxu0 0.0
      %1536 = vmatpush.xpose.msra.mxu0 0.0
      %1537 = vmatpush.xpose.msra.mxu0 0.0
      %1538 = vmatpush.xpose.msra.mxu0 0.0
      %1539 = vmatpush.xpose.msra.mxu0 0.0
      %1540 = vmatpush.xpose.msra.mxu0 0.0
      %1541 = vmatpush.xpose.msra.mxu0 0.0
      %1542 = vmatpush.xpose.msra.mxu0 0.0
      %1543 = vmatpush.xpose.msra.mxu0 %v1529
      %1544 = vmatpush.xpose.msra.mxu0 %v1526
      %1545 = vmatpush.xpose.msra.mxu0 %v1523
      %1546 = vmatpush.xpose.msra.mxu0 %v1520
      %1547 = vmatmul.f32.gmra.mxu0 %v1514
      %v1548 = vpop.f32.mrf.mxu0
      %v1549 = vadd.f32 0.0, %v1548
      %1550 = vmatmul.f32.gmra.mxu0 %v1517
      %v1551 = vpop.f32.mrf.mxu0
      %v1552 = vadd.f32 0.0, %v1551
      %1553 = vdwg.mxu0
      %v1555 = vsel %vm1471, %v454, 0
      %v1558 = vsel %vm1471, %v508, 0
      %v1561 = vsel %vm1471, %v826, 0
      %v1564 = vsel %vm1471, %v880, 0
      %v1567 = vsel %vm1471, %v934, 0
      %v1570 = vsel %vm1471, %v988, 0
      %1572 = vmatpush.xpose.msra.mxu0 0.0
      %1573 = vmatpush.xpose.msra.mxu0 0.0
      %1574 = vmatpush.xpose.msra.mxu0 0.0
      %1575 = vmatpush.xpose.msra.mxu0 0.0
      %1576 = vmatpush.xpose.msra.mxu0 0.0
      %1577 = vmatpush.xpose.msra.mxu0 0.0
      %1578 = vmatpush.xpose.msra.mxu0 0.0
      %1579 = vmatpush.xpose.msra.mxu0 0.0
      %1580 = vmatpush.xpose.msra.mxu0 0.0
      %1581 = vmatpush.xpose.msra.mxu0 0.0
      %1582 = vmatpush.xpose.msra.mxu0 0.0
      %1583 = vmatpush.xpose.msra.mxu0 0.0
      %1584 = vmatpush.xpose.msra.mxu0 %v1570
      %1585 = vmatpush.xpose.msra.mxu0 %v1567
      %1586 = vmatpush.xpose.msra.mxu0 %v1564
      %1587 = vmatpush.xpose.msra.mxu0 %v1561
      %1588 = vmatmul.f32.gmra.mxu0 %v1555
      %v1589 = vpop.f32.mrf.mxu0
      %v1590 = vadd.f32 0.0, %v1589
      %1591 = vmatmul.f32.gmra.mxu0 %v1558
      %v1592 = vpop.f32.mrf.mxu0
      %v1593 = vadd.f32 0.0, %v1592
      %1594 = vdwg.mxu0
      %v1596 = vsel %vm1471, %v456, 0
      %v1599 = vsel %vm1471, %v510, 0
      %v1602 = vsel %vm1471, %v828, 0
      %v1605 = vsel %vm1471, %v882, 0
      %v1608 = vsel %vm1471, %v936, 0
      %v1611 = vsel %vm1471, %v990, 0
      %1613 = vmatpush.xpose.msra.mxu0 0.0
      %1614 = vmatpush.xpose.msra.mxu0 0.0
      %1615 = vmatpush.xpose.msra.mxu0 0.0
      %1616 = vmatpush.xpose.msra.mxu0 0.0
      %1617 = vmatpush.xpose.msra.mxu0 0.0
      %1618 = vmatpush.xpose.msra.mxu0 0.0
      %1619 = vmatpush.xpose.msra.mxu0 0.0
      %1620 = vmatpush.xpose.msra.mxu0 0.0
      %1621 = vmatpush.xpose.msra.mxu0 0.0
      %1622 = vmatpush.xpose.msra.mxu0 0.0
      %1623 = vmatpush.xpose.msra.mxu0 0.0
      %1624 = vmatpush.xpose.msra.mxu0 0.0
      %1625 = vmatpush.xpose.msra.mxu0 %v1611
      %1626 = vmatpush.xpose.msra.mxu0 %v1608
      %1627 = vmatpush.xpose.msra.mxu0 %v1605
      %1628 = vmatpush.xpose.msra.mxu0 %v1602
      %1629 = vmatmul.f32.gmra.mxu0 %v1596
      %v1630 = vpop.f32.mrf.mxu0
      %v1631 = vadd.f32 0.0, %v1630
      %1632 = vmatmul.f32.gmra.mxu0 %v1599
      %v1633 = vpop.f32.mrf.mxu0
      %v1634 = vadd.f32 0.0, %v1633
      %1635 = vdwg.mxu0
      %v1636 = vmul.f32 %v1508, 0.35355338
      %v1637 = vmul.f32 %v1511, 0.35355338
      %v1638 = vmul.f32 %v1549, 0.35355338
      %v1639 = vmul.f32 %v1552, 0.35355338
      %v1640 = vmul.f32 %v1590, 0.35355338
      %v1641 = vmul.f32 %v1593, 0.35355338
      %v1642 = vmul.f32 %v1631, 0.35355338
      %v1643 = vmul.f32 %v1634, 0.35355338
      %vm1644 = vcmask 261120
      %v1645 = vsel %vm1644, %v1636, -inf
      %1646 = vmax.xlane.f32.xlu0 %v1645
      %v1647 = vpop.xlane.xlu0 %1646
      %v1648 = vsel %vm1644, %v1637, -inf
      %1649 = vmax.xlane.f32.xlu0 %v1648
      %v1650 = vpop.xlane.xlu0 %1649
      %v1651 = vsel %vm1644, %v1638, -inf
      %1652 = vmax.xlane.f32.xlu0 %v1651
      %v1653 = vpop.xlane.xlu0 %1652
      %v1654 = vsel %vm1644, %v1639, -inf
      %1655 = vmax.xlane.f32.xlu0 %v1654
      %v1656 = vpop.xlane.xlu0 %1655
      %v1657 = vsel %vm1644, %v1640, -inf
      %1658 = vmax.xlane.f32.xlu0 %v1657
      %v1659 = vpop.xlane.xlu0 %1658
      %v1660 = vsel %vm1644, %v1641, -inf
      %1661 = vmax.xlane.f32.xlu0 %v1660
      %v1662 = vpop.xlane.xlu0 %1661
      %v1663 = vsel %vm1644, %v1642, -inf
      %1664 = vmax.xlane.f32.xlu0 %v1663
      %v1665 = vpop.xlane.xlu0 %1664
      %v1666 = vsel %vm1644, %v1643, -inf
      %1667 = vmax.xlane.f32.xlu0 %v1666
      %v1668 = vpop.xlane.xlu0 %1667
      %v1669 = vsub.f32 %v1636, %v1647
      %v1670 = vsub.f32 %v1637, %v1650
      %v1671 = vsub.f32 %v1638, %v1653
      %v1672 = vsub.f32 %v1639, %v1656
      %v1673 = vsub.f32 %v1640, %v1659
      %v1674 = vsub.f32 %v1641, %v1662
      %v1675 = vsub.f32 %v1642, %v1665
      %v1676 = vsub.f32 %v1643, %v1668
      %v1677 = vmul.f32 %v1669, 1.442695
      %v1678 = vpow.pop %v1677
      %v1679 = vmul.f32 %v1670, 1.442695
      %v1680 = vpow.pop %v1679
      %v1681 = vmul.f32 %v1671, 1.442695
      %v1682 = vpow.pop %v1681
      %v1683 = vmul.f32 %v1672, 1.442695
      %v1684 = vpow.pop %v1683
      %v1685 = vmul.f32 %v1673, 1.442695
      %v1686 = vpow.pop %v1685
      %v1687 = vmul.f32 %v1674, 1.442695
      %v1688 = vpow.pop %v1687
      %v1689 = vmul.f32 %v1675, 1.442695
      %v1690 = vpow.pop %v1689
      %v1691 = vmul.f32 %v1676, 1.442695
      %v1692 = vpow.pop %v1691
      %v1693 = vsel %vm1644, %v1678, 0.0
      %1694 = vadd.xlane.f32.xlu0 %v1693
      %v1695 = vpop.xlane.xlu0 %1694
      %v1696 = vsel %vm1644, %v1680, 0.0
      %1697 = vadd.xlane.f32.xlu0 %v1696
      %v1698 = vpop.xlane.xlu0 %1697
      %v1699 = vsel %vm1644, %v1682, 0.0
      %1700 = vadd.xlane.f32.xlu0 %v1699
      %v1701 = vpop.xlane.xlu0 %1700
      %v1702 = vsel %vm1644, %v1684, 0.0
      %1703 = vadd.xlane.f32.xlu0 %v1702
      %v1704 = vpop.xlane.xlu0 %1703
      %v1705 = vsel %vm1644, %v1686, 0.0
      %1706 = vadd.xlane.f32.xlu0 %v1705
      %v1707 = vpop.xlane.xlu0 %1706
      %v1708 = vsel %vm1644, %v1688, 0.0
      %1709 = vadd.xlane.f32.xlu0 %v1708
      %v1710 = vpop.xlane.xlu0 %1709
      %v1711 = vsel %vm1644, %v1690, 0.0
      %1712 = vadd.xlane.f32.xlu0 %v1711
      %v1713 = vpop.xlane.xlu0 %1712
      %v1714 = vsel %vm1644, %v1692, 0.0
      %1715 = vadd.xlane.f32.xlu0 %v1714
      %v1716 = vpop.xlane.xlu0 %1715
      %v1717 = vrcp.pop %v1695
      %v1718 = vrcp.pop %v1698
      %v1719 = vrcp.pop %v1701
      %v1720 = vrcp.pop %v1704
      %v1721 = vrcp.pop %v1707
      %v1722 = vrcp.pop %v1710
      %v1723 = vrcp.pop %v1713
      %v1724 = vrcp.pop %v1716
      %v1725 = vmul.f32 %v1678, %v1717
      %v1726 = vmul.f32 %v1680, %v1718
      %v1727 = vmul.f32 %v1682, %v1719
      %v1728 = vmul.f32 %v1684, %v1720
      %v1729 = vmul.f32 %v1686, %v1721
      %v1730 = vmul.f32 %v1688, %v1722
      %v1731 = vmul.f32 %v1690, %v1723
      %v1732 = vmul.f32 %v1692, %v1724
      %v1734 = vsel %vm1644, %v1725, 0
      %v1737 = vsel %vm1644, %v1726, 0
      %1739 = vmatpush.msra.mxu0 0.0
      %1740 = vmatpush.msra.mxu0 0.0
      %1741 = vmatpush.msra.mxu0 0.0
      %1742 = vmatpush.msra.mxu0 0.0
      %1743 = vmatpush.msra.mxu0 0.0
      %1744 = vmatpush.msra.mxu0 0.0
      %1745 = vmatpush.msra.mxu0 0.0
      %1746 = vmatpush.msra.mxu0 0.0
      %1747 = vmatpush.msra.mxu0 0.0
      %1748 = vmatpush.msra.mxu0 0.0
      %1749 = vmatpush.msra.mxu0 0.0
      %1750 = vmatpush.msra.mxu0 0.0
      %1751 = vmatpush.msra.mxu0 %v1464
      %1752 = vmatpush.msra.mxu0 %v1410
      %1753 = vmatpush.msra.mxu0 %v1356
      %1754 = vmatpush.msra.mxu0 %v1302
      %1755 = vmatmul.f32.gmra.mxu0 %v1734
      %v1756 = vpop.f32.mrf.mxu0
      %v1757 = vadd.f32 0.0, %v1756
      %1758 = vmatmul.f32.gmra.mxu0 %v1737
      %v1759 = vpop.f32.mrf.mxu0
      %v1760 = vadd.f32 0.0, %v1759
      %1761 = vdwg.mxu0
      %v1763 = vsel %vm1644, %v1727, 0
      %v1766 = vsel %vm1644, %v1728, 0
      %1768 = vmatpush.msra.mxu0 0.0
      %1769 = vmatpush.msra.mxu0 0.0
      %1770 = vmatpush.msra.mxu0 0.0
      %1771 = vmatpush.msra.mxu0 0.0
      %1772 = vmatpush.msra.mxu0 0.0
      %1773 = vmatpush.msra.mxu0 0.0
      %1774 = vmatpush.msra.mxu0 0.0
      %1775 = vmatpush.msra.mxu0 0.0
      %1776 = vmatpush.msra.mxu0 0.0
      %1777 = vmatpush.msra.mxu0 0.0
      %1778 = vmatpush.msra.mxu0 0.0
      %1779 = vmatpush.msra.mxu0 0.0
      %1780 = vmatpush.msra.mxu0 %v1466
      %1781 = vmatpush.msra.mxu0 %v1412
      %1782 = vmatpush.msra.mxu0 %v1358
      %1783 = vmatpush.msra.mxu0 %v1304
      %1784 = vmatmul.f32.gmra.mxu0 %v1763
      %v1785 = vpop.f32.mrf.mxu0
      %v1786 = vadd.f32 0.0, %v1785
      %1787 = vmatmul.f32.gmra.mxu0 %v1766
      %v1788 = vpop.f32.mrf.mxu0
      %v1789 = vadd.f32 0.0, %v1788
      %1790 = vdwg.mxu0
      %v1792 = vsel %vm1644, %v1729, 0
      %v1795 = vsel %vm1644, %v1730, 0
      %1797 = vmatpush.msra.mxu0 0.0
      %1798 = vmatpush.msra.mxu0 0.0
      %1799 = vmatpush.msra.mxu0 0.0
      %1800 = vmatpush.msra.mxu0 0.0
      %1801 = vmatpush.msra.mxu0 0.0
      %1802 = vmatpush.msra.mxu0 0.0
      %1803 = vmatpush.msra.mxu0 0.0
      %1804 = vmatpush.msra.mxu0 0.0
      %1805 = vmatpush.msra.mxu0 0.0
      %1806 = vmatpush.msra.mxu0 0.0
      %1807 = vmatpush.msra.mxu0 0.0
      %1808 = vmatpush.msra.mxu0 0.0
      %1809 = vmatpush.msra.mxu0 %v1468
      %1810 = vmatpush.msra.mxu0 %v1414
      %1811 = vmatpush.msra.mxu0 %v1360
      %1812 = vmatpush.msra.mxu0 %v1306
      %1813 = vmatmul.f32.gmra.mxu0 %v1792
      %v1814 = vpop.f32.mrf.mxu0
      %v1815 = vadd.f32 0.0, %v1814
      %1816 = vmatmul.f32.gmra.mxu0 %v1795
      %v1817 = vpop.f32.mrf.mxu0
      %v1818 = vadd.f32 0.0, %v1817
      %1819 = vdwg.mxu0
      %v1821 = vsel %vm1644, %v1731, 0
      %v1824 = vsel %vm1644, %v1732, 0
      %1826 = vmatpush.msra.mxu0 0.0
      %1827 = vmatpush.msra.mxu0 0.0
      %1828 = vmatpush.msra.mxu0 0.0
      %1829 = vmatpush.msra.mxu0 0.0
      %1830 = vmatpush.msra.mxu0 0.0
      %1831 = vmatpush.msra.mxu0 0.0
      %1832 = vmatpush.msra.mxu0 0.0
      %1833 = vmatpush.msra.mxu0 0.0
      %1834 = vmatpush.msra.mxu0 0.0
      %1835 = vmatpush.msra.mxu0 0.0
      %1836 = vmatpush.msra.mxu0 0.0
      %1837 = vmatpush.msra.mxu0 0.0
      %1838 = vmatpush.msra.mxu0 %v1470
      %1839 = vmatpush.msra.mxu0 %v1416
      %1840 = vmatpush.msra.mxu0 %v1362
      %1841 = vmatpush.msra.mxu0 %v1308
      %1842 = vmatmul.f32.gmra.mxu0 %v1821
      %v1843 = vpop.f32.mrf.mxu0
      %v1844 = vadd.f32 0.0, %v1843
      %1845 = vmatmul.f32.gmra.mxu0 %v1824
      %v1846 = vpop.f32.mrf.mxu0
      %v1847 = vadd.f32 0.0, %v1846
      %1848 = vdwg.mxu0
      %v1849 = vrot.slane %v1815, 4
      %v1850 = vsel %vm291, %v1849, %v1757
      %v1851 = vrot.slane %v1757, 4
      %v1852 = vsel %vm291, %v1815, %v1851
      %v1854 = vunpack.c.l.s4 1983009808
      %v1855 = vunpack.c.0.s8 %v1854
      %v1856 = vperm.slane %v1850, %v1855
      %v1858 = vunpack.c.l.s4 1983009808
      %v1859 = vunpack.c.0.s8 %v1858
      %v1860 = vperm.slane %v1852, %v1859
      %v1861 = vrot.slane %v1844, 4
      %v1862 = vsel %vm291, %v1861, %v1786
      %v1863 = vrot.slane %v1786, 4
      %v1864 = vsel %vm291, %v1844, %v1863
      %v1866 = vunpack.c.l.s4 1983009808
      %v1867 = vunpack.c.0.s8 %v1866
      %v1868 = vperm.slane %v1862, %v1867
      %v1870 = vunpack.c.l.s4 1983009808
      %v1871 = vunpack.c.0.s8 %v1870
      %v1872 = vperm.slane %v1864, %v1871
      %v1873 = vrot.slane %v1868, 4
      %v1874 = vsel %vm291, %v1873, %v1856
      %v1875 = vrot.slane %v1856, 4
      %v1876 = vsel %vm291, %v1868, %v1875
      %v1878 = vunpack.c.l.s4 1934713408
      %v1879 = vunpack.c.0.s8 %v1878
      %v1880 = vperm.slane %v1874, %v1879
      %v1882 = vunpack.c.l.s4 1934713408
      %v1883 = vunpack.c.0.s8 %v1882
      %v1884 = vperm.slane %v1876, %v1883
      %v1885 = vrot.slane %v1872, 4
      %v1886 = vsel %vm291, %v1885, %v1860
      %v1887 = vrot.slane %v1860, 4
      %v1888 = vsel %vm291, %v1872, %v1887
      %v1890 = vunpack.c.l.s4 1934713408
      %v1891 = vunpack.c.0.s8 %v1890
      %v1892 = vperm.slane %v1886, %v1891
      %v1894 = vunpack.c.l.s4 1934713408
      %v1895 = vunpack.c.0.s8 %v1894
      %v1896 = vperm.slane %v1888, %v1895
      %v1897 = vrot.slane %v1880, 4
      %v1898 = vsel %vm291, 0.0, %v1897
      %v1899 = vrot.slane %v1884, 4
      %v1900 = vsel %vm291, 0.0, %v1899
      %v1901 = vrot.slane %v1892, 4
      %v1902 = vsel %vm291, 0.0, %v1901
      %v1903 = vrot.slane %v1896, 4
      %v1904 = vsel %vm291, 0.0, %v1903
      %v1905 = vrot.slane %v1818, 4
      %v1906 = vsel %vm291, %v1905, %v1760
      %v1907 = vrot.slane %v1760, 4
      %v1908 = vsel %vm291, %v1818, %v1907
      %v1910 = vunpack.c.l.s4 1983009808
      %v1911 = vunpack.c.0.s8 %v1910
      %v1912 = vperm.slane %v1906, %v1911
      %v1914 = vunpack.c.l.s4 1983009808
      %v1915 = vunpack.c.0.s8 %v1914
      %v1916 = vperm.slane %v1908, %v1915
      %v1917 = vrot.slane %v1847, 4
      %v1918 = vsel %vm291, %v1917, %v1789
      %v1919 = vrot.slane %v1789, 4
      %v1920 = vsel %vm291, %v1847, %v1919
      %v1922 = vunpack.c.l.s4 1983009808
      %v1923 = vunpack.c.0.s8 %v1922
      %v1924 = vperm.slane %v1918, %v1923
      %v1926 = vunpack.c.l.s4 1983009808
      %v1927 = vunpack.c.0.s8 %v1926
      %v1928 = vperm.slane %v1920, %v1927
      %v1929 = vrot.slane %v1924, 4
      %v1930 = vsel %vm291, %v1929, %v1912
      %v1931 = vrot.slane %v1912, 4
      %v1932 = vsel %vm291, %v1924, %v1931
      %v1934 = vunpack.c.l.s4 1934713408
      %v1935 = vunpack.c.0.s8 %v1934
      %v1936 = vperm.slane %v1930, %v1935
      %v1938 = vunpack.c.l.s4 1934713408
      %v1939 = vunpack.c.0.s8 %v1938
      %v1940 = vperm.slane %v1932, %v1939
      %v1941 = vrot.slane %v1928, 4
      %v1942 = vsel %vm291, %v1941, %v1916
      %v1943 = vrot.slane %v1916, 4
      %v1944 = vsel %vm291, %v1928, %v1943
      %v1946 = vunpack.c.l.s4 1934713408
      %v1947 = vunpack.c.0.s8 %v1946
      %v1948 = vperm.slane %v1942, %v1947
      %v1950 = vunpack.c.l.s4 1934713408
      %v1951 = vunpack.c.0.s8 %v1950
      %v1952 = vperm.slane %v1944, %v1951
      %v1953 = vrot.slane %v1936, 4
      %v1954 = vsel %vm291, 0.0, %v1953
      %v1955 = vrot.slane %v1940, 4
      %v1956 = vsel %vm291, 0.0, %v1955
      %v1957 = vrot.slane %v1948, 4
      %v1958 = vsel %vm291, 0.0, %v1957
      %v1959 = vrot.slane %v1952, 4
      %v1960 = vsel %vm291, 0.0, %v1959
      %v1961 = vsel %vm291, %v1899, %v1880
      %v1963 = vunpack.c.l.s4 1983009808
      %v1964 = vunpack.c.0.s8 %v1963
      %v1965 = vperm.slane %v1961, %v1964
      %v1966 = vrot.slane %v1900, 4
      %v1967 = vsel %vm291, %v1966, %v1898
      %v1969 = vunpack.c.l.s4 1983009808
      %v1970 = vunpack.c.0.s8 %v1969
      %v1971 = vperm.slane %v1967, %v1970
      %v1972 = vsel %vm291, %v1903, %v1892
      %v1974 = vunpack.c.l.s4 1983009808
      %v1975 = vunpack.c.0.s8 %v1974
      %v1976 = vperm.slane %v1972, %v1975
      %v1977 = vrot.slane %v1904, 4
      %v1978 = vsel %vm291, %v1977, %v1902
      %v1980 = vunpack.c.l.s4 1983009808
      %v1981 = vunpack.c.0.s8 %v1980
      %v1982 = vperm.slane %v1978, %v1981
      %v1983 = vrot.slane %v1971, 4
      %v1984 = vsel %vm291, %v1983, %v1965
      %v1985 = vrot.slane %v1965, 4
      %v1986 = vsel %vm291, %v1971, %v1985
      %v1988 = vunpack.c.l.s4 1934713408
      %v1989 = vunpack.c.0.s8 %v1988
      %v1990 = vperm.slane %v1984, %v1989
      %v1992 = vunpack.c.l.s4 1934713408
      %v1993 = vunpack.c.0.s8 %v1992
      %v1994 = vperm.slane %v1986, %v1993
      %v1995 = vrot.slane %v1982, 4
      %v1996 = vsel %vm291, %v1995, %v1976
      %v1997 = vrot.slane %v1976, 4
      %v1998 = vsel %vm291, %v1982, %v1997
      %v2000 = vunpack.c.l.s4 1934713408
      %v2001 = vunpack.c.0.s8 %v2000
      %v2002 = vperm.slane %v1996, %v2001
      %v2004 = vunpack.c.l.s4 1934713408
      %v2005 = vunpack.c.0.s8 %v2004
      %v2006 = vperm.slane %v1998, %v2005
      %v2007 = vrot.slane %v2002, 4
      %v2008 = vsel %vm291, %v2007, %v1990
      %v2009 = vrot.slane %v1990, 4
      %v2010 = vsel %vm291, %v2002, %v2009
      %v2011 = vrot.slane %v2006, 4
      %v2012 = vsel %vm291, %v2011, %v1994
      %v2013 = vrot.slane %v1994, 4
      %v2014 = vsel %vm291, %v2006, %v2013
      %v2015 = vsel %vm291, %v1955, %v1936
      %v2017 = vunpack.c.l.s4 1983009808
      %v2018 = vunpack.c.0.s8 %v2017
      %v2019 = vperm.slane %v2015, %v2018
      %v2020 = vrot.slane %v1956, 4
      %v2021 = vsel %vm291, %v2020, %v1954
      %v2023 = vunpack.c.l.s4 1983009808
      %v2024 = vunpack.c.0.s8 %v2023
      %v2025 = vperm.slane %v2021, %v2024
      %v2026 = vsel %vm291, %v1959, %v1948
      %v2028 = vunpack.c.l.s4 1983009808
      %v2029 = vunpack.c.0.s8 %v2028
      %v2030 = vperm.slane %v2026, %v2029
      %v2031 = vrot.slane %v1960, 4
      %v2032 = vsel %vm291, %v2031, %v1958
      %v2034 = vunpack.c.l.s4 1983009808
      %v2035 = vunpack.c.0.s8 %v2034
      %v2036 = vperm.slane %v2032, %v2035
      %v2037 = vrot.slane %v2025, 4
      %v2038 = vsel %vm291, %v2037, %v2019
      %v2039 = vrot.slane %v2019, 4
      %v2040 = vsel %vm291, %v2025, %v2039
      %v2042 = vunpack.c.l.s4 1934713408
      %v2043 = vunpack.c.0.s8 %v2042
      %v2044 = vperm.slane %v2038, %v2043
      %v2046 = vunpack.c.l.s4 1934713408
      %v2047 = vunpack.c.0.s8 %v2046
      %v2048 = vperm.slane %v2040, %v2047
      %v2049 = vrot.slane %v2036, 4
      %v2050 = vsel %vm291, %v2049, %v2030
      %v2051 = vrot.slane %v2030, 4
      %v2052 = vsel %vm291, %v2036, %v2051
      %v2054 = vunpack.c.l.s4 1934713408
      %v2055 = vunpack.c.0.s8 %v2054
      %v2056 = vperm.slane %v2050, %v2055
      %v2058 = vunpack.c.l.s4 1934713408
      %v2059 = vunpack.c.0.s8 %v2058
      %v2060 = vperm.slane %v2052, %v2059
      %v2061 = vrot.slane %v2056, 4
      %v2062 = vsel %vm291, %v2061, %v2044
      %v2063 = vrot.slane %v2044, 4
      %v2064 = vsel %vm291, %v2056, %v2063
      %v2065 = vrot.slane %v2060, 4
      %v2066 = vsel %vm291, %v2065, %v2048
      %v2067 = vrot.slane %v2048, 4
      %v2068 = vsel %vm291, %v2060, %v2067
      %2071 = vrot.lane.b32.xlu0 %v2010, 8
      %v2072 = vpop.permute.xlu0 %2071
      %2073 = vrot.lane.b32.xlu0 %v2064, 8
      %v2074 = vpop.permute.xlu0 %2073
      %2079 = vrot.lane.b32.xlu0 %v2012, 16
      %v2080 = vpop.permute.xlu0 %2079
      %2081 = vrot.lane.b32.xlu0 %v2066, 16
      %v2082 = vpop.permute.xlu0 %2081
      %2087 = vrot.lane.b32.xlu0 %v2014, 24
      %v2088 = vpop.permute.xlu0 %2087
      %2089 = vrot.lane.b32.xlu0 %v2068, 24
      %v2090 = vpop.permute.xlu0 %2089
      %v2093 = vsel %vm1471, %v2008, %v2072
      %v2094 = vsel %vm1471, %v2062, %v2074
      %vm2095 = vcmask 130048
      %v2096 = vsel %vm2095, %v2093, %v2080
      %v2097 = vsel %vm2095, %v2094, %v2082
      %vm2098 = vcmask 195584
      %v2099 = vsel %vm2098, %v2096, %v2088
      %v2100 = vsel %vm2098, %v2097, %v2090
      %v2101 = vpack.c.bf16 %v2099, %v2099
      %v2102 = vpack.c.bf16 %v2100, %v2100
      %vm2103 = vcmask 257024
      %2104 = vst.msk [vmem:[%s248] sm:$0xf] %vm2103, %v2101
      %2105 = vst.msk [vmem:[%s248 + $0x4] sm:$0xf] %vm2103, %v2102
      %s2106 = smul.u32 2, %s19
      %p2107 = scmp.lt.s32.totalorder %s18, 1
      %s2108 = scalar_select %p2107, %s18, 1
      %p2109 = scmp.lt.s32.totalorder %s2106, 1
      %s2110 = scalar_select %p2109, %s2106, 1
      %s2111 = smul.addr %s2108, 2
      %s2112 = sadd.s32 %s2110, %s2111
      %s2113 = smul.addr %s2112, 4
      %s2114 = scalar_lea.vmem %s3, %s2113
      // Predicated region
      $region33: #{prompt_decoder_forward.21} parent=31 // pred_check
        %p2115 = pneg %p126
      $region34: #{prompt_decoder_forward.21} parent=31 // pred_check_branch
        %2117 = sbr.rel (%p2115) target = $region36
      $region35: #{prompt_decoder_forward.21} parent=31 // pred_region
        %s2118 = smul.u32 2, %s19
      $region36: #{prompt_decoder_forward.21} parent=31 // pred_fallthru
        _
    $region32: #{prompt_decoder_forward.21} parent=5 // pred_fallthru
      _
    %p2119 = scmp.le.s32.totalorder 2, %s9
    // Predicated region
    $region37: #{prompt_decoder_forward.21} parent=5 // pred_check
      %p2120 = pneg %p2119
    $region38: #{prompt_decoder_forward.21} parent=5 // pred_check_branch
      %2122 = sbr.rel (%p2120) target = $region40
    $region39: #{prompt_decoder_forward.21} parent=5 // pred_region
      %s2123 = ssub.s32 %s9, 2
      // Predicated region
      $region41: #{prompt_decoder_forward.21} parent=39 // pred_check
        %p2124 = pneg %p132
      $region42: #{prompt_decoder_forward.21} parent=39 // pred_check_branch
        %2126 = sbr.rel (%p2124) target = $region44
      $region43: #{prompt_decoder_forward.21} parent=39 // pred_region
        %s2127 = smul.u32 2, %s21
        %p2128 = scmp.lt.s32.totalorder %s20, 1
        %s2129 = scalar_select %p2128, %s20, 1
        %p2130 = scmp.lt.s32.totalorder %s2127, 1
        %s2131 = scalar_select %p2130, %s2127, 1
        %s2132 = smul.addr %s2129, 2
        %s2133 = sadd.s32 %s2131, %s2132
        %s2134 = smul.addr %s2133, 4
        %s2135 = scalar_lea.vmem %s3, %s2134
      $region44: #{prompt_decoder_forward.21} parent=39 // pred_fallthru
        _
    $region40: #{prompt_decoder_forward.21} parent=5 // pred_fallthru
      _
  $region6: #{prompt_decoder_forward.21} parent=0 // loop_footer
    %s13 = sadd.s32 1, %s9
  $region7: #{prompt_decoder_forward.21} parent=0 // loop_footer_branch
    %8 = sbr.rel target = $region3
  $region8: #{prompt_decoder_forward.21} parent=0 // loop_exit
    _

// kernel: prompt_decoder_forward.23
$region0: #{prompt_decoder_forward.23}
  #allocation0 [shape = 'u32[]', space=smem, size = 0x4, offset = 0x4, fixed_abs, tag = 'smem constant byte address 0x4 - core index']
  #allocation1 [shape = 'u32[72,128]{1,0:T(1,128)}', space=vmem, size = 0x9000, scoped, tag = 'internal scratch']
  %s0 = inlined_call_operand.vmem [shape: f32[32,32], index: 0, kind: input, shape index: {}, may-alias: {0,5}]
  %s1 = inlined_call_operand.vmem [shape: bf16[32,64], index: 1, kind: input, shape index: {}]
  %s2 = inlined_call_operand.vmem [shape: f32[1,64], index: 2, kind: input, shape index: {}]
  %s3 = inlined_call_operand.vmem [shape: bf16[64,32], index: 3, kind: input, shape index: {}]
  %s4 = inlined_call_operand.vmem [shape: f32[1,32], index: 4, kind: input, shape index: {}, may-alias: {4,7}]
  %s5 = inlined_call_operand.vmem [shape: f32[32,32], index: 5, kind: input, shape index: {}, may-alias: {0,5}]
  %s6 = inlined_call_operand.vmem [shape: f32[1,32], index: 6, kind: input, shape index: {}]
  %s7 = inlined_call_operand.vmem [shape: f32[1,32], index: 7, kind: input, shape index: {}, may-alias: {4,7}]
  %s8 = inlined_call_operand.vmem [shape: f32[32,32], index: 8, kind: output, shape index: {}]
  %s9 = sld [smem:[#allocation0]]
  $region65: #{prompt_decoder_forward.23} parent=0
    _
  %s11 = ssub.s32 1, %s9
  %s12 = scalar_select 0, %s11, %s9
  loop: start=0, step=1, limit=4
  $region2: #{prompt_decoder_forward.23} parent=0 // loop_pre_header
    _
  $region3: #{prompt_decoder_forward.23} parent=0 // loop_header
    %s14 = sphi 0, %s18
    %p15 = scmp.ge.s32.totalorder %s14, 4
    %s24 = sphi 0, %s26
    %s27 = sphi 0, %s24
    %s28 = sphi 0, %s27
    %s44 = sphi 0, %s28
    %s48 = sphi 0, %s48
    %s50 = sphi 0, %s48
    %s51 = sphi 0, %s50
    %s65 = sphi 0, %s51
    %s69 = sphi 0, %s69
    %s71 = sphi 0, %s69
    %s72 = sphi 0, %s71
    %s86 = sphi 0, %s72
    %s90 = sphi 0, %s90
    %s92 = sphi 0, %s90
    %s93 = sphi 0, %s92
    %s107 = sphi 0, %s93
    %s111 = sphi 0, %s111
    %s113 = sphi 0, %s111
    %s114 = sphi 0, %s113
    %s128 = sphi 0, %s114
    %s134 = sphi 0, %s136
    %s137 = sphi 0, %s134
    %s138 = sphi 0, %s137
    %s154 = sphi 0, %s138
    %s158 = sphi 0, %s158
    %s160 = sphi 0, %s158
    %s161 = sphi 0, %s160
    %s175 = sphi 0, %s161
    %s179 = sphi 0, %s179
    %s181 = sphi 0, %s179
    %s182 = sphi 0, %s181
    %s196 = sphi 0, %s182
    %s202 = sphi 0, %s204
    %s205 = sphi 0, %s202
    %s206 = sphi 0, %s205
    %s222 = sphi 0, %s206
  $region4: #{prompt_decoder_forward.23} parent=0 // loop_header_branch
    %17 = sbr.rel (%p15) target = $region8
  $region5: #{prompt_decoder_forward.23} parent=0 // loop_body
    %s19 = ssub.s32 %s14, 1
    %s20 = ssub.s32 %s14, 2
    %s21 = sadd.s32 %s14, 1
    %s22 = ssub.s32 %s14, %s21
    %p23 = scmp.eq.s32.totalorder %s22, 0
    %s25 = sadd.s32 %s24, 1
    %s26 = scalar_select %p23, %s24, %s25
    %p29 = pneg %p23
    %p30 = scmp.eq.s32.totalorder %s14, 1
    %p31 = por %p29, %p30
    %p32 = scmp.ne.s32.totalorder %s24, %s27
    %p33 = scmp.eq.s32.totalorder %s14, 0
    %p34 = por %p32, %p33
    %p35 = scmp.ne.s32.totalorder %s24, %s27
    %p36 = scmp.eq.s32.totalorder %s19, 1
    %p37 = por %p35, %p36
    %p38 = scmp.ne.s32.totalorder %s27, %s28
    %p39 = scmp.eq.s32.totalorder %s19, 0
    %p40 = por %p38, %p39
    %p41 = scmp.ne.s32.totalorder %s27, %s28
    %p42 = scmp.eq.s32.totalorder %s20, 1
    %p43 = por %p41, %p42
    %p45 = scmp.ne.s32.totalorder %s28, %s44
    %p46 = scmp.eq.s32.totalorder %s20, 0
    %p47 = por %p45, %p46
    %s49 = sadd.s32 %s48, 1
    %p52 = scmp.eq.s32.totalorder %s14, 1
    %p53 = scmp.ne.s32.totalorder %s48, %s50
    %p54 = scmp.eq.s32.totalorder %s14, 0
    %p55 = por %p53, %p54
    %p56 = scmp.ne.s32.totalorder %s48, %s50
    %p57 = scmp.eq.s32.totalorder %s19, 1
    %p58 = por %p56, %p57
    %p59 = scmp.ne.s32.totalorder %s50, %s51
    %p60 = scmp.eq.s32.totalorder %s19, 0
    %p61 = por %p59, %p60
    %p62 = scmp.ne.s32.totalorder %s50, %s51
    %p63 = scmp.eq.s32.totalorder %s20, 1
    %p64 = por %p62, %p63
    %p66 = scmp.ne.s32.totalorder %s51, %s65
    %p67 = scmp.eq.s32.totalorder %s20, 0
    %p68 = por %p66, %p67
    %s70 = sadd.s32 %s69, 1
    %p73 = scmp.eq.s32.totalorder %s14, 1
    %p74 = scmp.ne.s32.totalorder %s69, %s71
    %p75 = scmp.eq.s32.totalorder %s14, 0
    %p76 = por %p74, %p75
    %p77 = scmp.ne.s32.totalorder %s69, %s71
    %p78 = scmp.eq.s32.totalorder %s19, 1
    %p79 = por %p77, %p78
    %p80 = scmp.ne.s32.totalorder %s71, %s72
    %p81 = scmp.eq.s32.totalorder %s19, 0
    %p82 = por %p80, %p81
    %p83 = scmp.ne.s32.totalorder %s71, %s72
    %p84 = scmp.eq.s32.totalorder %s20, 1
    %p85 = por %p83, %p84
    %p87 = scmp.ne.s32.totalorder %s72, %s86
    %p88 = scmp.eq.s32.totalorder %s20, 0
    %p89 = por %p87, %p88
    %s91 = sadd.s32 %s90, 1
    %p94 = scmp.eq.s32.totalorder %s14, 1
    %p95 = scmp.ne.s32.totalorder %s90, %s92
    %p96 = scmp.eq.s32.totalorder %s14, 0
    %p97 = por %p95, %p96
    %p98 = scmp.ne.s32.totalorder %s90, %s92
    %p99 = scmp.eq.s32.totalorder %s19, 1
    %p100 = por %p98, %p99
    %p101 = scmp.ne.s32.totalorder %s92, %s93
    %p102 = scmp.eq.s32.totalorder %s19, 0
    %p103 = por %p101, %p102
    %p104 = scmp.ne.s32.totalorder %s92, %s93
    %p105 = scmp.eq.s32.totalorder %s20, 1
    %p106 = por %p104, %p105
    %p108 = scmp.ne.s32.totalorder %s93, %s107
    %p109 = scmp.eq.s32.totalorder %s20, 0
    %p110 = por %p108, %p109
    %s112 = sadd.s32 %s111, 1
    %p115 = scmp.eq.s32.totalorder %s14, 1
    %p116 = scmp.ne.s32.totalorder %s111, %s113
    %p117 = scmp.eq.s32.totalorder %s14, 0
    %p118 = por %p116, %p117
    %p119 = scmp.ne.s32.totalorder %s111, %s113
    %p120 = scmp.eq.s32.totalorder %s19, 1
    %p121 = por %p119, %p120
    %p122 = scmp.ne.s32.totalorder %s113, %s114
    %p123 = scmp.eq.s32.totalorder %s19, 0
    %p124 = por %p122, %p123
    %p125 = scmp.ne.s32.totalorder %s113, %s114
    %p126 = scmp.eq.s32.totalorder %s20, 1
    %p127 = por %p125, %p126
    %p129 = scmp.ne.s32.totalorder %s114, %s128
    %p130 = scmp.eq.s32.totalorder %s20, 0
    %p131 = por %p129, %p130
    %s132 = ssub.s32 %s14, %s21
    %p133 = scmp.eq.s32.totalorder %s132, 0
    %s135 = sadd.s32 %s134, 1
    %s136 = scalar_select %p133, %s134, %s135
    %p139 = pneg %p133
    %p140 = scmp.eq.s32.totalorder %s14, 1
    %p141 = por %p139, %p140
    %p142 = scmp.ne.s32.totalorder %s134, %s137
    %p143 = scmp.eq.s32.totalorder %s14, 0
    %p144 = por %p142, %p143
    %p145 = scmp.ne.s32.totalorder %s134, %s137
    %p146 = scmp.eq.s32.totalorder %s19, 1
    %p147 = por %p145, %p146
    %p148 = scmp.ne.s32.totalorder %s137, %s138
    %p149 = scmp.eq.s32.totalorder %s19, 0
    %p150 = por %p148, %p149
    %p151 = scmp.ne.s32.totalorder %s137, %s138
    %p152 = scmp.eq.s32.totalorder %s20, 1
    %p153 = por %p151, %p152
    %p155 = scmp.ne.s32.totalorder %s138, %s154
    %p156 = scmp.eq.s32.totalorder %s20, 0
    %p157 = por %p155, %p156
    %s159 = sadd.s32 %s158, 1
    %p162 = scmp.eq.s32.totalorder %s14, 1
    %p163 = scmp.ne.s32.totalorder %s158, %s160
    %p164 = scmp.eq.s32.totalorder %s14, 0
    %p165 = por %p163, %p164
    %p166 = scmp.ne.s32.totalorder %s158, %s160
    %p167 = scmp.eq.s32.totalorder %s19, 1
    %p168 = por %p166, %p167
    %p169 = scmp.ne.s32.totalorder %s160, %s161
    %p170 = scmp.eq.s32.totalorder %s19, 0
    %p171 = por %p169, %p170
    %p172 = scmp.ne.s32.totalorder %s160, %s161
    %p173 = scmp.eq.s32.totalorder %s20, 1
    %p174 = por %p172, %p173
    %p176 = scmp.ne.s32.totalorder %s161, %s175
    %p177 = scmp.eq.s32.totalorder %s20, 0
    %p178 = por %p176, %p177
    %s180 = sadd.s32 %s179, 1
    %p183 = scmp.eq.s32.totalorder %s14, 1
    %p184 = scmp.ne.s32.totalorder %s179, %s181
    %p185 = scmp.eq.s32.totalorder %s14, 0
    %p186 = por %p184, %p185
    %p187 = scmp.ne.s32.totalorder %s179, %s181
    %p188 = scmp.eq.s32.totalorder %s19, 1
    %p189 = por %p187, %p188
    %p190 = scmp.ne.s32.totalorder %s181, %s182
    %p191 = scmp.eq.s32.totalorder %s19, 0
    %p192 = por %p190, %p191
    %p193 = scmp.ne.s32.totalorder %s181, %s182
    %p194 = scmp.eq.s32.totalorder %s20, 1
    %p195 = por %p193, %p194
    %p197 = scmp.ne.s32.totalorder %s182, %s196
    %p198 = scmp.eq.s32.totalorder %s20, 0
    %p199 = por %p197, %p198
    %s200 = ssub.s32 %s14, %s21
    %p201 = scmp.eq.s32.totalorder %s200, 0
    %s203 = sadd.s32 %s202, 1
    %s204 = scalar_select %p201, %s202, %s203
    %p207 = pneg %p201
    %p208 = scmp.eq.s32.totalorder %s14, 1
    %p209 = por %p207, %p208
    %p210 = scmp.ne.s32.totalorder %s202, %s205
    %p211 = scmp.eq.s32.totalorder %s14, 0
    %p212 = por %p210, %p211
    %p213 = scmp.ne.s32.totalorder %s202, %s205
    %p214 = scmp.eq.s32.totalorder %s19, 1
    %p215 = por %p213, %p214
    %p216 = scmp.ne.s32.totalorder %s205, %s206
    %p217 = scmp.eq.s32.totalorder %s19, 0
    %p218 = por %p216, %p217
    %p219 = scmp.ne.s32.totalorder %s205, %s206
    %p220 = scmp.eq.s32.totalorder %s20, 1
    %p221 = por %p219, %p220
    %p223 = scmp.ne.s32.totalorder %s206, %s222
    %p224 = scmp.eq.s32.totalorder %s20, 0
    %p225 = por %p223, %p224
    %p226 = scmp.le.s32.totalorder 1, %s14
    %p227 = scmp.lt.s32.totalorder %s14, 3
    %p228 = pnand %p226, %p227
    %p229 = pneg %p228
    // Predicated region
    $region9: #{prompt_decoder_forward.23} parent=5 // pred_check
      _
    $region10: #{prompt_decoder_forward.23} parent=5 // pred_check_branch
      %231 = sbr.rel (%p228) target = $region12
    $region11: #{prompt_decoder_forward.23} parent=5 // pred_region
      %s232 = ssub.s32 %s14, 1
      // Predicated region
      $region13: #{prompt_decoder_forward.23} parent=11 // pred_check
        %p233 = pneg %p61
      $region14: #{prompt_decoder_forward.23} parent=11 // pred_check_branch
        %235 = sbr.rel (%p233) target = $region16
      $region15: #{prompt_decoder_forward.23} parent=11 // pred_region
        _
      $region16: #{prompt_decoder_forward.23} parent=11 // pred_fallthru
        _
      // Predicated region
      $region17: #{prompt_decoder_forward.23} parent=11 // pred_check
        %p236 = pneg %p82
      $region18: #{prompt_decoder_forward.23} parent=11 // pred_check_branch
        %238 = sbr.rel (%p236) target = $region20
      $region19: #{prompt_decoder_forward.23} parent=11 // pred_region
        _
      $region20: #{prompt_decoder_forward.23} parent=11 // pred_fallthru
        _
      // Predicated region
      $region21: #{prompt_decoder_forward.23} parent=11 // pred_check
        %p239 = pneg %p103
      $region22: #{prompt_decoder_forward.23} parent=11 // pred_check_branch
        %241 = sbr.rel (%p239) target = $region24
      $region23: #{prompt_decoder_forward.23} parent=11 // pred_region
        _
      $region24: #{prompt_decoder_forward.23} parent=11 // pred_fallthru
        _
      // Predicated region
      $region25: #{prompt_decoder_forward.23} parent=11 // pred_check
        %p242 = pneg %p124
      $region26: #{prompt_decoder_forward.23} parent=11 // pred_check_branch
        %244 = sbr.rel (%p242) target = $region28
      $region27: #{prompt_decoder_forward.23} parent=11 // pred_region
        _
      $region28: #{prompt_decoder_forward.23} parent=11 // pred_fallthru
        _
      // Predicated region
      $region29: #{prompt_decoder_forward.23} parent=11 // pred_check
        %p245 = pneg %p171
      $region30: #{prompt_decoder_forward.23} parent=11 // pred_check_branch
        %247 = sbr.rel (%p245) target = $region32
      $region31: #{prompt_decoder_forward.23} parent=11 // pred_region
        _
      $region32: #{prompt_decoder_forward.23} parent=11 // pred_fallthru
        _
      // Predicated region
      $region33: #{prompt_decoder_forward.23} parent=11 // pred_check
        %p248 = pneg %p192
      $region34: #{prompt_decoder_forward.23} parent=11 // pred_check_branch
        %250 = sbr.rel (%p248) target = $region36
      $region35: #{prompt_decoder_forward.23} parent=11 // pred_region
        _
      $region36: #{prompt_decoder_forward.23} parent=11 // pred_fallthru
        _
    $region12: #{prompt_decoder_forward.23} parent=5 // pred_fallthru
      _
    %p251 = scmp.lt.s32.totalorder %s14, 2
    // Predicated region
    $region37: #{prompt_decoder_forward.23} parent=5 // pred_check
      %p252 = pneg %p251
    $region38: #{prompt_decoder_forward.23} parent=5 // pred_check_branch
      %254 = sbr.rel (%p252) target = $region40
    $region39: #{prompt_decoder_forward.23} parent=5 // pred_region
      // Predicated region
      $region41: #{prompt_decoder_forward.23} parent=39 // pred_check
        %p255 = pneg %p34
      $region42: #{prompt_decoder_forward.23} parent=39 // pred_check_branch
        %257 = sbr.rel (%p255) target = $region44
      $region43: #{prompt_decoder_forward.23} parent=39 // pred_region
        %s258 = smul.u32 2, %s14
        %p259 = scmp.lt.s32.totalorder %s258, 3
        %s260 = scalar_select %p259, %s258, 3
        %s261 = smul.addr %s260, 8
        %s262 = scalar_lea.vmem %s0, %s261
        %s263 = smul.u32 2, %s14
      $region44: #{prompt_decoder_forward.23} parent=39 // pred_fallthru
        _
      // Predicated region
      $region45: #{prompt_decoder_forward.23} parent=39 // pred_check
        %p264 = pneg %p144
      $region46: #{prompt_decoder_forward.23} parent=39 // pred_check_branch
        %266 = sbr.rel (%p264) target = $region48
      $region47: #{prompt_decoder_forward.23} parent=39 // pred_region
        %s267 = smul.u32 2, %s14
        %p268 = scmp.lt.s32.totalorder %s267, 3
        %s269 = scalar_select %p268, %s267, 3
        %s270 = smul.addr %s269, 8
        %s271 = scalar_lea.vmem %s5, %s270
        %s272 = smul.u32 2, %s14
      $region48: #{prompt_decoder_forward.23} parent=39 // pred_fallthru
        _
    $region40: #{prompt_decoder_forward.23} parent=5 // pred_fallthru
      _
    %p273 = scmp.le.s32.totalorder 1, %s14
    %p274 = scmp.lt.s32.totalorder %s14, 3
    %p275 = pnand %p273, %p274
    %p276 = pneg %p275
    // Predicated region
    $region49: #{prompt_decoder_forward.23} parent=5 // pred_check
      _
    $region50: #{prompt_decoder_forward.23} parent=5 // pred_check_branch
      %278 = sbr.rel (%p275) target = $region52
    $region51: #{prompt_decoder_forward.23} parent=5 // pred_region
      %s279 = ssub.s32 %s14, 1
      %s280 = smul.u32 2, %s19
      %p281 = scmp.lt.s32.totalorder %s280, 3
      %s282 = scalar_select %p281, %s280, 3
      %s283 = smul.addr %s282, 8
      %s284 = scalar_lea.vmem %s0, %s283
      %p285 = pneg %p40
      %p286 = pneg %p37
      %p287 = pneg %p61
      %p288 = pneg %p58
      %p289 = pneg %p82
      %p290 = pneg %p79
      %p291 = pneg %p103
      %p292 = pneg %p100
      %p293 = pneg %p124
      %p294 = pneg %p121
      %s295 = smul.u32 2, %s19
      %p296 = scmp.lt.s32.totalorder %s295, 3
      %s297 = scalar_select %p296, %s295, 3
      %s298 = smul.addr %s297, 8
      %s299 = scalar_lea.vmem %s5, %s298
      %p300 = pneg %p150
      %p301 = pneg %p147
      %p302 = pneg %p171
      %p303 = pneg %p168
      %p304 = pneg %p192
      %p305 = pneg %p189
      %p306 = pneg %p218
      %p307 = pneg %p215
      %s308 = smul.u32 2, %s19
      %p309 = scmp.lt.s32.totalorder %s308, 3
      %s310 = scalar_select %p309, %s308, 3
      %s311 = smul.addr %s310, 8
      %s312 = scalar_lea.vmem %s8, %s311
      %s313 = smul.u32 2, %s19
      %p314 = scmp.lt.s32.totalorder %s313, 3
      %s315 = scalar_select %p314, %s313, 3
      %s316 = smul.addr %s315, 8
      %s317 = scalar_lea.vmem %s0, %s316
      %s318 = smul.u32 2, %s19
      %s319 = smul.u32 2, %s19
      %p320 = scmp.lt.s32.totalorder %s319, 3
      %s321 = scalar_select %p320, %s319, 3
      %s322 = smul.addr %s321, 8
      %s323 = scalar_lea.vmem %s5, %s322
      %s324 = smul.u32 2, %s19
      %s325 = smul.u32 2, %s19
      %p326 = scmp.lt.s32.totalorder %s325, 3
      %s327 = scalar_select %p326, %s325, 3
      %s328 = smul.addr %s327, 8
      %s329 = scalar_lea.vmem %s8, %s328
      %s330 = smul.u32 2, %s19
      %v332 = vld [vmem:[%s317] sm:$0xff]
      %v333 = vld [vmem:[%s317 + $0x8] sm:$0xff]
      %v334 = vpack.c.bf16 %v333, %v332
      %v335 = vld [vmem:[%s1] sm:$0xf]
      %v336 = vld [vmem:[%s1 + $0x4] sm:$0xf]
      %v337 = vld [vmem:[%s1 + $0x8] sm:$0xf]
      %v338 = vld [vmem:[%s1 + $0xc] sm:$0xf]
      %v339 = vld [vmem:[%s2] sm:$0x1]
      %v341 = vperm.slane %v339, 0
      %v347 = vunpack.c.l.b16 %v335
      %v348 = vunpack.c.l.b16 %v336
      %v349 = vunpack.c.l.b16 %v337
      %v350 = vunpack.c.l.b16 %v338
      %v351 = vpack.c.b16 %v348, %v347
      %v352 = vpack.c.b16 %v350, %v349
      %vm355 = vcmask 261120
      %v357 = vsel %vm355, %v334, 0
      %359 = vmatpush.bf16.msra.mxu0 0
      %360 = vmatpush.bf16.msra.mxu0 0
      %361 = vmatpush.bf16.msra.mxu0 0
      %362 = vmatpush.bf16.msra.mxu0 0
      %363 = vmatpush.bf16.msra.mxu0 0
      %364 = vmatpush.bf16.msra.mxu0 0
      %365 = vmatpush.bf16.msra.mxu0 %v352
      %366 = vmatpush.bf16.msra.mxu0 %v351
      %367 = vmatmul.bf16.gmra.mxu0 %v357
      %v368 = vpop.f32.mrf.mxu0
      %v369 = vadd.f32 %v341, %v368
      %v370 = vpop.f32.mrf.mxu0
      %v371 = vadd.f32 %v341, %v370
      %372 = vdwg.mxu0
      %v373 = vmul.f32 %v369, %v369
      %v374 = vmul.f32 %v371, %v371
      %v375 = vmul.f32 %v369, %v373
      %v376 = vmul.f32 %v371, %v374
      %v377 = vmul.f32 %v375, 0.044715
      %v378 = vmul.f32 %v376, 0.044715
      %v379 = vadd.f32 %v369, %v377
      %v380 = vadd.f32 %v371, %v378
      %v381 = vmul.f32 %v379, 0.7978846
      %v382 = vmul.f32 %v380, 0.7978846
      %v383 = vtanh.pop %v381
      %v384 = vtanh.pop %v382
      %v385 = vadd.f32 %v383, 1.0
      %v386 = vadd.f32 %v384, 1.0
      %v387 = vmul.f32 %v385, 0.5
      %v388 = vmul.f32 %v386, 0.5
      %v389 = vmul.f32 %v369, %v387
      %v390 = vmul.f32 %v371, %v388
      %v391 = vpack.c.bf16 %v390, %v389
      %v392 = vld [vmem:[%s3] sm:$0xf]
      %v393 = vld [vmem:[%s3 + $0x4] sm:$0xf]
      %v394 = vld [vmem:[%s3 + $0x8] sm:$0xf]
      %v395 = vld [vmem:[%s3 + $0xc] sm:$0xf]
      %v396 = vld [vmem:[%s3 + $0x10] sm:$0xf]
      %v397 = vld [vmem:[%s3 + $0x14] sm:$0xf]
      %v398 = vld [vmem:[%s3 + $0x18] sm:$0xf]
      %v399 = vld [vmem:[%s3 + $0x1c] sm:$0xf]
      %v400 = vld [vmem:[%s4] sm:$0x1]
      %v402 = vperm.slane %v400, 0
      %v412 = vunpack.c.l.b16 %v392
      %v413 = vunpack.c.l.b16 %v393
      %v414 = vunpack.c.l.b16 %v394
      %v415 = vunpack.c.l.b16 %v395
      %v416 = vunpack.c.l.b16 %v396
      %v417 = vunpack.c.l.b16 %v397
      %v418 = vunpack.c.l.b16 %v398
      %v419 = vunpack.c.l.b16 %v399
      %v420 = vpack.c.b16 %v413, %v412
      %v421 = vpack.c.b16 %v415, %v414
      %v422 = vpack.c.b16 %v417, %v416
      %v423 = vpack.c.b16 %v419, %v418
      %vm428 = vcmask 523264
      %v430 = vsel %vm428, %v391, 0
      %432 = vmatpush.bf16.msra.mxu0 0
      %433 = vmatpush.bf16.msra.mxu0 0
      %434 = vmatpush.bf16.msra.mxu0 0
      %435 = vmatpush.bf16.msra.mxu0 0
      %436 = vmatpush.bf16.msra.mxu0 %v423
      %437 = vmatpush.bf16.msra.mxu0 %v422
      %438 = vmatpush.bf16.msra.mxu0 %v421
      %439 = vmatpush.bf16.msra.mxu0 %v420
      %440 = vmatmul.bf16.gmra.mxu0 %v430
      %v441 = vpop.f32.mrf.mxu0
      %v442 = vadd.f32 %v402, %v441
      %v443 = vpop.f32.mrf.mxu0
      %v444 = vadd.f32 %v402, %v443
      %445 = vdwg.mxu0
      %v446 = vld [vmem:[%s323] sm:$0xff]
      %v447 = vld [vmem:[%s323 + $0x8] sm:$0xff]
      %v448 = vadd.f32 %v442, %v446
      %v449 = vadd.f32 %v444, %v447
      %v450 = vsel %vm355, %v448, 0.0
      %451 = vadd.xlane.f32.xlu0 %v450
      %v452 = vpop.xlane.xlu0 %451
      %v453 = vsel %vm355, %v449, 0.0
      %454 = vadd.xlane.f32.xlu0 %v453
      %v455 = vpop.xlane.xlu0 %454
      %v456 = vrcp.pop 32.0
      %v457 = vmul.f32 32.0, %v456
      %v458 = vsub.f32 1.0, %v457
      %v459 = vmul.f32 %v456, %v458
      %v460 = vadd.f32 %v456, %v459
      %vm461 = vweird.f32 %v456
      %v462 = vsel %vm461, %v456, %v460
      %v463 = vmul.f32 %v452, %v462
      %v464 = vmul.f32 %v455, %v462
      %v465 = vsub.f32 %v448, %v463
      %v466 = vsub.f32 %v449, %v464
      %v467 = vmul.f32 %v465, %v465
      %v468 = vmul.f32 %v466, %v466
      %v469 = vsel %vm355, %v467, 0.0
      %470 = vadd.xlane.f32.xlu0 %v469
      %v471 = vpop.xlane.xlu0 %470
      %v472 = vsel %vm355, %v468, 0.0
      %473 = vadd.xlane.f32.xlu0 %v472
      %v474 = vpop.xlane.xlu0 %473
      %v475 = vmul.f32 %v471, %v462
      %v476 = vmul.f32 %v474, %v462
      %v477 = vadd.f32 %v475, 1e-05
      %v478 = vadd.f32 %v476, 1e-05
      %v479 = vrsqrt.pop %v477
      %v480 = vmul.f32 %v479, %v477
      %v481 = vmul.f32 %v480, %v479
      %v482 = vmul.f32 0.5, %v481
      %v483 = vsub.f32 1.5, %v482
      %v484 = vmul.f32 %v479, %v483
      %vm485 = vweird.f32 %v477
      %vm486 = vweird.f32 %v479
      %vm487 = vmor %vm485, %vm486
      %v488 = vsel %vm487, %v479, %v484
      %v489 = vrsqrt.pop %v478
      %v490 = vmul.f32 %v489, %v478
      %v491 = vmul.f32 %v490, %v489
      %v492 = vmul.f32 0.5, %v491
      %v493 = vsub.f32 1.5, %v492
      %v494 = vmul.f32 %v489, %v493
      %vm495 = vweird.f32 %v478
      %vm496 = vweird.f32 %v489
      %vm497 = vmor %vm495, %vm496
      %v498 = vsel %vm497, %v489, %v494
      %v499 = vmul.f32 %v465, %v488
      %v500 = vmul.f32 %v466, %v498
      %v501 = vld [vmem:[%s6] sm:$0x1]
      %v503 = vperm.slane %v501, 0
      %v505 = vmul.f32 %v499, %v503
      %v506 = vmul.f32 %v500, %v503
      %v507 = vld [vmem:[%s7] sm:$0x1]
      %v509 = vperm.slane %v507, 0
      %v511 = vadd.f32 %v505, %v509
      %v512 = vadd.f32 %v506, %v509
      %513 = vst.msk [vmem:[%s329] sm:$0xff] %vm355, %v511
      %514 = vst.msk [vmem:[%s329 + $0x8] sm:$0xff] %vm355, %v512
      %s515 = smul.u32 2, %s19
      %p516 = scmp.lt.s32.totalorder %s515, 3
      %s517 = scalar_select %p516, %s515, 3
      %s518 = smul.addr %s517, 8
      %s519 = scalar_lea.vmem %s8, %s518
      // Predicated region
      $region53: #{prompt_decoder_forward.23} parent=51 // pred_check
        %p520 = pneg %p215
      $region54: #{prompt_decoder_forward.23} parent=51 // pred_check_branch
        %522 = sbr.rel (%p520) target = $region56
      $region55: #{prompt_decoder_forward.23} parent=51 // pred_region
        %s523 = smul.u32 2, %s19
      $region56: #{prompt_decoder_forward.23} parent=51 // pred_fallthru
        _
    $region52: #{prompt_decoder_forward.23} parent=5 // pred_fallthru
      _
    %p524 = scmp.le.s32.totalorder 2, %s14
    // Predicated region
    $region57: #{prompt_decoder_forward.23} parent=5 // pred_check
      %p525 = pneg %p524
    $region58: #{prompt_decoder_forward.23} parent=5 // pred_check_branch
      %527 = sbr.rel (%p525) target = $region60
    $region59: #{prompt_decoder_forward.23} parent=5 // pred_region
      %s528 = ssub.s32 %s14, 2
      // Predicated region
      $region61: #{prompt_decoder_forward.23} parent=59 // pred_check
        %p529 = pneg %p221
      $region62: #{prompt_decoder_forward.23} parent=59 // pred_check_branch
        %531 = sbr.rel (%p529) target = $region64
      $region63: #{prompt_decoder_forward.23} parent=59 // pred_region
        %s532 = smul.u32 2, %s20
        %p533 = scmp.lt.s32.totalorder %s532, 3
        %s534 = scalar_select %p533, %s532, 3
        %s535 = smul.addr %s534, 8
        %s536 = scalar_lea.vmem %s8, %s535
      $region64: #{prompt_decoder_forward.23} parent=59 // pred_fallthru
        _
    $region60: #{prompt_decoder_forward.23} parent=5 // pred_fallthru
      _
  $region6: #{prompt_decoder_forward.23} parent=0 // loop_footer
    %s18 = sadd.s32 1, %s14
  $region7: #{prompt_decoder_forward.23} parent=0 // loop_footer_branch
    %13 = sbr.rel target = $region3
  $region8: #{prompt_decoder_forward.23} parent=0 // loop_exit
    _

// kernel: prompt_decoder_forward.25
$region0: #{prompt_decoder_forward.25}
  #allocation0 [shape = 'u32[]', space=smem, size = 0x4, offset = 0x4, fixed_abs, tag = 'smem constant byte address 0x4 - core index']
  #allocation1 [shape = 'u32[72,128]{1,0:T(1,128)}', space=vmem, size = 0x9000, scoped, tag = 'internal scratch']
  %s0 = inlined_call_operand.vmem [shape: f32[32,32], index: 0, kind: input, shape index: {}]
  %s1 = inlined_call_operand.vmem [shape: bf16[32,32], index: 1, kind: input, shape index: {}]
  %s2 = inlined_call_operand.vmem [shape: f32[1,32], index: 2, kind: input, shape index: {}]
  %s3 = inlined_call_operand.vmem [shape: bf16[32,32], index: 3, kind: input, shape index: {}]
  %s4 = inlined_call_operand.vmem [shape: f32[1,32], index: 4, kind: input, shape index: {}]
  %s5 = inlined_call_operand.vmem [shape: bf16[32,32], index: 5, kind: output, shape index: {0}]
  %s6 = inlined_call_operand.vmem [shape: bf16[32,32], index: 6, kind: output, shape index: {1}]
  %7 = xla_tuple %s5, %s6
  %s8 = sld [smem:[#allocation0]]
  $region61: #{prompt_decoder_forward.25} parent=0
    _
  %s10 = ssub.s32 1, %s8
  %s11 = scalar_select 0, %s10, %s8
  loop: start=0, step=1, limit=4
  $region2: #{prompt_decoder_forward.25} parent=0 // loop_pre_header
    _
  $region3: #{prompt_decoder_forward.25} parent=0 // loop_header
    %s13 = sphi 0, %s17
    %p14 = scmp.ge.s32.totalorder %s13, 4
    %s23 = sphi 0, %s25
    %s26 = sphi 0, %s23
    %s27 = sphi 0, %s26
    %s43 = sphi 0, %s27
    %s47 = sphi 0, %s47
    %s49 = sphi 0, %s47
    %s50 = sphi 0, %s49
    %s64 = sphi 0, %s50
    %s68 = sphi 0, %s68
    %s70 = sphi 0, %s68
    %s71 = sphi 0, %s70
    %s85 = sphi 0, %s71
    %s89 = sphi 0, %s89
    %s91 = sphi 0, %s89
    %s92 = sphi 0, %s91
    %s106 = sphi 0, %s92
    %s110 = sphi 0, %s110
    %s112 = sphi 0, %s110
    %s113 = sphi 0, %s112
    %s127 = sphi 0, %s113
    %s133 = sphi 0, %s135
    %s136 = sphi 0, %s133
    %s137 = sphi 0, %s136
    %s153 = sphi 0, %s137
    %s159 = sphi 0, %s161
    %s162 = sphi 0, %s159
    %s163 = sphi 0, %s162
    %s179 = sphi 0, %s163
  $region4: #{prompt_decoder_forward.25} parent=0 // loop_header_branch
    %16 = sbr.rel (%p14) target = $region8
  $region5: #{prompt_decoder_forward.25} parent=0 // loop_body
    %s18 = ssub.s32 %s13, 1
    %s19 = ssub.s32 %s13, 2
    %s20 = sadd.s32 %s13, 1
    %s21 = ssub.s32 %s13, %s20
    %p22 = scmp.eq.s32.totalorder %s21, 0
    %s24 = sadd.s32 %s23, 1
    %s25 = scalar_select %p22, %s23, %s24
    %p28 = pneg %p22
    %p29 = scmp.eq.s32.totalorder %s13, 1
    %p30 = por %p28, %p29
    %p31 = scmp.ne.s32.totalorder %s23, %s26
    %p32 = scmp.eq.s32.totalorder %s13, 0
    %p33 = por %p31, %p32
    %p34 = scmp.ne.s32.totalorder %s23, %s26
    %p35 = scmp.eq.s32.totalorder %s18, 1
    %p36 = por %p34, %p35
    %p37 = scmp.ne.s32.totalorder %s26, %s27
    %p38 = scmp.eq.s32.totalorder %s18, 0
    %p39 = por %p37, %p38
    %p40 = scmp.ne.s32.totalorder %s26, %s27
    %p41 = scmp.eq.s32.totalorder %s19, 1
    %p42 = por %p40, %p41
    %p44 = scmp.ne.s32.totalorder %s27, %s43
    %p45 = scmp.eq.s32.totalorder %s19, 0
    %p46 = por %p44, %p45
    %s48 = sadd.s32 %s47, 1
    %p51 = scmp.eq.s32.totalorder %s13, 1
    %p52 = scmp.ne.s32.totalorder %s47, %s49
    %p53 = scmp.eq.s32.totalorder %s13, 0
    %p54 = por %p52, %p53
    %p55 = scmp.ne.s32.totalorder %s47, %s49
    %p56 = scmp.eq.s32.totalorder %s18, 1
    %p57 = por %p55, %p56
    %p58 = scmp.ne.s32.totalorder %s49, %s50
    %p59 = scmp.eq.s32.totalorder %s18, 0
    %p60 = por %p58, %p59
    %p61 = scmp.ne.s32.totalorder %s49, %s50
    %p62 = scmp.eq.s32.totalorder %s19, 1
    %p63 = por %p61, %p62
    %p65 = scmp.ne.s32.totalorder %s50, %s64
    %p66 = scmp.eq.s32.totalorder %s19, 0
    %p67 = por %p65, %p66
    %s69 = sadd.s32 %s68, 1
    %p72 = scmp.eq.s32.totalorder %s13, 1
    %p73 = scmp.ne.s32.totalorder %s68, %s70
    %p74 = scmp.eq.s32.totalorder %s13, 0
    %p75 = por %p73, %p74
    %p76 = scmp.ne.s32.totalorder %s68, %s70
    %p77 = scmp.eq.s32.totalorder %s18, 1
    %p78 = por %p76, %p77
    %p79 = scmp.ne.s32.totalorder %s70, %s71
    %p80 = scmp.eq.s32.totalorder %s18, 0
    %p81 = por %p79, %p80
    %p82 = scmp.ne.s32.totalorder %s70, %s71
    %p83 = scmp.eq.s32.totalorder %s19, 1
    %p84 = por %p82, %p83
    %p86 = scmp.ne.s32.totalorder %s71, %s85
    %p87 = scmp.eq.s32.totalorder %s19, 0
    %p88 = por %p86, %p87
    %s90 = sadd.s32 %s89, 1
    %p93 = scmp.eq.s32.totalorder %s13, 1
    %p94 = scmp.ne.s32.totalorder %s89, %s91
    %p95 = scmp.eq.s32.totalorder %s13, 0
    %p96 = por %p94, %p95
    %p97 = scmp.ne.s32.totalorder %s89, %s91
    %p98 = scmp.eq.s32.totalorder %s18, 1
    %p99 = por %p97, %p98
    %p100 = scmp.ne.s32.totalorder %s91, %s92
    %p101 = scmp.eq.s32.totalorder %s18, 0
    %p102 = por %p100, %p101
    %p103 = scmp.ne.s32.totalorder %s91, %s92
    %p104 = scmp.eq.s32.totalorder %s19, 1
    %p105 = por %p103, %p104
    %p107 = scmp.ne.s32.totalorder %s92, %s106
    %p108 = scmp.eq.s32.totalorder %s19, 0
    %p109 = por %p107, %p108
    %s111 = sadd.s32 %s110, 1
    %p114 = scmp.eq.s32.totalorder %s13, 1
    %p115 = scmp.ne.s32.totalorder %s110, %s112
    %p116 = scmp.eq.s32.totalorder %s13, 0
    %p117 = por %p115, %p116
    %p118 = scmp.ne.s32.totalorder %s110, %s112
    %p119 = scmp.eq.s32.totalorder %s18, 1
    %p120 = por %p118, %p119
    %p121 = scmp.ne.s32.totalorder %s112, %s113
    %p122 = scmp.eq.s32.totalorder %s18, 0
    %p123 = por %p121, %p122
    %p124 = scmp.ne.s32.totalorder %s112, %s113
    %p125 = scmp.eq.s32.totalorder %s19, 1
    %p126 = por %p124, %p125
    %p128 = scmp.ne.s32.totalorder %s113, %s127
    %p129 = scmp.eq.s32.totalorder %s19, 0
    %p130 = por %p128, %p129
    %s131 = ssub.s32 %s13, %s20
    %p132 = scmp.eq.s32.totalorder %s131, 0
    %s134 = sadd.s32 %s133, 1
    %s135 = scalar_select %p132, %s133, %s134
    %p138 = pneg %p132
    %p139 = scmp.eq.s32.totalorder %s13, 1
    %p140 = por %p138, %p139
    %p141 = scmp.ne.s32.totalorder %s133, %s136
    %p142 = scmp.eq.s32.totalorder %s13, 0
    %p143 = por %p141, %p142
    %p144 = scmp.ne.s32.totalorder %s133, %s136
    %p145 = scmp.eq.s32.totalorder %s18, 1
    %p146 = por %p144, %p145
    %p147 = scmp.ne.s32.totalorder %s136, %s137
    %p148 = scmp.eq.s32.totalorder %s18, 0
    %p149 = por %p147, %p148
    %p150 = scmp.ne.s32.totalorder %s136, %s137
    %p151 = scmp.eq.s32.totalorder %s19, 1
    %p152 = por %p150, %p151
    %p154 = scmp.ne.s32.totalorder %s137, %s153
    %p155 = scmp.eq.s32.totalorder %s19, 0
    %p156 = por %p154, %p155
    %s157 = ssub.s32 %s13, %s20
    %p158 = scmp.eq.s32.totalorder %s157, 0
    %s160 = sadd.s32 %s159, 1
    %s161 = scalar_select %p158, %s159, %s160
    %p164 = pneg %p158
    %p165 = scmp.eq.s32.totalorder %s13, 1
    %p166 = por %p164, %p165
    %p167 = scmp.ne.s32.totalorder %s159, %s162
    %p168 = scmp.eq.s32.totalorder %s13, 0
    %p169 = por %p167, %p168
    %p170 = scmp.ne.s32.totalorder %s159, %s162
    %p171 = scmp.eq.s32.totalorder %s18, 1
    %p172 = por %p170, %p171
    %p173 = scmp.ne.s32.totalorder %s162, %s163
    %p174 = scmp.eq.s32.totalorder %s18, 0
    %p175 = por %p173, %p174
    %p176 = scmp.ne.s32.totalorder %s162, %s163
    %p177 = scmp.eq.s32.totalorder %s19, 1
    %p178 = por %p176, %p177
    %p180 = scmp.ne.s32.totalorder %s163, %s179
    %p181 = scmp.eq.s32.totalorder %s19, 0
    %p182 = por %p180, %p181
    %p183 = scmp.le.s32.totalorder 1, %s13
    %p184 = scmp.lt.s32.totalorder %s13, 3
    %p185 = pnand %p183, %p184
    %p186 = pneg %p185
    // Predicated region
    $region9: #{prompt_decoder_forward.25} parent=5 // pred_check
      _
    $region10: #{prompt_decoder_forward.25} parent=5 // pred_check_branch
      %188 = sbr.rel (%p185) target = $region12
    $region11: #{prompt_decoder_forward.25} parent=5 // pred_region
      %s189 = ssub.s32 %s13, 1
      // Predicated region
      $region13: #{prompt_decoder_forward.25} parent=11 // pred_check
        %p190 = pneg %p60
      $region14: #{prompt_decoder_forward.25} parent=11 // pred_check_branch
        %192 = sbr.rel (%p190) target = $region16
      $region15: #{prompt_decoder_forward.25} parent=11 // pred_region
        _
      $region16: #{prompt_decoder_forward.25} parent=11 // pred_fallthru
        _
      // Predicated region
      $region17: #{prompt_decoder_forward.25} parent=11 // pred_check
        %p193 = pneg %p81
      $region18: #{prompt_decoder_forward.25} parent=11 // pred_check_branch
        %195 = sbr.rel (%p193) target = $region20
      $region19: #{prompt_decoder_forward.25} parent=11 // pred_region
        _
      $region20: #{prompt_decoder_forward.25} parent=11 // pred_fallthru
        _
      // Predicated region
      $region21: #{prompt_decoder_forward.25} parent=11 // pred_check
        %p196 = pneg %p102
      $region22: #{prompt_decoder_forward.25} parent=11 // pred_check_branch
        %198 = sbr.rel (%p196) target = $region24
      $region23: #{prompt_decoder_forward.25} parent=11 // pred_region
        _
      $region24: #{prompt_decoder_forward.25} parent=11 // pred_fallthru
        _
      // Predicated region
      $region25: #{prompt_decoder_forward.25} parent=11 // pred_check
        %p199 = pneg %p123
      $region26: #{prompt_decoder_forward.25} parent=11 // pred_check_branch
        %201 = sbr.rel (%p199) target = $region28
      $region27: #{prompt_decoder_forward.25} parent=11 // pred_region
        _
      $region28: #{prompt_decoder_forward.25} parent=11 // pred_fallthru
        _
    $region12: #{prompt_decoder_forward.25} parent=5 // pred_fallthru
      _
    %p202 = scmp.lt.s32.totalorder %s13, 2
    // Predicated region
    $region29: #{prompt_decoder_forward.25} parent=5 // pred_check
      %p203 = pneg %p202
    $region30: #{prompt_decoder_forward.25} parent=5 // pred_check_branch
      %205 = sbr.rel (%p203) target = $region32
    $region31: #{prompt_decoder_forward.25} parent=5 // pred_region
      // Predicated region
      $region33: #{prompt_decoder_forward.25} parent=31 // pred_check
        %p206 = pneg %p33
      $region34: #{prompt_decoder_forward.25} parent=31 // pred_check_branch
        %208 = sbr.rel (%p206) target = $region36
      $region35: #{prompt_decoder_forward.25} parent=31 // pred_region
        %s209 = smul.u32 2, %s13
        %p210 = scmp.lt.s32.totalorder %s209, 3
        %s211 = scalar_select %p210, %s209, 3
        %s212 = smul.addr %s211, 8
        %s213 = scalar_lea.vmem %s0, %s212
        %s214 = smul.u32 2, %s13
      $region36: #{prompt_decoder_forward.25} parent=31 // pred_fallthru
        _
    $region32: #{prompt_decoder_forward.25} parent=5 // pred_fallthru
      _
    %p215 = scmp.le.s32.totalorder 1, %s13
    %p216 = scmp.lt.s32.totalorder %s13, 3
    %p217 = pnand %p215, %p216
    %p218 = pneg %p217
    // Predicated region
    $region37: #{prompt_decoder_forward.25} parent=5 // pred_check
      _
    $region38: #{prompt_decoder_forward.25} parent=5 // pred_check_branch
      %220 = sbr.rel (%p217) target = $region40
    $region39: #{prompt_decoder_forward.25} parent=5 // pred_region
      %s221 = ssub.s32 %s13, 1
      %s222 = smul.u32 2, %s18
      %p223 = scmp.lt.s32.totalorder %s222, 3
      %s224 = scalar_select %p223, %s222, 3
      %s225 = smul.addr %s224, 8
      %s226 = scalar_lea.vmem %s0, %s225
      %p227 = pneg %p39
      %p228 = pneg %p36
      %p229 = pneg %p60
      %p230 = pneg %p57
      %p231 = pneg %p81
      %p232 = pneg %p78
      %p233 = pneg %p102
      %p234 = pneg %p99
      %p235 = pneg %p123
      %p236 = pneg %p120
      %p237 = pneg %p149
      %p238 = pneg %p146
      %s239 = smul.u32 2, %s18
      %p240 = scmp.lt.s32.totalorder %s239, 3
      %s241 = scalar_select %p240, %s239, 3
      %s242 = smul.addr %s241, 4
      %s243 = scalar_lea.vmem %s5, %s242
      %p244 = pneg %p175
      %p245 = pneg %p172
      %s246 = smul.u32 2, %s18
      %p247 = scmp.lt.s32.totalorder %s246, 3
      %s248 = scalar_select %p247, %s246, 3
      %s249 = smul.addr %s248, 4
      %s250 = scalar_lea.vmem %s6, %s249
      %s251 = smul.u32 2, %s18
      %p252 = scmp.lt.s32.totalorder %s251, 3
      %s253 = scalar_select %p252, %s251, 3
      %s254 = smul.addr %s253, 8
      %s255 = scalar_lea.vmem %s0, %s254
      %s256 = smul.u32 2, %s18
      %s257 = smul.u32 2, %s18
      %p258 = scmp.lt.s32.totalorder %s257, 3
      %s259 = scalar_select %p258, %s257, 3
      %s260 = smul.addr %s259, 4
      %s261 = scalar_lea.vmem %s5, %s260
      %s262 = smul.u32 2, %s18
      %s263 = smul.u32 2, %s18
      %p264 = scmp.lt.s32.totalorder %s263, 3
      %s265 = scalar_select %p264, %s263, 3
      %s266 = smul.addr %s265, 4
      %s267 = scalar_lea.vmem %s6, %s266
      %s268 = smul.u32 2, %s18
      %v270 = vld [vmem:[%s255] sm:$0xff]
      %v271 = vld [vmem:[%s255 + $0x8] sm:$0xff]
      %v272 = vpack.c.bf16 %v271, %v270
      %v273 = vld [vmem:[%s1] sm:$0xf]
      %v274 = vld [vmem:[%s1 + $0x4] sm:$0xf]
      %v275 = vld [vmem:[%s1 + $0x8] sm:$0xf]
      %v276 = vld [vmem:[%s1 + $0xc] sm:$0xf]
      %v277 = vld [vmem:[%s2] sm:$0x1]
      %v279 = vperm.slane %v277, 0
      %v285 = vunpack.c.l.b16 %v273
      %v286 = vunpack.c.l.b16 %v274
      %v287 = vunpack.c.l.b16 %v275
      %v288 = vunpack.c.l.b16 %v276
      %v289 = vpack.c.b16 %v286, %v285
      %v290 = vpack.c.b16 %v288, %v287
      %vm293 = vcmask 261120
      %v295 = vsel %vm293, %v272, 0
      %297 = vmatpush.bf16.msra.mxu0 0
      %298 = vmatpush.bf16.msra.mxu0 0
      %299 = vmatpush.bf16.msra.mxu0 0
      %300 = vmatpush.bf16.msra.mxu0 0
      %301 = vmatpush.bf16.msra.mxu0 0
      %302 = vmatpush.bf16.msra.mxu0 0
      %303 = vmatpush.bf16.msra.mxu0 %v290
      %304 = vmatpush.bf16.msra.mxu0 %v289
      %305 = vmatmul.bf16.gmra.mxu0 %v295
      %v306 = vpop.f32.mrf.mxu0
      %v307 = vadd.f32 %v279, %v306
      %v308 = vpop.f32.mrf.mxu0
      %v309 = vadd.f32 %v279, %v308
      %310 = vdwg.mxu0
      %v311 = vpack.c.bf16 %v307, %v307
      %v312 = vpack.c.bf16 %v309, %v309
      %vm313 = vcmask 257024
      %314 = vst.msk [vmem:[%s261] sm:$0xf] %vm313, %v311
      %315 = vst.msk [vmem:[%s261 + $0x4] sm:$0xf] %vm313, %v312
      %v316 = vld [vmem:[%s3] sm:$0xf]
      %v317 = vld [vmem:[%s3 + $0x4] sm:$0xf]
      %v318 = vld [vmem:[%s3 + $0x8] sm:$0xf]
      %v319 = vld [vmem:[%s3 + $0xc] sm:$0xf]
      %v320 = vld [vmem:[%s4] sm:$0x1]
      %v322 = vperm.slane %v320, 0
      %v328 = vunpack.c.l.b16 %v316
      %v329 = vunpack.c.l.b16 %v317
      %v330 = vunpack.c.l.b16 %v318
      %v331 = vunpack.c.l.b16 %v319
      %v332 = vpack.c.b16 %v329, %v328
      %v333 = vpack.c.b16 %v331, %v330
      %336 = vmatpush.bf16.msra.mxu0 0
      %337 = vmatpush.bf16.msra.mxu0 0
      %338 = vmatpush.bf16.msra.mxu0 0
      %339 = vmatpush.bf16.msra.mxu0 0
      %340 = vmatpush.bf16.msra.mxu0 0
      %341 = vmatpush.bf16.msra.mxu0 0
      %342 = vmatpush.bf16.msra.mxu0 %v333
      %343 = vmatpush.bf16.msra.mxu0 %v332
      %344 = vmatmul.bf16.gmra.mxu0 %v295
      %v345 = vpop.f32.mrf.mxu0
      %v346 = vadd.f32 %v322, %v345
      %v347 = vpop.f32.mrf.mxu0
      %v348 = vadd.f32 %v322, %v347
      %349 = vdwg.mxu0
      %v350 = vpack.c.bf16 %v346, %v346
      %v351 = vpack.c.bf16 %v348, %v348
      %352 = vst.msk [vmem:[%s267] sm:$0xf] %vm313, %v350
      %353 = vst.msk [vmem:[%s267 + $0x4] sm:$0xf] %vm313, %v351
      %s354 = smul.u32 2, %s18
      %p355 = scmp.lt.s32.totalorder %s354, 3
      %s356 = scalar_select %p355, %s354, 3
      %s357 = smul.addr %s356, 4
      %s358 = scalar_lea.vmem %s5, %s357
      %s359 = smul.u32 2, %s18
      %p360 = scmp.lt.s32.totalorder %s359, 3
      %s361 = scalar_select %p360, %s359, 3
      %s362 = smul.addr %s361, 4
      %s363 = scalar_lea.vmem %s6, %s362
      // Predicated region
      $region41: #{prompt_decoder_forward.25} parent=39 // pred_check
        %p364 = pneg %p146
      $region42: #{prompt_decoder_forward.25} parent=39 // pred_check_branch
        %366 = sbr.rel (%p364) target = $region44
      $region43: #{prompt_decoder_forward.25} parent=39 // pred_region
        %s367 = smul.u32 2, %s18
      $region44: #{prompt_decoder_forward.25} parent=39 // pred_fallthru
        _
      // Predicated region
      $region45: #{prompt_decoder_forward.25} parent=39 // pred_check
        %p368 = pneg %p172
      $region46: #{prompt_decoder_forward.25} parent=39 // pred_check_branch
        %370 = sbr.rel (%p368) target = $region48
      $region47: #{prompt_decoder_forward.25} parent=39 // pred_region
        %s371 = smul.u32 2, %s18
      $region48: #{prompt_decoder_forward.25} parent=39 // pred_fallthru
        _
    $region40: #{prompt_decoder_forward.25} parent=5 // pred_fallthru
      _
    %p372 = scmp.le.s32.totalorder 2, %s13
    // Predicated region
    $region49: #{prompt_decoder_forward.25} parent=5 // pred_check
      %p373 = pneg %p372
    $region50: #{prompt_decoder_forward.25} parent=5 // pred_check_branch
      %375 = sbr.rel (%p373) target = $region52
    $region51: #{prompt_decoder_forward.25} parent=5 // pred_region
      %s376 = ssub.s32 %s13, 2
      // Predicated region
      $region53: #{prompt_decoder_forward.25} parent=51 // pred_check
        %p377 = pneg %p152
      $region54: #{prompt_decoder_forward.25} parent=51 // pred_check_branch
        %379 = sbr.rel (%p377) target = $region56
      $region55: #{prompt_decoder_forward.25} parent=51 // pred_region
        %s380 = smul.u32 2, %s19
        %p381 = scmp.lt.s32.totalorder %s380, 3
        %s382 = scalar_select %p381, %s380, 3
        %s383 = smul.addr %s382, 4
        %s384 = scalar_lea.vmem %s5, %s383
      $region56: #{prompt_decoder_forward.25} parent=51 // pred_fallthru
        _
      // Predicated region
      $region57: #{prompt_decoder_forward.25} parent=51 // pred_check
        %p385 = pneg %p178
      $region58: #{prompt_decoder_forward.25} parent=51 // pred_check_branch
        %387 = sbr.rel (%p385) target = $region60
      $region59: #{prompt_decoder_forward.25} parent=51 // pred_region
        %s388 = smul.u32 2, %s19
        %p389 = scmp.lt.s32.totalorder %s388, 3
        %s390 = scalar_select %p389, %s388, 3
        %s391 = smul.addr %s390, 4
        %s392 = scalar_lea.vmem %s6, %s391
      $region60: #{prompt_decoder_forward.25} parent=51 // pred_fallthru
        _
    $region52: #{prompt_decoder_forward.25} parent=5 // pred_fallthru
      _
  $region6: #{prompt_decoder_forward.25} parent=0 // loop_footer
    %s17 = sadd.s32 1, %s13
  $region7: #{prompt_decoder_forward.25} parent=0 // loop_footer_branch
    %12 = sbr.rel target = $region3
  $region8: #{prompt_decoder_forward.25} parent=0 // loop_exit
    _

// kernel: prompt_decoder_forward.27
$region0: #{prompt_decoder_forward.27}
  #allocation0 [shape = 'u32[]', space=smem, size = 0x4, offset = 0x4, fixed_abs, tag = 'smem constant byte address 0x4 - core index']
  #allocation1 [shape = 'u32[72,128]{1,0:T(1,128)}', space=vmem, size = 0x9000, scoped, tag = 'internal scratch']
  %s0 = inlined_call_operand.vmem [shape: bf16[64,32], index: 0, kind: input, shape index: {}]
  %s1 = inlined_call_operand.vmem [shape: bf16[32,32], index: 1, kind: input, shape index: {}]
  %s2 = inlined_call_operand.vmem [shape: f32[1,32], index: 2, kind: input, shape index: {}]
  %s3 = inlined_call_operand.vmem [shape: f32[64,32], index: 3, kind: input, shape index: {}]
  %s4 = inlined_call_operand.vmem [shape: f32[64,32], index: 4, kind: output, shape index: {}]
  %s5 = sld [smem:[#allocation0]]
  $region49: #{prompt_decoder_forward.27} parent=0
    _
  %s7 = ssub.s32 1, %s5
  %s8 = scalar_select 0, %s7, %s5
  loop: start=0, step=1, limit=4
  $region2: #{prompt_decoder_forward.27} parent=0 // loop_pre_header
    _
  $region3: #{prompt_decoder_forward.27} parent=0 // loop_header
    %s10 = sphi 0, %s14
    %p11 = scmp.ge.s32.totalorder %s10, 4
    %s20 = sphi 0, %s22
    %s23 = sphi 0, %s20
    %s24 = sphi 0, %s23
    %s40 = sphi 0, %s24
    %s44 = sphi 0, %s44
    %s46 = sphi 0, %s44
    %s47 = sphi 0, %s46
    %s61 = sphi 0, %s47
    %s65 = sphi 0, %s65
    %s67 = sphi 0, %s65
    %s68 = sphi 0, %s67
    %s82 = sphi 0, %s68
    %s88 = sphi 0, %s90
    %s91 = sphi 0, %s88
    %s92 = sphi 0, %s91
    %s108 = sphi 0, %s92
    %s114 = sphi 0, %s116
    %s117 = sphi 0, %s114
    %s118 = sphi 0, %s117
    %s134 = sphi 0, %s118
  $region4: #{prompt_decoder_forward.27} parent=0 // loop_header_branch
    %13 = sbr.rel (%p11) target = $region8
  $region5: #{prompt_decoder_forward.27} parent=0 // loop_body
    %s15 = ssub.s32 %s10, 1
    %s16 = ssub.s32 %s10, 2
    %s17 = sadd.s32 %s10, 1
    %s18 = ssub.s32 %s10, %s17
    %p19 = scmp.eq.s32.totalorder %s18, 0
    %s21 = sadd.s32 %s20, 1
    %s22 = scalar_select %p19, %s20, %s21
    %p25 = pneg %p19
    %p26 = scmp.eq.s32.totalorder %s10, 1
    %p27 = por %p25, %p26
    %p28 = scmp.ne.s32.totalorder %s20, %s23
    %p29 = scmp.eq.s32.totalorder %s10, 0
    %p30 = por %p28, %p29
    %p31 = scmp.ne.s32.totalorder %s20, %s23
    %p32 = scmp.eq.s32.totalorder %s15, 1
    %p33 = por %p31, %p32
    %p34 = scmp.ne.s32.totalorder %s23, %s24
    %p35 = scmp.eq.s32.totalorder %s15, 0
    %p36 = por %p34, %p35
    %p37 = scmp.ne.s32.totalorder %s23, %s24
    %p38 = scmp.eq.s32.totalorder %s16, 1
    %p39 = por %p37, %p38
    %p41 = scmp.ne.s32.totalorder %s24, %s40
    %p42 = scmp.eq.s32.totalorder %s16, 0
    %p43 = por %p41, %p42
    %s45 = sadd.s32 %s44, 1
    %p48 = scmp.eq.s32.totalorder %s10, 1
    %p49 = scmp.ne.s32.totalorder %s44, %s46
    %p50 = scmp.eq.s32.totalorder %s10, 0
    %p51 = por %p49, %p50
    %p52 = scmp.ne.s32.totalorder %s44, %s46
    %p53 = scmp.eq.s32.totalorder %s15, 1
    %p54 = por %p52, %p53
    %p55 = scmp.ne.s32.totalorder %s46, %s47
    %p56 = scmp.eq.s32.totalorder %s15, 0
    %p57 = por %p55, %p56
    %p58 = scmp.ne.s32.totalorder %s46, %s47
    %p59 = scmp.eq.s32.totalorder %s16, 1
    %p60 = por %p58, %p59
    %p62 = scmp.ne.s32.totalorder %s47, %s61
    %p63 = scmp.eq.s32.totalorder %s16, 0
    %p64 = por %p62, %p63
    %s66 = sadd.s32 %s65, 1
    %p69 = scmp.eq.s32.totalorder %s10, 1
    %p70 = scmp.ne.s32.totalorder %s65, %s67
    %p71 = scmp.eq.s32.totalorder %s10, 0
    %p72 = por %p70, %p71
    %p73 = scmp.ne.s32.totalorder %s65, %s67
    %p74 = scmp.eq.s32.totalorder %s15, 1
    %p75 = por %p73, %p74
    %p76 = scmp.ne.s32.totalorder %s67, %s68
    %p77 = scmp.eq.s32.totalorder %s15, 0
    %p78 = por %p76, %p77
    %p79 = scmp.ne.s32.totalorder %s67, %s68
    %p80 = scmp.eq.s32.totalorder %s16, 1
    %p81 = por %p79, %p80
    %p83 = scmp.ne.s32.totalorder %s68, %s82
    %p84 = scmp.eq.s32.totalorder %s16, 0
    %p85 = por %p83, %p84
    %s86 = ssub.s32 %s10, %s17
    %p87 = scmp.eq.s32.totalorder %s86, 0
    %s89 = sadd.s32 %s88, 1
    %s90 = scalar_select %p87, %s88, %s89
    %p93 = pneg %p87
    %p94 = scmp.eq.s32.totalorder %s10, 1
    %p95 = por %p93, %p94
    %p96 = scmp.ne.s32.totalorder %s88, %s91
    %p97 = scmp.eq.s32.totalorder %s10, 0
    %p98 = por %p96, %p97
    %p99 = scmp.ne.s32.totalorder %s88, %s91
    %p100 = scmp.eq.s32.totalorder %s15, 1
    %p101 = por %p99, %p100
    %p102 = scmp.ne.s32.totalorder %s91, %s92
    %p103 = scmp.eq.s32.totalorder %s15, 0
    %p104 = por %p102, %p103
    %p105 = scmp.ne.s32.totalorder %s91, %s92
    %p106 = scmp.eq.s32.totalorder %s16, 1
    %p107 = por %p105, %p106
    %p109 = scmp.ne.s32.totalorder %s92, %s108
    %p110 = scmp.eq.s32.totalorder %s16, 0
    %p111 = por %p109, %p110
    %s112 = ssub.s32 %s10, %s17
    %p113 = scmp.eq.s32.totalorder %s112, 0
    %s115 = sadd.s32 %s114, 1
    %s116 = scalar_select %p113, %s114, %s115
    %p119 = pneg %p113
    %p120 = scmp.eq.s32.totalorder %s10, 1
    %p121 = por %p119, %p120
    %p122 = scmp.ne.s32.totalorder %s114, %s117
    %p123 = scmp.eq.s32.totalorder %s10, 0
    %p124 = por %p122, %p123
    %p125 = scmp.ne.s32.totalorder %s114, %s117
    %p126 = scmp.eq.s32.totalorder %s15, 1
    %p127 = por %p125, %p126
    %p128 = scmp.ne.s32.totalorder %s117, %s118
    %p129 = scmp.eq.s32.totalorder %s15, 0
    %p130 = por %p128, %p129
    %p131 = scmp.ne.s32.totalorder %s117, %s118
    %p132 = scmp.eq.s32.totalorder %s16, 1
    %p133 = por %p131, %p132
    %p135 = scmp.ne.s32.totalorder %s118, %s134
    %p136 = scmp.eq.s32.totalorder %s16, 0
    %p137 = por %p135, %p136
    %p138 = scmp.le.s32.totalorder 1, %s10
    %p139 = scmp.lt.s32.totalorder %s10, 3
    %p140 = pnand %p138, %p139
    %p141 = pneg %p140
    // Predicated region
    $region9: #{prompt_decoder_forward.27} parent=5 // pred_check
      _
    $region10: #{prompt_decoder_forward.27} parent=5 // pred_check_branch
      %143 = sbr.rel (%p140) target = $region12
    $region11: #{prompt_decoder_forward.27} parent=5 // pred_region
      %s144 = ssub.s32 %s10, 1
      // Predicated region
      $region13: #{prompt_decoder_forward.27} parent=11 // pred_check
        %p145 = pneg %p57
      $region14: #{prompt_decoder_forward.27} parent=11 // pred_check_branch
        %147 = sbr.rel (%p145) target = $region16
      $region15: #{prompt_decoder_forward.27} parent=11 // pred_region
        _
      $region16: #{prompt_decoder_forward.27} parent=11 // pred_fallthru
        _
      // Predicated region
      $region17: #{prompt_decoder_forward.27} parent=11 // pred_check
        %p148 = pneg %p78
      $region18: #{prompt_decoder_forward.27} parent=11 // pred_check_branch
        %150 = sbr.rel (%p148) target = $region20
      $region19: #{prompt_decoder_forward.27} parent=11 // pred_region
        _
      $region20: #{prompt_decoder_forward.27} parent=11 // pred_fallthru
        _
    $region12: #{prompt_decoder_forward.27} parent=5 // pred_fallthru
      _
    %p151 = scmp.lt.s32.totalorder %s10, 2
    // Predicated region
    $region21: #{prompt_decoder_forward.27} parent=5 // pred_check
      %p152 = pneg %p151
    $region22: #{prompt_decoder_forward.27} parent=5 // pred_check_branch
      %154 = sbr.rel (%p152) target = $region24
    $region23: #{prompt_decoder_forward.27} parent=5 // pred_region
      // Predicated region
      $region25: #{prompt_decoder_forward.27} parent=23 // pred_check
        %p155 = pneg %p30
      $region26: #{prompt_decoder_forward.27} parent=23 // pred_check_branch
        %157 = sbr.rel (%p155) target = $region28
      $region27: #{prompt_decoder_forward.27} parent=23 // pred_region
        %s158 = smul.u32 4, %s10
        %p159 = scmp.lt.s32.totalorder %s158, 7
        %s160 = scalar_select %p159, %s158, 7
        %s161 = smul.addr %s160, 4
        %s162 = scalar_lea.vmem %s0, %s161
        %s163 = smul.u32 4, %s10
      $region28: #{prompt_decoder_forward.27} parent=23 // pred_fallthru
        _
      // Predicated region
      $region29: #{prompt_decoder_forward.27} parent=23 // pred_check
        %p164 = pneg %p98
      $region30: #{prompt_decoder_forward.27} parent=23 // pred_check_branch
        %166 = sbr.rel (%p164) target = $region32
      $region31: #{prompt_decoder_forward.27} parent=23 // pred_region
        %s167 = smul.u32 4, %s10
        %p168 = scmp.lt.s32.totalorder %s167, 7
        %s169 = scalar_select %p168, %s167, 7
        %s170 = smul.addr %s169, 8
        %s171 = scalar_lea.vmem %s3, %s170
        %s172 = smul.u32 4, %s10
      $region32: #{prompt_decoder_forward.27} parent=23 // pred_fallthru
        _
    $region24: #{prompt_decoder_forward.27} parent=5 // pred_fallthru
      _
    %p173 = scmp.le.s32.totalorder 1, %s10
    %p174 = scmp.lt.s32.totalorder %s10, 3
    %p175 = pnand %p173, %p174
    %p176 = pneg %p175
    // Predicated region
    $region33: #{prompt_decoder_forward.27} parent=5 // pred_check
      _
    $region34: #{prompt_decoder_forward.27} parent=5 // pred_check_branch
      %178 = sbr.rel (%p175) target = $region36
    $region35: #{prompt_decoder_forward.27} parent=5 // pred_region
      %s179 = ssub.s32 %s10, 1
      %s180 = smul.u32 4, %s15
      %p181 = scmp.lt.s32.totalorder %s180, 7
      %s182 = scalar_select %p181, %s180, 7
      %s183 = smul.addr %s182, 4
      %s184 = scalar_lea.vmem %s0, %s183
      %p185 = pneg %p36
      %p186 = pneg %p33
      %p187 = pneg %p57
      %p188 = pneg %p54
      %p189 = pneg %p78
      %p190 = pneg %p75
      %s191 = smul.u32 4, %s15
      %p192 = scmp.lt.s32.totalorder %s191, 7
      %s193 = scalar_select %p192, %s191, 7
      %s194 = smul.addr %s193, 8
      %s195 = scalar_lea.vmem %s3, %s194
      %p196 = pneg %p104
      %p197 = pneg %p101
      %p198 = pneg %p130
      %p199 = pneg %p127
      %s200 = smul.u32 4, %s15
      %p201 = scmp.lt.s32.totalorder %s200, 7
      %s202 = scalar_select %p201, %s200, 7
      %s203 = smul.addr %s202, 8
      %s204 = scalar_lea.vmem %s4, %s203
      %s205 = smul.u32 4, %s15
      %p206 = scmp.lt.s32.totalorder %s205, 7
      %s207 = scalar_select %p206, %s205, 7
      %s208 = smul.addr %s207, 4
      %s209 = scalar_lea.vmem %s0, %s208
      %s210 = smul.u32 4, %s15
      %s211 = smul.u32 4, %s15
      %p212 = scmp.lt.s32.totalorder %s211, 7
      %s213 = scalar_select %p212, %s211, 7
      %s214 = smul.addr %s213, 8
      %s215 = scalar_lea.vmem %s3, %s214
      %s216 = smul.u32 4, %s15
      %s217 = smul.u32 4, %s15
      %p218 = scmp.lt.s32.totalorder %s217, 7
      %s219 = scalar_select %p218, %s217, 7
      %s220 = smul.addr %s219, 8
      %s221 = scalar_lea.vmem %s4, %s220
      %s222 = smul.u32 4, %s15
      %v224 = vld [vmem:[%s209] sm:$0xf]
      %v225 = vld [vmem:[%s209 + $0x4] sm:$0xf]
      %v226 = vld [vmem:[%s209 + $0x8] sm:$0xf]
      %v227 = vld [vmem:[%s209 + $0xc] sm:$0xf]
      %v228 = vld [vmem:[%s1] sm:$0xf]
      %v229 = vld [vmem:[%s1 + $0x4] sm:$0xf]
      %v230 = vld [vmem:[%s1 + $0x8] sm:$0xf]
      %v231 = vld [vmem:[%s1 + $0xc] sm:$0xf]
      %v232 = vld [vmem:[%s2] sm:$0x1]
      %v234 = vperm.slane %v232, 0
      %v240 = vunpack.c.l.b16 %v224
      %v241 = vunpack.c.l.b16 %v225
      %v242 = vunpack.c.l.b16 %v226
      %v243 = vunpack.c.l.b16 %v227
      %v244 = vpack.c.b16 %v241, %v240
      %v245 = vpack.c.b16 %v243, %v242
      %v250 = vunpack.c.l.b16 %v228
      %v251 = vunpack.c.l.b16 %v229
      %v252 = vunpack.c.l.b16 %v230
      %v253 = vunpack.c.l.b16 %v231
      %v254 = vpack.c.b16 %v251, %v250
      %v255 = vpack.c.b16 %v253, %v252
      %vm258 = vcmask 261120
      %v260 = vsel %vm258, %v244, 0
      %v263 = vsel %vm258, %v245, 0
      %265 = vmatpush.bf16.msra.mxu0 0
      %266 = vmatpush.bf16.msra.mxu0 0
      %267 = vmatpush.bf16.msra.mxu0 0
      %268 = vmatpush.bf16.msra.mxu0 0
      %269 = vmatpush.bf16.msra.mxu0 0
      %270 = vmatpush.bf16.msra.mxu0 0
      %271 = vmatpush.bf16.msra.mxu0 %v255
      %272 = vmatpush.bf16.msra.mxu0 %v254
      %273 = vmatmul.bf16.gmra.mxu0 %v260
      %v274 = vpop.f32.mrf.mxu0
      %v275 = vadd.f32 %v234, %v274
      %v276 = vpop.f32.mrf.mxu0
      %v277 = vadd.f32 %v234, %v276
      %278 = vmatmul.bf16.gmra.mxu0 %v263
      %v279 = vpop.f32.mrf.mxu0
      %v280 = vadd.f32 %v234, %v279
      %v281 = vpop.f32.mrf.mxu0
      %v282 = vadd.f32 %v234, %v281
      %283 = vdwg.mxu0
      %v284 = vld [vmem:[%s215] sm:$0xff]
      %v285 = vld [vmem:[%s215 + $0x8] sm:$0xff]
      %v286 = vld [vmem:[%s215 + $0x10] sm:$0xff]
      %v287 = vld [vmem:[%s215 + $0x18] sm:$0xff]
      %v288 = vadd.f32 %v275, %v284
      %v289 = vadd.f32 %v277, %v285
      %v290 = vadd.f32 %v280, %v286
      %v291 = vadd.f32 %v282, %v287
      %292 = vst.msk [vmem:[%s221] sm:$0xff] %vm258, %v288
      %293 = vst.msk [vmem:[%s221 + $0x8] sm:$0xff] %vm258, %v289
      %294 = vst.msk [vmem:[%s221 + $0x10] sm:$0xff] %vm258, %v290
      %295 = vst.msk [vmem:[%s221 + $0x18] sm:$0xff] %vm258, %v291
      %s296 = smul.u32 4, %s15
      %p297 = scmp.lt.s32.totalorder %s296, 7
      %s298 = scalar_select %p297, %s296, 7
      %s299 = smul.addr %s298, 8
      %s300 = scalar_lea.vmem %s4, %s299
      // Predicated region
      $region37: #{prompt_decoder_forward.27} parent=35 // pred_check
        %p301 = pneg %p127
      $region38: #{prompt_decoder_forward.27} parent=35 // pred_check_branch
        %303 = sbr.rel (%p301) target = $region40
      $region39: #{prompt_decoder_forward.27} parent=35 // pred_region
        %s304 = smul.u32 4, %s15
      $region40: #{prompt_decoder_forward.27} parent=35 // pred_fallthru
        _
    $region36: #{prompt_decoder_forward.27} parent=5 // pred_fallthru
      _
    %p305 = scmp.le.s32.totalorder 2, %s10
    // Predicated region
    $region41: #{prompt_decoder_forward.27} parent=5 // pred_check
      %p306 = pneg %p305
    $region42: #{prompt_decoder_forward.27} parent=5 // pred_check_branch
      %308 = sbr.rel (%p306) target = $region44
    $region43: #{prompt_decoder_forward.27} parent=5 // pred_region
      %s309 = ssub.s32 %s10, 2
      // Predicated region
      $region45: #{prompt_decoder_forward.27} parent=43 // pred_check
        %p310 = pneg %p133
      $region46: #{prompt_decoder_forward.27} parent=43 // pred_check_branch
        %312 = sbr.rel (%p310) target = $region48
      $region47: #{prompt_decoder_forward.27} parent=43 // pred_region
        %s313 = smul.u32 4, %s16
        %p314 = scmp.lt.s32.totalorder %s313, 7
        %s315 = scalar_select %p314, %s313, 7
        %s316 = smul.addr %s315, 8
        %s317 = scalar_lea.vmem %s4, %s316
      $region48: #{prompt_decoder_forward.27} parent=43 // pred_fallthru
        _
    $region44: #{prompt_decoder_forward.27} parent=5 // pred_fallthru
      _
  $region6: #{prompt_decoder_forward.27} parent=0 // loop_footer
    %s14 = sadd.s32 1, %s10
  $region7: #{prompt_decoder_forward.27} parent=0 // loop_footer_branch
    %9 = sbr.rel target = $region3
  $region8: #{prompt_decoder_forward.27} parent=0 // loop_exit
    _

// kernel: prompt_decoder_forward.26
$region0: #{prompt_decoder_forward.26}
  #allocation0 [shape = 'u32[]', space=smem, size = 0x4, offset = 0x4, fixed_abs, tag = 'smem constant byte address 0x4 - core index']
  #allocation1 [shape = 'u32[72,128]{1,0:T(1,128)}', space=vmem, size = 0x9000, scoped, tag = 'internal scratch']
  %s0 = inlined_call_operand.vmem [shape: bf16[2,32,32], index: 0, kind: input, shape index: {}]
  %s1 = inlined_call_operand.vmem [shape: bf16[2,16,32], index: 1, kind: input, shape index: {}]
  %s2 = inlined_call_operand.vmem [shape: bf16[2,16,32], index: 2, kind: input, shape index: {}]
  %s3 = inlined_call_operand.vmem [shape: bf16[2,32,32], index: 3, kind: output, shape index: {}]
  %s4 = sld [smem:[#allocation0]]
  $region45: #{prompt_decoder_forward.26} parent=0
    _
  %s6 = ssub.s32 1, %s4
  %s7 = scalar_select 0, %s6, %s4
  loop: start=0, step=1, limit=4
  $region2: #{prompt_decoder_forward.26} parent=0 // loop_pre_header
    _
  $region3: #{prompt_decoder_forward.26} parent=0 // loop_header
    %s9 = sphi 0, %s13
    %p10 = scmp.ge.s32.totalorder %s9, 4
    %s16 = sphi 0, %s28
    %s17 = sphi 0, %s24
    %s18 = sphi 0, %s16
    %s19 = sphi 0, %s17
    %s20 = sphi 0, %s18
    %s21 = sphi 0, %s19
    %s33 = sphi 0, %s35
    %s36 = sphi 0, %s33
    %s37 = sphi 0, %s36
    %s53 = sphi 0, %s37
    %s59 = sphi 0, %s61
    %s62 = sphi 0, %s59
    %s63 = sphi 0, %s62
    %s79 = sphi 0, %s63
    %s85 = sphi 0, %s87
    %s88 = sphi 0, %s85
    %s89 = sphi 0, %s88
    %s105 = sphi 0, %s89
    %s113 = sphi 0, %s115
    %s116 = sphi 0, %s113
    %s117 = sphi 0, %s116
    %s133 = sphi 0, %s117
  $region4: #{prompt_decoder_forward.26} parent=0 // loop_header_branch
    %12 = sbr.rel (%p10) target = $region8
  $region5: #{prompt_decoder_forward.26} parent=0 // loop_body
    %s14 = ssub.s32 %s9, 1
    %s15 = ssub.s32 %s9, 2
    %s22 = sadd.s32 1, %s17
    %p23 = scmp.ge.s32.totalorder %s22, 1
    %s24 = scalar_select %p23, 0, %s22
    %s25 = sadd.s32 1, %s16
    %s26 = scalar_select %p23, %s25, %s16
    %p27 = scmp.ge.s32.totalorder %s26, 2
    %s28 = scalar_select %p27, 0, %s26
    %s29 = ssub.s32 %s16, %s28
    %s30 = ssub.s32 %s17, %s24
    %s31 = sor.u32 %s29, %s30
    %p32 = scmp.eq.s32.totalorder %s31, 0
    %s34 = sadd.s32 %s33, 1
    %s35 = scalar_select %p32, %s33, %s34
    %p38 = pneg %p32
    %p39 = scmp.eq.s32.totalorder %s9, 1
    %p40 = por %p38, %p39
    %p41 = scmp.ne.s32.totalorder %s33, %s36
    %p42 = scmp.eq.s32.totalorder %s9, 0
    %p43 = por %p41, %p42
    %p44 = scmp.ne.s32.totalorder %s33, %s36
    %p45 = scmp.eq.s32.totalorder %s14, 1
    %p46 = por %p44, %p45
    %p47 = scmp.ne.s32.totalorder %s36, %s37
    %p48 = scmp.eq.s32.totalorder %s14, 0
    %p49 = por %p47, %p48
    %p50 = scmp.ne.s32.totalorder %s36, %s37
    %p51 = scmp.eq.s32.totalorder %s15, 1
    %p52 = por %p50, %p51
    %p54 = scmp.ne.s32.totalorder %s37, %s53
    %p55 = scmp.eq.s32.totalorder %s15, 0
    %p56 = por %p54, %p55
    %s57 = ssub.s32 %s16, %s28
    %p58 = scmp.eq.s32.totalorder %s57, 0
    %s60 = sadd.s32 %s59, 1
    %s61 = scalar_select %p58, %s59, %s60
    %p64 = pneg %p58
    %p65 = scmp.eq.s32.totalorder %s9, 1
    %p66 = por %p64, %p65
    %p67 = scmp.ne.s32.totalorder %s59, %s62
    %p68 = scmp.eq.s32.totalorder %s9, 0
    %p69 = por %p67, %p68
    %p70 = scmp.ne.s32.totalorder %s59, %s62
    %p71 = scmp.eq.s32.totalorder %s14, 1
    %p72 = por %p70, %p71
    %p73 = scmp.ne.s32.totalorder %s62, %s63
    %p74 = scmp.eq.s32.totalorder %s14, 0
    %p75 = por %p73, %p74
    %p76 = scmp.ne.s32.totalorder %s62, %s63
    %p77 = scmp.eq.s32.totalorder %s15, 1
    %p78 = por %p76, %p77
    %p80 = scmp.ne.s32.totalorder %s63, %s79
    %p81 = scmp.eq.s32.totalorder %s15, 0
    %p82 = por %p80, %p81
    %s83 = ssub.s32 %s16, %s28
    %p84 = scmp.eq.s32.totalorder %s83, 0
    %s86 = sadd.s32 %s85, 1
    %s87 = scalar_select %p84, %s85, %s86
    %p90 = pneg %p84
    %p91 = scmp.eq.s32.totalorder %s9, 1
    %p92 = por %p90, %p91
    %p93 = scmp.ne.s32.totalorder %s85, %s88
    %p94 = scmp.eq.s32.totalorder %s9, 0
    %p95 = por %p93, %p94
    %p96 = scmp.ne.s32.totalorder %s85, %s88
    %p97 = scmp.eq.s32.totalorder %s14, 1
    %p98 = por %p96, %p97
    %p99 = scmp.ne.s32.totalorder %s88, %s89
    %p100 = scmp.eq.s32.totalorder %s14, 0
    %p101 = por %p99, %p100
    %p102 = scmp.ne.s32.totalorder %s88, %s89
    %p103 = scmp.eq.s32.totalorder %s15, 1
    %p104 = por %p102, %p103
    %p106 = scmp.ne.s32.totalorder %s89, %s105
    %p107 = scmp.eq.s32.totalorder %s15, 0
    %p108 = por %p106, %p107
    %s109 = ssub.s32 %s16, %s28
    %s110 = ssub.s32 %s17, %s24
    %s111 = sor.u32 %s109, %s110
    %p112 = scmp.eq.s32.totalorder %s111, 0
    %s114 = sadd.s32 %s113, 1
    %s115 = scalar_select %p112, %s113, %s114
    %p118 = pneg %p112
    %p119 = scmp.eq.s32.totalorder %s9, 1
    %p120 = por %p118, %p119
    %p121 = scmp.ne.s32.totalorder %s113, %s116
    %p122 = scmp.eq.s32.totalorder %s9, 0
    %p123 = por %p121, %p122
    %p124 = scmp.ne.s32.totalorder %s113, %s116
    %p125 = scmp.eq.s32.totalorder %s14, 1
    %p126 = por %p124, %p125
    %p127 = scmp.ne.s32.totalorder %s116, %s117
    %p128 = scmp.eq.s32.totalorder %s14, 0
    %p129 = por %p127, %p128
    %p130 = scmp.ne.s32.totalorder %s116, %s117
    %p131 = scmp.eq.s32.totalorder %s15, 1
    %p132 = por %p130, %p131
    %p134 = scmp.ne.s32.totalorder %s117, %s133
    %p135 = scmp.eq.s32.totalorder %s15, 0
    %p136 = por %p134, %p135
    %p137 = scmp.le.s32.totalorder 1, %s9
    %p138 = scmp.lt.s32.totalorder %s9, 3
    %p139 = pnand %p137, %p138
    %p140 = pneg %p139
    // Predicated region
    $region9: #{prompt_decoder_forward.26} parent=5 // pred_check
      _
    $region10: #{prompt_decoder_forward.26} parent=5 // pred_check_branch
      %142 = sbr.rel (%p139) target = $region12
    $region11: #{prompt_decoder_forward.26} parent=5 // pred_region
      %s143 = ssub.s32 %s9, 1
    $region12: #{prompt_decoder_forward.26} parent=5 // pred_fallthru
      _
    %p144 = scmp.lt.s32.totalorder %s9, 2
    // Predicated region
    $region13: #{prompt_decoder_forward.26} parent=5 // pred_check
      %p145 = pneg %p144
    $region14: #{prompt_decoder_forward.26} parent=5 // pred_check_branch
      %147 = sbr.rel (%p145) target = $region16
    $region15: #{prompt_decoder_forward.26} parent=5 // pred_region
      // Predicated region
      $region17: #{prompt_decoder_forward.26} parent=15 // pred_check
        %p148 = pneg %p43
      $region18: #{prompt_decoder_forward.26} parent=15 // pred_check_branch
        %150 = sbr.rel (%p148) target = $region20
      $region19: #{prompt_decoder_forward.26} parent=15 // pred_region
        %s151 = smul.u32 4, %s17
        %p152 = scmp.lt.s32.totalorder %s16, 1
        %s153 = scalar_select %p152, %s16, 1
        %p154 = scmp.lt.s32.totalorder %s151, 3
        %s155 = scalar_select %p154, %s151, 3
        %s156 = smul.addr %s153, 4
        %s157 = sadd.s32 %s155, %s156
        %s158 = smul.addr %s157, 4
        %s159 = scalar_lea.vmem %s0, %s158
        %s160 = smul.u32 4, %s17
      $region20: #{prompt_decoder_forward.26} parent=15 // pred_fallthru
        _
      // Predicated region
      $region21: #{prompt_decoder_forward.26} parent=15 // pred_check
        %p161 = pneg %p69
      $region22: #{prompt_decoder_forward.26} parent=15 // pred_check_branch
        %163 = sbr.rel (%p161) target = $region24
      $region23: #{prompt_decoder_forward.26} parent=15 // pred_region
        %p164 = scmp.lt.s32.totalorder %s16, 1
        %s165 = scalar_select %p164, %s16, 1
        %s166 = smul.addr %s165, 2
        %s167 = smul.addr %s166, 4
        %s168 = scalar_lea.vmem %s1, %s167
      $region24: #{prompt_decoder_forward.26} parent=15 // pred_fallthru
        _
      // Predicated region
      $region25: #{prompt_decoder_forward.26} parent=15 // pred_check
        %p169 = pneg %p95
      $region26: #{prompt_decoder_forward.26} parent=15 // pred_check_branch
        %171 = sbr.rel (%p169) target = $region28
      $region27: #{prompt_decoder_forward.26} parent=15 // pred_region
        %p172 = scmp.lt.s32.totalorder %s16, 1
        %s173 = scalar_select %p172, %s16, 1
        %s174 = smul.addr %s173, 2
        %s175 = smul.addr %s174, 4
        %s176 = scalar_lea.vmem %s2, %s175
      $region28: #{prompt_decoder_forward.26} parent=15 // pred_fallthru
        _
    $region16: #{prompt_decoder_forward.26} parent=5 // pred_fallthru
      _
    %p177 = scmp.le.s32.totalorder 1, %s9
    %p178 = scmp.lt.s32.totalorder %s9, 3
    %p179 = pnand %p177, %p178
    %p180 = pneg %p179
    // Predicated region
    $region29: #{prompt_decoder_forward.26} parent=5 // pred_check
      _
    $region30: #{prompt_decoder_forward.26} parent=5 // pred_check_branch
      %182 = sbr.rel (%p179) target = $region32
    $region31: #{prompt_decoder_forward.26} parent=5 // pred_region
      %s183 = ssub.s32 %s9, 1
      %s184 = smul.u32 4, %s19
      %p185 = scmp.lt.s32.totalorder %s18, 1
      %s186 = scalar_select %p185, %s18, 1
      %p187 = scmp.lt.s32.totalorder %s184, 3
      %s188 = scalar_select %p187, %s184, 3
      %s189 = smul.addr %s186, 4
      %s190 = sadd.s32 %s188, %s189
      %s191 = smul.addr %s190, 4
      %s192 = scalar_lea.vmem %s0, %s191
      %p193 = pneg %p49
      %p194 = pneg %p46
      %p195 = scmp.lt.s32.totalorder %s18, 1
      %s196 = scalar_select %p195, %s18, 1
      %s197 = smul.addr %s196, 2
      %s198 = smul.addr %s197, 4
      %s199 = scalar_lea.vmem %s1, %s198
      %p200 = pneg %p75
      %p201 = pneg %p72
      %p202 = scmp.lt.s32.totalorder %s18, 1
      %s203 = scalar_select %p202, %s18, 1
      %s204 = smul.addr %s203, 2
      %s205 = smul.addr %s204, 4
      %s206 = scalar_lea.vmem %s2, %s205
      %p207 = pneg %p101
      %p208 = pneg %p98
      %p209 = pneg %p129
      %p210 = pneg %p126
      %s211 = smul.u32 4, %s19
      %p212 = scmp.lt.s32.totalorder %s18, 1
      %s213 = scalar_select %p212, %s18, 1
      %p214 = scmp.lt.s32.totalorder %s211, 3
      %s215 = scalar_select %p214, %s211, 3
      %s216 = smul.addr %s213, 4
      %s217 = sadd.s32 %s215, %s216
      %s218 = smul.addr %s217, 4
      %s219 = scalar_lea.vmem %s3, %s218
      %s220 = smul.u32 4, %s19
      %p221 = scmp.lt.s32.totalorder %s18, 1
      %s222 = scalar_select %p221, %s18, 1
      %p223 = scmp.lt.s32.totalorder %s220, 3
      %s224 = scalar_select %p223, %s220, 3
      %s225 = smul.addr %s222, 4
      %s226 = sadd.s32 %s224, %s225
      %s227 = smul.addr %s226, 4
      %s228 = scalar_lea.vmem %s0, %s227
      %s229 = smul.u32 4, %s19
      %p230 = scmp.lt.s32.totalorder %s18, 1
      %s231 = scalar_select %p230, %s18, 1
      %s232 = smul.addr %s231, 2
      %s233 = smul.addr %s232, 4
      %s234 = scalar_lea.vmem %s1, %s233
      %p235 = scmp.lt.s32.totalorder %s18, 1
      %s236 = scalar_select %p235, %s18, 1
      %s237 = smul.addr %s236, 2
      %s238 = smul.addr %s237, 4
      %s239 = scalar_lea.vmem %s2, %s238
      %s240 = smul.u32 4, %s19
      %p241 = scmp.lt.s32.totalorder %s18, 1
      %s242 = scalar_select %p241, %s18, 1
      %p243 = scmp.lt.s32.totalorder %s240, 3
      %s244 = scalar_select %p243, %s240, 3
      %s245 = smul.addr %s242, 4
      %s246 = sadd.s32 %s244, %s245
      %s247 = smul.addr %s246, 4
      %s248 = scalar_lea.vmem %s3, %s247
      %s249 = smul.u32 4, %s19
      %v250 = vld [vmem:[%s228] sm:$0xf]
      %v251 = vld [vmem:[%s228 + $0x4] sm:$0xf]
      %v252 = vld [vmem:[%s228 + $0x8] sm:$0xf]
      %v253 = vld [vmem:[%s228 + $0xc] sm:$0xf]
      %v254 = vunpack.c.l.bf16 %v250
      %v255 = vunpack.c.l.bf16 %v251
      %v256 = vunpack.c.l.bf16 %v252
      %v257 = vunpack.c.l.bf16 %v253
      %v258 = vld [vmem:[%s234] sm:$0xf]
      %v259 = vld [vmem:[%s234 + $0x4] sm:$0xf]
      %v260 = vunpack.c.l.bf16 %v258
      %v261 = vunpack.c.l.bf16 %v259
      %v262 = vld [vmem:[%s239] sm:$0xf]
      %v263 = vld [vmem:[%s239 + $0x4] sm:$0xf]
      %v264 = vunpack.c.l.bf16 %v262
      %v265 = vunpack.c.l.bf16 %v263
      %270 = vrot.lane.b32.xlu0 %v254, 120
      %v271 = vpop.permute.xlu0 %270
      %272 = vrot.lane.b32.xlu0 %v255, 120
      %v273 = vpop.permute.xlu0 %272
      %274 = vrot.lane.b32.xlu0 %v256, 120
      %v275 = vpop.permute.xlu0 %274
      %276 = vrot.lane.b32.xlu0 %v257, 120
      %v277 = vpop.permute.xlu0 %276
      %282 = vrot.lane.b32.xlu0 %v254, 112
      %v283 = vpop.permute.xlu0 %282
      %284 = vrot.lane.b32.xlu0 %v255, 112
      %v285 = vpop.permute.xlu0 %284
      %286 = vrot.lane.b32.xlu0 %v256, 112
      %v287 = vpop.permute.xlu0 %286
      %288 = vrot.lane.b32.xlu0 %v257, 112
      %v289 = vpop.permute.xlu0 %288
      %294 = vrot.lane.b32.xlu0 %v254, 104
      %v295 = vpop.permute.xlu0 %294
      %296 = vrot.lane.b32.xlu0 %v255, 104
      %v297 = vpop.permute.xlu0 %296
      %298 = vrot.lane.b32.xlu0 %v256, 104
      %v299 = vpop.permute.xlu0 %298
      %300 = vrot.lane.b32.xlu0 %v257, 104
      %v301 = vpop.permute.xlu0 %300
      %v306 = vrot.slane %v283, 4
      %vm307 = vcmask 1047556
      %v308 = vsel %vm307, %v306, %v254
      %v309 = vrot.slane %v254, 4
      %v310 = vsel %vm307, %v283, %v309
      %v312 = vunpack.c.l.s4 1983009808
      %v313 = vunpack.c.0.s8 %v312
      %v314 = vperm.slane %v308, %v313
      %v316 = vunpack.c.l.s4 1983009808
      %v317 = vunpack.c.0.s8 %v316
      %v318 = vperm.slane %v310, %v317
      %v319 = vrot.slane %v295, 4
      %v320 = vsel %vm307, %v319, %v271
      %v321 = vrot.slane %v271, 4
      %v322 = vsel %vm307, %v295, %v321
      %v324 = vunpack.c.l.s4 1983009808
      %v325 = vunpack.c.0.s8 %v324
      %v326 = vperm.slane %v320, %v325
      %v328 = vunpack.c.l.s4 1983009808
      %v329 = vunpack.c.0.s8 %v328
      %v330 = vperm.slane %v322, %v329
      %v331 = vrot.slane %v326, 4
      %v332 = vsel %vm307, %v331, %v314
      %v333 = vrot.slane %v314, 4
      %v334 = vsel %vm307, %v326, %v333
      %v336 = vunpack.c.l.s4 1934713408
      %v337 = vunpack.c.0.s8 %v336
      %v338 = vperm.slane %v332, %v337
      %v340 = vunpack.c.l.s4 1934713408
      %v341 = vunpack.c.0.s8 %v340
      %v342 = vperm.slane %v334, %v341
      %v343 = vrot.slane %v330, 4
      %v344 = vsel %vm307, %v343, %v318
      %v345 = vrot.slane %v318, 4
      %v346 = vsel %vm307, %v330, %v345
      %v348 = vunpack.c.l.s4 1934713408
      %v349 = vunpack.c.0.s8 %v348
      %v350 = vperm.slane %v344, %v349
      %v352 = vunpack.c.l.s4 1934713408
      %v353 = vunpack.c.0.s8 %v352
      %v354 = vperm.slane %v346, %v353
      %v355 = vrot.slane %v338, 4
      %v356 = vsel %vm307, 0.0, %v355
      %v357 = vrot.slane %v342, 4
      %v358 = vsel %vm307, 0.0, %v357
      %v359 = vrot.slane %v350, 4
      %v360 = vsel %vm307, 0.0, %v359
      %v361 = vrot.slane %v354, 4
      %v362 = vsel %vm307, 0.0, %v361
      %v363 = vrot.slane %v285, 4
      %v364 = vsel %vm307, %v363, %v255
      %v365 = vrot.slane %v255, 4
      %v366 = vsel %vm307, %v285, %v365
      %v368 = vunpack.c.l.s4 1983009808
      %v369 = vunpack.c.0.s8 %v368
      %v370 = vperm.slane %v364, %v369
      %v372 = vunpack.c.l.s4 1983009808
      %v373 = vunpack.c.0.s8 %v372
      %v374 = vperm.slane %v366, %v373
      %v375 = vrot.slane %v297, 4
      %v376 = vsel %vm307, %v375, %v273
      %v377 = vrot.slane %v273, 4
      %v378 = vsel %vm307, %v297, %v377
      %v380 = vunpack.c.l.s4 1983009808
      %v381 = vunpack.c.0.s8 %v380
      %v382 = vperm.slane %v376, %v381
      %v384 = vunpack.c.l.s4 1983009808
      %v385 = vunpack.c.0.s8 %v384
      %v386 = vperm.slane %v378, %v385
      %v387 = vrot.slane %v382, 4
      %v388 = vsel %vm307, %v387, %v370
      %v389 = vrot.slane %v370, 4
      %v390 = vsel %vm307, %v382, %v389
      %v392 = vunpack.c.l.s4 1934713408
      %v393 = vunpack.c.0.s8 %v392
      %v394 = vperm.slane %v388, %v393
      %v396 = vunpack.c.l.s4 1934713408
      %v397 = vunpack.c.0.s8 %v396
      %v398 = vperm.slane %v390, %v397
      %v399 = vrot.slane %v386, 4
      %v400 = vsel %vm307, %v399, %v374
      %v401 = vrot.slane %v374, 4
      %v402 = vsel %vm307, %v386, %v401
      %v404 = vunpack.c.l.s4 1934713408
      %v405 = vunpack.c.0.s8 %v404
      %v406 = vperm.slane %v400, %v405
      %v408 = vunpack.c.l.s4 1934713408
      %v409 = vunpack.c.0.s8 %v408
      %v410 = vperm.slane %v402, %v409
      %v411 = vrot.slane %v394, 4
      %v412 = vsel %vm307, 0.0, %v411
      %v413 = vrot.slane %v398, 4
      %v414 = vsel %vm307, 0.0, %v413
      %v415 = vrot.slane %v406, 4
      %v416 = vsel %vm307, 0.0, %v415
      %v417 = vrot.slane %v410, 4
      %v418 = vsel %vm307, 0.0, %v417
      %v419 = vrot.slane %v287, 4
      %v420 = vsel %vm307, %v419, %v256
      %v421 = vrot.slane %v256, 4
      %v422 = vsel %vm307, %v287, %v421
      %v424 = vunpack.c.l.s4 1983009808
      %v425 = vunpack.c.0.s8 %v424
      %v426 = vperm.slane %v420, %v425
      %v428 = vunpack.c.l.s4 1983009808
      %v429 = vunpack.c.0.s8 %v428
      %v430 = vperm.slane %v422, %v429
      %v431 = vrot.slane %v299, 4
      %v432 = vsel %vm307, %v431, %v275
      %v433 = vrot.slane %v275, 4
      %v434 = vsel %vm307, %v299, %v433
      %v436 = vunpack.c.l.s4 1983009808
      %v437 = vunpack.c.0.s8 %v436
      %v438 = vperm.slane %v432, %v437
      %v440 = vunpack.c.l.s4 1983009808
      %v441 = vunpack.c.0.s8 %v440
      %v442 = vperm.slane %v434, %v441
      %v443 = vrot.slane %v438, 4
      %v444 = vsel %vm307, %v443, %v426
      %v445 = vrot.slane %v426, 4
      %v446 = vsel %vm307, %v438, %v445
      %v448 = vunpack.c.l.s4 1934713408
      %v449 = vunpack.c.0.s8 %v448
      %v450 = vperm.slane %v444, %v449
      %v452 = vunpack.c.l.s4 1934713408
      %v453 = vunpack.c.0.s8 %v452
      %v454 = vperm.slane %v446, %v453
      %v455 = vrot.slane %v442, 4
      %v456 = vsel %vm307, %v455, %v430
      %v457 = vrot.slane %v430, 4
      %v458 = vsel %vm307, %v442, %v457
      %v460 = vunpack.c.l.s4 1934713408
      %v461 = vunpack.c.0.s8 %v460
      %v462 = vperm.slane %v456, %v461
      %v464 = vunpack.c.l.s4 1934713408
      %v465 = vunpack.c.0.s8 %v464
      %v466 = vperm.slane %v458, %v465
      %v467 = vrot.slane %v450, 4
      %v468 = vsel %vm307, 0.0, %v467
      %v469 = vrot.slane %v454, 4
      %v470 = vsel %vm307, 0.0, %v469
      %v471 = vrot.slane %v462, 4
      %v472 = vsel %vm307, 0.0, %v471
      %v473 = vrot.slane %v466, 4
      %v474 = vsel %vm307, 0.0, %v473
      %v475 = vrot.slane %v289, 4
      %v476 = vsel %vm307, %v475, %v257
      %v477 = vrot.slane %v257, 4
      %v478 = vsel %vm307, %v289, %v477
      %v480 = vunpack.c.l.s4 1983009808
      %v481 = vunpack.c.0.s8 %v480
      %v482 = vperm.slane %v476, %v481
      %v484 = vunpack.c.l.s4 1983009808
      %v485 = vunpack.c.0.s8 %v484
      %v486 = vperm.slane %v478, %v485
      %v487 = vrot.slane %v301, 4
      %v488 = vsel %vm307, %v487, %v277
      %v489 = vrot.slane %v277, 4
      %v490 = vsel %vm307, %v301, %v489
      %v492 = vunpack.c.l.s4 1983009808
      %v493 = vunpack.c.0.s8 %v492
      %v494 = vperm.slane %v488, %v493
      %v496 = vunpack.c.l.s4 1983009808
      %v497 = vunpack.c.0.s8 %v496
      %v498 = vperm.slane %v490, %v497
      %v499 = vrot.slane %v494, 4
      %v500 = vsel %vm307, %v499, %v482
      %v501 = vrot.slane %v482, 4
      %v502 = vsel %vm307, %v494, %v501
      %v504 = vunpack.c.l.s4 1934713408
      %v505 = vunpack.c.0.s8 %v504
      %v506 = vperm.slane %v500, %v505
      %v508 = vunpack.c.l.s4 1934713408
      %v509 = vunpack.c.0.s8 %v508
      %v510 = vperm.slane %v502, %v509
      %v511 = vrot.slane %v498, 4
      %v512 = vsel %vm307, %v511, %v486
      %v513 = vrot.slane %v486, 4
      %v514 = vsel %vm307, %v498, %v513
      %v516 = vunpack.c.l.s4 1934713408
      %v517 = vunpack.c.0.s8 %v516
      %v518 = vperm.slane %v512, %v517
      %v520 = vunpack.c.l.s4 1934713408
      %v521 = vunpack.c.0.s8 %v520
      %v522 = vperm.slane %v514, %v521
      %v523 = vrot.slane %v506, 4
      %v524 = vsel %vm307, 0.0, %v523
      %v525 = vrot.slane %v510, 4
      %v526 = vsel %vm307, 0.0, %v525
      %v527 = vrot.slane %v518, 4
      %v528 = vsel %vm307, 0.0, %v527
      %v529 = vrot.slane %v522, 4
      %v530 = vsel %vm307, 0.0, %v529
      %v531 = vsel %vm307, %v357, %v338
      %v533 = vunpack.c.l.s4 1983009808
      %v534 = vunpack.c.0.s8 %v533
      %v535 = vperm.slane %v531, %v534
      %v536 = vrot.slane %v358, 4
      %v537 = vsel %vm307, %v536, %v356
      %v539 = vunpack.c.l.s4 1983009808
      %v540 = vunpack.c.0.s8 %v539
      %v541 = vperm.slane %v537, %v540
      %v542 = vsel %vm307, %v361, %v350
      %v544 = vunpack.c.l.s4 1983009808
      %v545 = vunpack.c.0.s8 %v544
      %v546 = vperm.slane %v542, %v545
      %v547 = vrot.slane %v362, 4
      %v548 = vsel %vm307, %v547, %v360
      %v550 = vunpack.c.l.s4 1983009808
      %v551 = vunpack.c.0.s8 %v550
      %v552 = vperm.slane %v548, %v551
      %v553 = vrot.slane %v541, 4
      %v554 = vsel %vm307, %v553, %v535
      %v555 = vrot.slane %v535, 4
      %v556 = vsel %vm307, %v541, %v555
      %v558 = vunpack.c.l.s4 1934713408
      %v559 = vunpack.c.0.s8 %v558
      %v560 = vperm.slane %v554, %v559
      %v562 = vunpack.c.l.s4 1934713408
      %v563 = vunpack.c.0.s8 %v562
      %v564 = vperm.slane %v556, %v563
      %v565 = vrot.slane %v552, 4
      %v566 = vsel %vm307, %v565, %v546
      %v567 = vrot.slane %v546, 4
      %v568 = vsel %vm307, %v552, %v567
      %v570 = vunpack.c.l.s4 1934713408
      %v571 = vunpack.c.0.s8 %v570
      %v572 = vperm.slane %v566, %v571
      %v574 = vunpack.c.l.s4 1934713408
      %v575 = vunpack.c.0.s8 %v574
      %v576 = vperm.slane %v568, %v575
      %v577 = vrot.slane %v572, 4
      %v578 = vsel %vm307, %v577, %v560
      %v579 = vrot.slane %v560, 4
      %v580 = vsel %vm307, %v572, %v579
      %v581 = vrot.slane %v576, 4
      %v582 = vsel %vm307, %v581, %v564
      %v583 = vrot.slane %v564, 4
      %v584 = vsel %vm307, %v576, %v583
      %v585 = vsel %vm307, %v413, %v394
      %v587 = vunpack.c.l.s4 1983009808
      %v588 = vunpack.c.0.s8 %v587
      %v589 = vperm.slane %v585, %v588
      %v590 = vrot.slane %v414, 4
      %v591 = vsel %vm307, %v590, %v412
      %v593 = vunpack.c.l.s4 1983009808
      %v594 = vunpack.c.0.s8 %v593
      %v595 = vperm.slane %v591, %v594
      %v596 = vsel %vm307, %v417, %v406
      %v598 = vunpack.c.l.s4 1983009808
      %v599 = vunpack.c.0.s8 %v598
      %v600 = vperm.slane %v596, %v599
      %v601 = vrot.slane %v418, 4
      %v602 = vsel %vm307, %v601, %v416
      %v604 = vunpack.c.l.s4 1983009808
      %v605 = vunpack.c.0.s8 %v604
      %v606 = vperm.slane %v602, %v605
      %v607 = vrot.slane %v595, 4
      %v608 = vsel %vm307, %v607, %v589
      %v609 = vrot.slane %v589, 4
      %v610 = vsel %vm307, %v595, %v609
      %v612 = vunpack.c.l.s4 1934713408
      %v613 = vunpack.c.0.s8 %v612
      %v614 = vperm.slane %v608, %v613
      %v616 = vunpack.c.l.s4 1934713408
      %v617 = vunpack.c.0.s8 %v616
      %v618 = vperm.slane %v610, %v617
      %v619 = vrot.slane %v606, 4
      %v620 = vsel %vm307, %v619, %v600
      %v621 = vrot.slane %v600, 4
      %v622 = vsel %vm307, %v606, %v621
      %v624 = vunpack.c.l.s4 1934713408
      %v625 = vunpack.c.0.s8 %v624
      %v626 = vperm.slane %v620, %v625
      %v628 = vunpack.c.l.s4 1934713408
      %v629 = vunpack.c.0.s8 %v628
      %v630 = vperm.slane %v622, %v629
      %v631 = vrot.slane %v626, 4
      %v632 = vsel %vm307, %v631, %v614
      %v633 = vrot.slane %v614, 4
      %v634 = vsel %vm307, %v626, %v633
      %v635 = vrot.slane %v630, 4
      %v636 = vsel %vm307, %v635, %v618
      %v637 = vrot.slane %v618, 4
      %v638 = vsel %vm307, %v630, %v637
      %v639 = vsel %vm307, %v469, %v450
      %v641 = vunpack.c.l.s4 1983009808
      %v642 = vunpack.c.0.s8 %v641
      %v643 = vperm.slane %v639, %v642
      %v644 = vrot.slane %v470, 4
      %v645 = vsel %vm307, %v644, %v468
      %v647 = vunpack.c.l.s4 1983009808
      %v648 = vunpack.c.0.s8 %v647
      %v649 = vperm.slane %v645, %v648
      %v650 = vsel %vm307, %v473, %v462
      %v652 = vunpack.c.l.s4 1983009808
      %v653 = vunpack.c.0.s8 %v652
      %v654 = vperm.slane %v650, %v653
      %v655 = vrot.slane %v474, 4
      %v656 = vsel %vm307, %v655, %v472
      %v658 = vunpack.c.l.s4 1983009808
      %v659 = vunpack.c.0.s8 %v658
      %v660 = vperm.slane %v656, %v659
      %v661 = vrot.slane %v649, 4
      %v662 = vsel %vm307, %v661, %v643
      %v663 = vrot.slane %v643, 4
      %v664 = vsel %vm307, %v649, %v663
      %v666 = vunpack.c.l.s4 1934713408
      %v667 = vunpack.c.0.s8 %v666
      %v668 = vperm.slane %v662, %v667
      %v670 = vunpack.c.l.s4 1934713408
      %v671 = vunpack.c.0.s8 %v670
      %v672 = vperm.slane %v664, %v671
      %v673 = vrot.slane %v660, 4
      %v674 = vsel %vm307, %v673, %v654
      %v675 = vrot.slane %v654, 4
      %v676 = vsel %vm307, %v660, %v675
      %v678 = vunpack.c.l.s4 1934713408
      %v679 = vunpack.c.0.s8 %v678
      %v680 = vperm.slane %v674, %v679
      %v682 = vunpack.c.l.s4 1934713408
      %v683 = vunpack.c.0.s8 %v682
      %v684 = vperm.slane %v676, %v683
      %v685 = vrot.slane %v680, 4
      %v686 = vsel %vm307, %v685, %v668
      %v687 = vrot.slane %v668, 4
      %v688 = vsel %vm307, %v680, %v687
      %v689 = vrot.slane %v684, 4
      %v690 = vsel %vm307, %v689, %v672
      %v691 = vrot.slane %v672, 4
      %v692 = vsel %vm307, %v684, %v691
      %v693 = vsel %vm307, %v525, %v506
      %v695 = vunpack.c.l.s4 1983009808
      %v696 = vunpack.c.0.s8 %v695
      %v697 = vperm.slane %v693, %v696
      %v698 = vrot.slane %v526, 4
      %v699 = vsel %vm307, %v698, %v524
      %v701 = vunpack.c.l.s4 1983009808
      %v702 = vunpack.c.0.s8 %v701
      %v703 = vperm.slane %v699, %v702
      %v704 = vsel %vm307, %v529, %v518
      %v706 = vunpack.c.l.s4 1983009808
      %v707 = vunpack.c.0.s8 %v706
      %v708 = vperm.slane %v704, %v707
      %v709 = vrot.slane %v530, 4
      %v710 = vsel %vm307, %v709, %v528
      %v712 = vunpack.c.l.s4 1983009808
      %v713 = vunpack.c.0.s8 %v712
      %v714 = vperm.slane %v710, %v713
      %v715 = vrot.slane %v703, 4
      %v716 = vsel %vm307, %v715, %v697
      %v717 = vrot.slane %v697, 4
      %v718 = vsel %vm307, %v703, %v717
      %v720 = vunpack.c.l.s4 1934713408
      %v721 = vunpack.c.0.s8 %v720
      %v722 = vperm.slane %v716, %v721
      %v724 = vunpack.c.l.s4 1934713408
      %v725 = vunpack.c.0.s8 %v724
      %v726 = vperm.slane %v718, %v725
      %v727 = vrot.slane %v714, 4
      %v728 = vsel %vm307, %v727, %v708
      %v729 = vrot.slane %v708, 4
      %v730 = vsel %vm307, %v714, %v729
      %v732 = vunpack.c.l.s4 1934713408
      %v733 = vunpack.c.0.s8 %v732
      %v734 = vperm.slane %v728, %v733
      %v736 = vunpack.c.l.s4 1934713408
      %v737 = vunpack.c.0.s8 %v736
      %v738 = vperm.slane %v730, %v737
      %v739 = vrot.slane %v734, 4
      %v740 = vsel %vm307, %v739, %v722
      %v741 = vrot.slane %v722, 4
      %v742 = vsel %vm307, %v734, %v741
      %v743 = vrot.slane %v738, 4
      %v744 = vsel %vm307, %v743, %v726
      %v745 = vrot.slane %v726, 4
      %v746 = vsel %vm307, %v738, %v745
      %749 = vrot.lane.b32.xlu0 %v260, 120
      %v750 = vpop.permute.xlu0 %749
      %751 = vrot.lane.b32.xlu0 %v261, 120
      %v752 = vpop.permute.xlu0 %751
      %755 = vrot.lane.b32.xlu0 %v260, 112
      %v756 = vpop.permute.xlu0 %755
      %757 = vrot.lane.b32.xlu0 %v261, 112
      %v758 = vpop.permute.xlu0 %757
      %761 = vrot.lane.b32.xlu0 %v260, 104
      %v762 = vpop.permute.xlu0 %761
      %763 = vrot.lane.b32.xlu0 %v261, 104
      %v764 = vpop.permute.xlu0 %763
      %v767 = vrot.slane %v756, 4
      %v768 = vsel %vm307, %v767, %v260
      %v769 = vrot.slane %v260, 4
      %v770 = vsel %vm307, %v756, %v769
      %v772 = vunpack.c.l.s4 1983009808
      %v773 = vunpack.c.0.s8 %v772
      %v774 = vperm.slane %v768, %v773
      %v776 = vunpack.c.l.s4 1983009808
      %v777 = vunpack.c.0.s8 %v776
      %v778 = vperm.slane %v770, %v777
      %v779 = vrot.slane %v762, 4
      %v780 = vsel %vm307, %v779, %v750
      %v781 = vrot.slane %v750, 4
      %v782 = vsel %vm307, %v762, %v781
      %v784 = vunpack.c.l.s4 1983009808
      %v785 = vunpack.c.0.s8 %v784
      %v786 = vperm.slane %v780, %v785
      %v788 = vunpack.c.l.s4 1983009808
      %v789 = vunpack.c.0.s8 %v788
      %v790 = vperm.slane %v782, %v789
      %v791 = vrot.slane %v786, 4
      %v792 = vsel %vm307, %v791, %v774
      %v793 = vrot.slane %v774, 4
      %v794 = vsel %vm307, %v786, %v793
      %v796 = vunpack.c.l.s4 1934713408
      %v797 = vunpack.c.0.s8 %v796
      %v798 = vperm.slane %v792, %v797
      %v800 = vunpack.c.l.s4 1934713408
      %v801 = vunpack.c.0.s8 %v800
      %v802 = vperm.slane %v794, %v801
      %v803 = vrot.slane %v790, 4
      %v804 = vsel %vm307, %v803, %v778
      %v805 = vrot.slane %v778, 4
      %v806 = vsel %vm307, %v790, %v805
      %v808 = vunpack.c.l.s4 1934713408
      %v809 = vunpack.c.0.s8 %v808
      %v810 = vperm.slane %v804, %v809
      %v812 = vunpack.c.l.s4 1934713408
      %v813 = vunpack.c.0.s8 %v812
      %v814 = vperm.slane %v806, %v813
      %v815 = vrot.slane %v798, 4
      %v816 = vsel %vm307, 0.0, %v815
      %v817 = vrot.slane %v802, 4
      %v818 = vsel %vm307, 0.0, %v817
      %v819 = vrot.slane %v810, 4
      %v820 = vsel %vm307, 0.0, %v819
      %v821 = vrot.slane %v814, 4
      %v822 = vsel %vm307, 0.0, %v821
      %v823 = vrot.slane %v758, 4
      %v824 = vsel %vm307, %v823, %v261
      %v825 = vrot.slane %v261, 4
      %v826 = vsel %vm307, %v758, %v825
      %v828 = vunpack.c.l.s4 1983009808
      %v829 = vunpack.c.0.s8 %v828
      %v830 = vperm.slane %v824, %v829
      %v832 = vunpack.c.l.s4 1983009808
      %v833 = vunpack.c.0.s8 %v832
      %v834 = vperm.slane %v826, %v833
      %v835 = vrot.slane %v764, 4
      %v836 = vsel %vm307, %v835, %v752
      %v837 = vrot.slane %v752, 4
      %v838 = vsel %vm307, %v764, %v837
      %v840 = vunpack.c.l.s4 1983009808
      %v841 = vunpack.c.0.s8 %v840
      %v842 = vperm.slane %v836, %v841
      %v844 = vunpack.c.l.s4 1983009808
      %v845 = vunpack.c.0.s8 %v844
      %v846 = vperm.slane %v838, %v845
      %v847 = vrot.slane %v842, 4
      %v848 = vsel %vm307, %v847, %v830
      %v849 = vrot.slane %v830, 4
      %v850 = vsel %vm307, %v842, %v849
      %v852 = vunpack.c.l.s4 1934713408
      %v853 = vunpack.c.0.s8 %v852
      %v854 = vperm.slane %v848, %v853
      %v856 = vunpack.c.l.s4 1934713408
      %v857 = vunpack.c.0.s8 %v856
      %v858 = vperm.slane %v850, %v857
      %v859 = vrot.slane %v846, 4
      %v860 = vsel %vm307, %v859, %v834
      %v861 = vrot.slane %v834, 4
      %v862 = vsel %vm307, %v846, %v861
      %v864 = vunpack.c.l.s4 1934713408
      %v865 = vunpack.c.0.s8 %v864
      %v866 = vperm.slane %v860, %v865
      %v868 = vunpack.c.l.s4 1934713408
      %v869 = vunpack.c.0.s8 %v868
      %v870 = vperm.slane %v862, %v869
      %v871 = vrot.slane %v854, 4
      %v872 = vsel %vm307, 0.0, %v871
      %v873 = vrot.slane %v858, 4
      %v874 = vsel %vm307, 0.0, %v873
      %v875 = vrot.slane %v866, 4
      %v876 = vsel %vm307, 0.0, %v875
      %v877 = vrot.slane %v870, 4
      %v878 = vsel %vm307, 0.0, %v877
      %v879 = vsel %vm307, %v817, %v798
      %v881 = vunpack.c.l.s4 1983009808
      %v882 = vunpack.c.0.s8 %v881
      %v883 = vperm.slane %v879, %v882
      %v884 = vrot.slane %v818, 4
      %v885 = vsel %vm307, %v884, %v816
      %v887 = vunpack.c.l.s4 1983009808
      %v888 = vunpack.c.0.s8 %v887
      %v889 = vperm.slane %v885, %v888
      %v890 = vsel %vm307, %v821, %v810
      %v892 = vunpack.c.l.s4 1983009808
      %v893 = vunpack.c.0.s8 %v892
      %v894 = vperm.slane %v890, %v893
      %v895 = vrot.slane %v822, 4
      %v896 = vsel %vm307, %v895, %v820
      %v898 = vunpack.c.l.s4 1983009808
      %v899 = vunpack.c.0.s8 %v898
      %v900 = vperm.slane %v896, %v899
      %v901 = vrot.slane %v889, 4
      %v902 = vsel %vm307, %v901, %v883
      %v903 = vrot.slane %v883, 4
      %v904 = vsel %vm307, %v889, %v903
      %v906 = vunpack.c.l.s4 1934713408
      %v907 = vunpack.c.0.s8 %v906
      %v908 = vperm.slane %v902, %v907
      %v910 = vunpack.c.l.s4 1934713408
      %v911 = vunpack.c.0.s8 %v910
      %v912 = vperm.slane %v904, %v911
      %v913 = vrot.slane %v900, 4
      %v914 = vsel %vm307, %v913, %v894
      %v915 = vrot.slane %v894, 4
      %v916 = vsel %vm307, %v900, %v915
      %v918 = vunpack.c.l.s4 1934713408
      %v919 = vunpack.c.0.s8 %v918
      %v920 = vperm.slane %v914, %v919
      %v922 = vunpack.c.l.s4 1934713408
      %v923 = vunpack.c.0.s8 %v922
      %v924 = vperm.slane %v916, %v923
      %v925 = vrot.slane %v920, 4
      %v926 = vsel %vm307, %v925, %v908
      %v927 = vrot.slane %v908, 4
      %v928 = vsel %vm307, %v920, %v927
      %v929 = vrot.slane %v924, 4
      %v930 = vsel %vm307, %v929, %v912
      %v931 = vrot.slane %v912, 4
      %v932 = vsel %vm307, %v924, %v931
      %v933 = vsel %vm307, %v873, %v854
      %v935 = vunpack.c.l.s4 1983009808
      %v936 = vunpack.c.0.s8 %v935
      %v937 = vperm.slane %v933, %v936
      %v938 = vrot.slane %v874, 4
      %v939 = vsel %vm307, %v938, %v872
      %v941 = vunpack.c.l.s4 1983009808
      %v942 = vunpack.c.0.s8 %v941
      %v943 = vperm.slane %v939, %v942
      %v944 = vsel %vm307, %v877, %v866
      %v946 = vunpack.c.l.s4 1983009808
      %v947 = vunpack.c.0.s8 %v946
      %v948 = vperm.slane %v944, %v947
      %v949 = vrot.slane %v878, 4
      %v950 = vsel %vm307, %v949, %v876
      %v952 = vunpack.c.l.s4 1983009808
      %v953 = vunpack.c.0.s8 %v952
      %v954 = vperm.slane %v950, %v953
      %v955 = vrot.slane %v943, 4
      %v956 = vsel %vm307, %v955, %v937
      %v957 = vrot.slane %v937, 4
      %v958 = vsel %vm307, %v943, %v957
      %v960 = vunpack.c.l.s4 1934713408
      %v961 = vunpack.c.0.s8 %v960
      %v962 = vperm.slane %v956, %v961
      %v964 = vunpack.c.l.s4 1934713408
      %v965 = vunpack.c.0.s8 %v964
      %v966 = vperm.slane %v958, %v965
      %v967 = vrot.slane %v954, 4
      %v968 = vsel %vm307, %v967, %v948
      %v969 = vrot.slane %v948, 4
      %v970 = vsel %vm307, %v954, %v969
      %v972 = vunpack.c.l.s4 1934713408
      %v973 = vunpack.c.0.s8 %v972
      %v974 = vperm.slane %v968, %v973
      %v976 = vunpack.c.l.s4 1934713408
      %v977 = vunpack.c.0.s8 %v976
      %v978 = vperm.slane %v970, %v977
      %v979 = vrot.slane %v974, 4
      %v980 = vsel %vm307, %v979, %v962
      %v981 = vrot.slane %v962, 4
      %v982 = vsel %vm307, %v974, %v981
      %v983 = vrot.slane %v978, 4
      %v984 = vsel %vm307, %v983, %v966
      %v985 = vrot.slane %v966, 4
      %v986 = vsel %vm307, %v978, %v985
      %989 = vrot.lane.b32.xlu0 %v264, 120
      %v990 = vpop.permute.xlu0 %989
      %991 = vrot.lane.b32.xlu0 %v265, 120
      %v992 = vpop.permute.xlu0 %991
      %995 = vrot.lane.b32.xlu0 %v264, 112
      %v996 = vpop.permute.xlu0 %995
      %997 = vrot.lane.b32.xlu0 %v265, 112
      %v998 = vpop.permute.xlu0 %997
      %1001 = vrot.lane.b32.xlu0 %v264, 104
      %v1002 = vpop.permute.xlu0 %1001
      %1003 = vrot.lane.b32.xlu0 %v265, 104
      %v1004 = vpop.permute.xlu0 %1003
      %v1007 = vrot.slane %v996, 4
      %v1008 = vsel %vm307, %v1007, %v264
      %v1009 = vrot.slane %v264, 4
      %v1010 = vsel %vm307, %v996, %v1009
      %v1012 = vunpack.c.l.s4 1983009808
      %v1013 = vunpack.c.0.s8 %v1012
      %v1014 = vperm.slane %v1008, %v1013
      %v1016 = vunpack.c.l.s4 1983009808
      %v1017 = vunpack.c.0.s8 %v1016
      %v1018 = vperm.slane %v1010, %v1017
      %v1019 = vrot.slane %v1002, 4
      %v1020 = vsel %vm307, %v1019, %v990
      %v1021 = vrot.slane %v990, 4
      %v1022 = vsel %vm307, %v1002, %v1021
      %v1024 = vunpack.c.l.s4 1983009808
      %v1025 = vunpack.c.0.s8 %v1024
      %v1026 = vperm.slane %v1020, %v1025
      %v1028 = vunpack.c.l.s4 1983009808
      %v1029 = vunpack.c.0.s8 %v1028
      %v1030 = vperm.slane %v1022, %v1029
      %v1031 = vrot.slane %v1026, 4
      %v1032 = vsel %vm307, %v1031, %v1014
      %v1033 = vrot.slane %v1014, 4
      %v1034 = vsel %vm307, %v1026, %v1033
      %v1036 = vunpack.c.l.s4 1934713408
      %v1037 = vunpack.c.0.s8 %v1036
      %v1038 = vperm.slane %v1032, %v1037
      %v1040 = vunpack.c.l.s4 1934713408
      %v1041 = vunpack.c.0.s8 %v1040
      %v1042 = vperm.slane %v1034, %v1041
      %v1043 = vrot.slane %v1030, 4
      %v1044 = vsel %vm307, %v1043, %v1018
      %v1045 = vrot.slane %v1018, 4
      %v1046 = vsel %vm307, %v1030, %v1045
      %v1048 = vunpack.c.l.s4 1934713408
      %v1049 = vunpack.c.0.s8 %v1048
      %v1050 = vperm.slane %v1044, %v1049
      %v1052 = vunpack.c.l.s4 1934713408
      %v1053 = vunpack.c.0.s8 %v1052
      %v1054 = vperm.slane %v1046, %v1053
      %v1055 = vrot.slane %v1038, 4
      %v1056 = vsel %vm307, 0.0, %v1055
      %v1057 = vrot.slane %v1042, 4
      %v1058 = vsel %vm307, 0.0, %v1057
      %v1059 = vrot.slane %v1050, 4
      %v1060 = vsel %vm307, 0.0, %v1059
      %v1061 = vrot.slane %v1054, 4
      %v1062 = vsel %vm307, 0.0, %v1061
      %v1063 = vrot.slane %v998, 4
      %v1064 = vsel %vm307, %v1063, %v265
      %v1065 = vrot.slane %v265, 4
      %v1066 = vsel %vm307, %v998, %v1065
      %v1068 = vunpack.c.l.s4 1983009808
      %v1069 = vunpack.c.0.s8 %v1068
      %v1070 = vperm.slane %v1064, %v1069
      %v1072 = vunpack.c.l.s4 1983009808
      %v1073 = vunpack.c.0.s8 %v1072
      %v1074 = vperm.slane %v1066, %v1073
      %v1075 = vrot.slane %v1004, 4
      %v1076 = vsel %vm307, %v1075, %v992
      %v1077 = vrot.slane %v992, 4
      %v1078 = vsel %vm307, %v1004, %v1077
      %v1080 = vunpack.c.l.s4 1983009808
      %v1081 = vunpack.c.0.s8 %v1080
      %v1082 = vperm.slane %v1076, %v1081
      %v1084 = vunpack.c.l.s4 1983009808
      %v1085 = vunpack.c.0.s8 %v1084
      %v1086 = vperm.slane %v1078, %v1085
      %v1087 = vrot.slane %v1082, 4
      %v1088 = vsel %vm307, %v1087, %v1070
      %v1089 = vrot.slane %v1070, 4
      %v1090 = vsel %vm307, %v1082, %v1089
      %v1092 = vunpack.c.l.s4 1934713408
      %v1093 = vunpack.c.0.s8 %v1092
      %v1094 = vperm.slane %v1088, %v1093
      %v1096 = vunpack.c.l.s4 1934713408
      %v1097 = vunpack.c.0.s8 %v1096
      %v1098 = vperm.slane %v1090, %v1097
      %v1099 = vrot.slane %v1086, 4
      %v1100 = vsel %vm307, %v1099, %v1074
      %v1101 = vrot.slane %v1074, 4
      %v1102 = vsel %vm307, %v1086, %v1101
      %v1104 = vunpack.c.l.s4 1934713408
      %v1105 = vunpack.c.0.s8 %v1104
      %v1106 = vperm.slane %v1100, %v1105
      %v1108 = vunpack.c.l.s4 1934713408
      %v1109 = vunpack.c.0.s8 %v1108
      %v1110 = vperm.slane %v1102, %v1109
      %v1111 = vrot.slane %v1094, 4
      %v1112 = vsel %vm307, 0.0, %v1111
      %v1113 = vrot.slane %v1098, 4
      %v1114 = vsel %vm307, 0.0, %v1113
      %v1115 = vrot.slane %v1106, 4
      %v1116 = vsel %vm307, 0.0, %v1115
      %v1117 = vrot.slane %v1110, 4
      %v1118 = vsel %vm307, 0.0, %v1117
      %v1119 = vsel %vm307, %v1057, %v1038
      %v1121 = vunpack.c.l.s4 1983009808
      %v1122 = vunpack.c.0.s8 %v1121
      %v1123 = vperm.slane %v1119, %v1122
      %v1124 = vrot.slane %v1058, 4
      %v1125 = vsel %vm307, %v1124, %v1056
      %v1127 = vunpack.c.l.s4 1983009808
      %v1128 = vunpack.c.0.s8 %v1127
      %v1129 = vperm.slane %v1125, %v1128
      %v1130 = vsel %vm307, %v1061, %v1050
      %v1132 = vunpack.c.l.s4 1983009808
      %v1133 = vunpack.c.0.s8 %v1132
      %v1134 = vperm.slane %v1130, %v1133
      %v1135 = vrot.slane %v1062, 4
      %v1136 = vsel %vm307, %v1135, %v1060
      %v1138 = vunpack.c.l.s4 1983009808
      %v1139 = vunpack.c.0.s8 %v1138
      %v1140 = vperm.slane %v1136, %v1139
      %v1141 = vrot.slane %v1129, 4
      %v1142 = vsel %vm307, %v1141, %v1123
      %v1143 = vrot.slane %v1123, 4
      %v1144 = vsel %vm307, %v1129, %v1143
      %v1146 = vunpack.c.l.s4 1934713408
      %v1147 = vunpack.c.0.s8 %v1146
      %v1148 = vperm.slane %v1142, %v1147
      %v1150 = vunpack.c.l.s4 1934713408
      %v1151 = vunpack.c.0.s8 %v1150
      %v1152 = vperm.slane %v1144, %v1151
      %v1153 = vrot.slane %v1140, 4
      %v1154 = vsel %vm307, %v1153, %v1134
      %v1155 = vrot.slane %v1134, 4
      %v1156 = vsel %vm307, %v1140, %v1155
      %v1158 = vunpack.c.l.s4 1934713408
      %v1159 = vunpack.c.0.s8 %v1158
      %v1160 = vperm.slane %v1154, %v1159
      %v1162 = vunpack.c.l.s4 1934713408
      %v1163 = vunpack.c.0.s8 %v1162
      %v1164 = vperm.slane %v1156, %v1163
      %v1165 = vrot.slane %v1160, 4
      %v1166 = vsel %vm307, %v1165, %v1148
      %v1167 = vrot.slane %v1148, 4
      %v1168 = vsel %vm307, %v1160, %v1167
      %v1169 = vrot.slane %v1164, 4
      %v1170 = vsel %vm307, %v1169, %v1152
      %v1171 = vrot.slane %v1152, 4
      %v1172 = vsel %vm307, %v1164, %v1171
      %v1173 = vsel %vm307, %v1113, %v1094
      %v1175 = vunpack.c.l.s4 1983009808
      %v1176 = vunpack.c.0.s8 %v1175
      %v1177 = vperm.slane %v1173, %v1176
      %v1178 = vrot.slane %v1114, 4
      %v1179 = vsel %vm307, %v1178, %v1112
      %v1181 = vunpack.c.l.s4 1983009808
      %v1182 = vunpack.c.0.s8 %v1181
      %v1183 = vperm.slane %v1179, %v1182
      %v1184 = vsel %vm307, %v1117, %v1106
      %v1186 = vunpack.c.l.s4 1983009808
      %v1187 = vunpack.c.0.s8 %v1186
      %v1188 = vperm.slane %v1184, %v1187
      %v1189 = vrot.slane %v1118, 4
      %v1190 = vsel %vm307, %v1189, %v1116
      %v1192 = vunpack.c.l.s4 1983009808
      %v1193 = vunpack.c.0.s8 %v1192
      %v1194 = vperm.slane %v1190, %v1193
      %v1195 = vrot.slane %v1183, 4
      %v1196 = vsel %vm307, %v1195, %v1177
      %v1197 = vrot.slane %v1177, 4
      %v1198 = vsel %vm307, %v1183, %v1197
      %v1200 = vunpack.c.l.s4 1934713408
      %v1201 = vunpack.c.0.s8 %v1200
      %v1202 = vperm.slane %v1196, %v1201
      %v1204 = vunpack.c.l.s4 1934713408
      %v1205 = vunpack.c.0.s8 %v1204
      %v1206 = vperm.slane %v1198, %v1205
      %v1207 = vrot.slane %v1194, 4
      %v1208 = vsel %vm307, %v1207, %v1188
      %v1209 = vrot.slane %v1188, 4
      %v1210 = vsel %vm307, %v1194, %v1209
      %v1212 = vunpack.c.l.s4 1934713408
      %v1213 = vunpack.c.0.s8 %v1212
      %v1214 = vperm.slane %v1208, %v1213
      %v1216 = vunpack.c.l.s4 1934713408
      %v1217 = vunpack.c.0.s8 %v1216
      %v1218 = vperm.slane %v1210, %v1217
      %v1219 = vrot.slane %v1214, 4
      %v1220 = vsel %vm307, %v1219, %v1202
      %v1221 = vrot.slane %v1202, 4
      %v1222 = vsel %vm307, %v1214, %v1221
      %v1223 = vrot.slane %v1218, 4
      %v1224 = vsel %vm307, %v1223, %v1206
      %v1225 = vrot.slane %v1206, 4
      %v1226 = vsel %vm307, %v1218, %v1225
      %vm1227 = vcmask 64512
      %v1229 = vsel %vm1227, %v578, 0
      %v1232 = vsel %vm1227, %v632, 0
      %v1235 = vsel %vm1227, %v686, 0
      %v1238 = vsel %vm1227, %v740, 0
      %v1241 = vsel %vm1227, %v926, 0
      %v1244 = vsel %vm1227, %v980, 0
      %1246 = vmatpush.xpose.msra.mxu0 0.0
      %1247 = vmatpush.xpose.msra.mxu0 0.0
      %1248 = vmatpush.xpose.msra.mxu0 0.0
      %1249 = vmatpush.xpose.msra.mxu0 0.0
      %1250 = vmatpush.xpose.msra.mxu0 0.0
      %1251 = vmatpush.xpose.msra.mxu0 0.0
      %1252 = vmatpush.xpose.msra.mxu0 0.0
      %1253 = vmatpush.xpose.msra.mxu0 0.0
      %1254 = vmatpush.xpose.msra.mxu0 0.0
      %1255 = vmatpush.xpose.msra.mxu0 0.0
      %1256 = vmatpush.xpose.msra.mxu0 0.0
      %1257 = vmatpush.xpose.msra.mxu0 0.0
      %1258 = vmatpush.xpose.msra.mxu0 0.0
      %1259 = vmatpush.xpose.msra.mxu0 0.0
      %1260 = vmatpush.xpose.msra.mxu0 %v1244
      %1261 = vmatpush.xpose.msra.mxu0 %v1241
      %1262 = vmatmul.f32.gmra.mxu0 %v1229
      %v1263 = vpop.f32.mrf.mxu0
      %v1264 = vadd.f32 0.0, %v1263
      %1265 = vmatmul.f32.gmra.mxu0 %v1232
      %v1266 = vpop.f32.mrf.mxu0
      %v1267 = vadd.f32 0.0, %v1266
      %1268 = vmatmul.f32.gmra.mxu0 %v1235
      %v1269 = vpop.f32.mrf.mxu0
      %v1270 = vadd.f32 0.0, %v1269
      %1271 = vmatmul.f32.gmra.mxu0 %v1238
      %v1272 = vpop.f32.mrf.mxu0
      %v1273 = vadd.f32 0.0, %v1272
      %1274 = vdwg.mxu0
      %v1276 = vsel %vm1227, %v580, 0
      %v1279 = vsel %vm1227, %v634, 0
      %v1282 = vsel %vm1227, %v688, 0
      %v1285 = vsel %vm1227, %v742, 0
      %v1288 = vsel %vm1227, %v928, 0
      %v1291 = vsel %vm1227, %v982, 0
      %1293 = vmatpush.xpose.msra.mxu0 0.0
      %1294 = vmatpush.xpose.msra.mxu0 0.0
      %1295 = vmatpush.xpose.msra.mxu0 0.0
      %1296 = vmatpush.xpose.msra.mxu0 0.0
      %1297 = vmatpush.xpose.msra.mxu0 0.0
      %1298 = vmatpush.xpose.msra.mxu0 0.0
      %1299 = vmatpush.xpose.msra.mxu0 0.0
      %1300 = vmatpush.xpose.msra.mxu0 0.0
      %1301 = vmatpush.xpose.msra.mxu0 0.0
      %1302 = vmatpush.xpose.msra.mxu0 0.0
      %1303 = vmatpush.xpose.msra.mxu0 0.0
      %1304 = vmatpush.xpose.msra.mxu0 0.0
      %1305 = vmatpush.xpose.msra.mxu0 0.0
      %1306 = vmatpush.xpose.msra.mxu0 0.0
      %1307 = vmatpush.xpose.msra.mxu0 %v1291
      %1308 = vmatpush.xpose.msra.mxu0 %v1288
      %1309 = vmatmul.f32.gmra.mxu0 %v1276
      %v1310 = vpop.f32.mrf.mxu0
      %v1311 = vadd.f32 0.0, %v1310
      %1312 = vmatmul.f32.gmra.mxu0 %v1279
      %v1313 = vpop.f32.mrf.mxu0
      %v1314 = vadd.f32 0.0, %v1313
      %1315 = vmatmul.f32.gmra.mxu0 %v1282
      %v1316 = vpop.f32.mrf.mxu0
      %v1317 = vadd.f32 0.0, %v1316
      %1318 = vmatmul.f32.gmra.mxu0 %v1285
      %v1319 = vpop.f32.mrf.mxu0
      %v1320 = vadd.f32 0.0, %v1319
      %1321 = vdwg.mxu0
      %v1323 = vsel %vm1227, %v582, 0
      %v1326 = vsel %vm1227, %v636, 0
      %v1329 = vsel %vm1227, %v690, 0
      %v1332 = vsel %vm1227, %v744, 0
      %v1335 = vsel %vm1227, %v930, 0
      %v1338 = vsel %vm1227, %v984, 0
      %1340 = vmatpush.xpose.msra.mxu0 0.0
      %1341 = vmatpush.xpose.msra.mxu0 0.0
      %1342 = vmatpush.xpose.msra.mxu0 0.0
      %1343 = vmatpush.xpose.msra.mxu0 0.0
      %1344 = vmatpush.xpose.msra.mxu0 0.0
      %1345 = vmatpush.xpose.msra.mxu0 0.0
      %1346 = vmatpush.xpose.msra.mxu0 0.0
      %1347 = vmatpush.xpose.msra.mxu0 0.0
      %1348 = vmatpush.xpose.msra.mxu0 0.0
      %1349 = vmatpush.xpose.msra.mxu0 0.0
      %1350 = vmatpush.xpose.msra.mxu0 0.0
      %1351 = vmatpush.xpose.msra.mxu0 0.0
      %1352 = vmatpush.xpose.msra.mxu0 0.0
      %1353 = vmatpush.xpose.msra.mxu0 0.0
      %1354 = vmatpush.xpose.msra.mxu0 %v1338
      %1355 = vmatpush.xpose.msra.mxu0 %v1335
      %1356 = vmatmul.f32.gmra.mxu0 %v1323
      %v1357 = vpop.f32.mrf.mxu0
      %v1358 = vadd.f32 0.0, %v1357
      %1359 = vmatmul.f32.gmra.mxu0 %v1326
      %v1360 = vpop.f32.mrf.mxu0
      %v1361 = vadd.f32 0.0, %v1360
      %1362 = vmatmul.f32.gmra.mxu0 %v1329
      %v1363 = vpop.f32.mrf.mxu0
      %v1364 = vadd.f32 0.0, %v1363
      %1365 = vmatmul.f32.gmra.mxu0 %v1332
      %v1366 = vpop.f32.mrf.mxu0
      %v1367 = vadd.f32 0.0, %v1366
      %1368 = vdwg.mxu0
      %v1370 = vsel %vm1227, %v584, 0
      %v1373 = vsel %vm1227, %v638, 0
      %v1376 = vsel %vm1227, %v692, 0
      %v1379 = vsel %vm1227, %v746, 0
      %v1382 = vsel %vm1227, %v932, 0
      %v1385 = vsel %vm1227, %v986, 0
      %1387 = vmatpush.xpose.msra.mxu0 0.0
      %1388 = vmatpush.xpose.msra.mxu0 0.0
      %1389 = vmatpush.xpose.msra.mxu0 0.0
      %1390 = vmatpush.xpose.msra.mxu0 0.0
      %1391 = vmatpush.xpose.msra.mxu0 0.0
      %1392 = vmatpush.xpose.msra.mxu0 0.0
      %1393 = vmatpush.xpose.msra.mxu0 0.0
      %1394 = vmatpush.xpose.msra.mxu0 0.0
      %1395 = vmatpush.xpose.msra.mxu0 0.0
      %1396 = vmatpush.xpose.msra.mxu0 0.0
      %1397 = vmatpush.xpose.msra.mxu0 0.0
      %1398 = vmatpush.xpose.msra.mxu0 0.0
      %1399 = vmatpush.xpose.msra.mxu0 0.0
      %1400 = vmatpush.xpose.msra.mxu0 0.0
      %1401 = vmatpush.xpose.msra.mxu0 %v1385
      %1402 = vmatpush.xpose.msra.mxu0 %v1382
      %1403 = vmatmul.f32.gmra.mxu0 %v1370
      %v1404 = vpop.f32.mrf.mxu0
      %v1405 = vadd.f32 0.0, %v1404
      %1406 = vmatmul.f32.gmra.mxu0 %v1373
      %v1407 = vpop.f32.mrf.mxu0
      %v1408 = vadd.f32 0.0, %v1407
      %1409 = vmatmul.f32.gmra.mxu0 %v1376
      %v1410 = vpop.f32.mrf.mxu0
      %v1411 = vadd.f32 0.0, %v1410
      %1412 = vmatmul.f32.gmra.mxu0 %v1379
      %v1413 = vpop.f32.mrf.mxu0
      %v1414 = vadd.f32 0.0, %v1413
      %1415 = vdwg.mxu0
      %v1416 = vmul.f32 %v1264, 0.35355338
      %v1417 = vmul.f32 %v1267, 0.35355338
      %v1418 = vmul.f32 %v1270, 0.35355338
      %v1419 = vmul.f32 %v1273, 0.35355338
      %v1420 = vmul.f32 %v1311, 0.35355338
      %v1421 = vmul.f32 %v1314, 0.35355338
      %v1422 = vmul.f32 %v1317, 0.35355338
      %v1423 = vmul.f32 %v1320, 0.35355338
      %v1424 = vmul.f32 %v1358, 0.35355338
      %v1425 = vmul.f32 %v1361, 0.35355338
      %v1426 = vmul.f32 %v1364, 0.35355338
      %v1427 = vmul.f32 %v1367, 0.35355338
      %v1428 = vmul.f32 %v1405, 0.35355338
      %v1429 = vmul.f32 %v1408, 0.35355338
      %v1430 = vmul.f32 %v1411, 0.35355338
      %v1431 = vmul.f32 %v1414, 0.35355338
      %vm1432 = vcmask 130048
      %v1433 = vsel %vm1432, %v1416, -inf
      %1434 = vmax.xlane.f32.xlu0 %v1433
      %v1435 = vpop.xlane.xlu0 %1434
      %v1436 = vsel %vm1432, %v1417, -inf
      %1437 = vmax.xlane.f32.xlu0 %v1436
      %v1438 = vpop.xlane.xlu0 %1437
      %v1439 = vsel %vm1432, %v1418, -inf
      %1440 = vmax.xlane.f32.xlu0 %v1439
      %v1441 = vpop.xlane.xlu0 %1440
      %v1442 = vsel %vm1432, %v1419, -inf
      %1443 = vmax.xlane.f32.xlu0 %v1442
      %v1444 = vpop.xlane.xlu0 %1443
      %v1445 = vsel %vm1432, %v1420, -inf
      %1446 = vmax.xlane.f32.xlu0 %v1445
      %v1447 = vpop.xlane.xlu0 %1446
      %v1448 = vsel %vm1432, %v1421, -inf
      %1449 = vmax.xlane.f32.xlu0 %v1448
      %v1450 = vpop.xlane.xlu0 %1449
      %v1451 = vsel %vm1432, %v1422, -inf
      %1452 = vmax.xlane.f32.xlu0 %v1451
      %v1453 = vpop.xlane.xlu0 %1452
      %v1454 = vsel %vm1432, %v1423, -inf
      %1455 = vmax.xlane.f32.xlu0 %v1454
      %v1456 = vpop.xlane.xlu0 %1455
      %v1457 = vsel %vm1432, %v1424, -inf
      %1458 = vmax.xlane.f32.xlu0 %v1457
      %v1459 = vpop.xlane.xlu0 %1458
      %v1460 = vsel %vm1432, %v1425, -inf
      %1461 = vmax.xlane.f32.xlu0 %v1460
      %v1462 = vpop.xlane.xlu0 %1461
      %v1463 = vsel %vm1432, %v1426, -inf
      %1464 = vmax.xlane.f32.xlu0 %v1463
      %v1465 = vpop.xlane.xlu0 %1464
      %v1466 = vsel %vm1432, %v1427, -inf
      %1467 = vmax.xlane.f32.xlu0 %v1466
      %v1468 = vpop.xlane.xlu0 %1467
      %v1469 = vsel %vm1432, %v1428, -inf
      %1470 = vmax.xlane.f32.xlu0 %v1469
      %v1471 = vpop.xlane.xlu0 %1470
      %v1472 = vsel %vm1432, %v1429, -inf
      %1473 = vmax.xlane.f32.xlu0 %v1472
      %v1474 = vpop.xlane.xlu0 %1473
      %v1475 = vsel %vm1432, %v1430, -inf
      %1476 = vmax.xlane.f32.xlu0 %v1475
      %v1477 = vpop.xlane.xlu0 %1476
      %v1478 = vsel %vm1432, %v1431, -inf
      %1479 = vmax.xlane.f32.xlu0 %v1478
      %v1480 = vpop.xlane.xlu0 %1479
      %v1481 = vsub.f32 %v1416, %v1435
      %v1482 = vsub.f32 %v1417, %v1438
      %v1483 = vsub.f32 %v1418, %v1441
      %v1484 = vsub.f32 %v1419, %v1444
      %v1485 = vsub.f32 %v1420, %v1447
      %v1486 = vsub.f32 %v1421, %v1450
      %v1487 = vsub.f32 %v1422, %v1453
      %v1488 = vsub.f32 %v1423, %v1456
      %v1489 = vsub.f32 %v1424, %v1459
      %v1490 = vsub.f32 %v1425, %v1462
      %v1491 = vsub.f32 %v1426, %v1465
      %v1492 = vsub.f32 %v1427, %v1468
      %v1493 = vsub.f32 %v1428, %v1471
      %v1494 = vsub.f32 %v1429, %v1474
      %v1495 = vsub.f32 %v1430, %v1477
      %v1496 = vsub.f32 %v1431, %v1480
      %v1497 = vmul.f32 %v1481, 1.442695
      %v1498 = vpow.pop %v1497
      %v1499 = vmul.f32 %v1482, 1.442695
      %v1500 = vpow.pop %v1499
      %v1501 = vmul.f32 %v1483, 1.442695
      %v1502 = vpow.pop %v1501
      %v1503 = vmul.f32 %v1484, 1.442695
      %v1504 = vpow.pop %v1503
      %v1505 = vmul.f32 %v1485, 1.442695
      %v1506 = vpow.pop %v1505
      %v1507 = vmul.f32 %v1486, 1.442695
      %v1508 = vpow.pop %v1507
      %v1509 = vmul.f32 %v1487, 1.442695
      %v1510 = vpow.pop %v1509
      %v1511 = vmul.f32 %v1488, 1.442695
      %v1512 = vpow.pop %v1511
      %v1513 = vmul.f32 %v1489, 1.442695
      %v1514 = vpow.pop %v1513
      %v1515 = vmul.f32 %v1490, 1.442695
      %v1516 = vpow.pop %v1515
      %v1517 = vmul.f32 %v1491, 1.442695
      %v1518 = vpow.pop %v1517
      %v1519 = vmul.f32 %v1492, 1.442695
      %v1520 = vpow.pop %v1519
      %v1521 = vmul.f32 %v1493, 1.442695
      %v1522 = vpow.pop %v1521
      %v1523 = vmul.f32 %v1494, 1.442695
      %v1524 = vpow.pop %v1523
      %v1525 = vmul.f32 %v1495, 1.442695
      %v1526 = vpow.pop %v1525
      %v1527 = vmul.f32 %v1496, 1.442695
      %v1528 = vpow.pop %v1527
      %v1529 = vsel %vm1432, %v1498, 0.0
      %1530 = vadd.xlane.f32.xlu0 %v1529
      %v1531 = vpop.xlane.xlu0 %1530
      %v1532 = vsel %vm1432, %v1500, 0.0
      %1533 = vadd.xlane.f32.xlu0 %v1532
      %v1534 = vpop.xlane.xlu0 %1533
      %v1535 = vsel %vm1432, %v1502, 0.0
      %1536 = vadd.xlane.f32.xlu0 %v1535
      %v1537 = vpop.xlane.xlu0 %1536
      %v1538 = vsel %vm1432, %v1504, 0.0
      %1539 = vadd.xlane.f32.xlu0 %v1538
      %v1540 = vpop.xlane.xlu0 %1539
      %v1541 = vsel %vm1432, %v1506, 0.0
      %1542 = vadd.xlane.f32.xlu0 %v1541
      %v1543 = vpop.xlane.xlu0 %1542
      %v1544 = vsel %vm1432, %v1508, 0.0
      %1545 = vadd.xlane.f32.xlu0 %v1544
      %v1546 = vpop.xlane.xlu0 %1545
      %v1547 = vsel %vm1432, %v1510, 0.0
      %1548 = vadd.xlane.f32.xlu0 %v1547
      %v1549 = vpop.xlane.xlu0 %1548
      %v1550 = vsel %vm1432, %v1512, 0.0
      %1551 = vadd.xlane.f32.xlu0 %v1550
      %v1552 = vpop.xlane.xlu0 %1551
      %v1553 = vsel %vm1432, %v1514, 0.0
      %1554 = vadd.xlane.f32.xlu0 %v1553
      %v1555 = vpop.xlane.xlu0 %1554
      %v1556 = vsel %vm1432, %v1516, 0.0
      %1557 = vadd.xlane.f32.xlu0 %v1556
      %v1558 = vpop.xlane.xlu0 %1557
      %v1559 = vsel %vm1432, %v1518, 0.0
      %1560 = vadd.xlane.f32.xlu0 %v1559
      %v1561 = vpop.xlane.xlu0 %1560
      %v1562 = vsel %vm1432, %v1520, 0.0
      %1563 = vadd.xlane.f32.xlu0 %v1562
      %v1564 = vpop.xlane.xlu0 %1563
      %v1565 = vsel %vm1432, %v1522, 0.0
      %1566 = vadd.xlane.f32.xlu0 %v1565
      %v1567 = vpop.xlane.xlu0 %1566
      %v1568 = vsel %vm1432, %v1524, 0.0
      %1569 = vadd.xlane.f32.xlu0 %v1568
      %v1570 = vpop.xlane.xlu0 %1569
      %v1571 = vsel %vm1432, %v1526, 0.0
      %1572 = vadd.xlane.f32.xlu0 %v1571
      %v1573 = vpop.xlane.xlu0 %1572
      %v1574 = vsel %vm1432, %v1528, 0.0
      %1575 = vadd.xlane.f32.xlu0 %v1574
      %v1576 = vpop.xlane.xlu0 %1575
      %v1577 = vrcp.pop %v1531
      %v1578 = vrcp.pop %v1534
      %v1579 = vrcp.pop %v1537
      %v1580 = vrcp.pop %v1540
      %v1581 = vrcp.pop %v1543
      %v1582 = vrcp.pop %v1546
      %v1583 = vrcp.pop %v1549
      %v1584 = vrcp.pop %v1552
      %v1585 = vrcp.pop %v1555
      %v1586 = vrcp.pop %v1558
      %v1587 = vrcp.pop %v1561
      %v1588 = vrcp.pop %v1564
      %v1589 = vrcp.pop %v1567
      %v1590 = vrcp.pop %v1570
      %v1591 = vrcp.pop %v1573
      %v1592 = vrcp.pop %v1576
      %v1593 = vmul.f32 %v1498, %v1577
      %v1594 = vmul.f32 %v1500, %v1578
      %v1595 = vmul.f32 %v1502, %v1579
      %v1596 = vmul.f32 %v1504, %v1580
      %v1597 = vmul.f32 %v1506, %v1581
      %v1598 = vmul.f32 %v1508, %v1582
      %v1599 = vmul.f32 %v1510, %v1583
      %v1600 = vmul.f32 %v1512, %v1584
      %v1601 = vmul.f32 %v1514, %v1585
      %v1602 = vmul.f32 %v1516, %v1586
      %v1603 = vmul.f32 %v1518, %v1587
      %v1604 = vmul.f32 %v1520, %v1588
      %v1605 = vmul.f32 %v1522, %v1589
      %v1606 = vmul.f32 %v1524, %v1590
      %v1607 = vmul.f32 %v1526, %v1591
      %v1608 = vmul.f32 %v1528, %v1592
      %v1610 = vsel %vm1432, %v1593, 0
      %v1613 = vsel %vm1432, %v1594, 0
      %v1616 = vsel %vm1432, %v1595, 0
      %v1619 = vsel %vm1432, %v1596, 0
      %1621 = vmatpush.msra.mxu0 0.0
      %1622 = vmatpush.msra.mxu0 0.0
      %1623 = vmatpush.msra.mxu0 0.0
      %1624 = vmatpush.msra.mxu0 0.0
      %1625 = vmatpush.msra.mxu0 0.0
      %1626 = vmatpush.msra.mxu0 0.0
      %1627 = vmatpush.msra.mxu0 0.0
      %1628 = vmatpush.msra.mxu0 0.0
      %1629 = vmatpush.msra.mxu0 0.0
      %1630 = vmatpush.msra.mxu0 0.0
      %1631 = vmatpush.msra.mxu0 0.0
      %1632 = vmatpush.msra.mxu0 0.0
      %1633 = vmatpush.msra.mxu0 0.0
      %1634 = vmatpush.msra.mxu0 0.0
      %1635 = vmatpush.msra.mxu0 %v1220
      %1636 = vmatpush.msra.mxu0 %v1166
      %1637 = vmatmul.f32.gmra.mxu0 %v1610
      %v1638 = vpop.f32.mrf.mxu0
      %v1639 = vadd.f32 0.0, %v1638
      %1640 = vmatmul.f32.gmra.mxu0 %v1613
      %v1641 = vpop.f32.mrf.mxu0
      %v1642 = vadd.f32 0.0, %v1641
      %1643 = vmatmul.f32.gmra.mxu0 %v1616
      %v1644 = vpop.f32.mrf.mxu0
      %v1645 = vadd.f32 0.0, %v1644
      %1646 = vmatmul.f32.gmra.mxu0 %v1619
      %v1647 = vpop.f32.mrf.mxu0
      %v1648 = vadd.f32 0.0, %v1647
      %1649 = vdwg.mxu0
      %v1651 = vsel %vm1432, %v1597, 0
      %v1654 = vsel %vm1432, %v1598, 0
      %v1657 = vsel %vm1432, %v1599, 0
      %v1660 = vsel %vm1432, %v1600, 0
      %1662 = vmatpush.msra.mxu0 0.0
      %1663 = vmatpush.msra.mxu0 0.0
      %1664 = vmatpush.msra.mxu0 0.0
      %1665 = vmatpush.msra.mxu0 0.0
      %1666 = vmatpush.msra.mxu0 0.0
      %1667 = vmatpush.msra.mxu0 0.0
      %1668 = vmatpush.msra.mxu0 0.0
      %1669 = vmatpush.msra.mxu0 0.0
      %1670 = vmatpush.msra.mxu0 0.0
      %1671 = vmatpush.msra.mxu0 0.0
      %1672 = vmatpush.msra.mxu0 0.0
      %1673 = vmatpush.msra.mxu0 0.0
      %1674 = vmatpush.msra.mxu0 0.0
      %1675 = vmatpush.msra.mxu0 0.0
      %1676 = vmatpush.msra.mxu0 %v1222
      %1677 = vmatpush.msra.mxu0 %v1168
      %1678 = vmatmul.f32.gmra.mxu0 %v1651
      %v1679 = vpop.f32.mrf.mxu0
      %v1680 = vadd.f32 0.0, %v1679
      %1681 = vmatmul.f32.gmra.mxu0 %v1654
      %v1682 = vpop.f32.mrf.mxu0
      %v1683 = vadd.f32 0.0, %v1682
      %1684 = vmatmul.f32.gmra.mxu0 %v1657
      %v1685 = vpop.f32.mrf.mxu0
      %v1686 = vadd.f32 0.0, %v1685
      %1687 = vmatmul.f32.gmra.mxu0 %v1660
      %v1688 = vpop.f32.mrf.mxu0
      %v1689 = vadd.f32 0.0, %v1688
      %1690 = vdwg.mxu0
      %v1692 = vsel %vm1432, %v1601, 0
      %v1695 = vsel %vm1432, %v1602, 0
      %v1698 = vsel %vm1432, %v1603, 0
      %v1701 = vsel %vm1432, %v1604, 0
      %1703 = vmatpush.msra.mxu0 0.0
      %1704 = vmatpush.msra.mxu0 0.0
      %1705 = vmatpush.msra.mxu0 0.0
      %1706 = vmatpush.msra.mxu0 0.0
      %1707 = vmatpush.msra.mxu0 0.0
      %1708 = vmatpush.msra.mxu0 0.0
      %1709 = vmatpush.msra.mxu0 0.0
      %1710 = vmatpush.msra.mxu0 0.0
      %1711 = vmatpush.msra.mxu0 0.0
      %1712 = vmatpush.msra.mxu0 0.0
      %1713 = vmatpush.msra.mxu0 0.0
      %1714 = vmatpush.msra.mxu0 0.0
      %1715 = vmatpush.msra.mxu0 0.0
      %1716 = vmatpush.msra.mxu0 0.0
      %1717 = vmatpush.msra.mxu0 %v1224
      %1718 = vmatpush.msra.mxu0 %v1170
      %1719 = vmatmul.f32.gmra.mxu0 %v1692
      %v1720 = vpop.f32.mrf.mxu0
      %v1721 = vadd.f32 0.0, %v1720
      %1722 = vmatmul.f32.gmra.mxu0 %v1695
      %v1723 = vpop.f32.mrf.mxu0
      %v1724 = vadd.f32 0.0, %v1723
      %1725 = vmatmul.f32.gmra.mxu0 %v1698
      %v1726 = vpop.f32.mrf.mxu0
      %v1727 = vadd.f32 0.0, %v1726
      %1728 = vmatmul.f32.gmra.mxu0 %v1701
      %v1729 = vpop.f32.mrf.mxu0
      %v1730 = vadd.f32 0.0, %v1729
      %1731 = vdwg.mxu0
      %v1733 = vsel %vm1432, %v1605, 0
      %v1736 = vsel %vm1432, %v1606, 0
      %v1739 = vsel %vm1432, %v1607, 0
      %v1742 = vsel %vm1432, %v1608, 0
      %1744 = vmatpush.msra.mxu0 0.0
      %1745 = vmatpush.msra.mxu0 0.0
      %1746 = vmatpush.msra.mxu0 0.0
      %1747 = vmatpush.msra.mxu0 0.0
      %1748 = vmatpush.msra.mxu0 0.0
      %1749 = vmatpush.msra.mxu0 0.0
      %1750 = vmatpush.msra.mxu0 0.0
      %1751 = vmatpush.msra.mxu0 0.0
      %1752 = vmatpush.msra.mxu0 0.0
      %1753 = vmatpush.msra.mxu0 0.0
      %1754 = vmatpush.msra.mxu0 0.0
      %1755 = vmatpush.msra.mxu0 0.0
      %1756 = vmatpush.msra.mxu0 0.0
      %1757 = vmatpush.msra.mxu0 0.0
      %1758 = vmatpush.msra.mxu0 %v1226
      %1759 = vmatpush.msra.mxu0 %v1172
      %1760 = vmatmul.f32.gmra.mxu0 %v1733
      %v1761 = vpop.f32.mrf.mxu0
      %v1762 = vadd.f32 0.0, %v1761
      %1763 = vmatmul.f32.gmra.mxu0 %v1736
      %v1764 = vpop.f32.mrf.mxu0
      %v1765 = vadd.f32 0.0, %v1764
      %1766 = vmatmul.f32.gmra.mxu0 %v1739
      %v1767 = vpop.f32.mrf.mxu0
      %v1768 = vadd.f32 0.0, %v1767
      %1769 = vmatmul.f32.gmra.mxu0 %v1742
      %v1770 = vpop.f32.mrf.mxu0
      %v1771 = vadd.f32 0.0, %v1770
      %1772 = vdwg.mxu0
      %v1773 = vrot.slane %v1721, 4
      %v1774 = vsel %vm307, %v1773, %v1639
      %v1775 = vrot.slane %v1639, 4
      %v1776 = vsel %vm307, %v1721, %v1775
      %v1778 = vunpack.c.l.s4 1983009808
      %v1779 = vunpack.c.0.s8 %v1778
      %v1780 = vperm.slane %v1774, %v1779
      %v1782 = vunpack.c.l.s4 1983009808
      %v1783 = vunpack.c.0.s8 %v1782
      %v1784 = vperm.slane %v1776, %v1783
      %v1785 = vrot.slane %v1762, 4
      %v1786 = vsel %vm307, %v1785, %v1680
      %v1787 = vrot.slane %v1680, 4
      %v1788 = vsel %vm307, %v1762, %v1787
      %v1790 = vunpack.c.l.s4 1983009808
      %v1791 = vunpack.c.0.s8 %v1790
      %v1792 = vperm.slane %v1786, %v1791
      %v1794 = vunpack.c.l.s4 1983009808
      %v1795 = vunpack.c.0.s8 %v1794
      %v1796 = vperm.slane %v1788, %v1795
      %v1797 = vrot.slane %v1792, 4
      %v1798 = vsel %vm307, %v1797, %v1780
      %v1799 = vrot.slane %v1780, 4
      %v1800 = vsel %vm307, %v1792, %v1799
      %v1802 = vunpack.c.l.s4 1934713408
      %v1803 = vunpack.c.0.s8 %v1802
      %v1804 = vperm.slane %v1798, %v1803
      %v1806 = vunpack.c.l.s4 1934713408
      %v1807 = vunpack.c.0.s8 %v1806
      %v1808 = vperm.slane %v1800, %v1807
      %v1809 = vrot.slane %v1796, 4
      %v1810 = vsel %vm307, %v1809, %v1784
      %v1811 = vrot.slane %v1784, 4
      %v1812 = vsel %vm307, %v1796, %v1811
      %v1814 = vunpack.c.l.s4 1934713408
      %v1815 = vunpack.c.0.s8 %v1814
      %v1816 = vperm.slane %v1810, %v1815
      %v1818 = vunpack.c.l.s4 1934713408
      %v1819 = vunpack.c.0.s8 %v1818
      %v1820 = vperm.slane %v1812, %v1819
      %v1821 = vrot.slane %v1804, 4
      %v1822 = vsel %vm307, 0.0, %v1821
      %v1823 = vrot.slane %v1808, 4
      %v1824 = vsel %vm307, 0.0, %v1823
      %v1825 = vrot.slane %v1816, 4
      %v1826 = vsel %vm307, 0.0, %v1825
      %v1827 = vrot.slane %v1820, 4
      %v1828 = vsel %vm307, 0.0, %v1827
      %v1829 = vrot.slane %v1724, 4
      %v1830 = vsel %vm307, %v1829, %v1642
      %v1831 = vrot.slane %v1642, 4
      %v1832 = vsel %vm307, %v1724, %v1831
      %v1834 = vunpack.c.l.s4 1983009808
      %v1835 = vunpack.c.0.s8 %v1834
      %v1836 = vperm.slane %v1830, %v1835
      %v1838 = vunpack.c.l.s4 1983009808
      %v1839 = vunpack.c.0.s8 %v1838
      %v1840 = vperm.slane %v1832, %v1839
      %v1841 = vrot.slane %v1765, 4
      %v1842 = vsel %vm307, %v1841, %v1683
      %v1843 = vrot.slane %v1683, 4
      %v1844 = vsel %vm307, %v1765, %v1843
      %v1846 = vunpack.c.l.s4 1983009808
      %v1847 = vunpack.c.0.s8 %v1846
      %v1848 = vperm.slane %v1842, %v1847
      %v1850 = vunpack.c.l.s4 1983009808
      %v1851 = vunpack.c.0.s8 %v1850
      %v1852 = vperm.slane %v1844, %v1851
      %v1853 = vrot.slane %v1848, 4
      %v1854 = vsel %vm307, %v1853, %v1836
      %v1855 = vrot.slane %v1836, 4
      %v1856 = vsel %vm307, %v1848, %v1855
      %v1858 = vunpack.c.l.s4 1934713408
      %v1859 = vunpack.c.0.s8 %v1858
      %v1860 = vperm.slane %v1854, %v1859
      %v1862 = vunpack.c.l.s4 1934713408
      %v1863 = vunpack.c.0.s8 %v1862
      %v1864 = vperm.slane %v1856, %v1863
      %v1865 = vrot.slane %v1852, 4
      %v1866 = vsel %vm307, %v1865, %v1840
      %v1867 = vrot.slane %v1840, 4
      %v1868 = vsel %vm307, %v1852, %v1867
      %v1870 = vunpack.c.l.s4 1934713408
      %v1871 = vunpack.c.0.s8 %v1870
      %v1872 = vperm.slane %v1866, %v1871
      %v1874 = vunpack.c.l.s4 1934713408
      %v1875 = vunpack.c.0.s8 %v1874
      %v1876 = vperm.slane %v1868, %v1875
      %v1877 = vrot.slane %v1860, 4
      %v1878 = vsel %vm307, 0.0, %v1877
      %v1879 = vrot.slane %v1864, 4
      %v1880 = vsel %vm307, 0.0, %v1879
      %v1881 = vrot.slane %v1872, 4
      %v1882 = vsel %vm307, 0.0, %v1881
      %v1883 = vrot.slane %v1876, 4
      %v1884 = vsel %vm307, 0.0, %v1883
      %v1885 = vrot.slane %v1727, 4
      %v1886 = vsel %vm307, %v1885, %v1645
      %v1887 = vrot.slane %v1645, 4
      %v1888 = vsel %vm307, %v1727, %v1887
      %v1890 = vunpack.c.l.s4 1983009808
      %v1891 = vunpack.c.0.s8 %v1890
      %v1892 = vperm.slane %v1886, %v1891
      %v1894 = vunpack.c.l.s4 1983009808
      %v1895 = vunpack.c.0.s8 %v1894
      %v1896 = vperm.slane %v1888, %v1895
      %v1897 = vrot.slane %v1768, 4
      %v1898 = vsel %vm307, %v1897, %v1686
      %v1899 = vrot.slane %v1686, 4
      %v1900 = vsel %vm307, %v1768, %v1899
      %v1902 = vunpack.c.l.s4 1983009808
      %v1903 = vunpack.c.0.s8 %v1902
      %v1904 = vperm.slane %v1898, %v1903
      %v1906 = vunpack.c.l.s4 1983009808
      %v1907 = vunpack.c.0.s8 %v1906
      %v1908 = vperm.slane %v1900, %v1907
      %v1909 = vrot.slane %v1904, 4
      %v1910 = vsel %vm307, %v1909, %v1892
      %v1911 = vrot.slane %v1892, 4
      %v1912 = vsel %vm307, %v1904, %v1911
      %v1914 = vunpack.c.l.s4 1934713408
      %v1915 = vunpack.c.0.s8 %v1914
      %v1916 = vperm.slane %v1910, %v1915
      %v1918 = vunpack.c.l.s4 1934713408
      %v1919 = vunpack.c.0.s8 %v1918
      %v1920 = vperm.slane %v1912, %v1919
      %v1921 = vrot.slane %v1908, 4
      %v1922 = vsel %vm307, %v1921, %v1896
      %v1923 = vrot.slane %v1896, 4
      %v1924 = vsel %vm307, %v1908, %v1923
      %v1926 = vunpack.c.l.s4 1934713408
      %v1927 = vunpack.c.0.s8 %v1926
      %v1928 = vperm.slane %v1922, %v1927
      %v1930 = vunpack.c.l.s4 1934713408
      %v1931 = vunpack.c.0.s8 %v1930
      %v1932 = vperm.slane %v1924, %v1931
      %v1933 = vrot.slane %v1916, 4
      %v1934 = vsel %vm307, 0.0, %v1933
      %v1935 = vrot.slane %v1920, 4
      %v1936 = vsel %vm307, 0.0, %v1935
      %v1937 = vrot.slane %v1928, 4
      %v1938 = vsel %vm307, 0.0, %v1937
      %v1939 = vrot.slane %v1932, 4
      %v1940 = vsel %vm307, 0.0, %v1939
      %v1941 = vrot.slane %v1730, 4
      %v1942 = vsel %vm307, %v1941, %v1648
      %v1943 = vrot.slane %v1648, 4
      %v1944 = vsel %vm307, %v1730, %v1943
      %v1946 = vunpack.c.l.s4 1983009808
      %v1947 = vunpack.c.0.s8 %v1946
      %v1948 = vperm.slane %v1942, %v1947
      %v1950 = vunpack.c.l.s4 1983009808
      %v1951 = vunpack.c.0.s8 %v1950
      %v1952 = vperm.slane %v1944, %v1951
      %v1953 = vrot.slane %v1771, 4
      %v1954 = vsel %vm307, %v1953, %v1689
      %v1955 = vrot.slane %v1689, 4
      %v1956 = vsel %vm307, %v1771, %v1955
      %v1958 = vunpack.c.l.s4 1983009808
      %v1959 = vunpack.c.0.s8 %v1958
      %v1960 = vperm.slane %v1954, %v1959
      %v1962 = vunpack.c.l.s4 1983009808
      %v1963 = vunpack.c.0.s8 %v1962
      %v1964 = vperm.slane %v1956, %v1963
      %v1965 = vrot.slane %v1960, 4
      %v1966 = vsel %vm307, %v1965, %v1948
      %v1967 = vrot.slane %v1948, 4
      %v1968 = vsel %vm307, %v1960, %v1967
      %v1970 = vunpack.c.l.s4 1934713408
      %v1971 = vunpack.c.0.s8 %v1970
      %v1972 = vperm.slane %v1966, %v1971
      %v1974 = vunpack.c.l.s4 1934713408
      %v1975 = vunpack.c.0.s8 %v1974
      %v1976 = vperm.slane %v1968, %v1975
      %v1977 = vrot.slane %v1964, 4
      %v1978 = vsel %vm307, %v1977, %v1952
      %v1979 = vrot.slane %v1952, 4
      %v1980 = vsel %vm307, %v1964, %v1979
      %v1982 = vunpack.c.l.s4 1934713408
      %v1983 = vunpack.c.0.s8 %v1982
      %v1984 = vperm.slane %v1978, %v1983
      %v1986 = vunpack.c.l.s4 1934713408
      %v1987 = vunpack.c.0.s8 %v1986
      %v1988 = vperm.slane %v1980, %v1987
      %v1989 = vrot.slane %v1972, 4
      %v1990 = vsel %vm307, 0.0, %v1989
      %v1991 = vrot.slane %v1976, 4
      %v1992 = vsel %vm307, 0.0, %v1991
      %v1993 = vrot.slane %v1984, 4
      %v1994 = vsel %vm307, 0.0, %v1993
      %v1995 = vrot.slane %v1988, 4
      %v1996 = vsel %vm307, 0.0, %v1995
      %v1997 = vsel %vm307, %v1823, %v1804
      %v1999 = vunpack.c.l.s4 1983009808
      %v2000 = vunpack.c.0.s8 %v1999
      %v2001 = vperm.slane %v1997, %v2000
      %v2002 = vrot.slane %v1824, 4
      %v2003 = vsel %vm307, %v2002, %v1822
      %v2005 = vunpack.c.l.s4 1983009808
      %v2006 = vunpack.c.0.s8 %v2005
      %v2007 = vperm.slane %v2003, %v2006
      %v2008 = vsel %vm307, %v1827, %v1816
      %v2010 = vunpack.c.l.s4 1983009808
      %v2011 = vunpack.c.0.s8 %v2010
      %v2012 = vperm.slane %v2008, %v2011
      %v2013 = vrot.slane %v1828, 4
      %v2014 = vsel %vm307, %v2013, %v1826
      %v2016 = vunpack.c.l.s4 1983009808
      %v2017 = vunpack.c.0.s8 %v2016
      %v2018 = vperm.slane %v2014, %v2017
      %v2019 = vrot.slane %v2007, 4
      %v2020 = vsel %vm307, %v2019, %v2001
      %v2021 = vrot.slane %v2001, 4
      %v2022 = vsel %vm307, %v2007, %v2021
      %v2024 = vunpack.c.l.s4 1934713408
      %v2025 = vunpack.c.0.s8 %v2024
      %v2026 = vperm.slane %v2020, %v2025
      %v2028 = vunpack.c.l.s4 1934713408
      %v2029 = vunpack.c.0.s8 %v2028
      %v2030 = vperm.slane %v2022, %v2029
      %v2031 = vrot.slane %v2018, 4
      %v2032 = vsel %vm307, %v2031, %v2012
      %v2033 = vrot.slane %v2012, 4
      %v2034 = vsel %vm307, %v2018, %v2033
      %v2036 = vunpack.c.l.s4 1934713408
      %v2037 = vunpack.c.0.s8 %v2036
      %v2038 = vperm.slane %v2032, %v2037
      %v2040 = vunpack.c.l.s4 1934713408
      %v2041 = vunpack.c.0.s8 %v2040
      %v2042 = vperm.slane %v2034, %v2041
      %v2043 = vrot.slane %v2038, 4
      %v2044 = vsel %vm307, %v2043, %v2026
      %v2045 = vrot.slane %v2026, 4
      %v2046 = vsel %vm307, %v2038, %v2045
      %v2047 = vrot.slane %v2042, 4
      %v2048 = vsel %vm307, %v2047, %v2030
      %v2049 = vrot.slane %v2030, 4
      %v2050 = vsel %vm307, %v2042, %v2049
      %v2051 = vsel %vm307, %v1879, %v1860
      %v2053 = vunpack.c.l.s4 1983009808
      %v2054 = vunpack.c.0.s8 %v2053
      %v2055 = vperm.slane %v2051, %v2054
      %v2056 = vrot.slane %v1880, 4
      %v2057 = vsel %vm307, %v2056, %v1878
      %v2059 = vunpack.c.l.s4 1983009808
      %v2060 = vunpack.c.0.s8 %v2059
      %v2061 = vperm.slane %v2057, %v2060
      %v2062 = vsel %vm307, %v1883, %v1872
      %v2064 = vunpack.c.l.s4 1983009808
      %v2065 = vunpack.c.0.s8 %v2064
      %v2066 = vperm.slane %v2062, %v2065
      %v2067 = vrot.slane %v1884, 4
      %v2068 = vsel %vm307, %v2067, %v1882
      %v2070 = vunpack.c.l.s4 1983009808
      %v2071 = vunpack.c.0.s8 %v2070
      %v2072 = vperm.slane %v2068, %v2071
      %v2073 = vrot.slane %v2061, 4
      %v2074 = vsel %vm307, %v2073, %v2055
      %v2075 = vrot.slane %v2055, 4
      %v2076 = vsel %vm307, %v2061, %v2075
      %v2078 = vunpack.c.l.s4 1934713408
      %v2079 = vunpack.c.0.s8 %v2078
      %v2080 = vperm.slane %v2074, %v2079
      %v2082 = vunpack.c.l.s4 1934713408
      %v2083 = vunpack.c.0.s8 %v2082
      %v2084 = vperm.slane %v2076, %v2083
      %v2085 = vrot.slane %v2072, 4
      %v2086 = vsel %vm307, %v2085, %v2066
      %v2087 = vrot.slane %v2066, 4
      %v2088 = vsel %vm307, %v2072, %v2087
      %v2090 = vunpack.c.l.s4 1934713408
      %v2091 = vunpack.c.0.s8 %v2090
      %v2092 = vperm.slane %v2086, %v2091
      %v2094 = vunpack.c.l.s4 1934713408
      %v2095 = vunpack.c.0.s8 %v2094
      %v2096 = vperm.slane %v2088, %v2095
      %v2097 = vrot.slane %v2092, 4
      %v2098 = vsel %vm307, %v2097, %v2080
      %v2099 = vrot.slane %v2080, 4
      %v2100 = vsel %vm307, %v2092, %v2099
      %v2101 = vrot.slane %v2096, 4
      %v2102 = vsel %vm307, %v2101, %v2084
      %v2103 = vrot.slane %v2084, 4
      %v2104 = vsel %vm307, %v2096, %v2103
      %v2105 = vsel %vm307, %v1935, %v1916
      %v2107 = vunpack.c.l.s4 1983009808
      %v2108 = vunpack.c.0.s8 %v2107
      %v2109 = vperm.slane %v2105, %v2108
      %v2110 = vrot.slane %v1936, 4
      %v2111 = vsel %vm307, %v2110, %v1934
      %v2113 = vunpack.c.l.s4 1983009808
      %v2114 = vunpack.c.0.s8 %v2113
      %v2115 = vperm.slane %v2111, %v2114
      %v2116 = vsel %vm307, %v1939, %v1928
      %v2118 = vunpack.c.l.s4 1983009808
      %v2119 = vunpack.c.0.s8 %v2118
      %v2120 = vperm.slane %v2116, %v2119
      %v2121 = vrot.slane %v1940, 4
      %v2122 = vsel %vm307, %v2121, %v1938
      %v2124 = vunpack.c.l.s4 1983009808
      %v2125 = vunpack.c.0.s8 %v2124
      %v2126 = vperm.slane %v2122, %v2125
      %v2127 = vrot.slane %v2115, 4
      %v2128 = vsel %vm307, %v2127, %v2109
      %v2129 = vrot.slane %v2109, 4
      %v2130 = vsel %vm307, %v2115, %v2129
      %v2132 = vunpack.c.l.s4 1934713408
      %v2133 = vunpack.c.0.s8 %v2132
      %v2134 = vperm.slane %v2128, %v2133
      %v2136 = vunpack.c.l.s4 1934713408
      %v2137 = vunpack.c.0.s8 %v2136
      %v2138 = vperm.slane %v2130, %v2137
      %v2139 = vrot.slane %v2126, 4
      %v2140 = vsel %vm307, %v2139, %v2120
      %v2141 = vrot.slane %v2120, 4
      %v2142 = vsel %vm307, %v2126, %v2141
      %v2144 = vunpack.c.l.s4 1934713408
      %v2145 = vunpack.c.0.s8 %v2144
      %v2146 = vperm.slane %v2140, %v2145
      %v2148 = vunpack.c.l.s4 1934713408
      %v2149 = vunpack.c.0.s8 %v2148
      %v2150 = vperm.slane %v2142, %v2149
      %v2151 = vrot.slane %v2146, 4
      %v2152 = vsel %vm307, %v2151, %v2134
      %v2153 = vrot.slane %v2134, 4
      %v2154 = vsel %vm307, %v2146, %v2153
      %v2155 = vrot.slane %v2150, 4
      %v2156 = vsel %vm307, %v2155, %v2138
      %v2157 = vrot.slane %v2138, 4
      %v2158 = vsel %vm307, %v2150, %v2157
      %v2159 = vsel %vm307, %v1991, %v1972
      %v2161 = vunpack.c.l.s4 1983009808
      %v2162 = vunpack.c.0.s8 %v2161
      %v2163 = vperm.slane %v2159, %v2162
      %v2164 = vrot.slane %v1992, 4
      %v2165 = vsel %vm307, %v2164, %v1990
      %v2167 = vunpack.c.l.s4 1983009808
      %v2168 = vunpack.c.0.s8 %v2167
      %v2169 = vperm.slane %v2165, %v2168
      %v2170 = vsel %vm307, %v1995, %v1984
      %v2172 = vunpack.c.l.s4 1983009808
      %v2173 = vunpack.c.0.s8 %v2172
      %v2174 = vperm.slane %v2170, %v2173
      %v2175 = vrot.slane %v1996, 4
      %v2176 = vsel %vm307, %v2175, %v1994
      %v2178 = vunpack.c.l.s4 1983009808
      %v2179 = vunpack.c.0.s8 %v2178
      %v2180 = vperm.slane %v2176, %v2179
      %v2181 = vrot.slane %v2169, 4
      %v2182 = vsel %vm307, %v2181, %v2163
      %v2183 = vrot.slane %v2163, 4
      %v2184 = vsel %vm307, %v2169, %v2183
      %v2186 = vunpack.c.l.s4 1934713408
      %v2187 = vunpack.c.0.s8 %v2186
      %v2188 = vperm.slane %v2182, %v2187
      %v2190 = vunpack.c.l.s4 1934713408
      %v2191 = vunpack.c.0.s8 %v2190
      %v2192 = vperm.slane %v2184, %v2191
      %v2193 = vrot.slane %v2180, 4
      %v2194 = vsel %vm307, %v2193, %v2174
      %v2195 = vrot.slane %v2174, 4
      %v2196 = vsel %vm307, %v2180, %v2195
      %v2198 = vunpack.c.l.s4 1934713408
      %v2199 = vunpack.c.0.s8 %v2198
      %v2200 = vperm.slane %v2194, %v2199
      %v2202 = vunpack.c.l.s4 1934713408
      %v2203 = vunpack.c.0.s8 %v2202
      %v2204 = vperm.slane %v2196, %v2203
      %v2205 = vrot.slane %v2200, 4
      %v2206 = vsel %vm307, %v2205, %v2188
      %v2207 = vrot.slane %v2188, 4
      %v2208 = vsel %vm307, %v2200, %v2207
      %v2209 = vrot.slane %v2204, 4
      %v2210 = vsel %vm307, %v2209, %v2192
      %v2211 = vrot.slane %v2192, 4
      %v2212 = vsel %vm307, %v2204, %v2211
      %2217 = vrot.lane.b32.xlu0 %v2046, 8
      %v2218 = vpop.permute.xlu0 %2217
      %2219 = vrot.lane.b32.xlu0 %v2100, 8
      %v2220 = vpop.permute.xlu0 %2219
      %2221 = vrot.lane.b32.xlu0 %v2154, 8
      %v2222 = vpop.permute.xlu0 %2221
      %2223 = vrot.lane.b32.xlu0 %v2208, 8
      %v2224 = vpop.permute.xlu0 %2223
      %2233 = vrot.lane.b32.xlu0 %v2048, 16
      %v2234 = vpop.permute.xlu0 %2233
      %2235 = vrot.lane.b32.xlu0 %v2102, 16
      %v2236 = vpop.permute.xlu0 %2235
      %2237 = vrot.lane.b32.xlu0 %v2156, 16
      %v2238 = vpop.permute.xlu0 %2237
      %2239 = vrot.lane.b32.xlu0 %v2210, 16
      %v2240 = vpop.permute.xlu0 %2239
      %2249 = vrot.lane.b32.xlu0 %v2050, 24
      %v2250 = vpop.permute.xlu0 %2249
      %2251 = vrot.lane.b32.xlu0 %v2104, 24
      %v2252 = vpop.permute.xlu0 %2251
      %2253 = vrot.lane.b32.xlu0 %v2158, 24
      %v2254 = vpop.permute.xlu0 %2253
      %2255 = vrot.lane.b32.xlu0 %v2212, 24
      %v2256 = vpop.permute.xlu0 %2255
      %v2261 = vsel %vm1227, %v2044, %v2218
      %v2262 = vsel %vm1227, %v2098, %v2220
      %v2263 = vsel %vm1227, %v2152, %v2222
      %v2264 = vsel %vm1227, %v2206, %v2224
      %v2265 = vsel %vm1432, %v2261, %v2234
      %v2266 = vsel %vm1432, %v2262, %v2236
      %v2267 = vsel %vm1432, %v2263, %v2238
      %v2268 = vsel %vm1432, %v2264, %v2240
      %vm2269 = vcmask 195584
      %v2270 = vsel %vm2269, %v2265, %v2250
      %v2271 = vsel %vm2269, %v2266, %v2252
      %v2272 = vsel %vm2269, %v2267, %v2254
      %v2273 = vsel %vm2269, %v2268, %v2256
      %v2274 = vpack.c.bf16 %v2270, %v2270
      %v2275 = vpack.c.bf16 %v2271, %v2271
      %v2276 = vpack.c.bf16 %v2272, %v2272
      %v2277 = vpack.c.bf16 %v2273, %v2273
      %vm2278 = vcmask 257024
      %2279 = vst.msk [vmem:[%s248] sm:$0xf] %vm2278, %v2274
      %2280 = vst.msk [vmem:[%s248 + $0x4] sm:$0xf] %vm2278, %v2275
      %2281 = vst.msk [vmem:[%s248 + $0x8] sm:$0xf] %vm2278, %v2276
      %2282 = vst.msk [vmem:[%s248 + $0xc] sm:$0xf] %vm2278, %v2277
      %s2283 = smul.u32 4, %s19
      %p2284 = scmp.lt.s32.totalorder %s18, 1
      %s2285 = scalar_select %p2284, %s18, 1
      %p2286 = scmp.lt.s32.totalorder %s2283, 3
      %s2287 = scalar_select %p2286, %s2283, 3
      %s2288 = smul.addr %s2285, 4
      %s2289 = sadd.s32 %s2287, %s2288
      %s2290 = smul.addr %s2289, 4
      %s2291 = scalar_lea.vmem %s3, %s2290
      // Predicated region
      $region33: #{prompt_decoder_forward.26} parent=31 // pred_check
        %p2292 = pneg %p126
      $region34: #{prompt_decoder_forward.26} parent=31 // pred_check_branch
        %2294 = sbr.rel (%p2292) target = $region36
      $region35: #{prompt_decoder_forward.26} parent=31 // pred_region
        %s2295 = smul.u32 4, %s19
      $region36: #{prompt_decoder_forward.26} parent=31 // pred_fallthru
        _
    $region32: #{prompt_decoder_forward.26} parent=5 // pred_fallthru
      _
    %p2296 = scmp.le.s32.totalorder 2, %s9
    // Predicated region
    $region37: #{prompt_decoder_forward.26} parent=5 // pred_check
      %p2297 = pneg %p2296
    $region38: #{prompt_decoder_forward.26} parent=5 // pred_check_branch
      %2299 = sbr.rel (%p2297) target = $region40
    $region39: #{prompt_decoder_forward.26} parent=5 // pred_region
      %s2300 = ssub.s32 %s9, 2
      // Predicated region
      $region41: #{prompt_decoder_forward.26} parent=39 // pred_check
        %p2301 = pneg %p132
      $region42: #{prompt_decoder_forward.26} parent=39 // pred_check_branch
        %2303 = sbr.rel (%p2301) target = $region44
      $region43: #{prompt_decoder_forward.26} parent=39 // pred_region
        %s2304 = smul.u32 4, %s21
        %p2305 = scmp.lt.s32.totalorder %s20, 1
        %s2306 = scalar_select %p2305, %s20, 1
        %p2307 = scmp.lt.s32.totalorder %s2304, 3
        %s2308 = scalar_select %p2307, %s2304, 3
        %s2309 = smul.addr %s2306, 4
        %s2310 = sadd.s32 %s2308, %s2309
        %s2311 = smul.addr %s2310, 4
        %s2312 = scalar_lea.vmem %s3, %s2311
      $region44: #{prompt_decoder_forward.26} parent=39 // pred_fallthru
        _
    $region40: #{prompt_decoder_forward.26} parent=5 // pred_fallthru
      _
  $region6: #{prompt_decoder_forward.26} parent=0 // loop_footer
    %s13 = sadd.s32 1, %s9
  $region7: #{prompt_decoder_forward.26} parent=0 // loop_footer_branch
    %8 = sbr.rel target = $region3
  $region8: #{prompt_decoder_forward.26} parent=0 // loop_exit
    _

// kernel: prompt_decoder_forward.31
$region0: #{prompt_decoder_forward.31}
  #allocation0 [shape = 'u32[]', space=smem, size = 0x4, offset = 0x4, fixed_abs, tag = 'smem constant byte address 0x4 - core index']
  #allocation1 [shape = 'u32[72,128]{1,0:T(1,128)}', space=vmem, size = 0x9000, scoped, tag = 'internal scratch']
  %s0 = inlined_call_operand.vmem [shape: bf16[32,32], index: 0, kind: input, shape index: {}]
  %s1 = inlined_call_operand.vmem [shape: bf16[32,32], index: 1, kind: input, shape index: {}]
  %s2 = inlined_call_operand.vmem [shape: f32[1,32], index: 2, kind: input, shape index: {}]
  %s3 = inlined_call_operand.vmem [shape: f32[32,32], index: 3, kind: input, shape index: {}]
  %s4 = inlined_call_operand.vmem [shape: f32[1,32], index: 4, kind: input, shape index: {}]
  %s5 = inlined_call_operand.vmem [shape: f32[1,32], index: 5, kind: input, shape index: {}]
  %s6 = inlined_call_operand.hbm [shape: f32[32,32], index: 6, kind: output, shape index: {}]
  %s7 = sld [smem:[#allocation0]]
  $region57: #{prompt_decoder_forward.31} parent=0
    _
  %s9 = ssub.s32 1, %s7
  %s10 = scalar_select 0, %s9, %s7
  $region1: #{prompt_decoder_forward.31} parent=0
    #allocation2 [shape = 'u8[16384]{0}', space=vmem, size = 0x4000, scoped, tag = 'output window, operand 0']
    #allocation3 [shape = 's32[2]{0}', space=sflag, size = 0x8, scoped, tag = 'scoped memory for prompt_decoder_forward.31']
    %11 = vsyncpa [#allocation3], 0
    %s12 = scalar_lea.sflag [#allocation3], 1
    %13 = vsyncpa %s12, 0
    loop: start=0, step=1, limit=4
    $region2: #{prompt_decoder_forward.31} parent=1 // loop_pre_header
      _
    $region3: #{prompt_decoder_forward.31} parent=1 // loop_header
      %s15 = sphi 0, %s19
      %p16 = scmp.ge.s32.totalorder %s15, 4
      %s25 = sphi 0, %s27
      %s28 = sphi 0, %s25
      %s29 = sphi 0, %s28
      %s45 = sphi 0, %s29
      %s49 = sphi 0, %s49
      %s51 = sphi 0, %s49
      %s52 = sphi 0, %s51
      %s66 = sphi 0, %s52
      %s70 = sphi 0, %s70
      %s72 = sphi 0, %s70
      %s73 = sphi 0, %s72
      %s87 = sphi 0, %s73
      %s93 = sphi 0, %s95
      %s96 = sphi 0, %s93
      %s97 = sphi 0, %s96
      %s113 = sphi 0, %s97
      %s117 = sphi 0, %s117
      %s119 = sphi 0, %s117
      %s120 = sphi 0, %s119
      %s134 = sphi 0, %s120
      %s138 = sphi 0, %s138
      %s140 = sphi 0, %s138
      %s141 = sphi 0, %s140
      %s155 = sphi 0, %s141
      %s161 = sphi 0, %s163
      %s164 = sphi 0, %s161
      %s165 = sphi 0, %s164
      %s181 = sphi 0, %s165
    $region4: #{prompt_decoder_forward.31} parent=1 // loop_header_branch
      %18 = sbr.rel (%p16) target = $region8
    $region5: #{prompt_decoder_forward.31} parent=1 // loop_body
      %s20 = ssub.s32 %s15, 1
      %s21 = ssub.s32 %s15, 2
      %s22 = sadd.s32 %s15, 1
      %s23 = ssub.s32 %s15, %s22
      %p24 = scmp.eq.s32.totalorder %s23, 0
      %s26 = sadd.s32 %s25, 1
      %s27 = scalar_select %p24, %s25, %s26
      %p30 = pneg %p24
      %p31 = scmp.eq.s32.totalorder %s15, 1
      %p32 = por %p30, %p31
      %p33 = scmp.ne.s32.totalorder %s25, %s28
      %p34 = scmp.eq.s32.totalorder %s15, 0
      %p35 = por %p33, %p34
      %p36 = scmp.ne.s32.totalorder %s25, %s28
      %p37 = scmp.eq.s32.totalorder %s20, 1
      %p38 = por %p36, %p37
      %p39 = scmp.ne.s32.totalorder %s28, %s29
      %p40 = scmp.eq.s32.totalorder %s20, 0
      %p41 = por %p39, %p40
      %p42 = scmp.ne.s32.totalorder %s28, %s29
      %p43 = scmp.eq.s32.totalorder %s21, 1
      %p44 = por %p42, %p43
      %p46 = scmp.ne.s32.totalorder %s29, %s45
      %p47 = scmp.eq.s32.totalorder %s21, 0
      %p48 = por %p46, %p47
      %s50 = sadd.s32 %s49, 1
      %p53 = scmp.eq.s32.totalorder %s15, 1
      %p54 = scmp.ne.s32.totalorder %s49, %s51
      %p55 = scmp.eq.s32.totalorder %s15, 0
      %p56 = por %p54, %p55
      %p57 = scmp.ne.s32.totalorder %s49, %s51
      %p58 = scmp.eq.s32.totalorder %s20, 1
      %p59 = por %p57, %p58
      %p60 = scmp.ne.s32.totalorder %s51, %s52
      %p61 = scmp.eq.s32.totalorder %s20, 0
      %p62 = por %p60, %p61
      %p63 = scmp.ne.s32.totalorder %s51, %s52
      %p64 = scmp.eq.s32.totalorder %s21, 1
      %p65 = por %p63, %p64
      %p67 = scmp.ne.s32.totalorder %s52, %s66
      %p68 = scmp.eq.s32.totalorder %s21, 0
      %p69 = por %p67, %p68
      %s71 = sadd.s32 %s70, 1
      %p74 = scmp.eq.s32.totalorder %s15, 1
      %p75 = scmp.ne.s32.totalorder %s70, %s72
      %p76 = scmp.eq.s32.totalorder %s15, 0
      %p77 = por %p75, %p76
      %p78 = scmp.ne.s32.totalorder %s70, %s72
      %p79 = scmp.eq.s32.totalorder %s20, 1
      %p80 = por %p78, %p79
      %p81 = scmp.ne.s32.totalorder %s72, %s73
      %p82 = scmp.eq.s32.totalorder %s20, 0
      %p83 = por %p81, %p82
      %p84 = scmp.ne.s32.totalorder %s72, %s73
      %p85 = scmp.eq.s32.totalorder %s21, 1
      %p86 = por %p84, %p85
      %p88 = scmp.ne.s32.totalorder %s73, %s87
      %p89 = scmp.eq.s32.totalorder %s21, 0
      %p90 = por %p88, %p89
      %s91 = ssub.s32 %s15, %s22
      %p92 = scmp.eq.s32.totalorder %s91, 0
      %s94 = sadd.s32 %s93, 1
      %s95 = scalar_select %p92, %s93, %s94
      %p98 = pneg %p92
      %p99 = scmp.eq.s32.totalorder %s15, 1
      %p100 = por %p98, %p99
      %p101 = scmp.ne.s32.totalorder %s93, %s96
      %p102 = scmp.eq.s32.totalorder %s15, 0
      %p103 = por %p101, %p102
      %p104 = scmp.ne.s32.totalorder %s93, %s96
      %p105 = scmp.eq.s32.totalorder %s20, 1
      %p106 = por %p104, %p105
      %p107 = scmp.ne.s32.totalorder %s96, %s97
      %p108 = scmp.eq.s32.totalorder %s20, 0
      %p109 = por %p107, %p108
      %p110 = scmp.ne.s32.totalorder %s96, %s97
      %p111 = scmp.eq.s32.totalorder %s21, 1
      %p112 = por %p110, %p111
      %p114 = scmp.ne.s32.totalorder %s97, %s113
      %p115 = scmp.eq.s32.totalorder %s21, 0
      %p116 = por %p114, %p115
      %s118 = sadd.s32 %s117, 1
      %p121 = scmp.eq.s32.totalorder %s15, 1
      %p122 = scmp.ne.s32.totalorder %s117, %s119
      %p123 = scmp.eq.s32.totalorder %s15, 0
      %p124 = por %p122, %p123
      %p125 = scmp.ne.s32.totalorder %s117, %s119
      %p126 = scmp.eq.s32.totalorder %s20, 1
      %p127 = por %p125, %p126
      %p128 = scmp.ne.s32.totalorder %s119, %s120
      %p129 = scmp.eq.s32.totalorder %s20, 0
      %p130 = por %p128, %p129
      %p131 = scmp.ne.s32.totalorder %s119, %s120
      %p132 = scmp.eq.s32.totalorder %s21, 1
      %p133 = por %p131, %p132
      %p135 = scmp.ne.s32.totalorder %s120, %s134
      %p136 = scmp.eq.s32.totalorder %s21, 0
      %p137 = por %p135, %p136
      %s139 = sadd.s32 %s138, 1
      %p142 = scmp.eq.s32.totalorder %s15, 1
      %p143 = scmp.ne.s32.totalorder %s138, %s140
      %p144 = scmp.eq.s32.totalorder %s15, 0
      %p145 = por %p143, %p144
      %p146 = scmp.ne.s32.totalorder %s138, %s140
      %p147 = scmp.eq.s32.totalorder %s20, 1
      %p148 = por %p146, %p147
      %p149 = scmp.ne.s32.totalorder %s140, %s141
      %p150 = scmp.eq.s32.totalorder %s20, 0
      %p151 = por %p149, %p150
      %p152 = scmp.ne.s32.totalorder %s140, %s141
      %p153 = scmp.eq.s32.totalorder %s21, 1
      %p154 = por %p152, %p153
      %p156 = scmp.ne.s32.totalorder %s141, %s155
      %p157 = scmp.eq.s32.totalorder %s21, 0
      %p158 = por %p156, %p157
      %s159 = ssub.s32 %s15, %s22
      %p160 = scmp.eq.s32.totalorder %s159, 0
      %s162 = sadd.s32 %s161, 1
      %s163 = scalar_select %p160, %s161, %s162
      %p166 = pneg %p160
      %p167 = scmp.eq.s32.totalorder %s15, 1
      %p168 = por %p166, %p167
      %p169 = scmp.ne.s32.totalorder %s161, %s164
      %p170 = scmp.eq.s32.totalorder %s15, 0
      %p171 = por %p169, %p170
      %p172 = scmp.ne.s32.totalorder %s161, %s164
      %p173 = scmp.eq.s32.totalorder %s20, 1
      %p174 = por %p172, %p173
      %p175 = scmp.ne.s32.totalorder %s164, %s165
      %p176 = scmp.eq.s32.totalorder %s20, 0
      %p177 = por %p175, %p176
      %p178 = scmp.ne.s32.totalorder %s164, %s165
      %p179 = scmp.eq.s32.totalorder %s21, 1
      %p180 = por %p178, %p179
      %p182 = scmp.ne.s32.totalorder %s165, %s181
      %p183 = scmp.eq.s32.totalorder %s21, 0
      %p184 = por %p182, %p183
      %p185 = scmp.le.s32.totalorder 1, %s15
      %p186 = scmp.lt.s32.totalorder %s15, 3
      %p187 = pnand %p185, %p186
      %p188 = pneg %p187
      // Predicated region
      $region9: #{prompt_decoder_forward.31} parent=5 // pred_check
        _
      $region10: #{prompt_decoder_forward.31} parent=5 // pred_check_branch
        %190 = sbr.rel (%p187) target = $region12
      $region11: #{prompt_decoder_forward.31} parent=5 // pred_region
        %s191 = ssub.s32 %s15, 1
        // Predicated region
        $region13: #{prompt_decoder_forward.31} parent=11 // pred_check
          %p192 = pneg %p62
        $region14: #{prompt_decoder_forward.31} parent=11 // pred_check_branch
          %194 = sbr.rel (%p192) target = $region16
        $region15: #{prompt_decoder_forward.31} parent=11 // pred_region
          _
        $region16: #{prompt_decoder_forward.31} parent=11 // pred_fallthru
          _
        // Predicated region
        $region17: #{prompt_decoder_forward.31} parent=11 // pred_check
          %p195 = pneg %p83
        $region18: #{prompt_decoder_forward.31} parent=11 // pred_check_branch
          %197 = sbr.rel (%p195) target = $region20
        $region19: #{prompt_decoder_forward.31} parent=11 // pred_region
          _
        $region20: #{prompt_decoder_forward.31} parent=11 // pred_fallthru
          _
        // Predicated region
        $region21: #{prompt_decoder_forward.31} parent=11 // pred_check
          %p198 = pneg %p130
        $region22: #{prompt_decoder_forward.31} parent=11 // pred_check_branch
          %200 = sbr.rel (%p198) target = $region24
        $region23: #{prompt_decoder_forward.31} parent=11 // pred_region
          _
        $region24: #{prompt_decoder_forward.31} parent=11 // pred_fallthru
          _
        // Predicated region
        $region25: #{prompt_decoder_forward.31} parent=11 // pred_check
          %p201 = pneg %p151
        $region26: #{prompt_decoder_forward.31} parent=11 // pred_check_branch
          %203 = sbr.rel (%p201) target = $region28
        $region27: #{prompt_decoder_forward.31} parent=11 // pred_region
          _
        $region28: #{prompt_decoder_forward.31} parent=11 // pred_fallthru
          _
      $region12: #{prompt_decoder_forward.31} parent=5 // pred_fallthru
        _
      %p204 = scmp.lt.s32.totalorder %s15, 2
      // Predicated region
      $region29: #{prompt_decoder_forward.31} parent=5 // pred_check
        %p205 = pneg %p204
      $region30: #{prompt_decoder_forward.31} parent=5 // pred_check_branch
        %207 = sbr.rel (%p205) target = $region32
      $region31: #{prompt_decoder_forward.31} parent=5 // pred_region
        // Predicated region
        $region33: #{prompt_decoder_forward.31} parent=31 // pred_check
          %p208 = pneg %p35
        $region34: #{prompt_decoder_forward.31} parent=31 // pred_check_branch
          %210 = sbr.rel (%p208) target = $region36
        $region35: #{prompt_decoder_forward.31} parent=31 // pred_region
          %s211 = smul.u32 2, %s15
          %p212 = scmp.lt.s32.totalorder %s211, 3
          %s213 = scalar_select %p212, %s211, 3
          %s214 = smul.addr %s213, 4
          %s215 = scalar_lea.vmem %s0, %s214
          %s216 = smul.u32 2, %s15
        $region36: #{prompt_decoder_forward.31} parent=31 // pred_fallthru
          _
        // Predicated region
        $region37: #{prompt_decoder_forward.31} parent=31 // pred_check
          %p217 = pneg %p103
        $region38: #{prompt_decoder_forward.31} parent=31 // pred_check_branch
          %219 = sbr.rel (%p217) target = $region40
        $region39: #{prompt_decoder_forward.31} parent=31 // pred_region
          %s220 = smul.u32 2, %s15
          %p221 = scmp.lt.s32.totalorder %s220, 3
          %s222 = scalar_select %p221, %s220, 3
          %s223 = smul.addr %s222, 8
          %s224 = scalar_lea.vmem %s3, %s223
          %s225 = smul.u32 2, %s15
        $region40: #{prompt_decoder_forward.31} parent=31 // pred_fallthru
          _
      $region32: #{prompt_decoder_forward.31} parent=5 // pred_fallthru
        _
      %p226 = scmp.le.s32.totalorder 1, %s15
      %p227 = scmp.lt.s32.totalorder %s15, 3
      %p228 = pnand %p226, %p227
      %p229 = pneg %p228
      // Predicated region
      $region41: #{prompt_decoder_forward.31} parent=5 // pred_check
        _
      $region42: #{prompt_decoder_forward.31} parent=5 // pred_check_branch
        %231 = sbr.rel (%p228) target = $region44
      $region43: #{prompt_decoder_forward.31} parent=5 // pred_region
        %s232 = ssub.s32 %s15, 1
        %s233 = smul.u32 2, %s20
        %p234 = scmp.lt.s32.totalorder %s233, 3
        %s235 = scalar_select %p234, %s233, 3
        %s236 = smul.addr %s235, 4
        %s237 = scalar_lea.vmem %s0, %s236
        %p238 = pneg %p41
        %p239 = pneg %p38
        %p240 = pneg %p62
        %p241 = pneg %p59
        %p242 = pneg %p83
        %p243 = pneg %p80
        %s244 = smul.u32 2, %s20
        %p245 = scmp.lt.s32.totalorder %s244, 3
        %s246 = scalar_select %p245, %s244, 3
        %s247 = smul.addr %s246, 8
        %s248 = scalar_lea.vmem %s3, %s247
        %p249 = pneg %p109
        %p250 = pneg %p106
        %p251 = pneg %p130
        %p252 = pneg %p127
        %p253 = pneg %p151
        %p254 = pneg %p148
        %p255 = pneg %p177
        %p256 = pneg %p174
        %s257 = sand.u32 %s164, 1
        %s258 = scalar_lea.sflag [#allocation3], %s257
        %s259 = sand.u32 %s164, 1
        %s260 = smul.addr %s259, 16
        %s261 = scalar_lea.vmem [#allocation2], %s260
        %s262 = smul.u32 2, %s20
        %p263 = scmp.lt.s32.totalorder %s262, 3
        %s264 = scalar_select %p263, %s262, 3
        %s265 = smul.addr %s264, 4
        %s266 = scalar_lea.vmem %s0, %s265
        %s267 = smul.u32 2, %s20
        %s268 = smul.u32 2, %s20
        %p269 = scmp.lt.s32.totalorder %s268, 3
        %s270 = scalar_select %p269, %s268, 3
        %s271 = smul.addr %s270, 8
        %s272 = scalar_lea.vmem %s3, %s271
        %s273 = smul.u32 2, %s20
        %s274 = smul.u32 2, %s20
        %v276 = vld [vmem:[%s266] sm:$0xf]
        %v277 = vld [vmem:[%s266 + $0x4] sm:$0xf]
        %v278 = vld [vmem:[%s1] sm:$0xf]
        %v279 = vld [vmem:[%s1 + $0x4] sm:$0xf]
        %v280 = vld [vmem:[%s1 + $0x8] sm:$0xf]
        %v281 = vld [vmem:[%s1 + $0xc] sm:$0xf]
        %v282 = vld [vmem:[%s2] sm:$0x1]
        %v284 = vperm.slane %v282, 0
        %v288 = vunpack.c.l.b16 %v276
        %v289 = vunpack.c.l.b16 %v277
        %v290 = vpack.c.b16 %v289, %v288
        %v295 = vunpack.c.l.b16 %v278
        %v296 = vunpack.c.l.b16 %v279
        %v297 = vunpack.c.l.b16 %v280
        %v298 = vunpack.c.l.b16 %v281
        %v299 = vpack.c.b16 %v296, %v295
        %v300 = vpack.c.b16 %v298, %v297
        %vm303 = vcmask 261120
        %v305 = vsel %vm303, %v290, 0
        %307 = vmatpush.bf16.msra.mxu0 0
        %308 = vmatpush.bf16.msra.mxu0 0
        %309 = vmatpush.bf16.msra.mxu0 0
        %310 = vmatpush.bf16.msra.mxu0 0
        %311 = vmatpush.bf16.msra.mxu0 0
        %312 = vmatpush.bf16.msra.mxu0 0
        %313 = vmatpush.bf16.msra.mxu0 %v300
        %314 = vmatpush.bf16.msra.mxu0 %v299
        %315 = vmatmul.bf16.gmra.mxu0 %v305
        %v316 = vpop.f32.mrf.mxu0
        %v317 = vadd.f32 %v284, %v316
        %v318 = vpop.f32.mrf.mxu0
        %v319 = vadd.f32 %v284, %v318
        %320 = vdwg.mxu0
        %v321 = vld [vmem:[%s272] sm:$0xff]
        %v322 = vld [vmem:[%s272 + $0x8] sm:$0xff]
        %v323 = vadd.f32 %v317, %v321
        %v324 = vadd.f32 %v319, %v322
        %v325 = vsel %vm303, %v323, 0.0
        %326 = vadd.xlane.f32.xlu0 %v325
        %v327 = vpop.xlane.xlu0 %326
        %v328 = vsel %vm303, %v324, 0.0
        %329 = vadd.xlane.f32.xlu0 %v328
        %v330 = vpop.xlane.xlu0 %329
        %v331 = vrcp.pop 32.0
        %v332 = vmul.f32 32.0, %v331
        %v333 = vsub.f32 1.0, %v332
        %v334 = vmul.f32 %v331, %v333
        %v335 = vadd.f32 %v331, %v334
        %vm336 = vweird.f32 %v331
        %v337 = vsel %vm336, %v331, %v335
        %v338 = vmul.f32 %v327, %v337
        %v339 = vmul.f32 %v330, %v337
        %v340 = vsub.f32 %v323, %v338
        %v341 = vsub.f32 %v324, %v339
        %v342 = vmul.f32 %v340, %v340
        %v343 = vmul.f32 %v341, %v341
        %v344 = vsel %vm303, %v342, 0.0
        %345 = vadd.xlane.f32.xlu0 %v344
        %v346 = vpop.xlane.xlu0 %345
        %v347 = vsel %vm303, %v343, 0.0
        %348 = vadd.xlane.f32.xlu0 %v347
        %v349 = vpop.xlane.xlu0 %348
        %v350 = vmul.f32 %v346, %v337
        %v351 = vmul.f32 %v349, %v337
        %v352 = vadd.f32 %v350, 1e-05
        %v353 = vadd.f32 %v351, 1e-05
        %v354 = vrsqrt.pop %v352
        %v355 = vmul.f32 %v354, %v352
        %v356 = vmul.f32 %v355, %v354
        %v357 = vmul.f32 0.5, %v356
        %v358 = vsub.f32 1.5, %v357
        %v359 = vmul.f32 %v354, %v358
        %vm360 = vweird.f32 %v352
        %vm361 = vweird.f32 %v354
        %vm362 = vmor %vm360, %vm361
        %v363 = vsel %vm362, %v354, %v359
        %v364 = vrsqrt.pop %v353
        %v365 = vmul.f32 %v364, %v353
        %v366 = vmul.f32 %v365, %v364
        %v367 = vmul.f32 0.5, %v366
        %v368 = vsub.f32 1.5, %v367
        %v369 = vmul.f32 %v364, %v368
        %vm370 = vweird.f32 %v353
        %vm371 = vweird.f32 %v364
        %vm372 = vmor %vm370, %vm371
        %v373 = vsel %vm372, %v364, %v369
        %v374 = vmul.f32 %v340, %v363
        %v375 = vmul.f32 %v341, %v373
        %v376 = vld [vmem:[%s4] sm:$0x1]
        %v378 = vperm.slane %v376, 0
        %v380 = vmul.f32 %v374, %v378
        %v381 = vmul.f32 %v375, %v378
        %v382 = vld [vmem:[%s5] sm:$0x1]
        %v384 = vperm.slane %v382, 0
        %v386 = vadd.f32 %v380, %v384
        %v387 = vadd.f32 %v381, %v384
        %388 = vst.msk [vmem:[%s261] sm:$0xff] %vm303, %v386
        %389 = vst.msk [vmem:[%s261 + $0x8] sm:$0xff] %vm303, %v387
        %s390 = sand.u32 %s164, 1
        %s391 = scalar_lea.sflag [#allocation3], %s390
        %s392 = sand.u32 %s164, 1
        %s393 = smul.addr %s392, 16
        %s394 = scalar_lea.vmem [#allocation2], %s393
        // Predicated region
        $region45: #{prompt_decoder_forward.31} parent=43 // pred_check
          %p395 = pneg %p174
        $region46: #{prompt_decoder_forward.31} parent=43 // pred_check_branch
          %397 = sbr.rel (%p395) target = $region48
        $region47: #{prompt_decoder_forward.31} parent=43 // pred_region
          %s398 = smul.u32 2, %s20
          %400 = vsyncadd %s391, 0
          %s401 = smul.addr %s398, 8
          %s402 = scalar_lea.hbm %s6, %s401
          %s403 = sshll.u32 %s394, 4
          %s404 = int_to_ptr.vmem [resolvable:$true] %s403
          %s405 = sshll.u32 %s402, 4
          %s406 = int_to_ptr.hbm [resolvable:$true] %s405
          %411 = dma.vmem_to_hbm [thread:$0]  %s404, 256, %s406, %s391, 128, 128, 8
        $region48: #{prompt_decoder_forward.31} parent=43 // pred_fallthru
          _
      $region44: #{prompt_decoder_forward.31} parent=5 // pred_fallthru
        _
      %p412 = scmp.le.s32.totalorder 2, %s15
      // Predicated region
      $region49: #{prompt_decoder_forward.31} parent=5 // pred_check
        %p413 = pneg %p412
      $region50: #{prompt_decoder_forward.31} parent=5 // pred_check_branch
        %415 = sbr.rel (%p413) target = $region52
      $region51: #{prompt_decoder_forward.31} parent=5 // pred_region
        %s416 = ssub.s32 %s15, 2
        // Predicated region
        $region53: #{prompt_decoder_forward.31} parent=51 // pred_check
          %p417 = pneg %p180
        $region54: #{prompt_decoder_forward.31} parent=51 // pred_check_branch
          %419 = sbr.rel (%p417) target = $region56
        $region55: #{prompt_decoder_forward.31} parent=51 // pred_region
          %s420 = sand.u32 %s165, 1
          %s421 = scalar_lea.sflag [#allocation3], %s420
          %s422 = sand.u32 %s165, 1
          %s423 = smul.addr %s422, 16
          %s424 = scalar_lea.vmem [#allocation2], %s423
          %426 = dma.done %s421, 256
        $region56: #{prompt_decoder_forward.31} parent=51 // pred_fallthru
          _
      $region52: #{prompt_decoder_forward.31} parent=5 // pred_fallthru
        _
    $region6: #{prompt_decoder_forward.31} parent=1 // loop_footer
      %s19 = sadd.s32 1, %s15
    $region7: #{prompt_decoder_forward.31} parent=1 // loop_footer_branch
      %14 = sbr.rel target = $region3
    $region8: #{prompt_decoder_forward.31} parent=1 // loop_exit
      _
    %427 = vsyncpa [#allocation3], 1
    %s428 = scalar_lea.sflag [#allocation3], 1
    %429 = vsyncpa %s428, 1

</llo_original>
